<compile_context>
chip_gen: v7x
topology: tpu7x:2x2x1
jax: 0.10.0
libtpu: 0.0.40
codegen_flags: <defaults>
</compile_context>

<pallas_src>
import jax
import jax.numpy as jnp
from jax import lax
from jax.experimental import pallas as pl
from jax.experimental.pallas import tpu as pltpu

LANE = 128          # TPU lane width: all channel / FC dims are padded to this.
KH = KW = 5         # conv kernel size (both convs)


# ------------------------------ Pallas kernels ------------------------------ #

def _conv_relu_pool_kernel(p_ref, w_ref, b_ref, o_ref):
    """Fused conv (matmul on im2col patches) + bias + ReLU + 2x2 max-pool.

    p_ref: (1, 4, P, K) bf16  -- 4 pool-window offsets x P pooled pixels x K patch feats
    w_ref: (K, OC)      bf16  -- flattened conv weight, OC padded to 128 lanes
    b_ref: (1, OC)      f32
    o_ref: (1, P, OC)   bf16  -- pooled, ReLU'd feature map (channels-last)
    """
    w = w_ref[...]
    b = b_ref[...]

    def branch(d):
        acc = jnp.dot(p_ref[0, d], w, preferred_element_type=jnp.float32)
        return jnp.maximum(acc + b, 0.0)

    pooled = jnp.maximum(jnp.maximum(branch(0), branch(1)),
                         jnp.maximum(branch(2), branch(3)))
    o_ref[0] = pooled.astype(o_ref.dtype)


def _fc_fused_kernel(x_ref, w1_ref, b1_ref, w2_ref, b2_ref, w3_ref, b3_ref, o_ref):
    """fc1+ReLU -> fc2+ReLU -> fc3, all widths padded to 128 lanes, activations
    never leave VMEM/vregs between layers."""
    h = jnp.dot(x_ref[...], w1_ref[...], preferred_element_type=jnp.float32)
    h = jnp.maximum(h + b1_ref[...], 0.0).astype(jnp.bfloat16)
    h = jnp.dot(h, w2_ref[...], preferred_element_type=jnp.float32)
    h = jnp.maximum(h + b2_ref[...], 0.0).astype(jnp.bfloat16)
    h = jnp.dot(h, w3_ref[...], preferred_element_type=jnp.float32)
    o_ref[...] = (h + b3_ref[...]).astype(o_ref.dtype)


# ------------------------------ kernel wrappers ----------------------------- #

def conv_relu_pool(patches4, w, b):
    """patches4: (N, 4, P, K) bf16; w: (K, OC) bf16; b: (1, OC) f32 -> (N, P, OC) bf16."""
    N, _, P, K = patches4.shape
    OC = w.shape[1]
    return pl.pallas_call(
        _conv_relu_pool_kernel,
        out_shape=jax.ShapeDtypeStruct((N, P, OC), jnp.bfloat16),
        grid=(N,),
        in_specs=[
            pl.BlockSpec((1, 4, P, K), lambda n: (n, 0, 0, 0)),
            pl.BlockSpec((K, OC), lambda n: (0, 0)),
            pl.BlockSpec((1, OC), lambda n: (0, 0)),
        ],
        out_specs=pl.BlockSpec((1, P, OC), lambda n: (n, 0, 0)),
        compiler_params=pltpu.CompilerParams(
            dimension_semantics=("parallel",),          # shard batch over TCs (v7x)
            vmem_limit_bytes=32 * 1024 * 1024),
    )(patches4, w, b)


def fc_fused(x, w1, b1, w2, b2, w3, b3):
    """x: (N, K) bf16 -> (N, 128) f32 (first 10 lanes are the real logits)."""
    N, K = x.shape
    H1, H2, H3 = w1.shape[1], w2.shape[1], w3.shape[1]

    def full(shape):
        return pl.BlockSpec(shape, lambda i: (0,) * len(shape))

    return pl.pallas_call(
        _fc_fused_kernel,
        out_shape=jax.ShapeDtypeStruct((N, H3), jnp.float32),
        grid=(1,),
        in_specs=[full((N, K)),
                  full((K, H1)), full((1, H1)),
                  full((H1, H2)), full((1, H2)),
                  full((H2, H3)), full((1, H3))],
        out_specs=full((N, H3)),
        compiler_params=pltpu.CompilerParams(
            vmem_limit_bytes=32 * 1024 * 1024),
    )(x, w1, b1, w2, b2, w3, b3)


# ------------------------------ layout glue (XLA) --------------------------- #

def _pad_axis(a, size, axis):
    pad = size - a.shape[axis]
    if pad <= 0:
        return a
    widths = [(0, 0)] * a.ndim
    widths[axis] = (0, pad)
    return jnp.pad(a, widths)


def _extract_patches_cl(x):
    """Channels-last 5x5 'valid' patch extraction.

    x: (N, H, W, C) -> (N, OH, OW, KH*KW*C), lane order (kh, kw, c) -- matches
    the (kh, kw, ic, oc) weight flattening in prepare_params.
    """
    N, H, W, C = x.shape
    oh, ow = H - KH + 1, W - KW + 1
    views = [x[:, i:i + oh, j:j + ow, :] for i in range(KH) for j in range(KW)]
    p = jnp.stack(views, axis=3)                      # (N, oh, ow, KH*KW, C)
    return p.reshape(N, oh, ow, KH * KW * C), oh, ow


def _group_pool_windows(p, oh, ow):
    """(N, oh, ow, K) -> (N, 4, (oh//2)*(ow//2), K): axis 1 is the 2x2 pool offset."""
    N, K = p.shape[0], p.shape[-1]
    poh, pow_ = oh // 2, ow // 2
    p = p.reshape(N, poh, 2, pow_, 2, K)
    p = jnp.transpose(p, (0, 2, 4, 1, 3, 5))          # (N, dr, dc, poh, pow, K)
    return p.reshape(N, 4, poh * pow_, K), poh, pow_


# ------------------------------ params -------------------------------------- #

def init_params(key):
    """Same shapes / init scheme as the PyTorch Net (U(+-1/sqrt(fan_in)))."""
    ks = jax.random.split(key, 10)

    def u(k, shape, fan_in):
        bound = 1.0 / jnp.sqrt(jnp.float32(fan_in))
        return jax.random.uniform(k, shape, jnp.float32, -bound, bound)

    return {
        "conv1_w": u(ks[0], (6, 3, 5, 5), 3 * 25),
        "conv1_b": u(ks[1], (6,), 3 * 25),
        "conv2_w": u(ks[2], (16, 6, 5, 5), 6 * 25),
        "conv2_b": u(ks[3], (16,), 6 * 25),
        "fc1_w": u(ks[4], (120, 16 * 5 * 5), 16 * 5 * 5),
        "fc1_b": u(ks[5], (120,), 16 * 5 * 5),
        "fc2_w": u(ks[6], (84, 120), 120),
        "fc2_b": u(ks[7], (84,), 120),
        "fc3_w": u(ks[8], (10, 84), 84),
        "fc3_b": u(ks[9], (10,), 84),
    }


def prepare_params(p):
    """One-time re-layout of torch-layout params into kernel-ready form:
    transposed, zero-padded to 128 lanes, matmul operands cast to bf16."""
    # conv1: (OC=6, IC=3, 5, 5) -> (kh, kw, ic, oc) -> (75, 6) -> (128, 128)
    w1 = jnp.transpose(p["conv1_w"], (2, 3, 1, 0)).reshape(KH * KW * 3, 6)
    w1 = _pad_axis(_pad_axis(w1, LANE, 0), LANE, 1).astype(jnp.bfloat16)
    b1 = _pad_axis(p["conv1_b"], LANE, 0).reshape(1, LANE).astype(jnp.float32)

    # conv2: (16, 6, 5, 5) -> (kh, kw, ic_pad=128, oc_pad=128) -> (3200, 128)
    w2 = jnp.transpose(p["conv2_w"], (2, 3, 1, 0))            # (5, 5, 6, 16)
    w2 = _pad_axis(_pad_axis(w2, LANE, 2), LANE, 3)           # (5, 5, 128, 128)
    w2 = w2.reshape(KH * KW * LANE, LANE).astype(jnp.bfloat16)
    b2 = _pad_axis(p["conv2_b"], LANE, 0).reshape(1, LANE).astype(jnp.float32)

    # fc1: torch flatten order is (c, ph, pw); our features are (ph*pw, c_pad).
    f1 = p["fc1_w"].reshape(120, 16, 25)                      # (out, c, pix)
    f1 = jnp.transpose(f1, (2, 1, 0))                         # (pix, c, out)
    f1 = _pad_axis(_pad_axis(f1, LANE, 1), LANE, 2)           # (25, 128, 128)
    f1 = f1.reshape(25 * LANE, LANE).astype(jnp.bfloat16)
    fb1 = _pad_axis(p["fc1_b"], LANE, 0).reshape(1, LANE).astype(jnp.float32)

    f2 = _pad_axis(_pad_axis(p["fc2_w"].T, LANE, 0), LANE, 1).astype(jnp.bfloat16)
    fb2 = _pad_axis(p["fc2_b"], LANE, 0).reshape(1, LANE).astype(jnp.float32)
    f3 = _pad_axis(_pad_axis(p["fc3_w"].T, LANE, 0), LANE, 1).astype(jnp.bfloat16)
    fb3 = _pad_axis(p["fc3_b"], LANE, 0).reshape(1, LANE).astype(jnp.float32)

    return {"conv1_w": w1, "conv1_b": b1, "conv2_w": w2, "conv2_b": b2,
            "fc1_w": f1, "fc1_b": fb1, "fc2_w": f2, "fc2_b": fb2,
            "fc3_w": f3, "fc3_b": fb3}


# ------------------------------ forward pass -------------------------------- #

def net_forward(kp, x):
    """x: (N, 3, 32, 32) NCHW f32 -> (N, 10) f32 logits."""
    N = x.shape[0]

    # stage 1: conv1 + ReLU + pool (one fused kernel, batch-parallel grid)
    xcl = jnp.transpose(x, (0, 2, 3, 1)).astype(jnp.bfloat16)      # (N, 32, 32, 3)
    p, oh, ow = _extract_patches_cl(xcl)                           # (N, 28, 28, 75)
    p = _pad_axis(p, LANE, 3)                                      # lane-pad K 75 -> 128
    p4, poh, pow_ = _group_pool_windows(p, oh, ow)                 # (N, 4, 196, 128)
    h1 = conv_relu_pool(p4, kp["conv1_w"], kp["conv1_b"])          # (N, 196, 128) bf16

    # stage 2: conv2 + ReLU + pool (one fused kernel); carry padded channels-last
    h1 = h1.reshape(N, poh, pow_, LANE)                            # (N, 14, 14, 128)
    p, oh, ow = _extract_patches_cl(h1)                            # (N, 10, 10, 3200)
    p4, poh, pow_ = _group_pool_windows(p, oh, ow)                 # (N, 4, 25, 3200)
    h2 = conv_relu_pool(p4, kp["conv2_w"], kp["conv2_b"])          # (N, 25, 128) bf16

    # stage 3: fc1/fc2/fc3 in a single kernel
    feat = h2.reshape(N, 25 * LANE)                                # (N, 3200) bf16
    out = fc_fused(feat, kp["fc1_w"], kp["fc1_b"], kp["fc2_w"], kp["fc2_b"],
                   kp["fc3_w"], kp["fc3_b"])                       # (N, 128) f32
    return out[:, :10]                                             # slice padding only at the end


def reference_forward(p, x):
    """Pure-JAX f32 reference matching the PyTorch module (sanity check only)."""
    def conv(x, w, b):
        y = lax.conv_general_dilated(x, w, (1, 1), "VALID",
                                     dimension_numbers=("NCHW", "OIHW", "NCHW"))
        return jax.nn.relu(y + b.reshape(1, -1, 1, 1))

    def pool(x):
        return lax.reduce_window(x, -jnp.inf, lax.max,
                                 (1, 1, 2, 2), (1, 1, 2, 2), "VALID")

    x = pool(conv(x, p["conv1_w"], p["conv1_b"]))
    x = pool(conv(x, p["conv2_w"], p["conv2_b"]))
    x = x.reshape(x.shape[0], -1)
    x = jax.nn.relu(x @ p["fc1_w"].T + p["fc1_b"])
    x = jax.nn.relu(x @ p["fc2_w"].T + p["fc2_b"])
    return x @ p["fc3_w"].T + p["fc3_b"]


if __name__ == "__main__":
    key = jax.random.PRNGKey(0)
    pkey, xkey = jax.random.split(key)
    params = init_params(pkey)
    kparams = prepare_params(params)     # one-time re-layout, NOT at trace time

    # fc1 expects 16*5*5 features => 32x32 spatial input (CIFAR-10 shape).
    x = jax.random.normal(xkey, (2, 3, 32, 32), dtype=jnp.float32)

    out = jax.jit(net_forward)(kparams, x)
    out = jax.block_until_ready(out)
    assert out.shape == (2, 10) and out.dtype == jnp.float32

    # Sanity check vs pure-JAX f32 reference (bf16 MXU inputs + f32 accumulation
    # => small numerical differences; generous tolerance).
    ref = jax.block_until_ready(jax.jit(reference_forward)(params, x))
    max_err = float(jnp.max(jnp.abs(out - ref)))
    assert max_err < 0.1, f"kernel/reference mismatch: max_err={max_err}"

    print("KERNEL_OK")
</pallas_src>

<mosaic_0001>
module attributes {stable_mosaic.version = 11 : i64} {
  func.func @_conv_relu_pool_kernel(%arg0: i32, %arg1: memref<1x4x196x128xbf16, #tpu.memory_space<vmem>>, %arg2: memref<128x128xbf16, #tpu.memory_space<vmem>>, %arg3: memref<1x128xf32, #tpu.memory_space<vmem>>, %arg4: memref<1x196x128xbf16, #tpu.memory_space<vmem>>) attributes {dimension_semantics = [#tpu.dimension_semantics<parallel>], iteration_bounds = array<i64: 2>, scalar_prefetch = 0 : i64, scratch_operands = 0 : i64, tpu.core_type = #tpu.core_type<tc>, window_params = [{transform_indices = @transform_0, window_bounds = array<i64: 1, 4, 196, 128>}, {pipeline_mode = #tpu.pipeline_mode<synchronous>, transform_indices = @transform_1, window_bounds = array<i64: 128, 128>}, {pipeline_mode = #tpu.pipeline_mode<synchronous>, transform_indices = @transform_2, window_bounds = array<i64: 1, 128>}, {transform_indices = @transform_3, window_bounds = array<i64: 1, 196, 128>}]} {
    %c0 = arith.constant 0 : index
    %c0_0 = arith.constant 0 : index
    %0 = vector.load %arg2[%c0, %c0_0] : memref<128x128xbf16, #tpu.memory_space<vmem>>, vector<128x128xbf16>
    %c0_1 = arith.constant 0 : index
    %c0_2 = arith.constant 0 : index
    %1 = vector.load %arg3[%c0_1, %c0_2] : memref<1x128xf32, #tpu.memory_space<vmem>>, vector<1x128xf32>
    %c0_3 = arith.constant 0 : index
    %c0_4 = arith.constant 0 : index
    %c0_5 = arith.constant 0 : index
    %c0_6 = arith.constant 0 : index
    %2 = vector.load %arg1[%c0_3, %c0_4, %c0_5, %c0_6] : memref<1x4x196x128xbf16, #tpu.memory_space<vmem>>, vector<1x1x196x128xbf16>
    %3 = vector.shape_cast %2 : vector<1x1x196x128xbf16> to vector<196x128xbf16>
    %cst = arith.constant dense<0.000000e+00> : vector<196x128xf32>
    %4 = tpu.matmul %3, %0, %cst {dimension_numbers = #tpu.dot_dimension_numbers<[1], [0], [0], [1], [0, 0, 1, 1], [], []>} : vector<196x128xbf16>, vector<128x128xbf16>, vector<196x128xf32> -> vector<196x128xf32>
    %5 = vector.broadcast %1 : vector<1x128xf32> to vector<196x128xf32>
    %6 = arith.addf %4, %5 : vector<196x128xf32>
    %cst_7 = arith.constant 0.000000e+00 : f32
    %7 = vector.broadcast %cst_7 : f32 to vector<196x128xf32>
    %8 = arith.maximumf %6, %7 : vector<196x128xf32>
    %c0_8 = arith.constant 0 : index
    %c1 = arith.constant 1 : index
    %c0_9 = arith.constant 0 : index
    %c0_10 = arith.constant 0 : index
    %9 = vector.load %arg1[%c0_8, %c1, %c0_9, %c0_10] : memref<1x4x196x128xbf16, #tpu.memory_space<vmem>>, vector<1x1x196x128xbf16>
    %10 = vector.shape_cast %9 : vector<1x1x196x128xbf16> to vector<196x128xbf16>
    %cst_11 = arith.constant dense<0.000000e+00> : vector<196x128xf32>
    %11 = tpu.matmul %10, %0, %cst_11 {dimension_numbers = #tpu.dot_dimension_numbers<[1], [0], [0], [1], [0, 0, 1, 1], [], []>} : vector<196x128xbf16>, vector<128x128xbf16>, vector<196x128xf32> -> vector<196x128xf32>
    %12 = vector.broadcast %1 : vector<1x128xf32> to vector<196x128xf32>
    %13 = arith.addf %11, %12 : vector<196x128xf32>
    %cst_12 = arith.constant 0.000000e+00 : f32
    %14 = vector.broadcast %cst_12 : f32 to vector<196x128xf32>
    %15 = arith.maximumf %13, %14 : vector<196x128xf32>
    %16 = arith.maximumf %8, %15 : vector<196x128xf32>
    %c0_13 = arith.constant 0 : index
    %c2 = arith.constant 2 : index
    %c0_14 = arith.constant 0 : index
    %c0_15 = arith.constant 0 : index
    %17 = vector.load %arg1[%c0_13, %c2, %c0_14, %c0_15] : memref<1x4x196x128xbf16, #tpu.memory_space<vmem>>, vector<1x1x196x128xbf16>
    %18 = vector.shape_cast %17 : vector<1x1x196x128xbf16> to vector<196x128xbf16>
    %cst_16 = arith.constant dense<0.000000e+00> : vector<196x128xf32>
    %19 = tpu.matmul %18, %0, %cst_16 {dimension_numbers = #tpu.dot_dimension_numbers<[1], [0], [0], [1], [0, 0, 1, 1], [], []>} : vector<196x128xbf16>, vector<128x128xbf16>, vector<196x128xf32> -> vector<196x128xf32>
    %20 = vector.broadcast %1 : vector<1x128xf32> to vector<196x128xf32>
    %21 = arith.addf %19, %20 : vector<196x128xf32>
    %cst_17 = arith.constant 0.000000e+00 : f32
    %22 = vector.broadcast %cst_17 : f32 to vector<196x128xf32>
    %23 = arith.maximumf %21, %22 : vector<196x128xf32>
    %c0_18 = arith.constant 0 : index
    %c3 = arith.constant 3 : index
    %c0_19 = arith.constant 0 : index
    %c0_20 = arith.constant 0 : index
    %24 = vector.load %arg1[%c0_18, %c3, %c0_19, %c0_20] : memref<1x4x196x128xbf16, #tpu.memory_space<vmem>>, vector<1x1x196x128xbf16>
    %25 = vector.shape_cast %24 : vector<1x1x196x128xbf16> to vector<196x128xbf16>
    %cst_21 = arith.constant dense<0.000000e+00> : vector<196x128xf32>
    %26 = tpu.matmul %25, %0, %cst_21 {dimension_numbers = #tpu.dot_dimension_numbers<[1], [0], [0], [1], [0, 0, 1, 1], [], []>} : vector<196x128xbf16>, vector<128x128xbf16>, vector<196x128xf32> -> vector<196x128xf32>
    %27 = vector.broadcast %1 : vector<1x128xf32> to vector<196x128xf32>
    %28 = arith.addf %26, %27 : vector<196x128xf32>
    %cst_22 = arith.constant 0.000000e+00 : f32
    %29 = vector.broadcast %cst_22 : f32 to vector<196x128xf32>
    %30 = arith.maximumf %28, %29 : vector<196x128xf32>
    %31 = arith.maximumf %23, %30 : vector<196x128xf32>
    %32 = arith.maximumf %16, %31 : vector<196x128xf32>
    %33 = arith.truncf %32 : vector<196x128xf32> to vector<196x128xbf16>
    %c0_23 = arith.constant 0 : index
    %c0_24 = arith.constant 0 : index
    %c0_25 = arith.constant 0 : index
    %34 = vector.load %arg4[%c0_23, %c0_24, %c0_25] : memref<1x196x128xbf16, #tpu.memory_space<vmem>>, vector<1x196x128xbf16>
    %35 = vector.shape_cast %34 : vector<1x196x128xbf16> to vector<196x128xbf16>
    %36 = vector.shape_cast %33 : vector<196x128xbf16> to vector<1x196x128xbf16>
    tpu.vector_store %arg4[%c0_23, %c0_24, %c0_25], %36 {strides = array<i32>} : memref<1x196x128xbf16, #tpu.memory_space<vmem>>, vector<1x196x128xbf16>,
    return
  }
  func.func @transform_0(%arg0: i32) -> (i32, i32, i32, i32) {
    %c0_i32 = arith.constant 0 : i32
    %c0_i32_0 = arith.constant 0 : i32
    %c0_i32_1 = arith.constant 0 : i32
    %c0_i32_2 = arith.constant 0 : i32
    return %arg0, %c0_i32, %c0_i32_0, %c0_i32_1 : i32, i32, i32, i32
  }
  func.func @transform_1(%arg0: i32) -> (i32, i32) {
    %c0_i32 = arith.constant 0 : i32
    %c0_i32_0 = arith.constant 0 : i32
    %c0_i32_1 = arith.constant 0 : i32
    return %c0_i32, %c0_i32_0 : i32, i32
  }
  func.func @transform_2(%arg0: i32) -> (i32, i32) {
    %c0_i32 = arith.constant 0 : i32
    %c0_i32_0 = arith.constant 0 : i32
    %c0_i32_1 = arith.constant 0 : i32
    return %c0_i32, %c0_i32_0 : i32, i32
  }
  func.func @transform_3(%arg0: i32) -> (i32, i32, i32) {
    %c0_i32 = arith.constant 0 : i32
    %c0_i32_0 = arith.constant 0 : i32
    %c0_i32_1 = arith.constant 0 : i32
    return %arg0, %c0_i32, %c0_i32_0 : i32, i32, i32
  }
}

module attributes {stable_mosaic.version = 11 : i64} {
  func.func @_conv_relu_pool_kernel(%arg0: i32, %arg1: memref<1x4x25x3200xbf16, #tpu.memory_space<vmem>>, %arg2: memref<3200x128xbf16, #tpu.memory_space<vmem>>, %arg3: memref<1x128xf32, #tpu.memory_space<vmem>>, %arg4: memref<1x25x128xbf16, #tpu.memory_space<vmem>>) attributes {dimension_semantics = [#tpu.dimension_semantics<parallel>], iteration_bounds = array<i64: 2>, scalar_prefetch = 0 : i64, scratch_operands = 0 : i64, tpu.core_type = #tpu.core_type<tc>, window_params = [{transform_indices = @transform_0, window_bounds = array<i64: 1, 4, 25, 3200>}, {pipeline_mode = #tpu.pipeline_mode<synchronous>, transform_indices = @transform_1, window_bounds = array<i64: 3200, 128>}, {pipeline_mode = #tpu.pipeline_mode<synchronous>, transform_indices = @transform_2, window_bounds = array<i64: 1, 128>}, {transform_indices = @transform_3, window_bounds = array<i64: 1, 25, 128>}]} {
    %c0 = arith.constant 0 : index
    %c0_0 = arith.constant 0 : index
    %0 = vector.load %arg2[%c0, %c0_0] : memref<3200x128xbf16, #tpu.memory_space<vmem>>, vector<3200x128xbf16>
    %c0_1 = arith.constant 0 : index
    %c0_2 = arith.constant 0 : index
    %1 = vector.load %arg3[%c0_1, %c0_2] : memref<1x128xf32, #tpu.memory_space<vmem>>, vector<1x128xf32>
    %c0_3 = arith.constant 0 : index
    %c0_4 = arith.constant 0 : index
    %c0_5 = arith.constant 0 : index
    %c0_6 = arith.constant 0 : index
    %2 = vector.load %arg1[%c0_3, %c0_4, %c0_5, %c0_6] : memref<1x4x25x3200xbf16, #tpu.memory_space<vmem>>, vector<1x1x25x3200xbf16>
    %3 = vector.shape_cast %2 : vector<1x1x25x3200xbf16> to vector<25x3200xbf16>
    %cst = arith.constant dense<0.000000e+00> : vector<25x128xf32>
    %4 = tpu.matmul %3, %0, %cst {dimension_numbers = #tpu.dot_dimension_numbers<[1], [0], [0], [1], [0, 0, 1, 1], [], []>} : vector<25x3200xbf16>, vector<3200x128xbf16>, vector<25x128xf32> -> vector<25x128xf32>
    %5 = vector.broadcast %1 : vector<1x128xf32> to vector<25x128xf32>
    %6 = arith.addf %4, %5 : vector<25x128xf32>
    %cst_7 = arith.constant 0.000000e+00 : f32
    %7 = vector.broadcast %cst_7 : f32 to vector<25x128xf32>
    %8 = arith.maximumf %6, %7 : vector<25x128xf32>
    %c0_8 = arith.constant 0 : index
    %c1 = arith.constant 1 : index
    %c0_9 = arith.constant 0 : index
    %c0_10 = arith.constant 0 : index
    %9 = vector.load %arg1[%c0_8, %c1, %c0_9, %c0_10] : memref<1x4x25x3200xbf16, #tpu.memory_space<vmem>>, vector<1x1x25x3200xbf16>
    %10 = vector.shape_cast %9 : vector<1x1x25x3200xbf16> to vector<25x3200xbf16>
    %cst_11 = arith.constant dense<0.000000e+00> : vector<25x128xf32>
    %11 = tpu.matmul %10, %0, %cst_11 {dimension_numbers = #tpu.dot_dimension_numbers<[1], [0], [0], [1], [0, 0, 1, 1], [], []>} : vector<25x3200xbf16>, vector<3200x128xbf16>, vector<25x128xf32> -> vector<25x128xf32>
    %12 = vector.broadcast %1 : vector<1x128xf32> to vector<25x128xf32>
    %13 = arith.addf %11, %12 : vector<25x128xf32>
    %cst_12 = arith.constant 0.000000e+00 : f32
    %14 = vector.broadcast %cst_12 : f32 to vector<25x128xf32>
    %15 = arith.maximumf %13, %14 : vector<25x128xf32>
    %16 = arith.maximumf %8, %15 : vector<25x128xf32>
    %c0_13 = arith.constant 0 : index
    %c2 = arith.constant 2 : index
    %c0_14 = arith.constant 0 : index
    %c0_15 = arith.constant 0 : index
    %17 = vector.load %arg1[%c0_13, %c2, %c0_14, %c0_15] : memref<1x4x25x3200xbf16, #tpu.memory_space<vmem>>, vector<1x1x25x3200xbf16>
    %18 = vector.shape_cast %17 : vector<1x1x25x3200xbf16> to vector<25x3200xbf16>
    %cst_16 = arith.constant dense<0.000000e+00> : vector<25x128xf32>
    %19 = tpu.matmul %18, %0, %cst_16 {dimension_numbers = #tpu.dot_dimension_numbers<[1], [0], [0], [1], [0, 0, 1, 1], [], []>} : vector<25x3200xbf16>, vector<3200x128xbf16>, vector<25x128xf32> -> vector<25x128xf32>
    %20 = vector.broadcast %1 : vector<1x128xf32> to vector<25x128xf32>
    %21 = arith.addf %19, %20 : vector<25x128xf32>
    %cst_17 = arith.constant 0.000000e+00 : f32
    %22 = vector.broadcast %cst_17 : f32 to vector<25x128xf32>
    %23 = arith.maximumf %21, %22 : vector<25x128xf32>
    %c0_18 = arith.constant 0 : index
    %c3 = arith.constant 3 : index
    %c0_19 = arith.constant 0 : index
    %c0_20 = arith.constant 0 : index
    %24 = vector.load %arg1[%c0_18, %c3, %c0_19, %c0_20] : memref<1x4x25x3200xbf16, #tpu.memory_space<vmem>>, vector<1x1x25x3200xbf16>
    %25 = vector.shape_cast %24 : vector<1x1x25x3200xbf16> to vector<25x3200xbf16>
    %cst_21 = arith.constant dense<0.000000e+00> : vector<25x128xf32>
    %26 = tpu.matmul %25, %0, %cst_21 {dimension_numbers = #tpu.dot_dimension_numbers<[1], [0], [0], [1], [0, 0, 1, 1], [], []>} : vector<25x3200xbf16>, vector<3200x128xbf16>, vector<25x128xf32> -> vector<25x128xf32>
    %27 = vector.broadcast %1 : vector<1x128xf32> to vector<25x128xf32>
    %28 = arith.addf %26, %27 : vector<25x128xf32>
    %cst_22 = arith.constant 0.000000e+00 : f32
    %29 = vector.broadcast %cst_22 : f32 to vector<25x128xf32>
    %30 = arith.maximumf %28, %29 : vector<25x128xf32>
    %31 = arith.maximumf %23, %30 : vector<25x128xf32>
    %32 = arith.maximumf %16, %31 : vector<25x128xf32>
    %33 = arith.truncf %32 : vector<25x128xf32> to vector<25x128xbf16>
    %c0_23 = arith.constant 0 : index
    %c0_24 = arith.constant 0 : index
    %c0_25 = arith.constant 0 : index
    %34 = vector.load %arg4[%c0_23, %c0_24, %c0_25] : memref<1x25x128xbf16, #tpu.memory_space<vmem>>, vector<1x25x128xbf16>
    %35 = vector.shape_cast %34 : vector<1x25x128xbf16> to vector<25x128xbf16>
    %36 = vector.shape_cast %33 : vector<25x128xbf16> to vector<1x25x128xbf16>
    tpu.vector_store %arg4[%c0_23, %c0_24, %c0_25], %36 {strides = array<i32>} : memref<1x25x128xbf16, #tpu.memory_space<vmem>>, vector<1x25x128xbf16>,
    return
  }
  func.func @transform_0(%arg0: i32) -> (i32, i32, i32, i32) {
    %c0_i32 = arith.constant 0 : i32
    %c0_i32_0 = arith.constant 0 : i32
    %c0_i32_1 = arith.constant 0 : i32
    %c0_i32_2 = arith.constant 0 : i32
    return %arg0, %c0_i32, %c0_i32_0, %c0_i32_1 : i32, i32, i32, i32
  }
  func.func @transform_1(%arg0: i32) -> (i32, i32) {
    %c0_i32 = arith.constant 0 : i32
    %c0_i32_0 = arith.constant 0 : i32
    %c0_i32_1 = arith.constant 0 : i32
    return %c0_i32, %c0_i32_0 : i32, i32
  }
  func.func @transform_2(%arg0: i32) -> (i32, i32) {
    %c0_i32 = arith.constant 0 : i32
    %c0_i32_0 = arith.constant 0 : i32
    %c0_i32_1 = arith.constant 0 : i32
    return %c0_i32, %c0_i32_0 : i32, i32
  }
  func.func @transform_3(%arg0: i32) -> (i32, i32, i32) {
    %c0_i32 = arith.constant 0 : i32
    %c0_i32_0 = arith.constant 0 : i32
    %c0_i32_1 = arith.constant 0 : i32
    return %arg0, %c0_i32, %c0_i32_0 : i32, i32, i32
  }
}

module attributes {stable_mosaic.version = 11 : i64} {
  func.func @_fc_fused_kernel(%arg0: i32, %arg1: memref<2x3200xbf16, #tpu.memory_space<vmem>>, %arg2: memref<3200x128xbf16, #tpu.memory_space<vmem>>, %arg3: memref<1x128xf32, #tpu.memory_space<vmem>>, %arg4: memref<128x128xbf16, #tpu.memory_space<vmem>>, %arg5: memref<1x128xf32, #tpu.memory_space<vmem>>, %arg6: memref<128x128xbf16, #tpu.memory_space<vmem>>, %arg7: memref<1x128xf32, #tpu.memory_space<vmem>>, %arg8: memref<2x128xf32, #tpu.memory_space<vmem>>) attributes {dimension_semantics = [#tpu.dimension_semantics<arbitrary>], iteration_bounds = array<i64: 1>, scalar_prefetch = 0 : i64, scratch_operands = 0 : i64, tpu.core_type = #tpu.core_type<tc>, window_params = [{pipeline_mode = #tpu.pipeline_mode<synchronous>, transform_indices = @transform_0, window_bounds = array<i64: 2, 3200>}, {pipeline_mode = #tpu.pipeline_mode<synchronous>, transform_indices = @transform_1, window_bounds = array<i64: 3200, 128>}, {pipeline_mode = #tpu.pipeline_mode<synchronous>, transform_indices = @transform_2, window_bounds = array<i64: 1, 128>}, {pipeline_mode = #tpu.pipeline_mode<synchronous>, transform_indices = @transform_3, window_bounds = array<i64: 128, 128>}, {pipeline_mode = #tpu.pipeline_mode<synchronous>, transform_indices = @transform_4, window_bounds = array<i64: 1, 128>}, {pipeline_mode = #tpu.pipeline_mode<synchronous>, transform_indices = @transform_5, window_bounds = array<i64: 128, 128>}, {pipeline_mode = #tpu.pipeline_mode<synchronous>, transform_indices = @transform_6, window_bounds = array<i64: 1, 128>}, {pipeline_mode = #tpu.pipeline_mode<synchronous>, transform_indices = @transform_7, window_bounds = array<i64: 2, 128>}]} {
    %c0 = arith.constant 0 : index
    %c0_0 = arith.constant 0 : index
    %0 = vector.load %arg1[%c0, %c0_0] : memref<2x3200xbf16, #tpu.memory_space<vmem>>, vector<2x3200xbf16>
    %c0_1 = arith.constant 0 : index
    %c0_2 = arith.constant 0 : index
    %1 = vector.load %arg2[%c0_1, %c0_2] : memref<3200x128xbf16, #tpu.memory_space<vmem>>, vector<3200x128xbf16>
    %cst = arith.constant dense<0.000000e+00> : vector<2x128xf32>
    %2 = tpu.matmul %0, %1, %cst {dimension_numbers = #tpu.dot_dimension_numbers<[1], [0], [0], [1], [0, 0, 1, 1], [], []>} : vector<2x3200xbf16>, vector<3200x128xbf16>, vector<2x128xf32> -> vector<2x128xf32>
    %c0_3 = arith.constant 0 : index
    %c0_4 = arith.constant 0 : index
    %3 = vector.load %arg3[%c0_3, %c0_4] : memref<1x128xf32, #tpu.memory_space<vmem>>, vector<1x128xf32>
    %4 = vector.broadcast %3 : vector<1x128xf32> to vector<2x128xf32>
    %5 = arith.addf %2, %4 : vector<2x128xf32>
    %cst_5 = arith.constant 0.000000e+00 : f32
    %6 = vector.broadcast %cst_5 : f32 to vector<2x128xf32>
    %7 = arith.maximumf %5, %6 : vector<2x128xf32>
    %8 = arith.truncf %7 : vector<2x128xf32> to vector<2x128xbf16>
    %c0_6 = arith.constant 0 : index
    %c0_7 = arith.constant 0 : index
    %9 = vector.load %arg4[%c0_6, %c0_7] : memref<128x128xbf16, #tpu.memory_space<vmem>>, vector<128x128xbf16>
    %cst_8 = arith.constant dense<0.000000e+00> : vector<2x128xf32>
    %10 = tpu.matmul %8, %9, %cst_8 {dimension_numbers = #tpu.dot_dimension_numbers<[1], [0], [0], [1], [0, 0, 1, 1], [], []>} : vector<2x128xbf16>, vector<128x128xbf16>, vector<2x128xf32> -> vector<2x128xf32>
    %c0_9 = arith.constant 0 : index
    %c0_10 = arith.constant 0 : index
    %11 = vector.load %arg5[%c0_9, %c0_10] : memref<1x128xf32, #tpu.memory_space<vmem>>, vector<1x128xf32>
    %12 = vector.broadcast %11 : vector<1x128xf32> to vector<2x128xf32>
    %13 = arith.addf %10, %12 : vector<2x128xf32>
    %cst_11 = arith.constant 0.000000e+00 : f32
    %14 = vector.broadcast %cst_11 : f32 to vector<2x128xf32>
    %15 = arith.maximumf %13, %14 : vector<2x128xf32>
    %16 = arith.truncf %15 : vector<2x128xf32> to vector<2x128xbf16>
    %c0_12 = arith.constant 0 : index
    %c0_13 = arith.constant 0 : index
    %17 = vector.load %arg6[%c0_12, %c0_13] : memref<128x128xbf16, #tpu.memory_space<vmem>>, vector<128x128xbf16>
    %cst_14 = arith.constant dense<0.000000e+00> : vector<2x128xf32>
    %18 = tpu.matmul %16, %17, %cst_14 {dimension_numbers = #tpu.dot_dimension_numbers<[1], [0], [0], [1], [0, 0, 1, 1], [], []>} : vector<2x128xbf16>, vector<128x128xbf16>, vector<2x128xf32> -> vector<2x128xf32>
    %c0_15 = arith.constant 0 : index
    %c0_16 = arith.constant 0 : index
    %19 = vector.load %arg7[%c0_15, %c0_16] : memref<1x128xf32, #tpu.memory_space<vmem>>, vector<1x128xf32>
    %20 = vector.broadcast %19 : vector<1x128xf32> to vector<2x128xf32>
    %21 = arith.addf %18, %20 : vector<2x128xf32>
    %c0_17 = arith.constant 0 : index
    %c0_18 = arith.constant 0 : index
    %22 = vector.load %arg8[%c0_17, %c0_18] : memref<2x128xf32, #tpu.memory_space<vmem>>, vector<2x128xf32>
    tpu.vector_store %arg8[%c0_17, %c0_18], %21 {strides = array<i32>} : memref<2x128xf32, #tpu.memory_space<vmem>>, vector<2x128xf32>,
    return
  }
  func.func @transform_0(%arg0: i32) -> (i32, i32) {
    %c0_i32 = arith.constant 0 : i32
    %c0_i32_0 = arith.constant 0 : i32
    %c0_i32_1 = arith.constant 0 : i32
    return %c0_i32, %c0_i32_0 : i32, i32
  }
  func.func @transform_1(%arg0: i32) -> (i32, i32) {
    %c0_i32 = arith.constant 0 : i32
    %c0_i32_0 = arith.constant 0 : i32
    %c0_i32_1 = arith.constant 0 : i32
    return %c0_i32, %c0_i32_0 : i32, i32
  }
  func.func @transform_2(%arg0: i32) -> (i32, i32) {
    %c0_i32 = arith.constant 0 : i32
    %c0_i32_0 = arith.constant 0 : i32
    %c0_i32_1 = arith.constant 0 : i32
    return %c0_i32, %c0_i32_0 : i32, i32
  }
  func.func @transform_3(%arg0: i32) -> (i32, i32) {
    %c0_i32 = arith.constant 0 : i32
    %c0_i32_0 = arith.constant 0 : i32
    %c0_i32_1 = arith.constant 0 : i32
    return %c0_i32, %c0_i32_0 : i32, i32
  }
  func.func @transform_4(%arg0: i32) -> (i32, i32) {
    %c0_i32 = arith.constant 0 : i32
    %c0_i32_0 = arith.constant 0 : i32
    %c0_i32_1 = arith.constant 0 : i32
    return %c0_i32, %c0_i32_0 : i32, i32
  }
  func.func @transform_5(%arg0: i32) -> (i32, i32) {
    %c0_i32 = arith.constant 0 : i32
    %c0_i32_0 = arith.constant 0 : i32
    %c0_i32_1 = arith.constant 0 : i32
    return %c0_i32, %c0_i32_0 : i32, i32
  }
  func.func @transform_6(%arg0: i32) -> (i32, i32) {
    %c0_i32 = arith.constant 0 : i32
    %c0_i32_0 = arith.constant 0 : i32
    %c0_i32_1 = arith.constant 0 : i32
    return %c0_i32, %c0_i32_0 : i32, i32
  }
  func.func @transform_7(%arg0: i32) -> (i32, i32) {
    %c0_i32 = arith.constant 0 : i32
    %c0_i32_0 = arith.constant 0 : i32
    %c0_i32_1 = arith.constant 0 : i32
    return %c0_i32, %c0_i32_0 : i32, i32
  }
}

</mosaic_0001>

<llo_original>
// kernel: net_forward.3
$region0: #{net_forward.3}
  #allocation0 [shape = 'u32[]', space=smem, size = 0x4, offset = 0x4, fixed_abs, tag = 'smem constant byte address 0x4 - core index']
  #allocation1 [shape = 'u32[144,128]{1,0:T(1,128)}', space=vmem, size = 0x12000, scoped, tag = 'internal scratch']
  %s0 = inlined_call_operand.vmem [shape: bf16[2,4,196,128], index: 0, kind: input, shape index: {}]
  %s1 = inlined_call_operand.vmem [shape: bf16[128,128], index: 1, kind: input, shape index: {}]
  %s2 = inlined_call_operand.vmem [shape: f32[1,128], index: 2, kind: input, shape index: {}]
  %s3 = inlined_call_operand.vmem [shape: bf16[2,196,128], index: 3, kind: output, shape index: {}]
  %s4 = sld [smem:[#allocation0]]
  $region45: #{net_forward.3} parent=0
    _
  %s6 = ssub.s32 1, %s4
  %s7 = scalar_select 0, %s6, %s4
  loop: start=0, step=1, limit=4
  $region2: #{net_forward.3} parent=0 // loop_pre_header
    _
  $region3: #{net_forward.3} parent=0 // loop_header
    %s9 = sphi 0, %s13
    %p10 = scmp.ge.s32.totalorder %s9, 4
    %s19 = sphi 0, %s21
    %s22 = sphi 0, %s19
    %s23 = sphi 0, %s22
    %s39 = sphi 0, %s23
    %s43 = sphi 0, %s43
    %s45 = sphi 0, %s43
    %s46 = sphi 0, %s45
    %s60 = sphi 0, %s46
    %s64 = sphi 0, %s64
    %s66 = sphi 0, %s64
    %s67 = sphi 0, %s66
    %s81 = sphi 0, %s67
    %s87 = sphi 0, %s89
    %s90 = sphi 0, %s87
    %s91 = sphi 0, %s90
    %s107 = sphi 0, %s91
  $region4: #{net_forward.3} parent=0 // loop_header_branch
    %12 = sbr.rel (%p10) target = $region8
  $region5: #{net_forward.3} parent=0 // loop_body
    %s14 = ssub.s32 %s9, 1
    %s15 = ssub.s32 %s9, 2
    %s16 = sadd.s32 %s9, 1
    %s17 = ssub.s32 %s9, %s16
    %p18 = scmp.eq.s32.totalorder %s17, 0
    %s20 = sadd.s32 %s19, 1
    %s21 = scalar_select %p18, %s19, %s20
    %p24 = pneg %p18
    %p25 = scmp.eq.s32.totalorder %s9, 1
    %p26 = por %p24, %p25
    %p27 = scmp.ne.s32.totalorder %s19, %s22
    %p28 = scmp.eq.s32.totalorder %s9, 0
    %p29 = por %p27, %p28
    %p30 = scmp.ne.s32.totalorder %s19, %s22
    %p31 = scmp.eq.s32.totalorder %s14, 1
    %p32 = por %p30, %p31
    %p33 = scmp.ne.s32.totalorder %s22, %s23
    %p34 = scmp.eq.s32.totalorder %s14, 0
    %p35 = por %p33, %p34
    %p36 = scmp.ne.s32.totalorder %s22, %s23
    %p37 = scmp.eq.s32.totalorder %s15, 1
    %p38 = por %p36, %p37
    %p40 = scmp.ne.s32.totalorder %s23, %s39
    %p41 = scmp.eq.s32.totalorder %s15, 0
    %p42 = por %p40, %p41
    %s44 = sadd.s32 %s43, 1
    %p47 = scmp.eq.s32.totalorder %s9, 1
    %p48 = scmp.ne.s32.totalorder %s43, %s45
    %p49 = scmp.eq.s32.totalorder %s9, 0
    %p50 = por %p48, %p49
    %p51 = scmp.ne.s32.totalorder %s43, %s45
    %p52 = scmp.eq.s32.totalorder %s14, 1
    %p53 = por %p51, %p52
    %p54 = scmp.ne.s32.totalorder %s45, %s46
    %p55 = scmp.eq.s32.totalorder %s14, 0
    %p56 = por %p54, %p55
    %p57 = scmp.ne.s32.totalorder %s45, %s46
    %p58 = scmp.eq.s32.totalorder %s15, 1
    %p59 = por %p57, %p58
    %p61 = scmp.ne.s32.totalorder %s46, %s60
    %p62 = scmp.eq.s32.totalorder %s15, 0
    %p63 = por %p61, %p62
    %s65 = sadd.s32 %s64, 1
    %p68 = scmp.eq.s32.totalorder %s9, 1
    %p69 = scmp.ne.s32.totalorder %s64, %s66
    %p70 = scmp.eq.s32.totalorder %s9, 0
    %p71 = por %p69, %p70
    %p72 = scmp.ne.s32.totalorder %s64, %s66
    %p73 = scmp.eq.s32.totalorder %s14, 1
    %p74 = por %p72, %p73
    %p75 = scmp.ne.s32.totalorder %s66, %s67
    %p76 = scmp.eq.s32.totalorder %s14, 0
    %p77 = por %p75, %p76
    %p78 = scmp.ne.s32.totalorder %s66, %s67
    %p79 = scmp.eq.s32.totalorder %s15, 1
    %p80 = por %p78, %p79
    %p82 = scmp.ne.s32.totalorder %s67, %s81
    %p83 = scmp.eq.s32.totalorder %s15, 0
    %p84 = por %p82, %p83
    %s85 = ssub.s32 %s9, %s16
    %p86 = scmp.eq.s32.totalorder %s85, 0
    %s88 = sadd.s32 %s87, 1
    %s89 = scalar_select %p86, %s87, %s88
    %p92 = pneg %p86
    %p93 = scmp.eq.s32.totalorder %s9, 1
    %p94 = por %p92, %p93
    %p95 = scmp.ne.s32.totalorder %s87, %s90
    %p96 = scmp.eq.s32.totalorder %s9, 0
    %p97 = por %p95, %p96
    %p98 = scmp.ne.s32.totalorder %s87, %s90
    %p99 = scmp.eq.s32.totalorder %s14, 1
    %p100 = por %p98, %p99
    %p101 = scmp.ne.s32.totalorder %s90, %s91
    %p102 = scmp.eq.s32.totalorder %s14, 0
    %p103 = por %p101, %p102
    %p104 = scmp.ne.s32.totalorder %s90, %s91
    %p105 = scmp.eq.s32.totalorder %s15, 1
    %p106 = por %p104, %p105
    %p108 = scmp.ne.s32.totalorder %s91, %s107
    %p109 = scmp.eq.s32.totalorder %s15, 0
    %p110 = por %p108, %p109
    %p111 = scmp.le.s32.totalorder 1, %s9
    %p112 = scmp.lt.s32.totalorder %s9, 3
    %p113 = pnand %p111, %p112
    %p114 = pneg %p113
    // Predicated region
    $region9: #{net_forward.3} parent=5 // pred_check
      _
    $region10: #{net_forward.3} parent=5 // pred_check_branch
      %116 = sbr.rel (%p113) target = $region12
    $region11: #{net_forward.3} parent=5 // pred_region
      %s117 = ssub.s32 %s9, 1
      // Predicated region
      $region13: #{net_forward.3} parent=11 // pred_check
        %p118 = pneg %p56
      $region14: #{net_forward.3} parent=11 // pred_check_branch
        %120 = sbr.rel (%p118) target = $region16
      $region15: #{net_forward.3} parent=11 // pred_region
        _
      $region16: #{net_forward.3} parent=11 // pred_fallthru
        _
      // Predicated region
      $region17: #{net_forward.3} parent=11 // pred_check
        %p121 = pneg %p77
      $region18: #{net_forward.3} parent=11 // pred_check_branch
        %123 = sbr.rel (%p121) target = $region20
      $region19: #{net_forward.3} parent=11 // pred_region
        _
      $region20: #{net_forward.3} parent=11 // pred_fallthru
        _
    $region12: #{net_forward.3} parent=5 // pred_fallthru
      _
    %p124 = scmp.lt.s32.totalorder %s9, 2
    // Predicated region
    $region21: #{net_forward.3} parent=5 // pred_check
      %p125 = pneg %p124
    $region22: #{net_forward.3} parent=5 // pred_check_branch
      %127 = sbr.rel (%p125) target = $region24
    $region23: #{net_forward.3} parent=5 // pred_region
      // Predicated region
      $region25: #{net_forward.3} parent=23 // pred_check
        %p128 = pneg %p29
      $region26: #{net_forward.3} parent=23 // pred_check_branch
        %130 = sbr.rel (%p128) target = $region28
      $region27: #{net_forward.3} parent=23 // pred_region
        %p131 = scmp.lt.s32.totalorder %s9, 1
        %s132 = scalar_select %p131, %s9, 1
        %s133 = smul.addr %s132, 100
        %s134 = smul.addr %s133, 4
        %s135 = scalar_lea.vmem %s0, %s134
      $region28: #{net_forward.3} parent=23 // pred_fallthru
        _
    $region24: #{net_forward.3} parent=5 // pred_fallthru
      _
    %p136 = scmp.le.s32.totalorder 1, %s9
    %p137 = scmp.lt.s32.totalorder %s9, 3
    %p138 = pnand %p136, %p137
    %p139 = pneg %p138
    // Predicated region
    $region29: #{net_forward.3} parent=5 // pred_check
      _
    $region30: #{net_forward.3} parent=5 // pred_check_branch
      %141 = sbr.rel (%p138) target = $region32
    $region31: #{net_forward.3} parent=5 // pred_region
      %s142 = ssub.s32 %s9, 1
      %p143 = scmp.lt.s32.totalorder %s14, 1
      %s144 = scalar_select %p143, %s14, 1
      %s145 = smul.addr %s144, 100
      %s146 = smul.addr %s145, 4
      %s147 = scalar_lea.vmem %s0, %s146
      %p148 = pneg %p35
      %p149 = pneg %p32
      %p150 = pneg %p56
      %p151 = pneg %p53
      %p152 = pneg %p77
      %p153 = pneg %p74
      %p154 = pneg %p103
      %p155 = pneg %p100
      %p156 = scmp.lt.s32.totalorder %s14, 1
      %s157 = scalar_select %p156, %s14, 1
      %s158 = smul.addr %s157, 25
      %s159 = smul.addr %s158, 4
      %s160 = scalar_lea.vmem %s3, %s159
      %p161 = scmp.lt.s32.totalorder %s14, 1
      %s162 = scalar_select %p161, %s14, 1
      %s163 = smul.addr %s162, 100
      %s164 = smul.addr %s163, 4
      %s165 = scalar_lea.vmem %s0, %s164
      %p166 = scmp.lt.s32.totalorder %s14, 1
      %s167 = scalar_select %p166, %s14, 1
      %s168 = smul.addr %s167, 25
      %s169 = smul.addr %s168, 4
      %s170 = scalar_lea.vmem %s3, %s169
      %v172 = vld [vmem:[%s1] sm:$0xf]
      %v173 = vld [vmem:[%s1 + $0x4] sm:$0xf]
      %v174 = vld [vmem:[%s1 + $0x8] sm:$0xf]
      %v175 = vld [vmem:[%s1 + $0xc] sm:$0xf]
      %v176 = vld [vmem:[%s1 + $0x10] sm:$0xf]
      %v177 = vld [vmem:[%s1 + $0x14] sm:$0xf]
      %v178 = vld [vmem:[%s1 + $0x18] sm:$0xf]
      %v179 = vld [vmem:[%s1 + $0x1c] sm:$0xf]
      %v180 = vld [vmem:[%s1 + $0x20] sm:$0xf]
      %v181 = vld [vmem:[%s1 + $0x24] sm:$0xf]
      %v182 = vld [vmem:[%s1 + $0x28] sm:$0xf]
      %v183 = vld [vmem:[%s1 + $0x2c] sm:$0xf]
      %v184 = vld [vmem:[%s1 + $0x30] sm:$0xf]
      %v185 = vld [vmem:[%s1 + $0x34] sm:$0xf]
      %v186 = vld [vmem:[%s1 + $0x38] sm:$0xf]
      %v187 = vld [vmem:[%s1 + $0x3c] sm:$0xf]
      %v188 = vld [vmem:[%s2] sm:$0x1]
      %v189 = vld [vmem:[%s165] sm:$0xf]
      %v190 = vld [vmem:[%s165 + $0x4] sm:$0xf]
      %v191 = vld [vmem:[%s165 + $0x8] sm:$0xf]
      %v192 = vld [vmem:[%s165 + $0xc] sm:$0xf]
      %v193 = vld [vmem:[%s165 + $0x10] sm:$0xf]
      %v194 = vld [vmem:[%s165 + $0x14] sm:$0xf]
      %v195 = vld [vmem:[%s165 + $0x18] sm:$0xf]
      %v196 = vld [vmem:[%s165 + $0x1c] sm:$0xf]
      %v197 = vld [vmem:[%s165 + $0x20] sm:$0xf]
      %v198 = vld [vmem:[%s165 + $0x24] sm:$0xf]
      %v199 = vld [vmem:[%s165 + $0x28] sm:$0xf]
      %v200 = vld [vmem:[%s165 + $0x2c] sm:$0xf]
      %v201 = vld [vmem:[%s165 + $0x30] sm:$0xf]
      %v202 = vld [vmem:[%s165 + $0x34] sm:$0xf]
      %v203 = vld [vmem:[%s165 + $0x38] sm:$0xf]
      %v204 = vld [vmem:[%s165 + $0x3c] sm:$0xf]
      %v205 = vld [vmem:[%s165 + $0x40] sm:$0xf]
      %v206 = vld [vmem:[%s165 + $0x44] sm:$0xf]
      %v207 = vld [vmem:[%s165 + $0x48] sm:$0xf]
      %v208 = vld [vmem:[%s165 + $0x4c] sm:$0xf]
      %v209 = vld [vmem:[%s165 + $0x50] sm:$0xf]
      %v210 = vld [vmem:[%s165 + $0x54] sm:$0xf]
      %v211 = vld [vmem:[%s165 + $0x58] sm:$0xf]
      %v212 = vld [vmem:[%s165 + $0x5c] sm:$0xf]
      %v213 = vld [vmem:[%s165 + $0x60] sm:$0x3]
      %v215 = vlaneseq
      %v216 = vshrl.u32 %v215, 7
      %v217 = vsub.s32 0, %v216
      %v218 = vrot.slane %v188, %v217
      %v245 = vunpack.c.l.b16 %v189
      %v246 = vunpack.c.l.b16 %v190
      %v247 = vunpack.c.l.b16 %v191
      %v248 = vunpack.c.l.b16 %v192
      %v249 = vunpack.c.l.b16 %v193
      %v250 = vunpack.c.l.b16 %v194
      %v251 = vunpack.c.l.b16 %v195
      %v252 = vunpack.c.l.b16 %v196
      %v253 = vunpack.c.l.b16 %v197
      %v254 = vunpack.c.l.b16 %v198
      %v255 = vunpack.c.l.b16 %v199
      %v256 = vunpack.c.l.b16 %v200
      %v257 = vunpack.c.l.b16 %v201
      %v258 = vunpack.c.l.b16 %v202
      %v259 = vunpack.c.l.b16 %v203
      %v260 = vunpack.c.l.b16 %v204
      %v261 = vunpack.c.l.b16 %v205
      %v262 = vunpack.c.l.b16 %v206
      %v263 = vunpack.c.l.b16 %v207
      %v264 = vunpack.c.l.b16 %v208
      %v265 = vunpack.c.l.b16 %v209
      %v266 = vunpack.c.l.b16 %v210
      %v267 = vunpack.c.l.b16 %v211
      %v268 = vunpack.c.l.b16 %v212
      %v269 = vunpack.c.l.b16 %v213
      %v270 = vpack.c.b16 %v246, %v245
      %v271 = vpack.c.b16 %v248, %v247
      %v272 = vpack.c.b16 %v250, %v249
      %v273 = vpack.c.b16 %v252, %v251
      %v274 = vpack.c.b16 %v254, %v253
      %v275 = vpack.c.b16 %v256, %v255
      %v276 = vpack.c.b16 %v258, %v257
      %v277 = vpack.c.b16 %v260, %v259
      %v278 = vpack.c.b16 %v262, %v261
      %v279 = vpack.c.b16 %v264, %v263
      %v280 = vpack.c.b16 %v266, %v265
      %v281 = vpack.c.b16 %v268, %v267
      %v282 = vpack.c.b16 %v269, %v269
      %v312 = vunpack.c.l.b16 %v172
      %v313 = vunpack.c.l.b16 %v173
      %v314 = vunpack.c.l.b16 %v174
      %v315 = vunpack.c.l.b16 %v175
      %v316 = vunpack.c.l.b16 %v176
      %v317 = vunpack.c.l.b16 %v177
      %v318 = vunpack.c.l.b16 %v178
      %v319 = vunpack.c.l.b16 %v179
      %v320 = vunpack.c.l.b16 %v180
      %v321 = vunpack.c.l.b16 %v181
      %v322 = vunpack.c.l.b16 %v182
      %v323 = vunpack.c.l.b16 %v183
      %v324 = vunpack.c.l.b16 %v184
      %v325 = vunpack.c.l.b16 %v185
      %v326 = vunpack.c.l.b16 %v186
      %v327 = vunpack.c.l.b16 %v187
      %v328 = vpack.c.b16 %v313, %v312
      %v329 = vpack.c.b16 %v315, %v314
      %v330 = vpack.c.b16 %v317, %v316
      %v331 = vpack.c.b16 %v319, %v318
      %v332 = vpack.c.b16 %v321, %v320
      %v333 = vpack.c.b16 %v323, %v322
      %v334 = vpack.c.b16 %v325, %v324
      %v335 = vpack.c.b16 %v327, %v326
      %344 = vmatprep.subr.bf16.mxu0 0
      %345 = vmatpush1.bf16.msra.mxu0 %v328
      %346 = vmatprep.subr.bf16.mxu0 0
      %347 = vmatpush1.bf16.msra.mxu0 %v329
      %348 = vmatprep.subr.bf16.mxu0 0
      %349 = vmatpush1.bf16.msra.mxu0 %v330
      %350 = vmatprep.subr.bf16.mxu0 0
      %351 = vmatpush1.bf16.msra.mxu0 %v331
      %352 = vmatprep.subr.bf16.mxu0 0
      %353 = vmatpush1.bf16.msra.mxu0 %v332
      %354 = vmatprep.subr.bf16.mxu0 0
      %355 = vmatpush1.bf16.msra.mxu0 %v333
      %356 = vmatprep.subr.bf16.mxu0 0
      %357 = vmatpush1.bf16.msra.mxu0 %v334
      %358 = vmatprep.subr.bf16.mxu0 0
      %359 = vmatpush1.bf16.msra.mxu0 %v335
      %360 = vmatprep.subr.bf16.mxu0 0
      %361 = vmatpush1.bf16.msra.mxu0 0
      %362 = vmatprep.subr.bf16.mxu0 0
      %363 = vmatpush1.bf16.msra.mxu0 0
      %364 = vmatprep.subr.bf16.mxu0 0
      %365 = vmatpush1.bf16.msra.mxu0 0
      %366 = vmatprep.subr.bf16.mxu0 0
      %367 = vmatpush1.bf16.msra.mxu0 0
      %368 = vmatprep.subr.bf16.mxu0 0
      %369 = vmatpush1.bf16.msra.mxu0 0
      %370 = vmatprep.subr.bf16.mxu0 0
      %371 = vmatpush1.bf16.msra.mxu0 0
      %372 = vmatprep.subr.bf16.mxu0 0
      %373 = vmatpush1.bf16.msra.mxu0 0
      %374 = vmatprep.subr.bf16.mxu0 0
      %375 = vmatpush1.bf16.msra.mxu0 0
      %376 = vmatprep.mubr.bf16.mxu0 0
      %377 = vmatmul.mubr.bf16.gmra.mrb[0].mxu0 %v270
      %v378 = vpop.f32.mrb[0].mxu0
      %v379 = vadd.f32 %v218, %v378
      %v380 = vpop.f32.mrb[0].mxu0
      %v381 = vpop.f32.mrb[0].mxu0
      %v382 = vadd.f32 %v218, %v381
      %v383 = vpop.f32.mrb[0].mxu0
      %384 = vmatprep.mubr.bf16.mxu0 0
      %385 = vmatmul.mubr.bf16.gmra.mrb[0].mxu0 %v271
      %v386 = vpop.f32.mrb[0].mxu0
      %v387 = vadd.f32 %v218, %v386
      %v388 = vpop.f32.mrb[0].mxu0
      %v389 = vpop.f32.mrb[0].mxu0
      %v390 = vadd.f32 %v218, %v389
      %v391 = vpop.f32.mrb[0].mxu0
      %392 = vmatprep.mubr.bf16.mxu0 0
      %393 = vmatmul.mubr.bf16.gmra.mrb[0].mxu0 %v272
      %v394 = vpop.f32.mrb[0].mxu0
      %v395 = vadd.f32 %v218, %v394
      %v396 = vpop.f32.mrb[0].mxu0
      %v397 = vpop.f32.mrb[0].mxu0
      %v398 = vadd.f32 %v218, %v397
      %v399 = vpop.f32.mrb[0].mxu0
      %400 = vmatprep.mubr.bf16.mxu0 0
      %401 = vmatmul.mubr.bf16.gmra.mrb[0].mxu0 %v273
      %v402 = vpop.f32.mrb[0].mxu0
      %v403 = vadd.f32 %v218, %v402
      %v404 = vpop.f32.mrb[0].mxu0
      %v405 = vpop.f32.mrb[0].mxu0
      %v406 = vadd.f32 %v218, %v405
      %v407 = vpop.f32.mrb[0].mxu0
      %408 = vmatprep.mubr.bf16.mxu0 0
      %409 = vmatmul.mubr.bf16.gmra.mrb[0].mxu0 %v274
      %v410 = vpop.f32.mrb[0].mxu0
      %v411 = vadd.f32 %v218, %v410
      %v412 = vpop.f32.mrb[0].mxu0
      %v413 = vpop.f32.mrb[0].mxu0
      %v414 = vadd.f32 %v218, %v413
      %v415 = vpop.f32.mrb[0].mxu0
      %416 = vmatprep.mubr.bf16.mxu0 0
      %417 = vmatmul.mubr.bf16.gmra.mrb[0].mxu0 %v275
      %v418 = vpop.f32.mrb[0].mxu0
      %v419 = vadd.f32 %v218, %v418
      %v420 = vpop.f32.mrb[0].mxu0
      %v421 = vpop.f32.mrb[0].mxu0
      %v422 = vadd.f32 %v218, %v421
      %v423 = vpop.f32.mrb[0].mxu0
      %424 = vmatprep.mubr.bf16.mxu0 0
      %425 = vmatmul.mubr.bf16.gmra.mrb[0].mxu0 %v276
      %v426 = vpop.f32.mrb[0].mxu0
      %v427 = vadd.f32 %v218, %v426
      %v428 = vpop.f32.mrb[0].mxu0
      %v429 = vpop.f32.mrb[0].mxu0
      %v430 = vadd.f32 %v218, %v429
      %v431 = vpop.f32.mrb[0].mxu0
      %432 = vmatprep.mubr.bf16.mxu0 0
      %433 = vmatmul.mubr.bf16.gmra.mrb[0].mxu0 %v277
      %v434 = vpop.f32.mrb[0].mxu0
      %v435 = vadd.f32 %v218, %v434
      %v436 = vpop.f32.mrb[0].mxu0
      %v437 = vpop.f32.mrb[0].mxu0
      %v438 = vadd.f32 %v218, %v437
      %v439 = vpop.f32.mrb[0].mxu0
      %440 = vmatprep.mubr.bf16.mxu0 0
      %441 = vmatmul.mubr.bf16.gmra.mrb[0].mxu0 %v278
      %v442 = vpop.f32.mrb[0].mxu0
      %v443 = vadd.f32 %v218, %v442
      %v444 = vpop.f32.mrb[0].mxu0
      %v445 = vpop.f32.mrb[0].mxu0
      %v446 = vadd.f32 %v218, %v445
      %v447 = vpop.f32.mrb[0].mxu0
      %448 = vmatprep.mubr.bf16.mxu0 0
      %449 = vmatmul.mubr.bf16.gmra.mrb[0].mxu0 %v279
      %v450 = vpop.f32.mrb[0].mxu0
      %v451 = vadd.f32 %v218, %v450
      %v452 = vpop.f32.mrb[0].mxu0
      %v453 = vpop.f32.mrb[0].mxu0
      %v454 = vadd.f32 %v218, %v453
      %v455 = vpop.f32.mrb[0].mxu0
      %456 = vmatprep.mubr.bf16.mxu0 0
      %457 = vmatmul.mubr.bf16.gmra.mrb[0].mxu0 %v280
      %v458 = vpop.f32.mrb[0].mxu0
      %v459 = vadd.f32 %v218, %v458
      %v460 = vpop.f32.mrb[0].mxu0
      %v461 = vpop.f32.mrb[0].mxu0
      %v462 = vadd.f32 %v218, %v461
      %v463 = vpop.f32.mrb[0].mxu0
      %464 = vmatprep.mubr.bf16.mxu0 0
      %465 = vmatmul.mubr.bf16.gmra.mrb[0].mxu0 %v281
      %v466 = vpop.f32.mrb[0].mxu0
      %v467 = vadd.f32 %v218, %v466
      %v468 = vpop.f32.mrb[0].mxu0
      %v469 = vpop.f32.mrb[0].mxu0
      %v470 = vadd.f32 %v218, %v469
      %v471 = vpop.f32.mrb[0].mxu0
      %472 = vmatprep.mubr.bf16.mxu0 0
      %473 = vmatmul.mubr.bf16.gmra.mrb[0].mxu0 %v282
      %v474 = vpop.f32.mrb[0].mxu0
      %v475 = vadd.f32 %v218, %v474
      %v476 = vpop.f32.mrb[0].mxu0
      %v477 = vpop.f32.mrb[0].mxu0
      %v478 = vpop.f32.mrb[0].mxu0
      %479 = vdwg.mxu0
      %v480 = vmax.f32 %v379, 0.0
      %v481 = vmax.f32 %v382, 0.0
      %v482 = vmax.f32 %v387, 0.0
      %v483 = vmax.f32 %v390, 0.0
      %v484 = vmax.f32 %v395, 0.0
      %v485 = vmax.f32 %v398, 0.0
      %v486 = vmax.f32 %v403, 0.0
      %v487 = vmax.f32 %v406, 0.0
      %v488 = vmax.f32 %v411, 0.0
      %v489 = vmax.f32 %v414, 0.0
      %v490 = vmax.f32 %v419, 0.0
      %v491 = vmax.f32 %v422, 0.0
      %v492 = vmax.f32 %v427, 0.0
      %v493 = vmax.f32 %v430, 0.0
      %v494 = vmax.f32 %v435, 0.0
      %v495 = vmax.f32 %v438, 0.0
      %v496 = vmax.f32 %v443, 0.0
      %v497 = vmax.f32 %v446, 0.0
      %v498 = vmax.f32 %v451, 0.0
      %v499 = vmax.f32 %v454, 0.0
      %v500 = vmax.f32 %v459, 0.0
      %v501 = vmax.f32 %v462, 0.0
      %v502 = vmax.f32 %v467, 0.0
      %v503 = vmax.f32 %v470, 0.0
      %v504 = vmax.f32 %v475, 0.0
      %s505 = scalar_lea.vmem %s165, 100
      %v506 = vld [vmem:[%s505] sm:$0xf]
      %v507 = vld [vmem:[%s505 + $0x4] sm:$0xf]
      %v508 = vld [vmem:[%s505 + $0x8] sm:$0xf]
      %v509 = vld [vmem:[%s505 + $0xc] sm:$0xf]
      %v510 = vld [vmem:[%s505 + $0x10] sm:$0xf]
      %v511 = vld [vmem:[%s505 + $0x14] sm:$0xf]
      %v512 = vld [vmem:[%s505 + $0x18] sm:$0xf]
      %v513 = vld [vmem:[%s505 + $0x1c] sm:$0xf]
      %v514 = vld [vmem:[%s505 + $0x20] sm:$0xf]
      %v515 = vld [vmem:[%s505 + $0x24] sm:$0xf]
      %v516 = vld [vmem:[%s505 + $0x28] sm:$0xf]
      %v517 = vld [vmem:[%s505 + $0x2c] sm:$0xf]
      %v518 = vld [vmem:[%s505 + $0x30] sm:$0xf]
      %v519 = vld [vmem:[%s505 + $0x34] sm:$0xf]
      %v520 = vld [vmem:[%s505 + $0x38] sm:$0xf]
      %v521 = vld [vmem:[%s505 + $0x3c] sm:$0xf]
      %v522 = vld [vmem:[%s505 + $0x40] sm:$0xf]
      %v523 = vld [vmem:[%s505 + $0x44] sm:$0xf]
      %v524 = vld [vmem:[%s505 + $0x48] sm:$0xf]
      %v525 = vld [vmem:[%s505 + $0x4c] sm:$0xf]
      %v526 = vld [vmem:[%s505 + $0x50] sm:$0xf]
      %v527 = vld [vmem:[%s505 + $0x54] sm:$0xf]
      %v528 = vld [vmem:[%s505 + $0x58] sm:$0xf]
      %v529 = vld [vmem:[%s505 + $0x5c] sm:$0xf]
      %v530 = vld [vmem:[%s505 + $0x60] sm:$0x3]
      %v556 = vunpack.c.l.b16 %v506
      %v557 = vunpack.c.l.b16 %v507
      %v558 = vunpack.c.l.b16 %v508
      %v559 = vunpack.c.l.b16 %v509
      %v560 = vunpack.c.l.b16 %v510
      %v561 = vunpack.c.l.b16 %v511
      %v562 = vunpack.c.l.b16 %v512
      %v563 = vunpack.c.l.b16 %v513
      %v564 = vunpack.c.l.b16 %v514
      %v565 = vunpack.c.l.b16 %v515
      %v566 = vunpack.c.l.b16 %v516
      %v567 = vunpack.c.l.b16 %v517
      %v568 = vunpack.c.l.b16 %v518
      %v569 = vunpack.c.l.b16 %v519
      %v570 = vunpack.c.l.b16 %v520
      %v571 = vunpack.c.l.b16 %v521
      %v572 = vunpack.c.l.b16 %v522
      %v573 = vunpack.c.l.b16 %v523
      %v574 = vunpack.c.l.b16 %v524
      %v575 = vunpack.c.l.b16 %v525
      %v576 = vunpack.c.l.b16 %v526
      %v577 = vunpack.c.l.b16 %v527
      %v578 = vunpack.c.l.b16 %v528
      %v579 = vunpack.c.l.b16 %v529
      %v580 = vunpack.c.l.b16 %v530
      %v581 = vpack.c.b16 %v557, %v556
      %v582 = vpack.c.b16 %v559, %v558
      %v583 = vpack.c.b16 %v561, %v560
      %v584 = vpack.c.b16 %v563, %v562
      %v585 = vpack.c.b16 %v565, %v564
      %v586 = vpack.c.b16 %v567, %v566
      %v587 = vpack.c.b16 %v569, %v568
      %v588 = vpack.c.b16 %v571, %v570
      %v589 = vpack.c.b16 %v573, %v572
      %v590 = vpack.c.b16 %v575, %v574
      %v591 = vpack.c.b16 %v577, %v576
      %v592 = vpack.c.b16 %v579, %v578
      %v593 = vpack.c.b16 %v580, %v580
      %607 = vmatprep.subr.bf16.mxu0 0
      %608 = vmatpush1.bf16.msra.mxu0 %v328
      %609 = vmatprep.subr.bf16.mxu0 0
      %610 = vmatpush1.bf16.msra.mxu0 %v329
      %611 = vmatprep.subr.bf16.mxu0 0
      %612 = vmatpush1.bf16.msra.mxu0 %v330
      %613 = vmatprep.subr.bf16.mxu0 0
      %614 = vmatpush1.bf16.msra.mxu0 %v331
      %615 = vmatprep.subr.bf16.mxu0 0
      %616 = vmatpush1.bf16.msra.mxu0 %v332
      %617 = vmatprep.subr.bf16.mxu0 0
      %618 = vmatpush1.bf16.msra.mxu0 %v333
      %619 = vmatprep.subr.bf16.mxu0 0
      %620 = vmatpush1.bf16.msra.mxu0 %v334
      %621 = vmatprep.subr.bf16.mxu0 0
      %622 = vmatpush1.bf16.msra.mxu0 %v335
      %623 = vmatprep.subr.bf16.mxu0 0
      %624 = vmatpush1.bf16.msra.mxu0 0
      %625 = vmatprep.subr.bf16.mxu0 0
      %626 = vmatpush1.bf16.msra.mxu0 0
      %627 = vmatprep.subr.bf16.mxu0 0
      %628 = vmatpush1.bf16.msra.mxu0 0
      %629 = vmatprep.subr.bf16.mxu0 0
      %630 = vmatpush1.bf16.msra.mxu0 0
      %631 = vmatprep.subr.bf16.mxu0 0
      %632 = vmatpush1.bf16.msra.mxu0 0
      %633 = vmatprep.subr.bf16.mxu0 0
      %634 = vmatpush1.bf16.msra.mxu0 0
      %635 = vmatprep.subr.bf16.mxu0 0
      %636 = vmatpush1.bf16.msra.mxu0 0
      %637 = vmatprep.subr.bf16.mxu0 0
      %638 = vmatpush1.bf16.msra.mxu0 0
      %639 = vmatprep.mubr.bf16.mxu0 0
      %640 = vmatmul.mubr.bf16.gmra.mrb[0].mxu0 %v581
      %v641 = vpop.f32.mrb[0].mxu0
      %v642 = vadd.f32 %v218, %v641
      %v643 = vpop.f32.mrb[0].mxu0
      %v644 = vpop.f32.mrb[0].mxu0
      %v645 = vadd.f32 %v218, %v644
      %v646 = vpop.f32.mrb[0].mxu0
      %647 = vmatprep.mubr.bf16.mxu0 0
      %648 = vmatmul.mubr.bf16.gmra.mrb[0].mxu0 %v582
      %v649 = vpop.f32.mrb[0].mxu0
      %v650 = vadd.f32 %v218, %v649
      %v651 = vpop.f32.mrb[0].mxu0
      %v652 = vpop.f32.mrb[0].mxu0
      %v653 = vadd.f32 %v218, %v652
      %v654 = vpop.f32.mrb[0].mxu0
      %655 = vmatprep.mubr.bf16.mxu0 0
      %656 = vmatmul.mubr.bf16.gmra.mrb[0].mxu0 %v583
      %v657 = vpop.f32.mrb[0].mxu0
      %v658 = vadd.f32 %v218, %v657
      %v659 = vpop.f32.mrb[0].mxu0
      %v660 = vpop.f32.mrb[0].mxu0
      %v661 = vadd.f32 %v218, %v660
      %v662 = vpop.f32.mrb[0].mxu0
      %663 = vmatprep.mubr.bf16.mxu0 0
      %664 = vmatmul.mubr.bf16.gmra.mrb[0].mxu0 %v584
      %v665 = vpop.f32.mrb[0].mxu0
      %v666 = vadd.f32 %v218, %v665
      %v667 = vpop.f32.mrb[0].mxu0
      %v668 = vpop.f32.mrb[0].mxu0
      %v669 = vadd.f32 %v218, %v668
      %v670 = vpop.f32.mrb[0].mxu0
      %671 = vmatprep.mubr.bf16.mxu0 0
      %672 = vmatmul.mubr.bf16.gmra.mrb[0].mxu0 %v585
      %v673 = vpop.f32.mrb[0].mxu0
      %v674 = vadd.f32 %v218, %v673
      %v675 = vpop.f32.mrb[0].mxu0
      %v676 = vpop.f32.mrb[0].mxu0
      %v677 = vadd.f32 %v218, %v676
      %v678 = vpop.f32.mrb[0].mxu0
      %679 = vmatprep.mubr.bf16.mxu0 0
      %680 = vmatmul.mubr.bf16.gmra.mrb[0].mxu0 %v586
      %v681 = vpop.f32.mrb[0].mxu0
      %v682 = vadd.f32 %v218, %v681
      %v683 = vpop.f32.mrb[0].mxu0
      %v684 = vpop.f32.mrb[0].mxu0
      %v685 = vadd.f32 %v218, %v684
      %v686 = vpop.f32.mrb[0].mxu0
      %687 = vmatprep.mubr.bf16.mxu0 0
      %688 = vmatmul.mubr.bf16.gmra.mrb[0].mxu0 %v587
      %v689 = vpop.f32.mrb[0].mxu0
      %v690 = vadd.f32 %v218, %v689
      %v691 = vpop.f32.mrb[0].mxu0
      %v692 = vpop.f32.mrb[0].mxu0
      %v693 = vadd.f32 %v218, %v692
      %v694 = vpop.f32.mrb[0].mxu0
      %695 = vmatprep.mubr.bf16.mxu0 0
      %696 = vmatmul.mubr.bf16.gmra.mrb[0].mxu0 %v588
      %v697 = vpop.f32.mrb[0].mxu0
      %v698 = vadd.f32 %v218, %v697
      %v699 = vpop.f32.mrb[0].mxu0
      %v700 = vpop.f32.mrb[0].mxu0
      %v701 = vadd.f32 %v218, %v700
      %v702 = vpop.f32.mrb[0].mxu0
      %703 = vmatprep.mubr.bf16.mxu0 0
      %704 = vmatmul.mubr.bf16.gmra.mrb[0].mxu0 %v589
      %v705 = vpop.f32.mrb[0].mxu0
      %v706 = vadd.f32 %v218, %v705
      %v707 = vpop.f32.mrb[0].mxu0
      %v708 = vpop.f32.mrb[0].mxu0
      %v709 = vadd.f32 %v218, %v708
      %v710 = vpop.f32.mrb[0].mxu0
      %711 = vmatprep.mubr.bf16.mxu0 0
      %712 = vmatmul.mubr.bf16.gmra.mrb[0].mxu0 %v590
      %v713 = vpop.f32.mrb[0].mxu0
      %v714 = vadd.f32 %v218, %v713
      %v715 = vpop.f32.mrb[0].mxu0
      %v716 = vpop.f32.mrb[0].mxu0
      %v717 = vadd.f32 %v218, %v716
      %v718 = vpop.f32.mrb[0].mxu0
      %719 = vmatprep.mubr.bf16.mxu0 0
      %720 = vmatmul.mubr.bf16.gmra.mrb[0].mxu0 %v591
      %v721 = vpop.f32.mrb[0].mxu0
      %v722 = vadd.f32 %v218, %v721
      %v723 = vpop.f32.mrb[0].mxu0
      %v724 = vpop.f32.mrb[0].mxu0
      %v725 = vadd.f32 %v218, %v724
      %v726 = vpop.f32.mrb[0].mxu0
      %727 = vmatprep.mubr.bf16.mxu0 0
      %728 = vmatmul.mubr.bf16.gmra.mrb[0].mxu0 %v592
      %v729 = vpop.f32.mrb[0].mxu0
      %v730 = vadd.f32 %v218, %v729
      %v731 = vpop.f32.mrb[0].mxu0
      %v732 = vpop.f32.mrb[0].mxu0
      %v733 = vadd.f32 %v218, %v732
      %v734 = vpop.f32.mrb[0].mxu0
      %735 = vmatprep.mubr.bf16.mxu0 0
      %736 = vmatmul.mubr.bf16.gmra.mrb[0].mxu0 %v593
      %v737 = vpop.f32.mrb[0].mxu0
      %v738 = vadd.f32 %v218, %v737
      %v739 = vpop.f32.mrb[0].mxu0
      %v740 = vpop.f32.mrb[0].mxu0
      %v741 = vpop.f32.mrb[0].mxu0
      %742 = vdwg.mxu0
      %v743 = vmax.f32 %v642, 0.0
      %v744 = vmax.f32 %v645, 0.0
      %v745 = vmax.f32 %v650, 0.0
      %v746 = vmax.f32 %v653, 0.0
      %v747 = vmax.f32 %v658, 0.0
      %v748 = vmax.f32 %v661, 0.0
      %v749 = vmax.f32 %v666, 0.0
      %v750 = vmax.f32 %v669, 0.0
      %v751 = vmax.f32 %v674, 0.0
      %v752 = vmax.f32 %v677, 0.0
      %v753 = vmax.f32 %v682, 0.0
      %v754 = vmax.f32 %v685, 0.0
      %v755 = vmax.f32 %v690, 0.0
      %v756 = vmax.f32 %v693, 0.0
      %v757 = vmax.f32 %v698, 0.0
      %v758 = vmax.f32 %v701, 0.0
      %v759 = vmax.f32 %v706, 0.0
      %v760 = vmax.f32 %v709, 0.0
      %v761 = vmax.f32 %v714, 0.0
      %v762 = vmax.f32 %v717, 0.0
      %v763 = vmax.f32 %v722, 0.0
      %v764 = vmax.f32 %v725, 0.0
      %v765 = vmax.f32 %v730, 0.0
      %v766 = vmax.f32 %v733, 0.0
      %v767 = vmax.f32 %v738, 0.0
      %v768 = vmax.f32 %v480, %v743
      %v769 = vmax.f32 %v481, %v744
      %v770 = vmax.f32 %v482, %v745
      %v771 = vmax.f32 %v483, %v746
      %v772 = vmax.f32 %v484, %v747
      %v773 = vmax.f32 %v485, %v748
      %v774 = vmax.f32 %v486, %v749
      %v775 = vmax.f32 %v487, %v750
      %v776 = vmax.f32 %v488, %v751
      %v777 = vmax.f32 %v489, %v752
      %v778 = vmax.f32 %v490, %v753
      %v779 = vmax.f32 %v491, %v754
      %v780 = vmax.f32 %v492, %v755
      %v781 = vmax.f32 %v493, %v756
      %v782 = vmax.f32 %v494, %v757
      %v783 = vmax.f32 %v495, %v758
      %v784 = vmax.f32 %v496, %v759
      %v785 = vmax.f32 %v497, %v760
      %v786 = vmax.f32 %v498, %v761
      %v787 = vmax.f32 %v499, %v762
      %v788 = vmax.f32 %v500, %v763
      %v789 = vmax.f32 %v501, %v764
      %v790 = vmax.f32 %v502, %v765
      %v791 = vmax.f32 %v503, %v766
      %v792 = vmax.f32 %v504, %v767
      %s793 = scalar_lea.vmem %s165, 200
      %v794 = vld [vmem:[%s793] sm:$0xf]
      %v795 = vld [vmem:[%s793 + $0x4] sm:$0xf]
      %v796 = vld [vmem:[%s793 + $0x8] sm:$0xf]
      %v797 = vld [vmem:[%s793 + $0xc] sm:$0xf]
      %v798 = vld [vmem:[%s793 + $0x10] sm:$0xf]
      %v799 = vld [vmem:[%s793 + $0x14] sm:$0xf]
      %v800 = vld [vmem:[%s793 + $0x18] sm:$0xf]
      %v801 = vld [vmem:[%s793 + $0x1c] sm:$0xf]
      %v802 = vld [vmem:[%s793 + $0x20] sm:$0xf]
      %v803 = vld [vmem:[%s793 + $0x24] sm:$0xf]
      %v804 = vld [vmem:[%s793 + $0x28] sm:$0xf]
      %v805 = vld [vmem:[%s793 + $0x2c] sm:$0xf]
      %v806 = vld [vmem:[%s793 + $0x30] sm:$0xf]
      %v807 = vld [vmem:[%s793 + $0x34] sm:$0xf]
      %v808 = vld [vmem:[%s793 + $0x38] sm:$0xf]
      %v809 = vld [vmem:[%s793 + $0x3c] sm:$0xf]
      %v810 = vld [vmem:[%s793 + $0x40] sm:$0xf]
      %v811 = vld [vmem:[%s793 + $0x44] sm:$0xf]
      %v812 = vld [vmem:[%s793 + $0x48] sm:$0xf]
      %v813 = vld [vmem:[%s793 + $0x4c] sm:$0xf]
      %v814 = vld [vmem:[%s793 + $0x50] sm:$0xf]
      %v815 = vld [vmem:[%s793 + $0x54] sm:$0xf]
      %v816 = vld [vmem:[%s793 + $0x58] sm:$0xf]
      %v817 = vld [vmem:[%s793 + $0x5c] sm:$0xf]
      %v818 = vld [vmem:[%s793 + $0x60] sm:$0x3]
      %v844 = vunpack.c.l.b16 %v794
      %v845 = vunpack.c.l.b16 %v795
      %v846 = vunpack.c.l.b16 %v796
      %v847 = vunpack.c.l.b16 %v797
      %v848 = vunpack.c.l.b16 %v798
      %v849 = vunpack.c.l.b16 %v799
      %v850 = vunpack.c.l.b16 %v800
      %v851 = vunpack.c.l.b16 %v801
      %v852 = vunpack.c.l.b16 %v802
      %v853 = vunpack.c.l.b16 %v803
      %v854 = vunpack.c.l.b16 %v804
      %v855 = vunpack.c.l.b16 %v805
      %v856 = vunpack.c.l.b16 %v806
      %v857 = vunpack.c.l.b16 %v807
      %v858 = vunpack.c.l.b16 %v808
      %v859 = vunpack.c.l.b16 %v809
      %v860 = vunpack.c.l.b16 %v810
      %v861 = vunpack.c.l.b16 %v811
      %v862 = vunpack.c.l.b16 %v812
      %v863 = vunpack.c.l.b16 %v813
      %v864 = vunpack.c.l.b16 %v814
      %v865 = vunpack.c.l.b16 %v815
      %v866 = vunpack.c.l.b16 %v816
      %v867 = vunpack.c.l.b16 %v817
      %v868 = vunpack.c.l.b16 %v818
      %v869 = vpack.c.b16 %v845, %v844
      %v870 = vpack.c.b16 %v847, %v846
      %v871 = vpack.c.b16 %v849, %v848
      %v872 = vpack.c.b16 %v851, %v850
      %v873 = vpack.c.b16 %v853, %v852
      %v874 = vpack.c.b16 %v855, %v854
      %v875 = vpack.c.b16 %v857, %v856
      %v876 = vpack.c.b16 %v859, %v858
      %v877 = vpack.c.b16 %v861, %v860
      %v878 = vpack.c.b16 %v863, %v862
      %v879 = vpack.c.b16 %v865, %v864
      %v880 = vpack.c.b16 %v867, %v866
      %v881 = vpack.c.b16 %v868, %v868
      %895 = vmatprep.subr.bf16.mxu0 0
      %896 = vmatpush1.bf16.msra.mxu0 %v328
      %897 = vmatprep.subr.bf16.mxu0 0
      %898 = vmatpush1.bf16.msra.mxu0 %v329
      %899 = vmatprep.subr.bf16.mxu0 0
      %900 = vmatpush1.bf16.msra.mxu0 %v330
      %901 = vmatprep.subr.bf16.mxu0 0
      %902 = vmatpush1.bf16.msra.mxu0 %v331
      %903 = vmatprep.subr.bf16.mxu0 0
      %904 = vmatpush1.bf16.msra.mxu0 %v332
      %905 = vmatprep.subr.bf16.mxu0 0
      %906 = vmatpush1.bf16.msra.mxu0 %v333
      %907 = vmatprep.subr.bf16.mxu0 0
      %908 = vmatpush1.bf16.msra.mxu0 %v334
      %909 = vmatprep.subr.bf16.mxu0 0
      %910 = vmatpush1.bf16.msra.mxu0 %v335
      %911 = vmatprep.subr.bf16.mxu0 0
      %912 = vmatpush1.bf16.msra.mxu0 0
      %913 = vmatprep.subr.bf16.mxu0 0
      %914 = vmatpush1.bf16.msra.mxu0 0
      %915 = vmatprep.subr.bf16.mxu0 0
      %916 = vmatpush1.bf16.msra.mxu0 0
      %917 = vmatprep.subr.bf16.mxu0 0
      %918 = vmatpush1.bf16.msra.mxu0 0
      %919 = vmatprep.subr.bf16.mxu0 0
      %920 = vmatpush1.bf16.msra.mxu0 0
      %921 = vmatprep.subr.bf16.mxu0 0
      %922 = vmatpush1.bf16.msra.mxu0 0
      %923 = vmatprep.subr.bf16.mxu0 0
      %924 = vmatpush1.bf16.msra.mxu0 0
      %925 = vmatprep.subr.bf16.mxu0 0
      %926 = vmatpush1.bf16.msra.mxu0 0
      %927 = vmatprep.mubr.bf16.mxu0 0
      %928 = vmatmul.mubr.bf16.gmra.mrb[0].mxu0 %v869
      %v929 = vpop.f32.mrb[0].mxu0
      %v930 = vadd.f32 %v218, %v929
      %v931 = vpop.f32.mrb[0].mxu0
      %v932 = vpop.f32.mrb[0].mxu0
      %v933 = vadd.f32 %v218, %v932
      %v934 = vpop.f32.mrb[0].mxu0
      %935 = vmatprep.mubr.bf16.mxu0 0
      %936 = vmatmul.mubr.bf16.gmra.mrb[0].mxu0 %v870
      %v937 = vpop.f32.mrb[0].mxu0
      %v938 = vadd.f32 %v218, %v937
      %v939 = vpop.f32.mrb[0].mxu0
      %v940 = vpop.f32.mrb[0].mxu0
      %v941 = vadd.f32 %v218, %v940
      %v942 = vpop.f32.mrb[0].mxu0
      %943 = vmatprep.mubr.bf16.mxu0 0
      %944 = vmatmul.mubr.bf16.gmra.mrb[0].mxu0 %v871
      %v945 = vpop.f32.mrb[0].mxu0
      %v946 = vadd.f32 %v218, %v945
      %v947 = vpop.f32.mrb[0].mxu0
      %v948 = vpop.f32.mrb[0].mxu0
      %v949 = vadd.f32 %v218, %v948
      %v950 = vpop.f32.mrb[0].mxu0
      %951 = vmatprep.mubr.bf16.mxu0 0
      %952 = vmatmul.mubr.bf16.gmra.mrb[0].mxu0 %v872
      %v953 = vpop.f32.mrb[0].mxu0
      %v954 = vadd.f32 %v218, %v953
      %v955 = vpop.f32.mrb[0].mxu0
      %v956 = vpop.f32.mrb[0].mxu0
      %v957 = vadd.f32 %v218, %v956
      %v958 = vpop.f32.mrb[0].mxu0
      %959 = vmatprep.mubr.bf16.mxu0 0
      %960 = vmatmul.mubr.bf16.gmra.mrb[0].mxu0 %v873
      %v961 = vpop.f32.mrb[0].mxu0
      %v962 = vadd.f32 %v218, %v961
      %v963 = vpop.f32.mrb[0].mxu0
      %v964 = vpop.f32.mrb[0].mxu0
      %v965 = vadd.f32 %v218, %v964
      %v966 = vpop.f32.mrb[0].mxu0
      %967 = vmatprep.mubr.bf16.mxu0 0
      %968 = vmatmul.mubr.bf16.gmra.mrb[0].mxu0 %v874
      %v969 = vpop.f32.mrb[0].mxu0
      %v970 = vadd.f32 %v218, %v969
      %v971 = vpop.f32.mrb[0].mxu0
      %v972 = vpop.f32.mrb[0].mxu0
      %v973 = vadd.f32 %v218, %v972
      %v974 = vpop.f32.mrb[0].mxu0
      %975 = vmatprep.mubr.bf16.mxu0 0
      %976 = vmatmul.mubr.bf16.gmra.mrb[0].mxu0 %v875
      %v977 = vpop.f32.mrb[0].mxu0
      %v978 = vadd.f32 %v218, %v977
      %v979 = vpop.f32.mrb[0].mxu0
      %v980 = vpop.f32.mrb[0].mxu0
      %v981 = vadd.f32 %v218, %v980
      %v982 = vpop.f32.mrb[0].mxu0
      %983 = vmatprep.mubr.bf16.mxu0 0
      %984 = vmatmul.mubr.bf16.gmra.mrb[0].mxu0 %v876
      %v985 = vpop.f32.mrb[0].mxu0
      %v986 = vadd.f32 %v218, %v985
      %v987 = vpop.f32.mrb[0].mxu0
      %v988 = vpop.f32.mrb[0].mxu0
      %v989 = vadd.f32 %v218, %v988
      %v990 = vpop.f32.mrb[0].mxu0
      %991 = vmatprep.mubr.bf16.mxu0 0
      %992 = vmatmul.mubr.bf16.gmra.mrb[0].mxu0 %v877
      %v993 = vpop.f32.mrb[0].mxu0
      %v994 = vadd.f32 %v218, %v993
      %v995 = vpop.f32.mrb[0].mxu0
      %v996 = vpop.f32.mrb[0].mxu0
      %v997 = vadd.f32 %v218, %v996
      %v998 = vpop.f32.mrb[0].mxu0
      %999 = vmatprep.mubr.bf16.mxu0 0
      %1000 = vmatmul.mubr.bf16.gmra.mrb[0].mxu0 %v878
      %v1001 = vpop.f32.mrb[0].mxu0
      %v1002 = vadd.f32 %v218, %v1001
      %v1003 = vpop.f32.mrb[0].mxu0
      %v1004 = vpop.f32.mrb[0].mxu0
      %v1005 = vadd.f32 %v218, %v1004
      %v1006 = vpop.f32.mrb[0].mxu0
      %1007 = vmatprep.mubr.bf16.mxu0 0
      %1008 = vmatmul.mubr.bf16.gmra.mrb[0].mxu0 %v879
      %v1009 = vpop.f32.mrb[0].mxu0
      %v1010 = vadd.f32 %v218, %v1009
      %v1011 = vpop.f32.mrb[0].mxu0
      %v1012 = vpop.f32.mrb[0].mxu0
      %v1013 = vadd.f32 %v218, %v1012
      %v1014 = vpop.f32.mrb[0].mxu0
      %1015 = vmatprep.mubr.bf16.mxu0 0
      %1016 = vmatmul.mubr.bf16.gmra.mrb[0].mxu0 %v880
      %v1017 = vpop.f32.mrb[0].mxu0
      %v1018 = vadd.f32 %v218, %v1017
      %v1019 = vpop.f32.mrb[0].mxu0
      %v1020 = vpop.f32.mrb[0].mxu0
      %v1021 = vadd.f32 %v218, %v1020
      %v1022 = vpop.f32.mrb[0].mxu0
      %1023 = vmatprep.mubr.bf16.mxu0 0
      %1024 = vmatmul.mubr.bf16.gmra.mrb[0].mxu0 %v881
      %v1025 = vpop.f32.mrb[0].mxu0
      %v1026 = vadd.f32 %v218, %v1025
      %v1027 = vpop.f32.mrb[0].mxu0
      %v1028 = vpop.f32.mrb[0].mxu0
      %v1029 = vpop.f32.mrb[0].mxu0
      %1030 = vdwg.mxu0
      %v1031 = vmax.f32 %v930, 0.0
      %v1032 = vmax.f32 %v933, 0.0
      %v1033 = vmax.f32 %v938, 0.0
      %v1034 = vmax.f32 %v941, 0.0
      %v1035 = vmax.f32 %v946, 0.0
      %v1036 = vmax.f32 %v949, 0.0
      %v1037 = vmax.f32 %v954, 0.0
      %v1038 = vmax.f32 %v957, 0.0
      %v1039 = vmax.f32 %v962, 0.0
      %v1040 = vmax.f32 %v965, 0.0
      %v1041 = vmax.f32 %v970, 0.0
      %v1042 = vmax.f32 %v973, 0.0
      %v1043 = vmax.f32 %v978, 0.0
      %v1044 = vmax.f32 %v981, 0.0
      %v1045 = vmax.f32 %v986, 0.0
      %v1046 = vmax.f32 %v989, 0.0
      %v1047 = vmax.f32 %v994, 0.0
      %v1048 = vmax.f32 %v997, 0.0
      %v1049 = vmax.f32 %v1002, 0.0
      %v1050 = vmax.f32 %v1005, 0.0
      %v1051 = vmax.f32 %v1010, 0.0
      %v1052 = vmax.f32 %v1013, 0.0
      %v1053 = vmax.f32 %v1018, 0.0
      %v1054 = vmax.f32 %v1021, 0.0
      %v1055 = vmax.f32 %v1026, 0.0
      %s1056 = scalar_lea.vmem %s165, 300
      %v1057 = vld [vmem:[%s1056] sm:$0xf]
      %v1058 = vld [vmem:[%s1056 + $0x4] sm:$0xf]
      %v1059 = vld [vmem:[%s1056 + $0x8] sm:$0xf]
      %v1060 = vld [vmem:[%s1056 + $0xc] sm:$0xf]
      %v1061 = vld [vmem:[%s1056 + $0x10] sm:$0xf]
      %v1062 = vld [vmem:[%s1056 + $0x14] sm:$0xf]
      %v1063 = vld [vmem:[%s1056 + $0x18] sm:$0xf]
      %v1064 = vld [vmem:[%s1056 + $0x1c] sm:$0xf]
      %v1065 = vld [vmem:[%s1056 + $0x20] sm:$0xf]
      %v1066 = vld [vmem:[%s1056 + $0x24] sm:$0xf]
      %v1067 = vld [vmem:[%s1056 + $0x28] sm:$0xf]
      %v1068 = vld [vmem:[%s1056 + $0x2c] sm:$0xf]
      %v1069 = vld [vmem:[%s1056 + $0x30] sm:$0xf]
      %v1070 = vld [vmem:[%s1056 + $0x34] sm:$0xf]
      %v1071 = vld [vmem:[%s1056 + $0x38] sm:$0xf]
      %v1072 = vld [vmem:[%s1056 + $0x3c] sm:$0xf]
      %v1073 = vld [vmem:[%s1056 + $0x40] sm:$0xf]
      %v1074 = vld [vmem:[%s1056 + $0x44] sm:$0xf]
      %v1075 = vld [vmem:[%s1056 + $0x48] sm:$0xf]
      %v1076 = vld [vmem:[%s1056 + $0x4c] sm:$0xf]
      %v1077 = vld [vmem:[%s1056 + $0x50] sm:$0xf]
      %v1078 = vld [vmem:[%s1056 + $0x54] sm:$0xf]
      %v1079 = vld [vmem:[%s1056 + $0x58] sm:$0xf]
      %v1080 = vld [vmem:[%s1056 + $0x5c] sm:$0xf]
      %v1081 = vld [vmem:[%s1056 + $0x60] sm:$0x3]
      %v1107 = vunpack.c.l.b16 %v1057
      %v1108 = vunpack.c.l.b16 %v1058
      %v1109 = vunpack.c.l.b16 %v1059
      %v1110 = vunpack.c.l.b16 %v1060
      %v1111 = vunpack.c.l.b16 %v1061
      %v1112 = vunpack.c.l.b16 %v1062
      %v1113 = vunpack.c.l.b16 %v1063
      %v1114 = vunpack.c.l.b16 %v1064
      %v1115 = vunpack.c.l.b16 %v1065
      %v1116 = vunpack.c.l.b16 %v1066
      %v1117 = vunpack.c.l.b16 %v1067
      %v1118 = vunpack.c.l.b16 %v1068
      %v1119 = vunpack.c.l.b16 %v1069
      %v1120 = vunpack.c.l.b16 %v1070
      %v1121 = vunpack.c.l.b16 %v1071
      %v1122 = vunpack.c.l.b16 %v1072
      %v1123 = vunpack.c.l.b16 %v1073
      %v1124 = vunpack.c.l.b16 %v1074
      %v1125 = vunpack.c.l.b16 %v1075
      %v1126 = vunpack.c.l.b16 %v1076
      %v1127 = vunpack.c.l.b16 %v1077
      %v1128 = vunpack.c.l.b16 %v1078
      %v1129 = vunpack.c.l.b16 %v1079
      %v1130 = vunpack.c.l.b16 %v1080
      %v1131 = vunpack.c.l.b16 %v1081
      %v1132 = vpack.c.b16 %v1108, %v1107
      %v1133 = vpack.c.b16 %v1110, %v1109
      %v1134 = vpack.c.b16 %v1112, %v1111
      %v1135 = vpack.c.b16 %v1114, %v1113
      %v1136 = vpack.c.b16 %v1116, %v1115
      %v1137 = vpack.c.b16 %v1118, %v1117
      %v1138 = vpack.c.b16 %v1120, %v1119
      %v1139 = vpack.c.b16 %v1122, %v1121
      %v1140 = vpack.c.b16 %v1124, %v1123
      %v1141 = vpack.c.b16 %v1126, %v1125
      %v1142 = vpack.c.b16 %v1128, %v1127
      %v1143 = vpack.c.b16 %v1130, %v1129
      %v1144 = vpack.c.b16 %v1131, %v1131
      %1158 = vmatprep.subr.bf16.mxu0 0
      %1159 = vmatpush1.bf16.msra.mxu0 %v328
      %1160 = vmatprep.subr.bf16.mxu0 0
      %1161 = vmatpush1.bf16.msra.mxu0 %v329
      %1162 = vmatprep.subr.bf16.mxu0 0
      %1163 = vmatpush1.bf16.msra.mxu0 %v330
      %1164 = vmatprep.subr.bf16.mxu0 0
      %1165 = vmatpush1.bf16.msra.mxu0 %v331
      %1166 = vmatprep.subr.bf16.mxu0 0
      %1167 = vmatpush1.bf16.msra.mxu0 %v332
      %1168 = vmatprep.subr.bf16.mxu0 0
      %1169 = vmatpush1.bf16.msra.mxu0 %v333
      %1170 = vmatprep.subr.bf16.mxu0 0
      %1171 = vmatpush1.bf16.msra.mxu0 %v334
      %1172 = vmatprep.subr.bf16.mxu0 0
      %1173 = vmatpush1.bf16.msra.mxu0 %v335
      %1174 = vmatprep.subr.bf16.mxu0 0
      %1175 = vmatpush1.bf16.msra.mxu0 0
      %1176 = vmatprep.subr.bf16.mxu0 0
      %1177 = vmatpush1.bf16.msra.mxu0 0
      %1178 = vmatprep.subr.bf16.mxu0 0
      %1179 = vmatpush1.bf16.msra.mxu0 0
      %1180 = vmatprep.subr.bf16.mxu0 0
      %1181 = vmatpush1.bf16.msra.mxu0 0
      %1182 = vmatprep.subr.bf16.mxu0 0
      %1183 = vmatpush1.bf16.msra.mxu0 0
      %1184 = vmatprep.subr.bf16.mxu0 0
      %1185 = vmatpush1.bf16.msra.mxu0 0
      %1186 = vmatprep.subr.bf16.mxu0 0
      %1187 = vmatpush1.bf16.msra.mxu0 0
      %1188 = vmatprep.subr.bf16.mxu0 0
      %1189 = vmatpush1.bf16.msra.mxu0 0
      %1190 = vmatprep.mubr.bf16.mxu0 0
      %1191 = vmatmul.mubr.bf16.gmra.mrb[0].mxu0 %v1132
      %v1192 = vpop.f32.mrb[0].mxu0
      %v1193 = vadd.f32 %v218, %v1192
      %v1194 = vpop.f32.mrb[0].mxu0
      %v1195 = vpop.f32.mrb[0].mxu0
      %v1196 = vadd.f32 %v218, %v1195
      %v1197 = vpop.f32.mrb[0].mxu0
      %1198 = vmatprep.mubr.bf16.mxu0 0
      %1199 = vmatmul.mubr.bf16.gmra.mrb[0].mxu0 %v1133
      %v1200 = vpop.f32.mrb[0].mxu0
      %v1201 = vadd.f32 %v218, %v1200
      %v1202 = vpop.f32.mrb[0].mxu0
      %v1203 = vpop.f32.mrb[0].mxu0
      %v1204 = vadd.f32 %v218, %v1203
      %v1205 = vpop.f32.mrb[0].mxu0
      %1206 = vmatprep.mubr.bf16.mxu0 0
      %1207 = vmatmul.mubr.bf16.gmra.mrb[0].mxu0 %v1134
      %v1208 = vpop.f32.mrb[0].mxu0
      %v1209 = vadd.f32 %v218, %v1208
      %v1210 = vpop.f32.mrb[0].mxu0
      %v1211 = vpop.f32.mrb[0].mxu0
      %v1212 = vadd.f32 %v218, %v1211
      %v1213 = vpop.f32.mrb[0].mxu0
      %1214 = vmatprep.mubr.bf16.mxu0 0
      %1215 = vmatmul.mubr.bf16.gmra.mrb[0].mxu0 %v1135
      %v1216 = vpop.f32.mrb[0].mxu0
      %v1217 = vadd.f32 %v218, %v1216
      %v1218 = vpop.f32.mrb[0].mxu0
      %v1219 = vpop.f32.mrb[0].mxu0
      %v1220 = vadd.f32 %v218, %v1219
      %v1221 = vpop.f32.mrb[0].mxu0
      %1222 = vmatprep.mubr.bf16.mxu0 0
      %1223 = vmatmul.mubr.bf16.gmra.mrb[0].mxu0 %v1136
      %v1224 = vpop.f32.mrb[0].mxu0
      %v1225 = vadd.f32 %v218, %v1224
      %v1226 = vpop.f32.mrb[0].mxu0
      %v1227 = vpop.f32.mrb[0].mxu0
      %v1228 = vadd.f32 %v218, %v1227
      %v1229 = vpop.f32.mrb[0].mxu0
      %1230 = vmatprep.mubr.bf16.mxu0 0
      %1231 = vmatmul.mubr.bf16.gmra.mrb[0].mxu0 %v1137
      %v1232 = vpop.f32.mrb[0].mxu0
      %v1233 = vadd.f32 %v218, %v1232
      %v1234 = vpop.f32.mrb[0].mxu0
      %v1235 = vpop.f32.mrb[0].mxu0
      %v1236 = vadd.f32 %v218, %v1235
      %v1237 = vpop.f32.mrb[0].mxu0
      %1238 = vmatprep.mubr.bf16.mxu0 0
      %1239 = vmatmul.mubr.bf16.gmra.mrb[0].mxu0 %v1138
      %v1240 = vpop.f32.mrb[0].mxu0
      %v1241 = vadd.f32 %v218, %v1240
      %v1242 = vpop.f32.mrb[0].mxu0
      %v1243 = vpop.f32.mrb[0].mxu0
      %v1244 = vadd.f32 %v218, %v1243
      %v1245 = vpop.f32.mrb[0].mxu0
      %1246 = vmatprep.mubr.bf16.mxu0 0
      %1247 = vmatmul.mubr.bf16.gmra.mrb[0].mxu0 %v1139
      %v1248 = vpop.f32.mrb[0].mxu0
      %v1249 = vadd.f32 %v218, %v1248
      %v1250 = vpop.f32.mrb[0].mxu0
      %v1251 = vpop.f32.mrb[0].mxu0
      %v1252 = vadd.f32 %v218, %v1251
      %v1253 = vpop.f32.mrb[0].mxu0
      %1254 = vmatprep.mubr.bf16.mxu0 0
      %1255 = vmatmul.mubr.bf16.gmra.mrb[0].mxu0 %v1140
      %v1256 = vpop.f32.mrb[0].mxu0
      %v1257 = vadd.f32 %v218, %v1256
      %v1258 = vpop.f32.mrb[0].mxu0
      %v1259 = vpop.f32.mrb[0].mxu0
      %v1260 = vadd.f32 %v218, %v1259
      %v1261 = vpop.f32.mrb[0].mxu0
      %1262 = vmatprep.mubr.bf16.mxu0 0
      %1263 = vmatmul.mubr.bf16.gmra.mrb[0].mxu0 %v1141
      %v1264 = vpop.f32.mrb[0].mxu0
      %v1265 = vadd.f32 %v218, %v1264
      %v1266 = vpop.f32.mrb[0].mxu0
      %v1267 = vpop.f32.mrb[0].mxu0
      %v1268 = vadd.f32 %v218, %v1267
      %v1269 = vpop.f32.mrb[0].mxu0
      %1270 = vmatprep.mubr.bf16.mxu0 0
      %1271 = vmatmul.mubr.bf16.gmra.mrb[0].mxu0 %v1142
      %v1272 = vpop.f32.mrb[0].mxu0
      %v1273 = vadd.f32 %v218, %v1272
      %v1274 = vpop.f32.mrb[0].mxu0
      %v1275 = vpop.f32.mrb[0].mxu0
      %v1276 = vadd.f32 %v218, %v1275
      %v1277 = vpop.f32.mrb[0].mxu0
      %1278 = vmatprep.mubr.bf16.mxu0 0
      %1279 = vmatmul.mubr.bf16.gmra.mrb[0].mxu0 %v1143
      %v1280 = vpop.f32.mrb[0].mxu0
      %v1281 = vadd.f32 %v218, %v1280
      %v1282 = vpop.f32.mrb[0].mxu0
      %v1283 = vpop.f32.mrb[0].mxu0
      %v1284 = vadd.f32 %v218, %v1283
      %v1285 = vpop.f32.mrb[0].mxu0
      %1286 = vmatprep.mubr.bf16.mxu0 0
      %1287 = vmatmul.mubr.bf16.gmra.mrb[0].mxu0 %v1144
      %v1288 = vpop.f32.mrb[0].mxu0
      %v1289 = vadd.f32 %v218, %v1288
      %v1290 = vpop.f32.mrb[0].mxu0
      %v1291 = vpop.f32.mrb[0].mxu0
      %v1292 = vpop.f32.mrb[0].mxu0
      %1293 = vdwg.mxu0
      %v1294 = vmax.f32 %v1193, 0.0
      %v1295 = vmax.f32 %v1196, 0.0
      %v1296 = vmax.f32 %v1201, 0.0
      %v1297 = vmax.f32 %v1204, 0.0
      %v1298 = vmax.f32 %v1209, 0.0
      %v1299 = vmax.f32 %v1212, 0.0
      %v1300 = vmax.f32 %v1217, 0.0
      %v1301 = vmax.f32 %v1220, 0.0
      %v1302 = vmax.f32 %v1225, 0.0
      %v1303 = vmax.f32 %v1228, 0.0
      %v1304 = vmax.f32 %v1233, 0.0
      %v1305 = vmax.f32 %v1236, 0.0
      %v1306 = vmax.f32 %v1241, 0.0
      %v1307 = vmax.f32 %v1244, 0.0
      %v1308 = vmax.f32 %v1249, 0.0
      %v1309 = vmax.f32 %v1252, 0.0
      %v1310 = vmax.f32 %v1257, 0.0
      %v1311 = vmax.f32 %v1260, 0.0
      %v1312 = vmax.f32 %v1265, 0.0
      %v1313 = vmax.f32 %v1268, 0.0
      %v1314 = vmax.f32 %v1273, 0.0
      %v1315 = vmax.f32 %v1276, 0.0
      %v1316 = vmax.f32 %v1281, 0.0
      %v1317 = vmax.f32 %v1284, 0.0
      %v1318 = vmax.f32 %v1289, 0.0
      %v1319 = vmax.f32 %v1031, %v1294
      %v1320 = vmax.f32 %v1032, %v1295
      %v1321 = vmax.f32 %v1033, %v1296
      %v1322 = vmax.f32 %v1034, %v1297
      %v1323 = vmax.f32 %v1035, %v1298
      %v1324 = vmax.f32 %v1036, %v1299
      %v1325 = vmax.f32 %v1037, %v1300
      %v1326 = vmax.f32 %v1038, %v1301
      %v1327 = vmax.f32 %v1039, %v1302
      %v1328 = vmax.f32 %v1040, %v1303
      %v1329 = vmax.f32 %v1041, %v1304
      %v1330 = vmax.f32 %v1042, %v1305
      %v1331 = vmax.f32 %v1043, %v1306
      %v1332 = vmax.f32 %v1044, %v1307
      %v1333 = vmax.f32 %v1045, %v1308
      %v1334 = vmax.f32 %v1046, %v1309
      %v1335 = vmax.f32 %v1047, %v1310
      %v1336 = vmax.f32 %v1048, %v1311
      %v1337 = vmax.f32 %v1049, %v1312
      %v1338 = vmax.f32 %v1050, %v1313
      %v1339 = vmax.f32 %v1051, %v1314
      %v1340 = vmax.f32 %v1052, %v1315
      %v1341 = vmax.f32 %v1053, %v1316
      %v1342 = vmax.f32 %v1054, %v1317
      %v1343 = vmax.f32 %v1055, %v1318
      %v1344 = vmax.f32 %v768, %v1319
      %v1345 = vmax.f32 %v769, %v1320
      %v1346 = vmax.f32 %v770, %v1321
      %v1347 = vmax.f32 %v771, %v1322
      %v1348 = vmax.f32 %v772, %v1323
      %v1349 = vmax.f32 %v773, %v1324
      %v1350 = vmax.f32 %v774, %v1325
      %v1351 = vmax.f32 %v775, %v1326
      %v1352 = vmax.f32 %v776, %v1327
      %v1353 = vmax.f32 %v777, %v1328
      %v1354 = vmax.f32 %v778, %v1329
      %v1355 = vmax.f32 %v779, %v1330
      %v1356 = vmax.f32 %v780, %v1331
      %v1357 = vmax.f32 %v781, %v1332
      %v1358 = vmax.f32 %v782, %v1333
      %v1359 = vmax.f32 %v783, %v1334
      %v1360 = vmax.f32 %v784, %v1335
      %v1361 = vmax.f32 %v785, %v1336
      %v1362 = vmax.f32 %v786, %v1337
      %v1363 = vmax.f32 %v787, %v1338
      %v1364 = vmax.f32 %v788, %v1339
      %v1365 = vmax.f32 %v789, %v1340
      %v1366 = vmax.f32 %v790, %v1341
      %v1367 = vmax.f32 %v791, %v1342
      %v1368 = vmax.f32 %v792, %v1343
      %v1369 = vpack.c.bf16 %v1345, %v1344
      %v1370 = vpack.c.bf16 %v1347, %v1346
      %v1371 = vpack.c.bf16 %v1349, %v1348
      %v1372 = vpack.c.bf16 %v1351, %v1350
      %v1373 = vpack.c.bf16 %v1353, %v1352
      %v1374 = vpack.c.bf16 %v1355, %v1354
      %v1375 = vpack.c.bf16 %v1357, %v1356
      %v1376 = vpack.c.bf16 %v1359, %v1358
      %v1377 = vpack.c.bf16 %v1361, %v1360
      %v1378 = vpack.c.bf16 %v1363, %v1362
      %v1379 = vpack.c.bf16 %v1365, %v1364
      %v1380 = vpack.c.bf16 %v1367, %v1366
      %v1381 = vpack.c.bf16 %v1368, %v1368
      %v1395 = vunpack.c.l.b16 %v1369
      %v1396 = vunpack.c.h.b16 %v1369
      %v1397 = vunpack.c.l.b16 %v1370
      %v1398 = vunpack.c.h.b16 %v1370
      %v1399 = vunpack.c.l.b16 %v1371
      %v1400 = vunpack.c.h.b16 %v1371
      %v1401 = vunpack.c.l.b16 %v1372
      %v1402 = vunpack.c.h.b16 %v1372
      %v1403 = vunpack.c.l.b16 %v1373
      %v1404 = vunpack.c.h.b16 %v1373
      %v1405 = vunpack.c.l.b16 %v1374
      %v1406 = vunpack.c.h.b16 %v1374
      %v1407 = vunpack.c.l.b16 %v1375
      %v1408 = vunpack.c.h.b16 %v1375
      %v1409 = vunpack.c.l.b16 %v1376
      %v1410 = vunpack.c.h.b16 %v1376
      %v1411 = vunpack.c.l.b16 %v1377
      %v1412 = vunpack.c.h.b16 %v1377
      %v1413 = vunpack.c.l.b16 %v1378
      %v1414 = vunpack.c.h.b16 %v1378
      %v1415 = vunpack.c.l.b16 %v1379
      %v1416 = vunpack.c.h.b16 %v1379
      %v1417 = vunpack.c.l.b16 %v1380
      %v1418 = vunpack.c.h.b16 %v1380
      %v1419 = vunpack.c.l.b16 %v1381
      %v1420 = vpack.c.b16 %v1395, %v1395
      %v1421 = vpack.c.b16 %v1396, %v1396
      %v1422 = vpack.c.b16 %v1397, %v1397
      %v1423 = vpack.c.b16 %v1398, %v1398
      %v1424 = vpack.c.b16 %v1399, %v1399
      %v1425 = vpack.c.b16 %v1400, %v1400
      %v1426 = vpack.c.b16 %v1401, %v1401
      %v1427 = vpack.c.b16 %v1402, %v1402
      %v1428 = vpack.c.b16 %v1403, %v1403
      %v1429 = vpack.c.b16 %v1404, %v1404
      %v1430 = vpack.c.b16 %v1405, %v1405
      %v1431 = vpack.c.b16 %v1406, %v1406
      %v1432 = vpack.c.b16 %v1407, %v1407
      %v1433 = vpack.c.b16 %v1408, %v1408
      %v1434 = vpack.c.b16 %v1409, %v1409
      %v1435 = vpack.c.b16 %v1410, %v1410
      %v1436 = vpack.c.b16 %v1411, %v1411
      %v1437 = vpack.c.b16 %v1412, %v1412
      %v1438 = vpack.c.b16 %v1413, %v1413
      %v1439 = vpack.c.b16 %v1414, %v1414
      %v1440 = vpack.c.b16 %v1415, %v1415
      %v1441 = vpack.c.b16 %v1416, %v1416
      %v1442 = vpack.c.b16 %v1417, %v1417
      %v1443 = vpack.c.b16 %v1418, %v1418
      %v1444 = vpack.c.b16 %v1419, %v1419
      %1470 = vst [vmem:[%s170] sm:$0xf] %v1420
      %1471 = vst [vmem:[%s170 + $0x4] sm:$0xf] %v1421
      %1472 = vst [vmem:[%s170 + $0x8] sm:$0xf] %v1422
      %1473 = vst [vmem:[%s170 + $0xc] sm:$0xf] %v1423
      %1474 = vst [vmem:[%s170 + $0x10] sm:$0xf] %v1424
      %1475 = vst [vmem:[%s170 + $0x14] sm:$0xf] %v1425
      %1476 = vst [vmem:[%s170 + $0x18] sm:$0xf] %v1426
      %1477 = vst [vmem:[%s170 + $0x1c] sm:$0xf] %v1427
      %1478 = vst [vmem:[%s170 + $0x20] sm:$0xf] %v1428
      %1479 = vst [vmem:[%s170 + $0x24] sm:$0xf] %v1429
      %1480 = vst [vmem:[%s170 + $0x28] sm:$0xf] %v1430
      %1481 = vst [vmem:[%s170 + $0x2c] sm:$0xf] %v1431
      %1482 = vst [vmem:[%s170 + $0x30] sm:$0xf] %v1432
      %1483 = vst [vmem:[%s170 + $0x34] sm:$0xf] %v1433
      %1484 = vst [vmem:[%s170 + $0x38] sm:$0xf] %v1434
      %1485 = vst [vmem:[%s170 + $0x3c] sm:$0xf] %v1435
      %1486 = vst [vmem:[%s170 + $0x40] sm:$0xf] %v1436
      %1487 = vst [vmem:[%s170 + $0x44] sm:$0xf] %v1437
      %1488 = vst [vmem:[%s170 + $0x48] sm:$0xf] %v1438
      %1489 = vst [vmem:[%s170 + $0x4c] sm:$0xf] %v1439
      %1490 = vst [vmem:[%s170 + $0x50] sm:$0xf] %v1440
      %1491 = vst [vmem:[%s170 + $0x54] sm:$0xf] %v1441
      %1492 = vst [vmem:[%s170 + $0x58] sm:$0xf] %v1442
      %1493 = vst [vmem:[%s170 + $0x5c] sm:$0xf] %v1443
      %1494 = vst [vmem:[%s170 + $0x60] sm:$0x3] %v1444
      %p1495 = scmp.lt.s32.totalorder %s14, 1
      %s1496 = scalar_select %p1495, %s14, 1
      %s1497 = smul.addr %s1496, 25
      %s1498 = smul.addr %s1497, 4
      %s1499 = scalar_lea.vmem %s3, %s1498
      // Predicated region
      $region33: #{net_forward.3} parent=31 // pred_check
        %p1500 = pneg %p100
      $region34: #{net_forward.3} parent=31 // pred_check_branch
        %1502 = sbr.rel (%p1500) target = $region36
      $region35: #{net_forward.3} parent=31 // pred_region
        _
      $region36: #{net_forward.3} parent=31 // pred_fallthru
        _
    $region32: #{net_forward.3} parent=5 // pred_fallthru
      _
    %p1503 = scmp.le.s32.totalorder 2, %s9
    // Predicated region
    $region37: #{net_forward.3} parent=5 // pred_check
      %p1504 = pneg %p1503
    $region38: #{net_forward.3} parent=5 // pred_check_branch
      %1506 = sbr.rel (%p1504) target = $region40
    $region39: #{net_forward.3} parent=5 // pred_region
      %s1507 = ssub.s32 %s9, 2
      // Predicated region
      $region41: #{net_forward.3} parent=39 // pred_check
        %p1508 = pneg %p106
      $region42: #{net_forward.3} parent=39 // pred_check_branch
        %1510 = sbr.rel (%p1508) target = $region44
      $region43: #{net_forward.3} parent=39 // pred_region
        %p1511 = scmp.lt.s32.totalorder %s15, 1
        %s1512 = scalar_select %p1511, %s15, 1
        %s1513 = smul.addr %s1512, 25
        %s1514 = smul.addr %s1513, 4
        %s1515 = scalar_lea.vmem %s3, %s1514
      $region44: #{net_forward.3} parent=39 // pred_fallthru
        _
    $region40: #{net_forward.3} parent=5 // pred_fallthru
      _
  $region6: #{net_forward.3} parent=0 // loop_footer
    %s13 = sadd.s32 1, %s9
  $region7: #{net_forward.3} parent=0 // loop_footer_branch
    %8 = sbr.rel target = $region3
  $region8: #{net_forward.3} parent=0 // loop_exit
    _

// kernel: net_forward.5
$region0: #{net_forward.5}
  #allocation0 [shape = 'u32[]', space=smem, size = 0x4, offset = 0x4, fixed_abs, tag = 'smem constant byte address 0x4 - core index']
  #allocation1 [shape = 'u32[144,128]{1,0:T(1,128)}', space=vmem, size = 0x12000, scoped, tag = 'internal scratch']
  %s0 = inlined_call_operand.vmem [shape: bf16[2,3200], index: 0, kind: input, shape index: {}]
  %s1 = inlined_call_operand.vmem [shape: bf16[3200,128], index: 1, kind: input, shape index: {}]
  %s2 = inlined_call_operand.vmem [shape: f32[1,128], index: 2, kind: input, shape index: {}]
  %s3 = inlined_call_operand.vmem [shape: bf16[128,128], index: 3, kind: input, shape index: {}]
  %s4 = inlined_call_operand.vmem [shape: f32[1,128], index: 4, kind: input, shape index: {}]
  %s5 = inlined_call_operand.vmem [shape: bf16[128,128], index: 5, kind: input, shape index: {}]
  %s6 = inlined_call_operand.vmem [shape: f32[1,128], index: 6, kind: input, shape index: {}]
  %s7 = inlined_call_operand.hbm [shape: f32[2,128], index: 7, kind: output, shape index: {}]
  %s8 = sld [smem:[#allocation0]]
  $region38: #{net_forward.5} parent=0
    _
  %s10 = ssub.s32 1, %s8
  %s11 = scalar_select 0, %s10, %s8
  $region1: #{net_forward.5} parent=0
    #allocation2 [shape = 'u8[1024]{0}', space=vmem, size = 0x400, scoped, tag = 'output window, operand 0, single buffered']
    #allocation3 [shape = 's32[1]{0}', space=sflag, size = 0x4, scoped, tag = 'scoped memory for net_forward.5']
    %12 = vsyncpa [#allocation3], 0
    // Predicated region
    $region2: #{net_forward.5} parent=1 // pred_check
      _
    $region3: #{net_forward.5} parent=1 // pred_check_branch
      %14 = sbr.rel (0) target = $region5
    $region4: #{net_forward.5} parent=1 // pred_region
      _
    $region5: #{net_forward.5} parent=1 // pred_fallthru
      _
    // Predicated region
    $region6: #{net_forward.5} parent=1 // pred_check
      _
    $region7: #{net_forward.5} parent=1 // pred_check_branch
      %16 = sbr.rel (0) target = $region9
    $region8: #{net_forward.5} parent=1 // pred_region
      _
    $region9: #{net_forward.5} parent=1 // pred_fallthru
      _
    // Predicated region
    $region10: #{net_forward.5} parent=1 // pred_check
      _
    $region11: #{net_forward.5} parent=1 // pred_check_branch
      %18 = sbr.rel (0) target = $region13
    $region12: #{net_forward.5} parent=1 // pred_region
      _
    $region13: #{net_forward.5} parent=1 // pred_fallthru
      _
    // Predicated region
    $region14: #{net_forward.5} parent=1 // pred_check
      _
    $region15: #{net_forward.5} parent=1 // pred_check_branch
      %20 = sbr.rel (0) target = $region17
    $region16: #{net_forward.5} parent=1 // pred_region
      _
    $region17: #{net_forward.5} parent=1 // pred_fallthru
      _
    // Predicated region
    $region18: #{net_forward.5} parent=1 // pred_check
      _
    $region19: #{net_forward.5} parent=1 // pred_check_branch
      %22 = sbr.rel (0) target = $region21
    $region20: #{net_forward.5} parent=1 // pred_region
      _
    $region21: #{net_forward.5} parent=1 // pred_fallthru
      _
    // Predicated region
    $region22: #{net_forward.5} parent=1 // pred_check
      _
    $region23: #{net_forward.5} parent=1 // pred_check_branch
      %24 = sbr.rel (0) target = $region25
    $region24: #{net_forward.5} parent=1 // pred_region
      _
    $region25: #{net_forward.5} parent=1 // pred_fallthru
      _
    // Predicated region
    $region26: #{net_forward.5} parent=1 // pred_check
      _
    $region27: #{net_forward.5} parent=1 // pred_check_branch
      %26 = sbr.rel (0) target = $region29
    $region28: #{net_forward.5} parent=1 // pred_region
      _
    $region29: #{net_forward.5} parent=1 // pred_fallthru
      _
    %v28 = vld [vmem:[%s0] sm:$0xff]
    %v29 = vld [vmem:[%s0 + $0x8] sm:$0xff]
    %v30 = vld [vmem:[%s0 + $0x10] sm:$0xff]
    %v31 = vld [vmem:[%s0 + $0x18] sm:$0x1]
    %v32 = vld [vmem:[%s1] sm:$0xf]
    %v33 = vld [vmem:[%s1 + $0x4] sm:$0xf]
    %v34 = vld [vmem:[%s1 + $0x8] sm:$0xf]
    %v35 = vld [vmem:[%s1 + $0xc] sm:$0xf]
    %v36 = vld [vmem:[%s1 + $0x10] sm:$0xf]
    %v37 = vld [vmem:[%s1 + $0x14] sm:$0xf]
    %v38 = vld [vmem:[%s1 + $0x18] sm:$0xf]
    %v39 = vld [vmem:[%s1 + $0x1c] sm:$0xf]
    %v40 = vld [vmem:[%s1 + $0x20] sm:$0xf]
    %v41 = vld [vmem:[%s1 + $0x24] sm:$0xf]
    %v42 = vld [vmem:[%s1 + $0x28] sm:$0xf]
    %v43 = vld [vmem:[%s1 + $0x2c] sm:$0xf]
    %v44 = vld [vmem:[%s1 + $0x30] sm:$0xf]
    %v45 = vld [vmem:[%s1 + $0x34] sm:$0xf]
    %v46 = vld [vmem:[%s1 + $0x38] sm:$0xf]
    %v47 = vld [vmem:[%s1 + $0x3c] sm:$0xf]
    %v48 = vld [vmem:[%s1 + $0x40] sm:$0xf]
    %v49 = vld [vmem:[%s1 + $0x44] sm:$0xf]
    %v50 = vld [vmem:[%s1 + $0x48] sm:$0xf]
    %v51 = vld [vmem:[%s1 + $0x4c] sm:$0xf]
    %v52 = vld [vmem:[%s1 + $0x50] sm:$0xf]
    %v53 = vld [vmem:[%s1 + $0x54] sm:$0xf]
    %v54 = vld [vmem:[%s1 + $0x58] sm:$0xf]
    %v55 = vld [vmem:[%s1 + $0x5c] sm:$0xf]
    %v56 = vld [vmem:[%s1 + $0x60] sm:$0xf]
    %v57 = vld [vmem:[%s1 + $0x64] sm:$0xf]
    %v58 = vld [vmem:[%s1 + $0x68] sm:$0xf]
    %v59 = vld [vmem:[%s1 + $0x6c] sm:$0xf]
    %v60 = vld [vmem:[%s1 + $0x70] sm:$0xf]
    %v61 = vld [vmem:[%s1 + $0x74] sm:$0xf]
    %v62 = vld [vmem:[%s1 + $0x78] sm:$0xf]
    %v63 = vld [vmem:[%s1 + $0x7c] sm:$0xf]
    %v64 = vld [vmem:[%s1 + $0x80] sm:$0xf]
    %v65 = vld [vmem:[%s1 + $0x84] sm:$0xf]
    %v66 = vld [vmem:[%s1 + $0x88] sm:$0xf]
    %v67 = vld [vmem:[%s1 + $0x8c] sm:$0xf]
    %v68 = vld [vmem:[%s1 + $0x90] sm:$0xf]
    %v69 = vld [vmem:[%s1 + $0x94] sm:$0xf]
    %v70 = vld [vmem:[%s1 + $0x98] sm:$0xf]
    %v71 = vld [vmem:[%s1 + $0x9c] sm:$0xf]
    %v72 = vld [vmem:[%s1 + $0xa0] sm:$0xf]
    %v73 = vld [vmem:[%s1 + $0xa4] sm:$0xf]
    %v74 = vld [vmem:[%s1 + $0xa8] sm:$0xf]
    %v75 = vld [vmem:[%s1 + $0xac] sm:$0xf]
    %v76 = vld [vmem:[%s1 + $0xb0] sm:$0xf]
    %v77 = vld [vmem:[%s1 + $0xb4] sm:$0xf]
    %v78 = vld [vmem:[%s1 + $0xb8] sm:$0xf]
    %v79 = vld [vmem:[%s1 + $0xbc] sm:$0xf]
    %v80 = vld [vmem:[%s1 + $0xc0] sm:$0xf]
    %v81 = vld [vmem:[%s1 + $0xc4] sm:$0xf]
    %v82 = vld [vmem:[%s1 + $0xc8] sm:$0xf]
    %v83 = vld [vmem:[%s1 + $0xcc] sm:$0xf]
    %v84 = vld [vmem:[%s1 + $0xd0] sm:$0xf]
    %v85 = vld [vmem:[%s1 + $0xd4] sm:$0xf]
    %v86 = vld [vmem:[%s1 + $0xd8] sm:$0xf]
    %v87 = vld [vmem:[%s1 + $0xdc] sm:$0xf]
    %v88 = vld [vmem:[%s1 + $0xe0] sm:$0xf]
    %v89 = vld [vmem:[%s1 + $0xe4] sm:$0xf]
    %v90 = vld [vmem:[%s1 + $0xe8] sm:$0xf]
    %v91 = vld [vmem:[%s1 + $0xec] sm:$0xf]
    %v92 = vld [vmem:[%s1 + $0xf0] sm:$0xf]
    %v93 = vld [vmem:[%s1 + $0xf4] sm:$0xf]
    %v94 = vld [vmem:[%s1 + $0xf8] sm:$0xf]
    %v95 = vld [vmem:[%s1 + $0xfc] sm:$0xf]
    %v96 = vld [vmem:[%s1 + $0x100] sm:$0xf]
    %v97 = vld [vmem:[%s1 + $0x104] sm:$0xf]
    %v98 = vld [vmem:[%s1 + $0x108] sm:$0xf]
    %v99 = vld [vmem:[%s1 + $0x10c] sm:$0xf]
    %v100 = vld [vmem:[%s1 + $0x110] sm:$0xf]
    %v101 = vld [vmem:[%s1 + $0x114] sm:$0xf]
    %v102 = vld [vmem:[%s1 + $0x118] sm:$0xf]
    %v103 = vld [vmem:[%s1 + $0x11c] sm:$0xf]
    %v104 = vld [vmem:[%s1 + $0x120] sm:$0xf]
    %v105 = vld [vmem:[%s1 + $0x124] sm:$0xf]
    %v106 = vld [vmem:[%s1 + $0x128] sm:$0xf]
    %v107 = vld [vmem:[%s1 + $0x12c] sm:$0xf]
    %v108 = vld [vmem:[%s1 + $0x130] sm:$0xf]
    %v109 = vld [vmem:[%s1 + $0x134] sm:$0xf]
    %v110 = vld [vmem:[%s1 + $0x138] sm:$0xf]
    %v111 = vld [vmem:[%s1 + $0x13c] sm:$0xf]
    %v112 = vld [vmem:[%s1 + $0x140] sm:$0xf]
    %v113 = vld [vmem:[%s1 + $0x144] sm:$0xf]
    %v114 = vld [vmem:[%s1 + $0x148] sm:$0xf]
    %v115 = vld [vmem:[%s1 + $0x14c] sm:$0xf]
    %v116 = vld [vmem:[%s1 + $0x150] sm:$0xf]
    %v117 = vld [vmem:[%s1 + $0x154] sm:$0xf]
    %v118 = vld [vmem:[%s1 + $0x158] sm:$0xf]
    %v119 = vld [vmem:[%s1 + $0x15c] sm:$0xf]
    %v120 = vld [vmem:[%s1 + $0x160] sm:$0xf]
    %v121 = vld [vmem:[%s1 + $0x164] sm:$0xf]
    %v122 = vld [vmem:[%s1 + $0x168] sm:$0xf]
    %v123 = vld [vmem:[%s1 + $0x16c] sm:$0xf]
    %v124 = vld [vmem:[%s1 + $0x170] sm:$0xf]
    %v125 = vld [vmem:[%s1 + $0x174] sm:$0xf]
    %v126 = vld [vmem:[%s1 + $0x178] sm:$0xf]
    %v127 = vld [vmem:[%s1 + $0x17c] sm:$0xf]
    %v128 = vld [vmem:[%s1 + $0x180] sm:$0xf]
    %v129 = vld [vmem:[%s1 + $0x184] sm:$0xf]
    %v130 = vld [vmem:[%s1 + $0x188] sm:$0xf]
    %v131 = vld [vmem:[%s1 + $0x18c] sm:$0xf]
    %v132 = vld [vmem:[%s1 + $0x190] sm:$0xf]
    %v133 = vld [vmem:[%s1 + $0x194] sm:$0xf]
    %v134 = vld [vmem:[%s1 + $0x198] sm:$0xf]
    %v135 = vld [vmem:[%s1 + $0x19c] sm:$0xf]
    %v136 = vld [vmem:[%s1 + $0x1a0] sm:$0xf]
    %v137 = vld [vmem:[%s1 + $0x1a4] sm:$0xf]
    %v138 = vld [vmem:[%s1 + $0x1a8] sm:$0xf]
    %v139 = vld [vmem:[%s1 + $0x1ac] sm:$0xf]
    %v140 = vld [vmem:[%s1 + $0x1b0] sm:$0xf]
    %v141 = vld [vmem:[%s1 + $0x1b4] sm:$0xf]
    %v142 = vld [vmem:[%s1 + $0x1b8] sm:$0xf]
    %v143 = vld [vmem:[%s1 + $0x1bc] sm:$0xf]
    %v144 = vld [vmem:[%s1 + $0x1c0] sm:$0xf]
    %v145 = vld [vmem:[%s1 + $0x1c4] sm:$0xf]
    %v146 = vld [vmem:[%s1 + $0x1c8] sm:$0xf]
    %v147 = vld [vmem:[%s1 + $0x1cc] sm:$0xf]
    %v148 = vld [vmem:[%s1 + $0x1d0] sm:$0xf]
    %v149 = vld [vmem:[%s1 + $0x1d4] sm:$0xf]
    %v150 = vld [vmem:[%s1 + $0x1d8] sm:$0xf]
    %v151 = vld [vmem:[%s1 + $0x1dc] sm:$0xf]
    %v152 = vld [vmem:[%s1 + $0x1e0] sm:$0xf]
    %v153 = vld [vmem:[%s1 + $0x1e4] sm:$0xf]
    %v154 = vld [vmem:[%s1 + $0x1e8] sm:$0xf]
    %v155 = vld [vmem:[%s1 + $0x1ec] sm:$0xf]
    %v156 = vld [vmem:[%s1 + $0x1f0] sm:$0xf]
    %v157 = vld [vmem:[%s1 + $0x1f4] sm:$0xf]
    %v158 = vld [vmem:[%s1 + $0x1f8] sm:$0xf]
    %v159 = vld [vmem:[%s1 + $0x1fc] sm:$0xf]
    %v160 = vld [vmem:[%s1 + $0x200] sm:$0xf]
    %v161 = vld [vmem:[%s1 + $0x204] sm:$0xf]
    %v162 = vld [vmem:[%s1 + $0x208] sm:$0xf]
    %v163 = vld [vmem:[%s1 + $0x20c] sm:$0xf]
    %v164 = vld [vmem:[%s1 + $0x210] sm:$0xf]
    %v165 = vld [vmem:[%s1 + $0x214] sm:$0xf]
    %v166 = vld [vmem:[%s1 + $0x218] sm:$0xf]
    %v167 = vld [vmem:[%s1 + $0x21c] sm:$0xf]
    %v168 = vld [vmem:[%s1 + $0x220] sm:$0xf]
    %v169 = vld [vmem:[%s1 + $0x224] sm:$0xf]
    %v170 = vld [vmem:[%s1 + $0x228] sm:$0xf]
    %v171 = vld [vmem:[%s1 + $0x22c] sm:$0xf]
    %v172 = vld [vmem:[%s1 + $0x230] sm:$0xf]
    %v173 = vld [vmem:[%s1 + $0x234] sm:$0xf]
    %v174 = vld [vmem:[%s1 + $0x238] sm:$0xf]
    %v175 = vld [vmem:[%s1 + $0x23c] sm:$0xf]
    %v176 = vld [vmem:[%s1 + $0x240] sm:$0xf]
    %v177 = vld [vmem:[%s1 + $0x244] sm:$0xf]
    %v178 = vld [vmem:[%s1 + $0x248] sm:$0xf]
    %v179 = vld [vmem:[%s1 + $0x24c] sm:$0xf]
    %v180 = vld [vmem:[%s1 + $0x250] sm:$0xf]
    %v181 = vld [vmem:[%s1 + $0x254] sm:$0xf]
    %v182 = vld [vmem:[%s1 + $0x258] sm:$0xf]
    %v183 = vld [vmem:[%s1 + $0x25c] sm:$0xf]
    %v184 = vld [vmem:[%s1 + $0x260] sm:$0xf]
    %v185 = vld [vmem:[%s1 + $0x264] sm:$0xf]
    %v186 = vld [vmem:[%s1 + $0x268] sm:$0xf]
    %v187 = vld [vmem:[%s1 + $0x26c] sm:$0xf]
    %v188 = vld [vmem:[%s1 + $0x270] sm:$0xf]
    %v189 = vld [vmem:[%s1 + $0x274] sm:$0xf]
    %v190 = vld [vmem:[%s1 + $0x278] sm:$0xf]
    %v191 = vld [vmem:[%s1 + $0x27c] sm:$0xf]
    %v192 = vld [vmem:[%s1 + $0x280] sm:$0xf]
    %v193 = vld [vmem:[%s1 + $0x284] sm:$0xf]
    %v194 = vld [vmem:[%s1 + $0x288] sm:$0xf]
    %v195 = vld [vmem:[%s1 + $0x28c] sm:$0xf]
    %v196 = vld [vmem:[%s1 + $0x290] sm:$0xf]
    %v197 = vld [vmem:[%s1 + $0x294] sm:$0xf]
    %v198 = vld [vmem:[%s1 + $0x298] sm:$0xf]
    %v199 = vld [vmem:[%s1 + $0x29c] sm:$0xf]
    %v200 = vld [vmem:[%s1 + $0x2a0] sm:$0xf]
    %v201 = vld [vmem:[%s1 + $0x2a4] sm:$0xf]
    %v202 = vld [vmem:[%s1 + $0x2a8] sm:$0xf]
    %v203 = vld [vmem:[%s1 + $0x2ac] sm:$0xf]
    %v204 = vld [vmem:[%s1 + $0x2b0] sm:$0xf]
    %v205 = vld [vmem:[%s1 + $0x2b4] sm:$0xf]
    %v206 = vld [vmem:[%s1 + $0x2b8] sm:$0xf]
    %v207 = vld [vmem:[%s1 + $0x2bc] sm:$0xf]
    %v208 = vld [vmem:[%s1 + $0x2c0] sm:$0xf]
    %v209 = vld [vmem:[%s1 + $0x2c4] sm:$0xf]
    %v210 = vld [vmem:[%s1 + $0x2c8] sm:$0xf]
    %v211 = vld [vmem:[%s1 + $0x2cc] sm:$0xf]
    %v212 = vld [vmem:[%s1 + $0x2d0] sm:$0xf]
    %v213 = vld [vmem:[%s1 + $0x2d4] sm:$0xf]
    %v214 = vld [vmem:[%s1 + $0x2d8] sm:$0xf]
    %v215 = vld [vmem:[%s1 + $0x2dc] sm:$0xf]
    %v216 = vld [vmem:[%s1 + $0x2e0] sm:$0xf]
    %v217 = vld [vmem:[%s1 + $0x2e4] sm:$0xf]
    %v218 = vld [vmem:[%s1 + $0x2e8] sm:$0xf]
    %v219 = vld [vmem:[%s1 + $0x2ec] sm:$0xf]
    %v220 = vld [vmem:[%s1 + $0x2f0] sm:$0xf]
    %v221 = vld [vmem:[%s1 + $0x2f4] sm:$0xf]
    %v222 = vld [vmem:[%s1 + $0x2f8] sm:$0xf]
    %v223 = vld [vmem:[%s1 + $0x2fc] sm:$0xf]
    %v224 = vld [vmem:[%s1 + $0x300] sm:$0xf]
    %v225 = vld [vmem:[%s1 + $0x304] sm:$0xf]
    %v226 = vld [vmem:[%s1 + $0x308] sm:$0xf]
    %v227 = vld [vmem:[%s1 + $0x30c] sm:$0xf]
    %v228 = vld [vmem:[%s1 + $0x310] sm:$0xf]
    %v229 = vld [vmem:[%s1 + $0x314] sm:$0xf]
    %v230 = vld [vmem:[%s1 + $0x318] sm:$0xf]
    %v231 = vld [vmem:[%s1 + $0x31c] sm:$0xf]
    %v232 = vld [vmem:[%s1 + $0x320] sm:$0xf]
    %v233 = vld [vmem:[%s1 + $0x324] sm:$0xf]
    %v234 = vld [vmem:[%s1 + $0x328] sm:$0xf]
    %v235 = vld [vmem:[%s1 + $0x32c] sm:$0xf]
    %v236 = vld [vmem:[%s1 + $0x330] sm:$0xf]
    %v237 = vld [vmem:[%s1 + $0x334] sm:$0xf]
    %v238 = vld [vmem:[%s1 + $0x338] sm:$0xf]
    %v239 = vld [vmem:[%s1 + $0x33c] sm:$0xf]
    %v240 = vld [vmem:[%s1 + $0x340] sm:$0xf]
    %v241 = vld [vmem:[%s1 + $0x344] sm:$0xf]
    %v242 = vld [vmem:[%s1 + $0x348] sm:$0xf]
    %v243 = vld [vmem:[%s1 + $0x34c] sm:$0xf]
    %v244 = vld [vmem:[%s1 + $0x350] sm:$0xf]
    %v245 = vld [vmem:[%s1 + $0x354] sm:$0xf]
    %v246 = vld [vmem:[%s1 + $0x358] sm:$0xf]
    %v247 = vld [vmem:[%s1 + $0x35c] sm:$0xf]
    %v248 = vld [vmem:[%s1 + $0x360] sm:$0xf]
    %v249 = vld [vmem:[%s1 + $0x364] sm:$0xf]
    %v250 = vld [vmem:[%s1 + $0x368] sm:$0xf]
    %v251 = vld [vmem:[%s1 + $0x36c] sm:$0xf]
    %v252 = vld [vmem:[%s1 + $0x370] sm:$0xf]
    %v253 = vld [vmem:[%s1 + $0x374] sm:$0xf]
    %v254 = vld [vmem:[%s1 + $0x378] sm:$0xf]
    %v255 = vld [vmem:[%s1 + $0x37c] sm:$0xf]
    %v256 = vld [vmem:[%s1 + $0x380] sm:$0xf]
    %v257 = vld [vmem:[%s1 + $0x384] sm:$0xf]
    %v258 = vld [vmem:[%s1 + $0x388] sm:$0xf]
    %v259 = vld [vmem:[%s1 + $0x38c] sm:$0xf]
    %v260 = vld [vmem:[%s1 + $0x390] sm:$0xf]
    %v261 = vld [vmem:[%s1 + $0x394] sm:$0xf]
    %v262 = vld [vmem:[%s1 + $0x398] sm:$0xf]
    %v263 = vld [vmem:[%s1 + $0x39c] sm:$0xf]
    %v264 = vld [vmem:[%s1 + $0x3a0] sm:$0xf]
    %v265 = vld [vmem:[%s1 + $0x3a4] sm:$0xf]
    %v266 = vld [vmem:[%s1 + $0x3a8] sm:$0xf]
    %v267 = vld [vmem:[%s1 + $0x3ac] sm:$0xf]
    %v268 = vld [vmem:[%s1 + $0x3b0] sm:$0xf]
    %v269 = vld [vmem:[%s1 + $0x3b4] sm:$0xf]
    %v270 = vld [vmem:[%s1 + $0x3b8] sm:$0xf]
    %v271 = vld [vmem:[%s1 + $0x3bc] sm:$0xf]
    %v272 = vld [vmem:[%s1 + $0x3c0] sm:$0xf]
    %v273 = vld [vmem:[%s1 + $0x3c4] sm:$0xf]
    %v274 = vld [vmem:[%s1 + $0x3c8] sm:$0xf]
    %v275 = vld [vmem:[%s1 + $0x3cc] sm:$0xf]
    %v276 = vld [vmem:[%s1 + $0x3d0] sm:$0xf]
    %v277 = vld [vmem:[%s1 + $0x3d4] sm:$0xf]
    %v278 = vld [vmem:[%s1 + $0x3d8] sm:$0xf]
    %v279 = vld [vmem:[%s1 + $0x3dc] sm:$0xf]
    %v280 = vld [vmem:[%s1 + $0x3e0] sm:$0xf]
    %v281 = vld [vmem:[%s1 + $0x3e4] sm:$0xf]
    %v282 = vld [vmem:[%s1 + $0x3e8] sm:$0xf]
    %v283 = vld [vmem:[%s1 + $0x3ec] sm:$0xf]
    %v284 = vld [vmem:[%s1 + $0x3f0] sm:$0xf]
    %v285 = vld [vmem:[%s1 + $0x3f4] sm:$0xf]
    %v286 = vld [vmem:[%s1 + $0x3f8] sm:$0xf]
    %v287 = vld [vmem:[%s1 + $0x3fc] sm:$0xf]
    %v288 = vld [vmem:[%s1 + $0x400] sm:$0xf]
    %v289 = vld [vmem:[%s1 + $0x404] sm:$0xf]
    %v290 = vld [vmem:[%s1 + $0x408] sm:$0xf]
    %v291 = vld [vmem:[%s1 + $0x40c] sm:$0xf]
    %v292 = vld [vmem:[%s1 + $0x410] sm:$0xf]
    %v293 = vld [vmem:[%s1 + $0x414] sm:$0xf]
    %v294 = vld [vmem:[%s1 + $0x418] sm:$0xf]
    %v295 = vld [vmem:[%s1 + $0x41c] sm:$0xf]
    %v296 = vld [vmem:[%s1 + $0x420] sm:$0xf]
    %v297 = vld [vmem:[%s1 + $0x424] sm:$0xf]
    %v298 = vld [vmem:[%s1 + $0x428] sm:$0xf]
    %v299 = vld [vmem:[%s1 + $0x42c] sm:$0xf]
    %v300 = vld [vmem:[%s1 + $0x430] sm:$0xf]
    %v301 = vld [vmem:[%s1 + $0x434] sm:$0xf]
    %v302 = vld [vmem:[%s1 + $0x438] sm:$0xf]
    %v303 = vld [vmem:[%s1 + $0x43c] sm:$0xf]
    %v304 = vld [vmem:[%s1 + $0x440] sm:$0xf]
    %v305 = vld [vmem:[%s1 + $0x444] sm:$0xf]
    %v306 = vld [vmem:[%s1 + $0x448] sm:$0xf]
    %v307 = vld [vmem:[%s1 + $0x44c] sm:$0xf]
    %v308 = vld [vmem:[%s1 + $0x450] sm:$0xf]
    %v309 = vld [vmem:[%s1 + $0x454] sm:$0xf]
    %v310 = vld [vmem:[%s1 + $0x458] sm:$0xf]
    %v311 = vld [vmem:[%s1 + $0x45c] sm:$0xf]
    %v312 = vld [vmem:[%s1 + $0x460] sm:$0xf]
    %v313 = vld [vmem:[%s1 + $0x464] sm:$0xf]
    %v314 = vld [vmem:[%s1 + $0x468] sm:$0xf]
    %v315 = vld [vmem:[%s1 + $0x46c] sm:$0xf]
    %v316 = vld [vmem:[%s1 + $0x470] sm:$0xf]
    %v317 = vld [vmem:[%s1 + $0x474] sm:$0xf]
    %v318 = vld [vmem:[%s1 + $0x478] sm:$0xf]
    %v319 = vld [vmem:[%s1 + $0x47c] sm:$0xf]
    %v320 = vld [vmem:[%s1 + $0x480] sm:$0xf]
    %v321 = vld [vmem:[%s1 + $0x484] sm:$0xf]
    %v322 = vld [vmem:[%s1 + $0x488] sm:$0xf]
    %v323 = vld [vmem:[%s1 + $0x48c] sm:$0xf]
    %v324 = vld [vmem:[%s1 + $0x490] sm:$0xf]
    %v325 = vld [vmem:[%s1 + $0x494] sm:$0xf]
    %v326 = vld [vmem:[%s1 + $0x498] sm:$0xf]
    %v327 = vld [vmem:[%s1 + $0x49c] sm:$0xf]
    %v328 = vld [vmem:[%s1 + $0x4a0] sm:$0xf]
    %v329 = vld [vmem:[%s1 + $0x4a4] sm:$0xf]
    %v330 = vld [vmem:[%s1 + $0x4a8] sm:$0xf]
    %v331 = vld [vmem:[%s1 + $0x4ac] sm:$0xf]
    %v332 = vld [vmem:[%s1 + $0x4b0] sm:$0xf]
    %v333 = vld [vmem:[%s1 + $0x4b4] sm:$0xf]
    %v334 = vld [vmem:[%s1 + $0x4b8] sm:$0xf]
    %v335 = vld [vmem:[%s1 + $0x4bc] sm:$0xf]
    %v336 = vld [vmem:[%s1 + $0x4c0] sm:$0xf]
    %v337 = vld [vmem:[%s1 + $0x4c4] sm:$0xf]
    %v338 = vld [vmem:[%s1 + $0x4c8] sm:$0xf]
    %v339 = vld [vmem:[%s1 + $0x4cc] sm:$0xf]
    %v340 = vld [vmem:[%s1 + $0x4d0] sm:$0xf]
    %v341 = vld [vmem:[%s1 + $0x4d4] sm:$0xf]
    %v342 = vld [vmem:[%s1 + $0x4d8] sm:$0xf]
    %v343 = vld [vmem:[%s1 + $0x4dc] sm:$0xf]
    %v344 = vld [vmem:[%s1 + $0x4e0] sm:$0xf]
    %v345 = vld [vmem:[%s1 + $0x4e4] sm:$0xf]
    %v346 = vld [vmem:[%s1 + $0x4e8] sm:$0xf]
    %v347 = vld [vmem:[%s1 + $0x4ec] sm:$0xf]
    %v348 = vld [vmem:[%s1 + $0x4f0] sm:$0xf]
    %v349 = vld [vmem:[%s1 + $0x4f4] sm:$0xf]
    %v350 = vld [vmem:[%s1 + $0x4f8] sm:$0xf]
    %v351 = vld [vmem:[%s1 + $0x4fc] sm:$0xf]
    %v352 = vld [vmem:[%s1 + $0x500] sm:$0xf]
    %v353 = vld [vmem:[%s1 + $0x504] sm:$0xf]
    %v354 = vld [vmem:[%s1 + $0x508] sm:$0xf]
    %v355 = vld [vmem:[%s1 + $0x50c] sm:$0xf]
    %v356 = vld [vmem:[%s1 + $0x510] sm:$0xf]
    %v357 = vld [vmem:[%s1 + $0x514] sm:$0xf]
    %v358 = vld [vmem:[%s1 + $0x518] sm:$0xf]
    %v359 = vld [vmem:[%s1 + $0x51c] sm:$0xf]
    %v360 = vld [vmem:[%s1 + $0x520] sm:$0xf]
    %v361 = vld [vmem:[%s1 + $0x524] sm:$0xf]
    %v362 = vld [vmem:[%s1 + $0x528] sm:$0xf]
    %v363 = vld [vmem:[%s1 + $0x52c] sm:$0xf]
    %v364 = vld [vmem:[%s1 + $0x530] sm:$0xf]
    %v365 = vld [vmem:[%s1 + $0x534] sm:$0xf]
    %v366 = vld [vmem:[%s1 + $0x538] sm:$0xf]
    %v367 = vld [vmem:[%s1 + $0x53c] sm:$0xf]
    %v368 = vld [vmem:[%s1 + $0x540] sm:$0xf]
    %v369 = vld [vmem:[%s1 + $0x544] sm:$0xf]
    %v370 = vld [vmem:[%s1 + $0x548] sm:$0xf]
    %v371 = vld [vmem:[%s1 + $0x54c] sm:$0xf]
    %v372 = vld [vmem:[%s1 + $0x550] sm:$0xf]
    %v373 = vld [vmem:[%s1 + $0x554] sm:$0xf]
    %v374 = vld [vmem:[%s1 + $0x558] sm:$0xf]
    %v375 = vld [vmem:[%s1 + $0x55c] sm:$0xf]
    %v376 = vld [vmem:[%s1 + $0x560] sm:$0xf]
    %v377 = vld [vmem:[%s1 + $0x564] sm:$0xf]
    %v378 = vld [vmem:[%s1 + $0x568] sm:$0xf]
    %v379 = vld [vmem:[%s1 + $0x56c] sm:$0xf]
    %v380 = vld [vmem:[%s1 + $0x570] sm:$0xf]
    %v381 = vld [vmem:[%s1 + $0x574] sm:$0xf]
    %v382 = vld [vmem:[%s1 + $0x578] sm:$0xf]
    %v383 = vld [vmem:[%s1 + $0x57c] sm:$0xf]
    %v384 = vld [vmem:[%s1 + $0x580] sm:$0xf]
    %v385 = vld [vmem:[%s1 + $0x584] sm:$0xf]
    %v386 = vld [vmem:[%s1 + $0x588] sm:$0xf]
    %v387 = vld [vmem:[%s1 + $0x58c] sm:$0xf]
    %v388 = vld [vmem:[%s1 + $0x590] sm:$0xf]
    %v389 = vld [vmem:[%s1 + $0x594] sm:$0xf]
    %v390 = vld [vmem:[%s1 + $0x598] sm:$0xf]
    %v391 = vld [vmem:[%s1 + $0x59c] sm:$0xf]
    %v392 = vld [vmem:[%s1 + $0x5a0] sm:$0xf]
    %v393 = vld [vmem:[%s1 + $0x5a4] sm:$0xf]
    %v394 = vld [vmem:[%s1 + $0x5a8] sm:$0xf]
    %v395 = vld [vmem:[%s1 + $0x5ac] sm:$0xf]
    %v396 = vld [vmem:[%s1 + $0x5b0] sm:$0xf]
    %v397 = vld [vmem:[%s1 + $0x5b4] sm:$0xf]
    %v398 = vld [vmem:[%s1 + $0x5b8] sm:$0xf]
    %v399 = vld [vmem:[%s1 + $0x5bc] sm:$0xf]
    %v400 = vld [vmem:[%s1 + $0x5c0] sm:$0xf]
    %v401 = vld [vmem:[%s1 + $0x5c4] sm:$0xf]
    %v402 = vld [vmem:[%s1 + $0x5c8] sm:$0xf]
    %v403 = vld [vmem:[%s1 + $0x5cc] sm:$0xf]
    %v404 = vld [vmem:[%s1 + $0x5d0] sm:$0xf]
    %v405 = vld [vmem:[%s1 + $0x5d4] sm:$0xf]
    %v406 = vld [vmem:[%s1 + $0x5d8] sm:$0xf]
    %v407 = vld [vmem:[%s1 + $0x5dc] sm:$0xf]
    %v408 = vld [vmem:[%s1 + $0x5e0] sm:$0xf]
    %v409 = vld [vmem:[%s1 + $0x5e4] sm:$0xf]
    %v410 = vld [vmem:[%s1 + $0x5e8] sm:$0xf]
    %v411 = vld [vmem:[%s1 + $0x5ec] sm:$0xf]
    %v412 = vld [vmem:[%s1 + $0x5f0] sm:$0xf]
    %v413 = vld [vmem:[%s1 + $0x5f4] sm:$0xf]
    %v414 = vld [vmem:[%s1 + $0x5f8] sm:$0xf]
    %v415 = vld [vmem:[%s1 + $0x5fc] sm:$0xf]
    %v416 = vld [vmem:[%s1 + $0x600] sm:$0xf]
    %v417 = vld [vmem:[%s1 + $0x604] sm:$0xf]
    %v418 = vld [vmem:[%s1 + $0x608] sm:$0xf]
    %v419 = vld [vmem:[%s1 + $0x60c] sm:$0xf]
    %v420 = vld [vmem:[%s1 + $0x610] sm:$0xf]
    %v421 = vld [vmem:[%s1 + $0x614] sm:$0xf]
    %v422 = vld [vmem:[%s1 + $0x618] sm:$0xf]
    %v423 = vld [vmem:[%s1 + $0x61c] sm:$0xf]
    %v424 = vld [vmem:[%s1 + $0x620] sm:$0xf]
    %v425 = vld [vmem:[%s1 + $0x624] sm:$0xf]
    %v426 = vld [vmem:[%s1 + $0x628] sm:$0xf]
    %v427 = vld [vmem:[%s1 + $0x62c] sm:$0xf]
    %v428 = vld [vmem:[%s1 + $0x630] sm:$0xf]
    %v429 = vld [vmem:[%s1 + $0x634] sm:$0xf]
    %v430 = vld [vmem:[%s1 + $0x638] sm:$0xf]
    %v431 = vld [vmem:[%s1 + $0x63c] sm:$0xf]
    %v432 = vld [vmem:[%s2] sm:$0x1]
    %v434 = vlaneseq
    %v435 = vshrl.u32 %v434, 7
    %v436 = vsub.s32 0, %v435
    %v437 = vrot.slane %v432, %v436
    %v443 = vcombine.high %v28, %v28
    %v445 = vunpack.c.l.s4 1966171168
    %v446 = vunpack.c.0.s8 %v445
    %v447 = vlaneseq
    %v448 = vshrl.u32 %v447, 7
    %v449 = vsub.s32 %v446, %v448
    %v450 = vrot.slane %v28, %v449
    %v452 = vunpack.c.l.s4 1966171168
    %v453 = vunpack.c.0.s8 %v452
    %v454 = vlaneseq
    %v455 = vshrl.u32 %v454, 7
    %v456 = vsub.s32 %v453, %v455
    %v457 = vrot.slane %v443, %v456
    %v458 = vcombine.high %v450, %v450
    %v459 = vcombine.high %v457, %v457
    %v461 = vunpack.c.l.s4 1966171168
    %v462 = vunpack.c.0.s8 %v461
    %v463 = vlaneseq
    %v464 = vshrl.u32 %v463, 7
    %v465 = vsub.s32 %v462, %v464
    %v466 = vrot.slane %v450, %v465
    %v468 = vunpack.c.l.s4 1966171168
    %v469 = vunpack.c.0.s8 %v468
    %v470 = vlaneseq
    %v471 = vshrl.u32 %v470, 7
    %v472 = vsub.s32 %v469, %v471
    %v473 = vrot.slane %v457, %v472
    %v475 = vunpack.c.l.s4 1966171168
    %v476 = vunpack.c.0.s8 %v475
    %v477 = vlaneseq
    %v478 = vshrl.u32 %v477, 7
    %v479 = vsub.s32 %v476, %v478
    %v480 = vrot.slane %v458, %v479
    %v482 = vunpack.c.l.s4 1966171168
    %v483 = vunpack.c.0.s8 %v482
    %v484 = vlaneseq
    %v485 = vshrl.u32 %v484, 7
    %v486 = vsub.s32 %v483, %v485
    %v487 = vrot.slane %v459, %v486
    %v488 = vcombine.high %v466, %v466
    %v489 = vcombine.high %v473, %v473
    %v490 = vcombine.high %v480, %v480
    %v491 = vcombine.high %v487, %v487
    %v492 = vcombine.high %v29, %v29
    %v494 = vunpack.c.l.s4 1966171168
    %v495 = vunpack.c.0.s8 %v494
    %v496 = vlaneseq
    %v497 = vshrl.u32 %v496, 7
    %v498 = vsub.s32 %v495, %v497
    %v499 = vrot.slane %v29, %v498
    %v501 = vunpack.c.l.s4 1966171168
    %v502 = vunpack.c.0.s8 %v501
    %v503 = vlaneseq
    %v504 = vshrl.u32 %v503, 7
    %v505 = vsub.s32 %v502, %v504
    %v506 = vrot.slane %v492, %v505
    %v507 = vcombine.high %v499, %v499
    %v508 = vcombine.high %v506, %v506
    %v510 = vunpack.c.l.s4 1966171168
    %v511 = vunpack.c.0.s8 %v510
    %v512 = vlaneseq
    %v513 = vshrl.u32 %v512, 7
    %v514 = vsub.s32 %v511, %v513
    %v515 = vrot.slane %v499, %v514
    %v517 = vunpack.c.l.s4 1966171168
    %v518 = vunpack.c.0.s8 %v517
    %v519 = vlaneseq
    %v520 = vshrl.u32 %v519, 7
    %v521 = vsub.s32 %v518, %v520
    %v522 = vrot.slane %v506, %v521
    %v524 = vunpack.c.l.s4 1966171168
    %v525 = vunpack.c.0.s8 %v524
    %v526 = vlaneseq
    %v527 = vshrl.u32 %v526, 7
    %v528 = vsub.s32 %v525, %v527
    %v529 = vrot.slane %v507, %v528
    %v531 = vunpack.c.l.s4 1966171168
    %v532 = vunpack.c.0.s8 %v531
    %v533 = vlaneseq
    %v534 = vshrl.u32 %v533, 7
    %v535 = vsub.s32 %v532, %v534
    %v536 = vrot.slane %v508, %v535
    %v537 = vcombine.high %v515, %v515
    %v538 = vcombine.high %v522, %v522
    %v539 = vcombine.high %v529, %v529
    %v540 = vcombine.high %v536, %v536
    %v541 = vcombine.high %v30, %v30
    %v543 = vunpack.c.l.s4 1966171168
    %v544 = vunpack.c.0.s8 %v543
    %v545 = vlaneseq
    %v546 = vshrl.u32 %v545, 7
    %v547 = vsub.s32 %v544, %v546
    %v548 = vrot.slane %v30, %v547
    %v550 = vunpack.c.l.s4 1966171168
    %v551 = vunpack.c.0.s8 %v550
    %v552 = vlaneseq
    %v553 = vshrl.u32 %v552, 7
    %v554 = vsub.s32 %v551, %v553
    %v555 = vrot.slane %v541, %v554
    %v556 = vcombine.high %v548, %v548
    %v557 = vcombine.high %v555, %v555
    %v559 = vunpack.c.l.s4 1966171168
    %v560 = vunpack.c.0.s8 %v559
    %v561 = vlaneseq
    %v562 = vshrl.u32 %v561, 7
    %v563 = vsub.s32 %v560, %v562
    %v564 = vrot.slane %v548, %v563
    %v566 = vunpack.c.l.s4 1966171168
    %v567 = vunpack.c.0.s8 %v566
    %v568 = vlaneseq
    %v569 = vshrl.u32 %v568, 7
    %v570 = vsub.s32 %v567, %v569
    %v571 = vrot.slane %v555, %v570
    %v573 = vunpack.c.l.s4 1966171168
    %v574 = vunpack.c.0.s8 %v573
    %v575 = vlaneseq
    %v576 = vshrl.u32 %v575, 7
    %v577 = vsub.s32 %v574, %v576
    %v578 = vrot.slane %v556, %v577
    %v580 = vunpack.c.l.s4 1966171168
    %v581 = vunpack.c.0.s8 %v580
    %v582 = vlaneseq
    %v583 = vshrl.u32 %v582, 7
    %v584 = vsub.s32 %v581, %v583
    %v585 = vrot.slane %v557, %v584
    %v586 = vcombine.high %v564, %v564
    %v587 = vcombine.high %v571, %v571
    %v588 = vcombine.high %v578, %v578
    %v589 = vcombine.high %v585, %v585
    %v591 = vunpack.c.l.s4 1966171168
    %v592 = vunpack.c.0.s8 %v591
    %v593 = vlaneseq
    %v594 = vshrl.u32 %v593, 7
    %v595 = vsub.s32 %v592, %v594
    %v596 = vrot.slane %v31, %v595
    %v598 = vunpack.c.l.s4 1966171168
    %v599 = vunpack.c.0.s8 %v598
    %v600 = vlaneseq
    %v601 = vshrl.u32 %v600, 7
    %v602 = vsub.s32 %v599, %v601
    %v603 = vrot.slane %v596, %v602
    %v1029 = vunpack.c.l.b16 %v32
    %v1030 = vunpack.c.l.b16 %v33
    %v1031 = vunpack.c.l.b16 %v34
    %v1032 = vunpack.c.l.b16 %v35
    %v1033 = vunpack.c.l.b16 %v36
    %v1034 = vunpack.c.l.b16 %v37
    %v1035 = vunpack.c.l.b16 %v38
    %v1036 = vunpack.c.l.b16 %v39
    %v1037 = vunpack.c.l.b16 %v40
    %v1038 = vunpack.c.l.b16 %v41
    %v1039 = vunpack.c.l.b16 %v42
    %v1040 = vunpack.c.l.b16 %v43
    %v1041 = vunpack.c.l.b16 %v44
    %v1042 = vunpack.c.l.b16 %v45
    %v1043 = vunpack.c.l.b16 %v46
    %v1044 = vunpack.c.l.b16 %v47
    %v1045 = vunpack.c.l.b16 %v48
    %v1046 = vunpack.c.l.b16 %v49
    %v1047 = vunpack.c.l.b16 %v50
    %v1048 = vunpack.c.l.b16 %v51
    %v1049 = vunpack.c.l.b16 %v52
    %v1050 = vunpack.c.l.b16 %v53
    %v1051 = vunpack.c.l.b16 %v54
    %v1052 = vunpack.c.l.b16 %v55
    %v1053 = vunpack.c.l.b16 %v56
    %v1054 = vunpack.c.l.b16 %v57
    %v1055 = vunpack.c.l.b16 %v58
    %v1056 = vunpack.c.l.b16 %v59
    %v1057 = vunpack.c.l.b16 %v60
    %v1058 = vunpack.c.l.b16 %v61
    %v1059 = vunpack.c.l.b16 %v62
    %v1060 = vunpack.c.l.b16 %v63
    %v1061 = vunpack.c.l.b16 %v64
    %v1062 = vunpack.c.l.b16 %v65
    %v1063 = vunpack.c.l.b16 %v66
    %v1064 = vunpack.c.l.b16 %v67
    %v1065 = vunpack.c.l.b16 %v68
    %v1066 = vunpack.c.l.b16 %v69
    %v1067 = vunpack.c.l.b16 %v70
    %v1068 = vunpack.c.l.b16 %v71
    %v1069 = vunpack.c.l.b16 %v72
    %v1070 = vunpack.c.l.b16 %v73
    %v1071 = vunpack.c.l.b16 %v74
    %v1072 = vunpack.c.l.b16 %v75
    %v1073 = vunpack.c.l.b16 %v76
    %v1074 = vunpack.c.l.b16 %v77
    %v1075 = vunpack.c.l.b16 %v78
    %v1076 = vunpack.c.l.b16 %v79
    %v1077 = vunpack.c.l.b16 %v80
    %v1078 = vunpack.c.l.b16 %v81
    %v1079 = vunpack.c.l.b16 %v82
    %v1080 = vunpack.c.l.b16 %v83
    %v1081 = vunpack.c.l.b16 %v84
    %v1082 = vunpack.c.l.b16 %v85
    %v1083 = vunpack.c.l.b16 %v86
    %v1084 = vunpack.c.l.b16 %v87
    %v1085 = vunpack.c.l.b16 %v88
    %v1086 = vunpack.c.l.b16 %v89
    %v1087 = vunpack.c.l.b16 %v90
    %v1088 = vunpack.c.l.b16 %v91
    %v1089 = vunpack.c.l.b16 %v92
    %v1090 = vunpack.c.l.b16 %v93
    %v1091 = vunpack.c.l.b16 %v94
    %v1092 = vunpack.c.l.b16 %v95
    %v1093 = vunpack.c.l.b16 %v96
    %v1094 = vunpack.c.l.b16 %v97
    %v1095 = vunpack.c.l.b16 %v98
    %v1096 = vunpack.c.l.b16 %v99
    %v1097 = vunpack.c.l.b16 %v100
    %v1098 = vunpack.c.l.b16 %v101
    %v1099 = vunpack.c.l.b16 %v102
    %v1100 = vunpack.c.l.b16 %v103
    %v1101 = vunpack.c.l.b16 %v104
    %v1102 = vunpack.c.l.b16 %v105
    %v1103 = vunpack.c.l.b16 %v106
    %v1104 = vunpack.c.l.b16 %v107
    %v1105 = vunpack.c.l.b16 %v108
    %v1106 = vunpack.c.l.b16 %v109
    %v1107 = vunpack.c.l.b16 %v110
    %v1108 = vunpack.c.l.b16 %v111
    %v1109 = vunpack.c.l.b16 %v112
    %v1110 = vunpack.c.l.b16 %v113
    %v1111 = vunpack.c.l.b16 %v114
    %v1112 = vunpack.c.l.b16 %v115
    %v1113 = vunpack.c.l.b16 %v116
    %v1114 = vunpack.c.l.b16 %v117
    %v1115 = vunpack.c.l.b16 %v118
    %v1116 = vunpack.c.l.b16 %v119
    %v1117 = vunpack.c.l.b16 %v120
    %v1118 = vunpack.c.l.b16 %v121
    %v1119 = vunpack.c.l.b16 %v122
    %v1120 = vunpack.c.l.b16 %v123
    %v1121 = vunpack.c.l.b16 %v124
    %v1122 = vunpack.c.l.b16 %v125
    %v1123 = vunpack.c.l.b16 %v126
    %v1124 = vunpack.c.l.b16 %v127
    %v1125 = vunpack.c.l.b16 %v128
    %v1126 = vunpack.c.l.b16 %v129
    %v1127 = vunpack.c.l.b16 %v130
    %v1128 = vunpack.c.l.b16 %v131
    %v1129 = vunpack.c.l.b16 %v132
    %v1130 = vunpack.c.l.b16 %v133
    %v1131 = vunpack.c.l.b16 %v134
    %v1132 = vunpack.c.l.b16 %v135
    %v1133 = vunpack.c.l.b16 %v136
    %v1134 = vunpack.c.l.b16 %v137
    %v1135 = vunpack.c.l.b16 %v138
    %v1136 = vunpack.c.l.b16 %v139
    %v1137 = vunpack.c.l.b16 %v140
    %v1138 = vunpack.c.l.b16 %v141
    %v1139 = vunpack.c.l.b16 %v142
    %v1140 = vunpack.c.l.b16 %v143
    %v1141 = vunpack.c.l.b16 %v144
    %v1142 = vunpack.c.l.b16 %v145
    %v1143 = vunpack.c.l.b16 %v146
    %v1144 = vunpack.c.l.b16 %v147
    %v1145 = vunpack.c.l.b16 %v148
    %v1146 = vunpack.c.l.b16 %v149
    %v1147 = vunpack.c.l.b16 %v150
    %v1148 = vunpack.c.l.b16 %v151
    %v1149 = vunpack.c.l.b16 %v152
    %v1150 = vunpack.c.l.b16 %v153
    %v1151 = vunpack.c.l.b16 %v154
    %v1152 = vunpack.c.l.b16 %v155
    %v1153 = vunpack.c.l.b16 %v156
    %v1154 = vunpack.c.l.b16 %v157
    %v1155 = vunpack.c.l.b16 %v158
    %v1156 = vunpack.c.l.b16 %v159
    %v1157 = vunpack.c.l.b16 %v160
    %v1158 = vunpack.c.l.b16 %v161
    %v1159 = vunpack.c.l.b16 %v162
    %v1160 = vunpack.c.l.b16 %v163
    %v1161 = vunpack.c.l.b16 %v164
    %v1162 = vunpack.c.l.b16 %v165
    %v1163 = vunpack.c.l.b16 %v166
    %v1164 = vunpack.c.l.b16 %v167
    %v1165 = vunpack.c.l.b16 %v168
    %v1166 = vunpack.c.l.b16 %v169
    %v1167 = vunpack.c.l.b16 %v170
    %v1168 = vunpack.c.l.b16 %v171
    %v1169 = vunpack.c.l.b16 %v172
    %v1170 = vunpack.c.l.b16 %v173
    %v1171 = vunpack.c.l.b16 %v174
    %v1172 = vunpack.c.l.b16 %v175
    %v1173 = vunpack.c.l.b16 %v176
    %v1174 = vunpack.c.l.b16 %v177
    %v1175 = vunpack.c.l.b16 %v178
    %v1176 = vunpack.c.l.b16 %v179
    %v1177 = vunpack.c.l.b16 %v180
    %v1178 = vunpack.c.l.b16 %v181
    %v1179 = vunpack.c.l.b16 %v182
    %v1180 = vunpack.c.l.b16 %v183
    %v1181 = vunpack.c.l.b16 %v184
    %v1182 = vunpack.c.l.b16 %v185
    %v1183 = vunpack.c.l.b16 %v186
    %v1184 = vunpack.c.l.b16 %v187
    %v1185 = vunpack.c.l.b16 %v188
    %v1186 = vunpack.c.l.b16 %v189
    %v1187 = vunpack.c.l.b16 %v190
    %v1188 = vunpack.c.l.b16 %v191
    %v1189 = vunpack.c.l.b16 %v192
    %v1190 = vunpack.c.l.b16 %v193
    %v1191 = vunpack.c.l.b16 %v194
    %v1192 = vunpack.c.l.b16 %v195
    %v1193 = vunpack.c.l.b16 %v196
    %v1194 = vunpack.c.l.b16 %v197
    %v1195 = vunpack.c.l.b16 %v198
    %v1196 = vunpack.c.l.b16 %v199
    %v1197 = vunpack.c.l.b16 %v200
    %v1198 = vunpack.c.l.b16 %v201
    %v1199 = vunpack.c.l.b16 %v202
    %v1200 = vunpack.c.l.b16 %v203
    %v1201 = vunpack.c.l.b16 %v204
    %v1202 = vunpack.c.l.b16 %v205
    %v1203 = vunpack.c.l.b16 %v206
    %v1204 = vunpack.c.l.b16 %v207
    %v1205 = vunpack.c.l.b16 %v208
    %v1206 = vunpack.c.l.b16 %v209
    %v1207 = vunpack.c.l.b16 %v210
    %v1208 = vunpack.c.l.b16 %v211
    %v1209 = vunpack.c.l.b16 %v212
    %v1210 = vunpack.c.l.b16 %v213
    %v1211 = vunpack.c.l.b16 %v214
    %v1212 = vunpack.c.l.b16 %v215
    %v1213 = vunpack.c.l.b16 %v216
    %v1214 = vunpack.c.l.b16 %v217
    %v1215 = vunpack.c.l.b16 %v218
    %v1216 = vunpack.c.l.b16 %v219
    %v1217 = vunpack.c.l.b16 %v220
    %v1218 = vunpack.c.l.b16 %v221
    %v1219 = vunpack.c.l.b16 %v222
    %v1220 = vunpack.c.l.b16 %v223
    %v1221 = vunpack.c.l.b16 %v224
    %v1222 = vunpack.c.l.b16 %v225
    %v1223 = vunpack.c.l.b16 %v226
    %v1224 = vunpack.c.l.b16 %v227
    %v1225 = vunpack.c.l.b16 %v228
    %v1226 = vunpack.c.l.b16 %v229
    %v1227 = vunpack.c.l.b16 %v230
    %v1228 = vunpack.c.l.b16 %v231
    %v1229 = vunpack.c.l.b16 %v232
    %v1230 = vunpack.c.l.b16 %v233
    %v1231 = vunpack.c.l.b16 %v234
    %v1232 = vunpack.c.l.b16 %v235
    %v1233 = vunpack.c.l.b16 %v236
    %v1234 = vunpack.c.l.b16 %v237
    %v1235 = vunpack.c.l.b16 %v238
    %v1236 = vunpack.c.l.b16 %v239
    %v1237 = vunpack.c.l.b16 %v240
    %v1238 = vunpack.c.l.b16 %v241
    %v1239 = vunpack.c.l.b16 %v242
    %v1240 = vunpack.c.l.b16 %v243
    %v1241 = vunpack.c.l.b16 %v244
    %v1242 = vunpack.c.l.b16 %v245
    %v1243 = vunpack.c.l.b16 %v246
    %v1244 = vunpack.c.l.b16 %v247
    %v1245 = vunpack.c.l.b16 %v248
    %v1246 = vunpack.c.l.b16 %v249
    %v1247 = vunpack.c.l.b16 %v250
    %v1248 = vunpack.c.l.b16 %v251
    %v1249 = vunpack.c.l.b16 %v252
    %v1250 = vunpack.c.l.b16 %v253
    %v1251 = vunpack.c.l.b16 %v254
    %v1252 = vunpack.c.l.b16 %v255
    %v1253 = vunpack.c.l.b16 %v256
    %v1254 = vunpack.c.l.b16 %v257
    %v1255 = vunpack.c.l.b16 %v258
    %v1256 = vunpack.c.l.b16 %v259
    %v1257 = vunpack.c.l.b16 %v260
    %v1258 = vunpack.c.l.b16 %v261
    %v1259 = vunpack.c.l.b16 %v262
    %v1260 = vunpack.c.l.b16 %v263
    %v1261 = vunpack.c.l.b16 %v264
    %v1262 = vunpack.c.l.b16 %v265
    %v1263 = vunpack.c.l.b16 %v266
    %v1264 = vunpack.c.l.b16 %v267
    %v1265 = vunpack.c.l.b16 %v268
    %v1266 = vunpack.c.l.b16 %v269
    %v1267 = vunpack.c.l.b16 %v270
    %v1268 = vunpack.c.l.b16 %v271
    %v1269 = vunpack.c.l.b16 %v272
    %v1270 = vunpack.c.l.b16 %v273
    %v1271 = vunpack.c.l.b16 %v274
    %v1272 = vunpack.c.l.b16 %v275
    %v1273 = vunpack.c.l.b16 %v276
    %v1274 = vunpack.c.l.b16 %v277
    %v1275 = vunpack.c.l.b16 %v278
    %v1276 = vunpack.c.l.b16 %v279
    %v1277 = vunpack.c.l.b16 %v280
    %v1278 = vunpack.c.l.b16 %v281
    %v1279 = vunpack.c.l.b16 %v282
    %v1280 = vunpack.c.l.b16 %v283
    %v1281 = vunpack.c.l.b16 %v284
    %v1282 = vunpack.c.l.b16 %v285
    %v1283 = vunpack.c.l.b16 %v286
    %v1284 = vunpack.c.l.b16 %v287
    %v1285 = vunpack.c.l.b16 %v288
    %v1286 = vunpack.c.l.b16 %v289
    %v1287 = vunpack.c.l.b16 %v290
    %v1288 = vunpack.c.l.b16 %v291
    %v1289 = vunpack.c.l.b16 %v292
    %v1290 = vunpack.c.l.b16 %v293
    %v1291 = vunpack.c.l.b16 %v294
    %v1292 = vunpack.c.l.b16 %v295
    %v1293 = vunpack.c.l.b16 %v296
    %v1294 = vunpack.c.l.b16 %v297
    %v1295 = vunpack.c.l.b16 %v298
    %v1296 = vunpack.c.l.b16 %v299
    %v1297 = vunpack.c.l.b16 %v300
    %v1298 = vunpack.c.l.b16 %v301
    %v1299 = vunpack.c.l.b16 %v302
    %v1300 = vunpack.c.l.b16 %v303
    %v1301 = vunpack.c.l.b16 %v304
    %v1302 = vunpack.c.l.b16 %v305
    %v1303 = vunpack.c.l.b16 %v306
    %v1304 = vunpack.c.l.b16 %v307
    %v1305 = vunpack.c.l.b16 %v308
    %v1306 = vunpack.c.l.b16 %v309
    %v1307 = vunpack.c.l.b16 %v310
    %v1308 = vunpack.c.l.b16 %v311
    %v1309 = vunpack.c.l.b16 %v312
    %v1310 = vunpack.c.l.b16 %v313
    %v1311 = vunpack.c.l.b16 %v314
    %v1312 = vunpack.c.l.b16 %v315
    %v1313 = vunpack.c.l.b16 %v316
    %v1314 = vunpack.c.l.b16 %v317
    %v1315 = vunpack.c.l.b16 %v318
    %v1316 = vunpack.c.l.b16 %v319
    %v1317 = vunpack.c.l.b16 %v320
    %v1318 = vunpack.c.l.b16 %v321
    %v1319 = vunpack.c.l.b16 %v322
    %v1320 = vunpack.c.l.b16 %v323
    %v1321 = vunpack.c.l.b16 %v324
    %v1322 = vunpack.c.l.b16 %v325
    %v1323 = vunpack.c.l.b16 %v326
    %v1324 = vunpack.c.l.b16 %v327
    %v1325 = vunpack.c.l.b16 %v328
    %v1326 = vunpack.c.l.b16 %v329
    %v1327 = vunpack.c.l.b16 %v330
    %v1328 = vunpack.c.l.b16 %v331
    %v1329 = vunpack.c.l.b16 %v332
    %v1330 = vunpack.c.l.b16 %v333
    %v1331 = vunpack.c.l.b16 %v334
    %v1332 = vunpack.c.l.b16 %v335
    %v1333 = vunpack.c.l.b16 %v336
    %v1334 = vunpack.c.l.b16 %v337
    %v1335 = vunpack.c.l.b16 %v338
    %v1336 = vunpack.c.l.b16 %v339
    %v1337 = vunpack.c.l.b16 %v340
    %v1338 = vunpack.c.l.b16 %v341
    %v1339 = vunpack.c.l.b16 %v342
    %v1340 = vunpack.c.l.b16 %v343
    %v1341 = vunpack.c.l.b16 %v344
    %v1342 = vunpack.c.l.b16 %v345
    %v1343 = vunpack.c.l.b16 %v346
    %v1344 = vunpack.c.l.b16 %v347
    %v1345 = vunpack.c.l.b16 %v348
    %v1346 = vunpack.c.l.b16 %v349
    %v1347 = vunpack.c.l.b16 %v350
    %v1348 = vunpack.c.l.b16 %v351
    %v1349 = vunpack.c.l.b16 %v352
    %v1350 = vunpack.c.l.b16 %v353
    %v1351 = vunpack.c.l.b16 %v354
    %v1352 = vunpack.c.l.b16 %v355
    %v1353 = vunpack.c.l.b16 %v356
    %v1354 = vunpack.c.l.b16 %v357
    %v1355 = vunpack.c.l.b16 %v358
    %v1356 = vunpack.c.l.b16 %v359
    %v1357 = vunpack.c.l.b16 %v360
    %v1358 = vunpack.c.l.b16 %v361
    %v1359 = vunpack.c.l.b16 %v362
    %v1360 = vunpack.c.l.b16 %v363
    %v1361 = vunpack.c.l.b16 %v364
    %v1362 = vunpack.c.l.b16 %v365
    %v1363 = vunpack.c.l.b16 %v366
    %v1364 = vunpack.c.l.b16 %v367
    %v1365 = vunpack.c.l.b16 %v368
    %v1366 = vunpack.c.l.b16 %v369
    %v1367 = vunpack.c.l.b16 %v370
    %v1368 = vunpack.c.l.b16 %v371
    %v1369 = vunpack.c.l.b16 %v372
    %v1370 = vunpack.c.l.b16 %v373
    %v1371 = vunpack.c.l.b16 %v374
    %v1372 = vunpack.c.l.b16 %v375
    %v1373 = vunpack.c.l.b16 %v376
    %v1374 = vunpack.c.l.b16 %v377
    %v1375 = vunpack.c.l.b16 %v378
    %v1376 = vunpack.c.l.b16 %v379
    %v1377 = vunpack.c.l.b16 %v380
    %v1378 = vunpack.c.l.b16 %v381
    %v1379 = vunpack.c.l.b16 %v382
    %v1380 = vunpack.c.l.b16 %v383
    %v1381 = vunpack.c.l.b16 %v384
    %v1382 = vunpack.c.l.b16 %v385
    %v1383 = vunpack.c.l.b16 %v386
    %v1384 = vunpack.c.l.b16 %v387
    %v1385 = vunpack.c.l.b16 %v388
    %v1386 = vunpack.c.l.b16 %v389
    %v1387 = vunpack.c.l.b16 %v390
    %v1388 = vunpack.c.l.b16 %v391
    %v1389 = vunpack.c.l.b16 %v392
    %v1390 = vunpack.c.l.b16 %v393
    %v1391 = vunpack.c.l.b16 %v394
    %v1392 = vunpack.c.l.b16 %v395
    %v1393 = vunpack.c.l.b16 %v396
    %v1394 = vunpack.c.l.b16 %v397
    %v1395 = vunpack.c.l.b16 %v398
    %v1396 = vunpack.c.l.b16 %v399
    %v1397 = vunpack.c.l.b16 %v400
    %v1398 = vunpack.c.l.b16 %v401
    %v1399 = vunpack.c.l.b16 %v402
    %v1400 = vunpack.c.l.b16 %v403
    %v1401 = vunpack.c.l.b16 %v404
    %v1402 = vunpack.c.l.b16 %v405
    %v1403 = vunpack.c.l.b16 %v406
    %v1404 = vunpack.c.l.b16 %v407
    %v1405 = vunpack.c.l.b16 %v408
    %v1406 = vunpack.c.l.b16 %v409
    %v1407 = vunpack.c.l.b16 %v410
    %v1408 = vunpack.c.l.b16 %v411
    %v1409 = vunpack.c.l.b16 %v412
    %v1410 = vunpack.c.l.b16 %v413
    %v1411 = vunpack.c.l.b16 %v414
    %v1412 = vunpack.c.l.b16 %v415
    %v1413 = vunpack.c.l.b16 %v416
    %v1414 = vunpack.c.l.b16 %v417
    %v1415 = vunpack.c.l.b16 %v418
    %v1416 = vunpack.c.l.b16 %v419
    %v1417 = vunpack.c.l.b16 %v420
    %v1418 = vunpack.c.l.b16 %v421
    %v1419 = vunpack.c.l.b16 %v422
    %v1420 = vunpack.c.l.b16 %v423
    %v1421 = vunpack.c.l.b16 %v424
    %v1422 = vunpack.c.l.b16 %v425
    %v1423 = vunpack.c.l.b16 %v426
    %v1424 = vunpack.c.l.b16 %v427
    %v1425 = vunpack.c.l.b16 %v428
    %v1426 = vunpack.c.l.b16 %v429
    %v1427 = vunpack.c.l.b16 %v430
    %v1428 = vunpack.c.l.b16 %v431
    %v1429 = vpack.c.b16 %v1030, %v1029
    %v1430 = vpack.c.b16 %v1032, %v1031
    %v1431 = vpack.c.b16 %v1034, %v1033
    %v1432 = vpack.c.b16 %v1036, %v1035
    %v1433 = vpack.c.b16 %v1038, %v1037
    %v1434 = vpack.c.b16 %v1040, %v1039
    %v1435 = vpack.c.b16 %v1042, %v1041
    %v1436 = vpack.c.b16 %v1044, %v1043
    %v1437 = vpack.c.b16 %v1046, %v1045
    %v1438 = vpack.c.b16 %v1048, %v1047
    %v1439 = vpack.c.b16 %v1050, %v1049
    %v1440 = vpack.c.b16 %v1052, %v1051
    %v1441 = vpack.c.b16 %v1054, %v1053
    %v1442 = vpack.c.b16 %v1056, %v1055
    %v1443 = vpack.c.b16 %v1058, %v1057
    %v1444 = vpack.c.b16 %v1060, %v1059
    %v1445 = vpack.c.b16 %v1062, %v1061
    %v1446 = vpack.c.b16 %v1064, %v1063
    %v1447 = vpack.c.b16 %v1066, %v1065
    %v1448 = vpack.c.b16 %v1068, %v1067
    %v1449 = vpack.c.b16 %v1070, %v1069
    %v1450 = vpack.c.b16 %v1072, %v1071
    %v1451 = vpack.c.b16 %v1074, %v1073
    %v1452 = vpack.c.b16 %v1076, %v1075
    %v1453 = vpack.c.b16 %v1078, %v1077
    %v1454 = vpack.c.b16 %v1080, %v1079
    %v1455 = vpack.c.b16 %v1082, %v1081
    %v1456 = vpack.c.b16 %v1084, %v1083
    %v1457 = vpack.c.b16 %v1086, %v1085
    %v1458 = vpack.c.b16 %v1088, %v1087
    %v1459 = vpack.c.b16 %v1090, %v1089
    %v1460 = vpack.c.b16 %v1092, %v1091
    %v1461 = vpack.c.b16 %v1094, %v1093
    %v1462 = vpack.c.b16 %v1096, %v1095
    %v1463 = vpack.c.b16 %v1098, %v1097
    %v1464 = vpack.c.b16 %v1100, %v1099
    %v1465 = vpack.c.b16 %v1102, %v1101
    %v1466 = vpack.c.b16 %v1104, %v1103
    %v1467 = vpack.c.b16 %v1106, %v1105
    %v1468 = vpack.c.b16 %v1108, %v1107
    %v1469 = vpack.c.b16 %v1110, %v1109
    %v1470 = vpack.c.b16 %v1112, %v1111
    %v1471 = vpack.c.b16 %v1114, %v1113
    %v1472 = vpack.c.b16 %v1116, %v1115
    %v1473 = vpack.c.b16 %v1118, %v1117
    %v1474 = vpack.c.b16 %v1120, %v1119
    %v1475 = vpack.c.b16 %v1122, %v1121
    %v1476 = vpack.c.b16 %v1124, %v1123
    %v1477 = vpack.c.b16 %v1126, %v1125
    %v1478 = vpack.c.b16 %v1128, %v1127
    %v1479 = vpack.c.b16 %v1130, %v1129
    %v1480 = vpack.c.b16 %v1132, %v1131
    %v1481 = vpack.c.b16 %v1134, %v1133
    %v1482 = vpack.c.b16 %v1136, %v1135
    %v1483 = vpack.c.b16 %v1138, %v1137
    %v1484 = vpack.c.b16 %v1140, %v1139
    %v1485 = vpack.c.b16 %v1142, %v1141
    %v1486 = vpack.c.b16 %v1144, %v1143
    %v1487 = vpack.c.b16 %v1146, %v1145
    %v1488 = vpack.c.b16 %v1148, %v1147
    %v1489 = vpack.c.b16 %v1150, %v1149
    %v1490 = vpack.c.b16 %v1152, %v1151
    %v1491 = vpack.c.b16 %v1154, %v1153
    %v1492 = vpack.c.b16 %v1156, %v1155
    %v1493 = vpack.c.b16 %v1158, %v1157
    %v1494 = vpack.c.b16 %v1160, %v1159
    %v1495 = vpack.c.b16 %v1162, %v1161
    %v1496 = vpack.c.b16 %v1164, %v1163
    %v1497 = vpack.c.b16 %v1166, %v1165
    %v1498 = vpack.c.b16 %v1168, %v1167
    %v1499 = vpack.c.b16 %v1170, %v1169
    %v1500 = vpack.c.b16 %v1172, %v1171
    %v1501 = vpack.c.b16 %v1174, %v1173
    %v1502 = vpack.c.b16 %v1176, %v1175
    %v1503 = vpack.c.b16 %v1178, %v1177
    %v1504 = vpack.c.b16 %v1180, %v1179
    %v1505 = vpack.c.b16 %v1182, %v1181
    %v1506 = vpack.c.b16 %v1184, %v1183
    %v1507 = vpack.c.b16 %v1186, %v1185
    %v1508 = vpack.c.b16 %v1188, %v1187
    %v1509 = vpack.c.b16 %v1190, %v1189
    %v1510 = vpack.c.b16 %v1192, %v1191
    %v1511 = vpack.c.b16 %v1194, %v1193
    %v1512 = vpack.c.b16 %v1196, %v1195
    %v1513 = vpack.c.b16 %v1198, %v1197
    %v1514 = vpack.c.b16 %v1200, %v1199
    %v1515 = vpack.c.b16 %v1202, %v1201
    %v1516 = vpack.c.b16 %v1204, %v1203
    %v1517 = vpack.c.b16 %v1206, %v1205
    %v1518 = vpack.c.b16 %v1208, %v1207
    %v1519 = vpack.c.b16 %v1210, %v1209
    %v1520 = vpack.c.b16 %v1212, %v1211
    %v1521 = vpack.c.b16 %v1214, %v1213
    %v1522 = vpack.c.b16 %v1216, %v1215
    %v1523 = vpack.c.b16 %v1218, %v1217
    %v1524 = vpack.c.b16 %v1220, %v1219
    %v1525 = vpack.c.b16 %v1222, %v1221
    %v1526 = vpack.c.b16 %v1224, %v1223
    %v1527 = vpack.c.b16 %v1226, %v1225
    %v1528 = vpack.c.b16 %v1228, %v1227
    %v1529 = vpack.c.b16 %v1230, %v1229
    %v1530 = vpack.c.b16 %v1232, %v1231
    %v1531 = vpack.c.b16 %v1234, %v1233
    %v1532 = vpack.c.b16 %v1236, %v1235
    %v1533 = vpack.c.b16 %v1238, %v1237
    %v1534 = vpack.c.b16 %v1240, %v1239
    %v1535 = vpack.c.b16 %v1242, %v1241
    %v1536 = vpack.c.b16 %v1244, %v1243
    %v1537 = vpack.c.b16 %v1246, %v1245
    %v1538 = vpack.c.b16 %v1248, %v1247
    %v1539 = vpack.c.b16 %v1250, %v1249
    %v1540 = vpack.c.b16 %v1252, %v1251
    %v1541 = vpack.c.b16 %v1254, %v1253
    %v1542 = vpack.c.b16 %v1256, %v1255
    %v1543 = vpack.c.b16 %v1258, %v1257
    %v1544 = vpack.c.b16 %v1260, %v1259
    %v1545 = vpack.c.b16 %v1262, %v1261
    %v1546 = vpack.c.b16 %v1264, %v1263
    %v1547 = vpack.c.b16 %v1266, %v1265
    %v1548 = vpack.c.b16 %v1268, %v1267
    %v1549 = vpack.c.b16 %v1270, %v1269
    %v1550 = vpack.c.b16 %v1272, %v1271
    %v1551 = vpack.c.b16 %v1274, %v1273
    %v1552 = vpack.c.b16 %v1276, %v1275
    %v1553 = vpack.c.b16 %v1278, %v1277
    %v1554 = vpack.c.b16 %v1280, %v1279
    %v1555 = vpack.c.b16 %v1282, %v1281
    %v1556 = vpack.c.b16 %v1284, %v1283
    %v1557 = vpack.c.b16 %v1286, %v1285
    %v1558 = vpack.c.b16 %v1288, %v1287
    %v1559 = vpack.c.b16 %v1290, %v1289
    %v1560 = vpack.c.b16 %v1292, %v1291
    %v1561 = vpack.c.b16 %v1294, %v1293
    %v1562 = vpack.c.b16 %v1296, %v1295
    %v1563 = vpack.c.b16 %v1298, %v1297
    %v1564 = vpack.c.b16 %v1300, %v1299
    %v1565 = vpack.c.b16 %v1302, %v1301
    %v1566 = vpack.c.b16 %v1304, %v1303
    %v1567 = vpack.c.b16 %v1306, %v1305
    %v1568 = vpack.c.b16 %v1308, %v1307
    %v1569 = vpack.c.b16 %v1310, %v1309
    %v1570 = vpack.c.b16 %v1312, %v1311
    %v1571 = vpack.c.b16 %v1314, %v1313
    %v1572 = vpack.c.b16 %v1316, %v1315
    %v1573 = vpack.c.b16 %v1318, %v1317
    %v1574 = vpack.c.b16 %v1320, %v1319
    %v1575 = vpack.c.b16 %v1322, %v1321
    %v1576 = vpack.c.b16 %v1324, %v1323
    %v1577 = vpack.c.b16 %v1326, %v1325
    %v1578 = vpack.c.b16 %v1328, %v1327
    %v1579 = vpack.c.b16 %v1330, %v1329
    %v1580 = vpack.c.b16 %v1332, %v1331
    %v1581 = vpack.c.b16 %v1334, %v1333
    %v1582 = vpack.c.b16 %v1336, %v1335
    %v1583 = vpack.c.b16 %v1338, %v1337
    %v1584 = vpack.c.b16 %v1340, %v1339
    %v1585 = vpack.c.b16 %v1342, %v1341
    %v1586 = vpack.c.b16 %v1344, %v1343
    %v1587 = vpack.c.b16 %v1346, %v1345
    %v1588 = vpack.c.b16 %v1348, %v1347
    %v1589 = vpack.c.b16 %v1350, %v1349
    %v1590 = vpack.c.b16 %v1352, %v1351
    %v1591 = vpack.c.b16 %v1354, %v1353
    %v1592 = vpack.c.b16 %v1356, %v1355
    %v1593 = vpack.c.b16 %v1358, %v1357
    %v1594 = vpack.c.b16 %v1360, %v1359
    %v1595 = vpack.c.b16 %v1362, %v1361
    %v1596 = vpack.c.b16 %v1364, %v1363
    %v1597 = vpack.c.b16 %v1366, %v1365
    %v1598 = vpack.c.b16 %v1368, %v1367
    %v1599 = vpack.c.b16 %v1370, %v1369
    %v1600 = vpack.c.b16 %v1372, %v1371
    %v1601 = vpack.c.b16 %v1374, %v1373
    %v1602 = vpack.c.b16 %v1376, %v1375
    %v1603 = vpack.c.b16 %v1378, %v1377
    %v1604 = vpack.c.b16 %v1380, %v1379
    %v1605 = vpack.c.b16 %v1382, %v1381
    %v1606 = vpack.c.b16 %v1384, %v1383
    %v1607 = vpack.c.b16 %v1386, %v1385
    %v1608 = vpack.c.b16 %v1388, %v1387
    %v1609 = vpack.c.b16 %v1390, %v1389
    %v1610 = vpack.c.b16 %v1392, %v1391
    %v1611 = vpack.c.b16 %v1394, %v1393
    %v1612 = vpack.c.b16 %v1396, %v1395
    %v1613 = vpack.c.b16 %v1398, %v1397
    %v1614 = vpack.c.b16 %v1400, %v1399
    %v1615 = vpack.c.b16 %v1402, %v1401
    %v1616 = vpack.c.b16 %v1404, %v1403
    %v1617 = vpack.c.b16 %v1406, %v1405
    %v1618 = vpack.c.b16 %v1408, %v1407
    %v1619 = vpack.c.b16 %v1410, %v1409
    %v1620 = vpack.c.b16 %v1412, %v1411
    %v1621 = vpack.c.b16 %v1414, %v1413
    %v1622 = vpack.c.b16 %v1416, %v1415
    %v1623 = vpack.c.b16 %v1418, %v1417
    %v1624 = vpack.c.b16 %v1420, %v1419
    %v1625 = vpack.c.b16 %v1422, %v1421
    %v1626 = vpack.c.b16 %v1424, %v1423
    %v1627 = vpack.c.b16 %v1426, %v1425
    %v1628 = vpack.c.b16 %v1428, %v1427
    %1829 = vmatprep.subr.bf16.mxu0 0
    %1830 = vmatpush1.bf16.msra.mxu0 %v1429
    %1831 = vmatprep.subr.bf16.mxu0 0
    %1832 = vmatpush1.bf16.msra.mxu0 %v1430
    %1833 = vmatprep.subr.bf16.mxu0 0
    %1834 = vmatpush1.bf16.msra.mxu0 %v1431
    %1835 = vmatprep.subr.bf16.mxu0 0
    %1836 = vmatpush1.bf16.msra.mxu0 %v1432
    %1837 = vmatprep.subr.bf16.mxu0 0
    %1838 = vmatpush1.bf16.msra.mxu0 %v1433
    %1839 = vmatprep.subr.bf16.mxu0 0
    %1840 = vmatpush1.bf16.msra.mxu0 %v1434
    %1841 = vmatprep.subr.bf16.mxu0 0
    %1842 = vmatpush1.bf16.msra.mxu0 %v1435
    %1843 = vmatprep.subr.bf16.mxu0 0
    %1844 = vmatpush1.bf16.msra.mxu0 %v1436
    %1845 = vmatprep.subr.bf16.mxu0 0
    %1846 = vmatpush1.bf16.msra.mxu0 %v1437
    %1847 = vmatprep.subr.bf16.mxu0 0
    %1848 = vmatpush1.bf16.msra.mxu0 %v1438
    %1849 = vmatprep.subr.bf16.mxu0 0
    %1850 = vmatpush1.bf16.msra.mxu0 %v1439
    %1851 = vmatprep.subr.bf16.mxu0 0
    %1852 = vmatpush1.bf16.msra.mxu0 %v1440
    %1853 = vmatprep.subr.bf16.mxu0 0
    %1854 = vmatpush1.bf16.msra.mxu0 %v1441
    %1855 = vmatprep.subr.bf16.mxu0 0
    %1856 = vmatpush1.bf16.msra.mxu0 %v1442
    %1857 = vmatprep.subr.bf16.mxu0 0
    %1858 = vmatpush1.bf16.msra.mxu0 %v1443
    %1859 = vmatprep.subr.bf16.mxu0 0
    %1860 = vmatpush1.bf16.msra.mxu0 %v1444
    %1861 = vmatprep.mubr.bf16.mxu0 %v480
    %1862 = vmatmul.mubr.bf16.gmra.mrb[0].mxu0 %v466
    %v1863 = vpop.f32.mrb[0].mxu0
    %v1864 = vadd.f32 %v437, %v1863
    %v1865 = vpop.f32.mrb[0].mxu0
    %v1866 = vpop.f32.mrb[0].mxu0
    %v1867 = vpop.f32.mrb[0].mxu0
    %1868 = vdwg.mxu0
    %1869 = vmatprep.subr.bf16.mxu0 0
    %1870 = vmatpush1.bf16.msra.mxu0 %v1445
    %1871 = vmatprep.subr.bf16.mxu0 0
    %1872 = vmatpush1.bf16.msra.mxu0 %v1446
    %1873 = vmatprep.subr.bf16.mxu0 0
    %1874 = vmatpush1.bf16.msra.mxu0 %v1447
    %1875 = vmatprep.subr.bf16.mxu0 0
    %1876 = vmatpush1.bf16.msra.mxu0 %v1448
    %1877 = vmatprep.subr.bf16.mxu0 0
    %1878 = vmatpush1.bf16.msra.mxu0 %v1449
    %1879 = vmatprep.subr.bf16.mxu0 0
    %1880 = vmatpush1.bf16.msra.mxu0 %v1450
    %1881 = vmatprep.subr.bf16.mxu0 0
    %1882 = vmatpush1.bf16.msra.mxu0 %v1451
    %1883 = vmatprep.subr.bf16.mxu0 0
    %1884 = vmatpush1.bf16.msra.mxu0 %v1452
    %1885 = vmatprep.subr.bf16.mxu0 0
    %1886 = vmatpush1.bf16.msra.mxu0 %v1453
    %1887 = vmatprep.subr.bf16.mxu0 0
    %1888 = vmatpush1.bf16.msra.mxu0 %v1454
    %1889 = vmatprep.subr.bf16.mxu0 0
    %1890 = vmatpush1.bf16.msra.mxu0 %v1455
    %1891 = vmatprep.subr.bf16.mxu0 0
    %1892 = vmatpush1.bf16.msra.mxu0 %v1456
    %1893 = vmatprep.subr.bf16.mxu0 0
    %1894 = vmatpush1.bf16.msra.mxu0 %v1457
    %1895 = vmatprep.subr.bf16.mxu0 0
    %1896 = vmatpush1.bf16.msra.mxu0 %v1458
    %1897 = vmatprep.subr.bf16.mxu0 0
    %1898 = vmatpush1.bf16.msra.mxu0 %v1459
    %1899 = vmatprep.subr.bf16.mxu0 0
    %1900 = vmatpush1.bf16.msra.mxu0 %v1460
    %1901 = vmatprep.mubr.bf16.mxu0 %v490
    %1902 = vmatmul.mubr.bf16.gmra.mrb[0].mxu0 %v488
    %v1903 = vpop.f32.mrb[0].mxu0
    %v1904 = vadd.f32 %v1864, %v1903
    %v1905 = vpop.f32.mrb[0].mxu0
    %v1906 = vpop.f32.mrb[0].mxu0
    %v1907 = vpop.f32.mrb[0].mxu0
    %1908 = vdwg.mxu0
    %1909 = vmatprep.subr.bf16.mxu0 0
    %1910 = vmatpush1.bf16.msra.mxu0 %v1461
    %1911 = vmatprep.subr.bf16.mxu0 0
    %1912 = vmatpush1.bf16.msra.mxu0 %v1462
    %1913 = vmatprep.subr.bf16.mxu0 0
    %1914 = vmatpush1.bf16.msra.mxu0 %v1463
    %1915 = vmatprep.subr.bf16.mxu0 0
    %1916 = vmatpush1.bf16.msra.mxu0 %v1464
    %1917 = vmatprep.subr.bf16.mxu0 0
    %1918 = vmatpush1.bf16.msra.mxu0 %v1465
    %1919 = vmatprep.subr.bf16.mxu0 0
    %1920 = vmatpush1.bf16.msra.mxu0 %v1466
    %1921 = vmatprep.subr.bf16.mxu0 0
    %1922 = vmatpush1.bf16.msra.mxu0 %v1467
    %1923 = vmatprep.subr.bf16.mxu0 0
    %1924 = vmatpush1.bf16.msra.mxu0 %v1468
    %1925 = vmatprep.subr.bf16.mxu0 0
    %1926 = vmatpush1.bf16.msra.mxu0 %v1469
    %1927 = vmatprep.subr.bf16.mxu0 0
    %1928 = vmatpush1.bf16.msra.mxu0 %v1470
    %1929 = vmatprep.subr.bf16.mxu0 0
    %1930 = vmatpush1.bf16.msra.mxu0 %v1471
    %1931 = vmatprep.subr.bf16.mxu0 0
    %1932 = vmatpush1.bf16.msra.mxu0 %v1472
    %1933 = vmatprep.subr.bf16.mxu0 0
    %1934 = vmatpush1.bf16.msra.mxu0 %v1473
    %1935 = vmatprep.subr.bf16.mxu0 0
    %1936 = vmatpush1.bf16.msra.mxu0 %v1474
    %1937 = vmatprep.subr.bf16.mxu0 0
    %1938 = vmatpush1.bf16.msra.mxu0 %v1475
    %1939 = vmatprep.subr.bf16.mxu0 0
    %1940 = vmatpush1.bf16.msra.mxu0 %v1476
    %1941 = vmatprep.mubr.bf16.mxu0 %v487
    %1942 = vmatmul.mubr.bf16.gmra.mrb[0].mxu0 %v473
    %v1943 = vpop.f32.mrb[0].mxu0
    %v1944 = vadd.f32 %v1904, %v1943
    %v1945 = vpop.f32.mrb[0].mxu0
    %v1946 = vpop.f32.mrb[0].mxu0
    %v1947 = vpop.f32.mrb[0].mxu0
    %1948 = vdwg.mxu0
    %1949 = vmatprep.subr.bf16.mxu0 0
    %1950 = vmatpush1.bf16.msra.mxu0 %v1477
    %1951 = vmatprep.subr.bf16.mxu0 0
    %1952 = vmatpush1.bf16.msra.mxu0 %v1478
    %1953 = vmatprep.subr.bf16.mxu0 0
    %1954 = vmatpush1.bf16.msra.mxu0 %v1479
    %1955 = vmatprep.subr.bf16.mxu0 0
    %1956 = vmatpush1.bf16.msra.mxu0 %v1480
    %1957 = vmatprep.subr.bf16.mxu0 0
    %1958 = vmatpush1.bf16.msra.mxu0 %v1481
    %1959 = vmatprep.subr.bf16.mxu0 0
    %1960 = vmatpush1.bf16.msra.mxu0 %v1482
    %1961 = vmatprep.subr.bf16.mxu0 0
    %1962 = vmatpush1.bf16.msra.mxu0 %v1483
    %1963 = vmatprep.subr.bf16.mxu0 0
    %1964 = vmatpush1.bf16.msra.mxu0 %v1484
    %1965 = vmatprep.subr.bf16.mxu0 0
    %1966 = vmatpush1.bf16.msra.mxu0 %v1485
    %1967 = vmatprep.subr.bf16.mxu0 0
    %1968 = vmatpush1.bf16.msra.mxu0 %v1486
    %1969 = vmatprep.subr.bf16.mxu0 0
    %1970 = vmatpush1.bf16.msra.mxu0 %v1487
    %1971 = vmatprep.subr.bf16.mxu0 0
    %1972 = vmatpush1.bf16.msra.mxu0 %v1488
    %1973 = vmatprep.subr.bf16.mxu0 0
    %1974 = vmatpush1.bf16.msra.mxu0 %v1489
    %1975 = vmatprep.subr.bf16.mxu0 0
    %1976 = vmatpush1.bf16.msra.mxu0 %v1490
    %1977 = vmatprep.subr.bf16.mxu0 0
    %1978 = vmatpush1.bf16.msra.mxu0 %v1491
    %1979 = vmatprep.subr.bf16.mxu0 0
    %1980 = vmatpush1.bf16.msra.mxu0 %v1492
    %1981 = vmatprep.mubr.bf16.mxu0 %v491
    %1982 = vmatmul.mubr.bf16.gmra.mrb[0].mxu0 %v489
    %v1983 = vpop.f32.mrb[0].mxu0
    %v1984 = vadd.f32 %v1944, %v1983
    %v1985 = vpop.f32.mrb[0].mxu0
    %v1986 = vpop.f32.mrb[0].mxu0
    %v1987 = vpop.f32.mrb[0].mxu0
    %1988 = vdwg.mxu0
    %1989 = vmatprep.subr.bf16.mxu0 0
    %1990 = vmatpush1.bf16.msra.mxu0 %v1493
    %1991 = vmatprep.subr.bf16.mxu0 0
    %1992 = vmatpush1.bf16.msra.mxu0 %v1494
    %1993 = vmatprep.subr.bf16.mxu0 0
    %1994 = vmatpush1.bf16.msra.mxu0 %v1495
    %1995 = vmatprep.subr.bf16.mxu0 0
    %1996 = vmatpush1.bf16.msra.mxu0 %v1496
    %1997 = vmatprep.subr.bf16.mxu0 0
    %1998 = vmatpush1.bf16.msra.mxu0 %v1497
    %1999 = vmatprep.subr.bf16.mxu0 0
    %2000 = vmatpush1.bf16.msra.mxu0 %v1498
    %2001 = vmatprep.subr.bf16.mxu0 0
    %2002 = vmatpush1.bf16.msra.mxu0 %v1499
    %2003 = vmatprep.subr.bf16.mxu0 0
    %2004 = vmatpush1.bf16.msra.mxu0 %v1500
    %2005 = vmatprep.subr.bf16.mxu0 0
    %2006 = vmatpush1.bf16.msra.mxu0 %v1501
    %2007 = vmatprep.subr.bf16.mxu0 0
    %2008 = vmatpush1.bf16.msra.mxu0 %v1502
    %2009 = vmatprep.subr.bf16.mxu0 0
    %2010 = vmatpush1.bf16.msra.mxu0 %v1503
    %2011 = vmatprep.subr.bf16.mxu0 0
    %2012 = vmatpush1.bf16.msra.mxu0 %v1504
    %2013 = vmatprep.subr.bf16.mxu0 0
    %2014 = vmatpush1.bf16.msra.mxu0 %v1505
    %2015 = vmatprep.subr.bf16.mxu0 0
    %2016 = vmatpush1.bf16.msra.mxu0 %v1506
    %2017 = vmatprep.subr.bf16.mxu0 0
    %2018 = vmatpush1.bf16.msra.mxu0 %v1507
    %2019 = vmatprep.subr.bf16.mxu0 0
    %2020 = vmatpush1.bf16.msra.mxu0 %v1508
    %2021 = vmatprep.mubr.bf16.mxu0 %v529
    %2022 = vmatmul.mubr.bf16.gmra.mrb[0].mxu0 %v515
    %v2023 = vpop.f32.mrb[0].mxu0
    %v2024 = vadd.f32 %v1984, %v2023
    %v2025 = vpop.f32.mrb[0].mxu0
    %v2026 = vpop.f32.mrb[0].mxu0
    %v2027 = vpop.f32.mrb[0].mxu0
    %2028 = vdwg.mxu0
    %2029 = vmatprep.subr.bf16.mxu0 0
    %2030 = vmatpush1.bf16.msra.mxu0 %v1509
    %2031 = vmatprep.subr.bf16.mxu0 0
    %2032 = vmatpush1.bf16.msra.mxu0 %v1510
    %2033 = vmatprep.subr.bf16.mxu0 0
    %2034 = vmatpush1.bf16.msra.mxu0 %v1511
    %2035 = vmatprep.subr.bf16.mxu0 0
    %2036 = vmatpush1.bf16.msra.mxu0 %v1512
    %2037 = vmatprep.subr.bf16.mxu0 0
    %2038 = vmatpush1.bf16.msra.mxu0 %v1513
    %2039 = vmatprep.subr.bf16.mxu0 0
    %2040 = vmatpush1.bf16.msra.mxu0 %v1514
    %2041 = vmatprep.subr.bf16.mxu0 0
    %2042 = vmatpush1.bf16.msra.mxu0 %v1515
    %2043 = vmatprep.subr.bf16.mxu0 0
    %2044 = vmatpush1.bf16.msra.mxu0 %v1516
    %2045 = vmatprep.subr.bf16.mxu0 0
    %2046 = vmatpush1.bf16.msra.mxu0 %v1517
    %2047 = vmatprep.subr.bf16.mxu0 0
    %2048 = vmatpush1.bf16.msra.mxu0 %v1518
    %2049 = vmatprep.subr.bf16.mxu0 0
    %2050 = vmatpush1.bf16.msra.mxu0 %v1519
    %2051 = vmatprep.subr.bf16.mxu0 0
    %2052 = vmatpush1.bf16.msra.mxu0 %v1520
    %2053 = vmatprep.subr.bf16.mxu0 0
    %2054 = vmatpush1.bf16.msra.mxu0 %v1521
    %2055 = vmatprep.subr.bf16.mxu0 0
    %2056 = vmatpush1.bf16.msra.mxu0 %v1522
    %2057 = vmatprep.subr.bf16.mxu0 0
    %2058 = vmatpush1.bf16.msra.mxu0 %v1523
    %2059 = vmatprep.subr.bf16.mxu0 0
    %2060 = vmatpush1.bf16.msra.mxu0 %v1524
    %2061 = vmatprep.mubr.bf16.mxu0 %v539
    %2062 = vmatmul.mubr.bf16.gmra.mrb[0].mxu0 %v537
    %v2063 = vpop.f32.mrb[0].mxu0
    %v2064 = vadd.f32 %v2024, %v2063
    %v2065 = vpop.f32.mrb[0].mxu0
    %v2066 = vpop.f32.mrb[0].mxu0
    %v2067 = vpop.f32.mrb[0].mxu0
    %2068 = vdwg.mxu0
    %2069 = vmatprep.subr.bf16.mxu0 0
    %2070 = vmatpush1.bf16.msra.mxu0 %v1525
    %2071 = vmatprep.subr.bf16.mxu0 0
    %2072 = vmatpush1.bf16.msra.mxu0 %v1526
    %2073 = vmatprep.subr.bf16.mxu0 0
    %2074 = vmatpush1.bf16.msra.mxu0 %v1527
    %2075 = vmatprep.subr.bf16.mxu0 0
    %2076 = vmatpush1.bf16.msra.mxu0 %v1528
    %2077 = vmatprep.subr.bf16.mxu0 0
    %2078 = vmatpush1.bf16.msra.mxu0 %v1529
    %2079 = vmatprep.subr.bf16.mxu0 0
    %2080 = vmatpush1.bf16.msra.mxu0 %v1530
    %2081 = vmatprep.subr.bf16.mxu0 0
    %2082 = vmatpush1.bf16.msra.mxu0 %v1531
    %2083 = vmatprep.subr.bf16.mxu0 0
    %2084 = vmatpush1.bf16.msra.mxu0 %v1532
    %2085 = vmatprep.subr.bf16.mxu0 0
    %2086 = vmatpush1.bf16.msra.mxu0 %v1533
    %2087 = vmatprep.subr.bf16.mxu0 0
    %2088 = vmatpush1.bf16.msra.mxu0 %v1534
    %2089 = vmatprep.subr.bf16.mxu0 0
    %2090 = vmatpush1.bf16.msra.mxu0 %v1535
    %2091 = vmatprep.subr.bf16.mxu0 0
    %2092 = vmatpush1.bf16.msra.mxu0 %v1536
    %2093 = vmatprep.subr.bf16.mxu0 0
    %2094 = vmatpush1.bf16.msra.mxu0 %v1537
    %2095 = vmatprep.subr.bf16.mxu0 0
    %2096 = vmatpush1.bf16.msra.mxu0 %v1538
    %2097 = vmatprep.subr.bf16.mxu0 0
    %2098 = vmatpush1.bf16.msra.mxu0 %v1539
    %2099 = vmatprep.subr.bf16.mxu0 0
    %2100 = vmatpush1.bf16.msra.mxu0 %v1540
    %2101 = vmatprep.mubr.bf16.mxu0 %v536
    %2102 = vmatmul.mubr.bf16.gmra.mrb[0].mxu0 %v522
    %v2103 = vpop.f32.mrb[0].mxu0
    %v2104 = vadd.f32 %v2064, %v2103
    %v2105 = vpop.f32.mrb[0].mxu0
    %v2106 = vpop.f32.mrb[0].mxu0
    %v2107 = vpop.f32.mrb[0].mxu0
    %2108 = vdwg.mxu0
    %2109 = vmatprep.subr.bf16.mxu0 0
    %2110 = vmatpush1.bf16.msra.mxu0 %v1541
    %2111 = vmatprep.subr.bf16.mxu0 0
    %2112 = vmatpush1.bf16.msra.mxu0 %v1542
    %2113 = vmatprep.subr.bf16.mxu0 0
    %2114 = vmatpush1.bf16.msra.mxu0 %v1543
    %2115 = vmatprep.subr.bf16.mxu0 0
    %2116 = vmatpush1.bf16.msra.mxu0 %v1544
    %2117 = vmatprep.subr.bf16.mxu0 0
    %2118 = vmatpush1.bf16.msra.mxu0 %v1545
    %2119 = vmatprep.subr.bf16.mxu0 0
    %2120 = vmatpush1.bf16.msra.mxu0 %v1546
    %2121 = vmatprep.subr.bf16.mxu0 0
    %2122 = vmatpush1.bf16.msra.mxu0 %v1547
    %2123 = vmatprep.subr.bf16.mxu0 0
    %2124 = vmatpush1.bf16.msra.mxu0 %v1548
    %2125 = vmatprep.subr.bf16.mxu0 0
    %2126 = vmatpush1.bf16.msra.mxu0 %v1549
    %2127 = vmatprep.subr.bf16.mxu0 0
    %2128 = vmatpush1.bf16.msra.mxu0 %v1550
    %2129 = vmatprep.subr.bf16.mxu0 0
    %2130 = vmatpush1.bf16.msra.mxu0 %v1551
    %2131 = vmatprep.subr.bf16.mxu0 0
    %2132 = vmatpush1.bf16.msra.mxu0 %v1552
    %2133 = vmatprep.subr.bf16.mxu0 0
    %2134 = vmatpush1.bf16.msra.mxu0 %v1553
    %2135 = vmatprep.subr.bf16.mxu0 0
    %2136 = vmatpush1.bf16.msra.mxu0 %v1554
    %2137 = vmatprep.subr.bf16.mxu0 0
    %2138 = vmatpush1.bf16.msra.mxu0 %v1555
    %2139 = vmatprep.subr.bf16.mxu0 0
    %2140 = vmatpush1.bf16.msra.mxu0 %v1556
    %2141 = vmatprep.mubr.bf16.mxu0 %v540
    %2142 = vmatmul.mubr.bf16.gmra.mrb[0].mxu0 %v538
    %v2143 = vpop.f32.mrb[0].mxu0
    %v2144 = vadd.f32 %v2104, %v2143
    %v2145 = vpop.f32.mrb[0].mxu0
    %v2146 = vpop.f32.mrb[0].mxu0
    %v2147 = vpop.f32.mrb[0].mxu0
    %2148 = vdwg.mxu0
    %2149 = vmatprep.subr.bf16.mxu0 0
    %2150 = vmatpush1.bf16.msra.mxu0 %v1557
    %2151 = vmatprep.subr.bf16.mxu0 0
    %2152 = vmatpush1.bf16.msra.mxu0 %v1558
    %2153 = vmatprep.subr.bf16.mxu0 0
    %2154 = vmatpush1.bf16.msra.mxu0 %v1559
    %2155 = vmatprep.subr.bf16.mxu0 0
    %2156 = vmatpush1.bf16.msra.mxu0 %v1560
    %2157 = vmatprep.subr.bf16.mxu0 0
    %2158 = vmatpush1.bf16.msra.mxu0 %v1561
    %2159 = vmatprep.subr.bf16.mxu0 0
    %2160 = vmatpush1.bf16.msra.mxu0 %v1562
    %2161 = vmatprep.subr.bf16.mxu0 0
    %2162 = vmatpush1.bf16.msra.mxu0 %v1563
    %2163 = vmatprep.subr.bf16.mxu0 0
    %2164 = vmatpush1.bf16.msra.mxu0 %v1564
    %2165 = vmatprep.subr.bf16.mxu0 0
    %2166 = vmatpush1.bf16.msra.mxu0 %v1565
    %2167 = vmatprep.subr.bf16.mxu0 0
    %2168 = vmatpush1.bf16.msra.mxu0 %v1566
    %2169 = vmatprep.subr.bf16.mxu0 0
    %2170 = vmatpush1.bf16.msra.mxu0 %v1567
    %2171 = vmatprep.subr.bf16.mxu0 0
    %2172 = vmatpush1.bf16.msra.mxu0 %v1568
    %2173 = vmatprep.subr.bf16.mxu0 0
    %2174 = vmatpush1.bf16.msra.mxu0 %v1569
    %2175 = vmatprep.subr.bf16.mxu0 0
    %2176 = vmatpush1.bf16.msra.mxu0 %v1570
    %2177 = vmatprep.subr.bf16.mxu0 0
    %2178 = vmatpush1.bf16.msra.mxu0 %v1571
    %2179 = vmatprep.subr.bf16.mxu0 0
    %2180 = vmatpush1.bf16.msra.mxu0 %v1572
    %2181 = vmatprep.mubr.bf16.mxu0 %v578
    %2182 = vmatmul.mubr.bf16.gmra.mrb[0].mxu0 %v564
    %v2183 = vpop.f32.mrb[0].mxu0
    %v2184 = vadd.f32 %v2144, %v2183
    %v2185 = vpop.f32.mrb[0].mxu0
    %v2186 = vpop.f32.mrb[0].mxu0
    %v2187 = vpop.f32.mrb[0].mxu0
    %2188 = vdwg.mxu0
    %2189 = vmatprep.subr.bf16.mxu0 0
    %2190 = vmatpush1.bf16.msra.mxu0 %v1573
    %2191 = vmatprep.subr.bf16.mxu0 0
    %2192 = vmatpush1.bf16.msra.mxu0 %v1574
    %2193 = vmatprep.subr.bf16.mxu0 0
    %2194 = vmatpush1.bf16.msra.mxu0 %v1575
    %2195 = vmatprep.subr.bf16.mxu0 0
    %2196 = vmatpush1.bf16.msra.mxu0 %v1576
    %2197 = vmatprep.subr.bf16.mxu0 0
    %2198 = vmatpush1.bf16.msra.mxu0 %v1577
    %2199 = vmatprep.subr.bf16.mxu0 0
    %2200 = vmatpush1.bf16.msra.mxu0 %v1578
    %2201 = vmatprep.subr.bf16.mxu0 0
    %2202 = vmatpush1.bf16.msra.mxu0 %v1579
    %2203 = vmatprep.subr.bf16.mxu0 0
    %2204 = vmatpush1.bf16.msra.mxu0 %v1580
    %2205 = vmatprep.subr.bf16.mxu0 0
    %2206 = vmatpush1.bf16.msra.mxu0 %v1581
    %2207 = vmatprep.subr.bf16.mxu0 0
    %2208 = vmatpush1.bf16.msra.mxu0 %v1582
    %2209 = vmatprep.subr.bf16.mxu0 0
    %2210 = vmatpush1.bf16.msra.mxu0 %v1583
    %2211 = vmatprep.subr.bf16.mxu0 0
    %2212 = vmatpush1.bf16.msra.mxu0 %v1584
    %2213 = vmatprep.subr.bf16.mxu0 0
    %2214 = vmatpush1.bf16.msra.mxu0 %v1585
    %2215 = vmatprep.subr.bf16.mxu0 0
    %2216 = vmatpush1.bf16.msra.mxu0 %v1586
    %2217 = vmatprep.subr.bf16.mxu0 0
    %2218 = vmatpush1.bf16.msra.mxu0 %v1587
    %2219 = vmatprep.subr.bf16.mxu0 0
    %2220 = vmatpush1.bf16.msra.mxu0 %v1588
    %2221 = vmatprep.mubr.bf16.mxu0 %v588
    %2222 = vmatmul.mubr.bf16.gmra.mrb[0].mxu0 %v586
    %v2223 = vpop.f32.mrb[0].mxu0
    %v2224 = vadd.f32 %v2184, %v2223
    %v2225 = vpop.f32.mrb[0].mxu0
    %v2226 = vpop.f32.mrb[0].mxu0
    %v2227 = vpop.f32.mrb[0].mxu0
    %2228 = vdwg.mxu0
    %2229 = vmatprep.subr.bf16.mxu0 0
    %2230 = vmatpush1.bf16.msra.mxu0 %v1589
    %2231 = vmatprep.subr.bf16.mxu0 0
    %2232 = vmatpush1.bf16.msra.mxu0 %v1590
    %2233 = vmatprep.subr.bf16.mxu0 0
    %2234 = vmatpush1.bf16.msra.mxu0 %v1591
    %2235 = vmatprep.subr.bf16.mxu0 0
    %2236 = vmatpush1.bf16.msra.mxu0 %v1592
    %2237 = vmatprep.subr.bf16.mxu0 0
    %2238 = vmatpush1.bf16.msra.mxu0 %v1593
    %2239 = vmatprep.subr.bf16.mxu0 0
    %2240 = vmatpush1.bf16.msra.mxu0 %v1594
    %2241 = vmatprep.subr.bf16.mxu0 0
    %2242 = vmatpush1.bf16.msra.mxu0 %v1595
    %2243 = vmatprep.subr.bf16.mxu0 0
    %2244 = vmatpush1.bf16.msra.mxu0 %v1596
    %2245 = vmatprep.subr.bf16.mxu0 0
    %2246 = vmatpush1.bf16.msra.mxu0 %v1597
    %2247 = vmatprep.subr.bf16.mxu0 0
    %2248 = vmatpush1.bf16.msra.mxu0 %v1598
    %2249 = vmatprep.subr.bf16.mxu0 0
    %2250 = vmatpush1.bf16.msra.mxu0 %v1599
    %2251 = vmatprep.subr.bf16.mxu0 0
    %2252 = vmatpush1.bf16.msra.mxu0 %v1600
    %2253 = vmatprep.subr.bf16.mxu0 0
    %2254 = vmatpush1.bf16.msra.mxu0 %v1601
    %2255 = vmatprep.subr.bf16.mxu0 0
    %2256 = vmatpush1.bf16.msra.mxu0 %v1602
    %2257 = vmatprep.subr.bf16.mxu0 0
    %2258 = vmatpush1.bf16.msra.mxu0 %v1603
    %2259 = vmatprep.subr.bf16.mxu0 0
    %2260 = vmatpush1.bf16.msra.mxu0 %v1604
    %2261 = vmatprep.mubr.bf16.mxu0 %v585
    %2262 = vmatmul.mubr.bf16.gmra.mrb[0].mxu0 %v571
    %v2263 = vpop.f32.mrb[0].mxu0
    %v2264 = vadd.f32 %v2224, %v2263
    %v2265 = vpop.f32.mrb[0].mxu0
    %v2266 = vpop.f32.mrb[0].mxu0
    %v2267 = vpop.f32.mrb[0].mxu0
    %2268 = vdwg.mxu0
    %2269 = vmatprep.subr.bf16.mxu0 0
    %2270 = vmatpush1.bf16.msra.mxu0 %v1605
    %2271 = vmatprep.subr.bf16.mxu0 0
    %2272 = vmatpush1.bf16.msra.mxu0 %v1606
    %2273 = vmatprep.subr.bf16.mxu0 0
    %2274 = vmatpush1.bf16.msra.mxu0 %v1607
    %2275 = vmatprep.subr.bf16.mxu0 0
    %2276 = vmatpush1.bf16.msra.mxu0 %v1608
    %2277 = vmatprep.subr.bf16.mxu0 0
    %2278 = vmatpush1.bf16.msra.mxu0 %v1609
    %2279 = vmatprep.subr.bf16.mxu0 0
    %2280 = vmatpush1.bf16.msra.mxu0 %v1610
    %2281 = vmatprep.subr.bf16.mxu0 0
    %2282 = vmatpush1.bf16.msra.mxu0 %v1611
    %2283 = vmatprep.subr.bf16.mxu0 0
    %2284 = vmatpush1.bf16.msra.mxu0 %v1612
    %2285 = vmatprep.subr.bf16.mxu0 0
    %2286 = vmatpush1.bf16.msra.mxu0 %v1613
    %2287 = vmatprep.subr.bf16.mxu0 0
    %2288 = vmatpush1.bf16.msra.mxu0 %v1614
    %2289 = vmatprep.subr.bf16.mxu0 0
    %2290 = vmatpush1.bf16.msra.mxu0 %v1615
    %2291 = vmatprep.subr.bf16.mxu0 0
    %2292 = vmatpush1.bf16.msra.mxu0 %v1616
    %2293 = vmatprep.subr.bf16.mxu0 0
    %2294 = vmatpush1.bf16.msra.mxu0 %v1617
    %2295 = vmatprep.subr.bf16.mxu0 0
    %2296 = vmatpush1.bf16.msra.mxu0 %v1618
    %2297 = vmatprep.subr.bf16.mxu0 0
    %2298 = vmatpush1.bf16.msra.mxu0 %v1619
    %2299 = vmatprep.subr.bf16.mxu0 0
    %2300 = vmatpush1.bf16.msra.mxu0 %v1620
    %2301 = vmatprep.mubr.bf16.mxu0 %v589
    %2302 = vmatmul.mubr.bf16.gmra.mrb[0].mxu0 %v587
    %v2303 = vpop.f32.mrb[0].mxu0
    %v2304 = vadd.f32 %v2264, %v2303
    %v2305 = vpop.f32.mrb[0].mxu0
    %v2306 = vpop.f32.mrb[0].mxu0
    %v2307 = vpop.f32.mrb[0].mxu0
    %2308 = vdwg.mxu0
    %2309 = vmatprep.subr.bf16.mxu0 0
    %2310 = vmatpush1.bf16.msra.mxu0 %v1621
    %2311 = vmatprep.subr.bf16.mxu0 0
    %2312 = vmatpush1.bf16.msra.mxu0 %v1622
    %2313 = vmatprep.subr.bf16.mxu0 0
    %2314 = vmatpush1.bf16.msra.mxu0 %v1623
    %2315 = vmatprep.subr.bf16.mxu0 0
    %2316 = vmatpush1.bf16.msra.mxu0 %v1624
    %2317 = vmatprep.subr.bf16.mxu0 0
    %2318 = vmatpush1.bf16.msra.mxu0 %v1625
    %2319 = vmatprep.subr.bf16.mxu0 0
    %2320 = vmatpush1.bf16.msra.mxu0 %v1626
    %2321 = vmatprep.subr.bf16.mxu0 0
    %2322 = vmatpush1.bf16.msra.mxu0 %v1627
    %2323 = vmatprep.subr.bf16.mxu0 0
    %2324 = vmatpush1.bf16.msra.mxu0 %v1628
    %2325 = vmatprep.subr.bf16.mxu0 0
    %2326 = vmatpush1.bf16.msra.mxu0 0
    %2327 = vmatprep.subr.bf16.mxu0 0
    %2328 = vmatpush1.bf16.msra.mxu0 0
    %2329 = vmatprep.subr.bf16.mxu0 0
    %2330 = vmatpush1.bf16.msra.mxu0 0
    %2331 = vmatprep.subr.bf16.mxu0 0
    %2332 = vmatpush1.bf16.msra.mxu0 0
    %2333 = vmatprep.subr.bf16.mxu0 0
    %2334 = vmatpush1.bf16.msra.mxu0 0
    %2335 = vmatprep.subr.bf16.mxu0 0
    %2336 = vmatpush1.bf16.msra.mxu0 0
    %2337 = vmatprep.subr.bf16.mxu0 0
    %2338 = vmatpush1.bf16.msra.mxu0 0
    %2339 = vmatprep.subr.bf16.mxu0 0
    %2340 = vmatpush1.bf16.msra.mxu0 0
    %2341 = vmatprep.mubr.bf16.mxu0 0
    %2342 = vmatmul.mubr.bf16.gmra.mrb[0].mxu0 %v603
    %v2343 = vpop.f32.mrb[0].mxu0
    %v2344 = vadd.f32 %v2304, %v2343
    %v2345 = vpop.f32.mrb[0].mxu0
    %v2346 = vpop.f32.mrb[0].mxu0
    %v2347 = vpop.f32.mrb[0].mxu0
    %2348 = vdwg.mxu0
    %v2349 = vmax.f32 %v2344, 0.0
    %v2350 = vpack.c.bf16 %v2349, %v2349
    %v2351 = vld [vmem:[%s3] sm:$0xf]
    %v2352 = vld [vmem:[%s3 + $0x4] sm:$0xf]
    %v2353 = vld [vmem:[%s3 + $0x8] sm:$0xf]
    %v2354 = vld [vmem:[%s3 + $0xc] sm:$0xf]
    %v2355 = vld [vmem:[%s3 + $0x10] sm:$0xf]
    %v2356 = vld [vmem:[%s3 + $0x14] sm:$0xf]
    %v2357 = vld [vmem:[%s3 + $0x18] sm:$0xf]
    %v2358 = vld [vmem:[%s3 + $0x1c] sm:$0xf]
    %v2359 = vld [vmem:[%s3 + $0x20] sm:$0xf]
    %v2360 = vld [vmem:[%s3 + $0x24] sm:$0xf]
    %v2361 = vld [vmem:[%s3 + $0x28] sm:$0xf]
    %v2362 = vld [vmem:[%s3 + $0x2c] sm:$0xf]
    %v2363 = vld [vmem:[%s3 + $0x30] sm:$0xf]
    %v2364 = vld [vmem:[%s3 + $0x34] sm:$0xf]
    %v2365 = vld [vmem:[%s3 + $0x38] sm:$0xf]
    %v2366 = vld [vmem:[%s3 + $0x3c] sm:$0xf]
    %v2367 = vld [vmem:[%s4] sm:$0x1]
    %v2369 = vlaneseq
    %v2370 = vshrl.u32 %v2369, 7
    %v2371 = vsub.s32 0, %v2370
    %v2372 = vrot.slane %v2367, %v2371
    %v2390 = vunpack.c.l.b16 %v2351
    %v2391 = vunpack.c.l.b16 %v2352
    %v2392 = vunpack.c.l.b16 %v2353
    %v2393 = vunpack.c.l.b16 %v2354
    %v2394 = vunpack.c.l.b16 %v2355
    %v2395 = vunpack.c.l.b16 %v2356
    %v2396 = vunpack.c.l.b16 %v2357
    %v2397 = vunpack.c.l.b16 %v2358
    %v2398 = vunpack.c.l.b16 %v2359
    %v2399 = vunpack.c.l.b16 %v2360
    %v2400 = vunpack.c.l.b16 %v2361
    %v2401 = vunpack.c.l.b16 %v2362
    %v2402 = vunpack.c.l.b16 %v2363
    %v2403 = vunpack.c.l.b16 %v2364
    %v2404 = vunpack.c.l.b16 %v2365
    %v2405 = vunpack.c.l.b16 %v2366
    %v2406 = vpack.c.b16 %v2391, %v2390
    %v2407 = vpack.c.b16 %v2393, %v2392
    %v2408 = vpack.c.b16 %v2395, %v2394
    %v2409 = vpack.c.b16 %v2397, %v2396
    %v2410 = vpack.c.b16 %v2399, %v2398
    %v2411 = vpack.c.b16 %v2401, %v2400
    %v2412 = vpack.c.b16 %v2403, %v2402
    %v2413 = vpack.c.b16 %v2405, %v2404
    %2422 = vmatprep.subr.bf16.mxu0 0
    %2423 = vmatpush1.bf16.msra.mxu0 %v2406
    %2424 = vmatprep.subr.bf16.mxu0 0
    %2425 = vmatpush1.bf16.msra.mxu0 %v2407
    %2426 = vmatprep.subr.bf16.mxu0 0
    %2427 = vmatpush1.bf16.msra.mxu0 %v2408
    %2428 = vmatprep.subr.bf16.mxu0 0
    %2429 = vmatpush1.bf16.msra.mxu0 %v2409
    %2430 = vmatprep.subr.bf16.mxu0 0
    %2431 = vmatpush1.bf16.msra.mxu0 %v2410
    %2432 = vmatprep.subr.bf16.mxu0 0
    %2433 = vmatpush1.bf16.msra.mxu0 %v2411
    %2434 = vmatprep.subr.bf16.mxu0 0
    %2435 = vmatpush1.bf16.msra.mxu0 %v2412
    %2436 = vmatprep.subr.bf16.mxu0 0
    %2437 = vmatpush1.bf16.msra.mxu0 %v2413
    %2438 = vmatprep.subr.bf16.mxu0 0
    %2439 = vmatpush1.bf16.msra.mxu0 0
    %2440 = vmatprep.subr.bf16.mxu0 0
    %2441 = vmatpush1.bf16.msra.mxu0 0
    %2442 = vmatprep.subr.bf16.mxu0 0
    %2443 = vmatpush1.bf16.msra.mxu0 0
    %2444 = vmatprep.subr.bf16.mxu0 0
    %2445 = vmatpush1.bf16.msra.mxu0 0
    %2446 = vmatprep.subr.bf16.mxu0 0
    %2447 = vmatpush1.bf16.msra.mxu0 0
    %2448 = vmatprep.subr.bf16.mxu0 0
    %2449 = vmatpush1.bf16.msra.mxu0 0
    %2450 = vmatprep.subr.bf16.mxu0 0
    %2451 = vmatpush1.bf16.msra.mxu0 0
    %2452 = vmatprep.subr.bf16.mxu0 0
    %2453 = vmatpush1.bf16.msra.mxu0 0
    %2454 = vmatprep.mubr.bf16.mxu0 0
    %2455 = vmatmul.mubr.bf16.gmra.mrb[0].mxu0 %v2350
    %v2456 = vpop.f32.mrb[0].mxu0
    %v2457 = vadd.f32 %v2372, %v2456
    %v2458 = vpop.f32.mrb[0].mxu0
    %v2459 = vpop.f32.mrb[0].mxu0
    %v2460 = vpop.f32.mrb[0].mxu0
    %2461 = vdwg.mxu0
    %v2462 = vmax.f32 %v2457, 0.0
    %v2463 = vpack.c.bf16 %v2462, %v2462
    %v2464 = vld [vmem:[%s5] sm:$0xf]
    %v2465 = vld [vmem:[%s5 + $0x4] sm:$0xf]
    %v2466 = vld [vmem:[%s5 + $0x8] sm:$0xf]
    %v2467 = vld [vmem:[%s5 + $0xc] sm:$0xf]
    %v2468 = vld [vmem:[%s5 + $0x10] sm:$0xf]
    %v2469 = vld [vmem:[%s5 + $0x14] sm:$0xf]
    %v2470 = vld [vmem:[%s5 + $0x18] sm:$0xf]
    %v2471 = vld [vmem:[%s5 + $0x1c] sm:$0xf]
    %v2472 = vld [vmem:[%s5 + $0x20] sm:$0xf]
    %v2473 = vld [vmem:[%s5 + $0x24] sm:$0xf]
    %v2474 = vld [vmem:[%s5 + $0x28] sm:$0xf]
    %v2475 = vld [vmem:[%s5 + $0x2c] sm:$0xf]
    %v2476 = vld [vmem:[%s5 + $0x30] sm:$0xf]
    %v2477 = vld [vmem:[%s5 + $0x34] sm:$0xf]
    %v2478 = vld [vmem:[%s5 + $0x38] sm:$0xf]
    %v2479 = vld [vmem:[%s5 + $0x3c] sm:$0xf]
    %v2480 = vld [vmem:[%s6] sm:$0x1]
    %v2482 = vlaneseq
    %v2483 = vshrl.u32 %v2482, 7
    %v2484 = vsub.s32 0, %v2483
    %v2485 = vrot.slane %v2480, %v2484
    %v2503 = vunpack.c.l.b16 %v2464
    %v2504 = vunpack.c.l.b16 %v2465
    %v2505 = vunpack.c.l.b16 %v2466
    %v2506 = vunpack.c.l.b16 %v2467
    %v2507 = vunpack.c.l.b16 %v2468
    %v2508 = vunpack.c.l.b16 %v2469
    %v2509 = vunpack.c.l.b16 %v2470
    %v2510 = vunpack.c.l.b16 %v2471
    %v2511 = vunpack.c.l.b16 %v2472
    %v2512 = vunpack.c.l.b16 %v2473
    %v2513 = vunpack.c.l.b16 %v2474
    %v2514 = vunpack.c.l.b16 %v2475
    %v2515 = vunpack.c.l.b16 %v2476
    %v2516 = vunpack.c.l.b16 %v2477
    %v2517 = vunpack.c.l.b16 %v2478
    %v2518 = vunpack.c.l.b16 %v2479
    %v2519 = vpack.c.b16 %v2504, %v2503
    %v2520 = vpack.c.b16 %v2506, %v2505
    %v2521 = vpack.c.b16 %v2508, %v2507
    %v2522 = vpack.c.b16 %v2510, %v2509
    %v2523 = vpack.c.b16 %v2512, %v2511
    %v2524 = vpack.c.b16 %v2514, %v2513
    %v2525 = vpack.c.b16 %v2516, %v2515
    %v2526 = vpack.c.b16 %v2518, %v2517
    %2535 = vmatprep.subr.bf16.mxu0 0
    %2536 = vmatpush1.bf16.msra.mxu0 %v2519
    %2537 = vmatprep.subr.bf16.mxu0 0
    %2538 = vmatpush1.bf16.msra.mxu0 %v2520
    %2539 = vmatprep.subr.bf16.mxu0 0
    %2540 = vmatpush1.bf16.msra.mxu0 %v2521
    %2541 = vmatprep.subr.bf16.mxu0 0
    %2542 = vmatpush1.bf16.msra.mxu0 %v2522
    %2543 = vmatprep.subr.bf16.mxu0 0
    %2544 = vmatpush1.bf16.msra.mxu0 %v2523
    %2545 = vmatprep.subr.bf16.mxu0 0
    %2546 = vmatpush1.bf16.msra.mxu0 %v2524
    %2547 = vmatprep.subr.bf16.mxu0 0
    %2548 = vmatpush1.bf16.msra.mxu0 %v2525
    %2549 = vmatprep.subr.bf16.mxu0 0
    %2550 = vmatpush1.bf16.msra.mxu0 %v2526
    %2551 = vmatprep.subr.bf16.mxu0 0
    %2552 = vmatpush1.bf16.msra.mxu0 0
    %2553 = vmatprep.subr.bf16.mxu0 0
    %2554 = vmatpush1.bf16.msra.mxu0 0
    %2555 = vmatprep.subr.bf16.mxu0 0
    %2556 = vmatpush1.bf16.msra.mxu0 0
    %2557 = vmatprep.subr.bf16.mxu0 0
    %2558 = vmatpush1.bf16.msra.mxu0 0
    %2559 = vmatprep.subr.bf16.mxu0 0
    %2560 = vmatpush1.bf16.msra.mxu0 0
    %2561 = vmatprep.subr.bf16.mxu0 0
    %2562 = vmatpush1.bf16.msra.mxu0 0
    %2563 = vmatprep.subr.bf16.mxu0 0
    %2564 = vmatpush1.bf16.msra.mxu0 0
    %2565 = vmatprep.subr.bf16.mxu0 0
    %2566 = vmatpush1.bf16.msra.mxu0 0
    %2567 = vmatprep.mubr.bf16.mxu0 0
    %2568 = vmatmul.mubr.bf16.gmra.mrb[0].mxu0 %v2463
    %v2569 = vpop.f32.mrb[0].mxu0
    %v2570 = vadd.f32 %v2485, %v2569
    %v2571 = vpop.f32.mrb[0].mxu0
    %v2572 = vpop.f32.mrb[0].mxu0
    %v2573 = vpop.f32.mrb[0].mxu0
    %2574 = vdwg.mxu0
    %2575 = vst [vmem:[#allocation2] sm:$0x3] %v2570
    // Predicated region
    $region30: #{net_forward.5} parent=1 // pred_check
      _
    $region31: #{net_forward.5} parent=1 // pred_check_branch
      %2577 = sbr.rel (0) target = $region33
    $region32: #{net_forward.5} parent=1 // pred_region
      %s2579 = ssub.s32 32, 32
      %2580 = vsyncadd [#allocation3], %s2579
      %s2582 = sshll.u32 [#allocation2], 4
      %s2583 = int_to_ptr.vmem [resolvable:$true] %s2582
      %2585 = dma.vmem_to_hbm [thread:$0]  %s2583, 32, %s7, [#allocation3]
    $region33: #{net_forward.5} parent=1 // pred_fallthru
      _
    // Predicated region
    $region34: #{net_forward.5} parent=1 // pred_check
      _
    $region35: #{net_forward.5} parent=1 // pred_check_branch
      %2587 = sbr.rel (0) target = $region37
    $region36: #{net_forward.5} parent=1 // pred_region
      %2588 = dma.done [#allocation3], 32
    $region37: #{net_forward.5} parent=1 // pred_fallthru
      _
    %2589 = vsyncpa [#allocation3], 1

// kernel: net_forward.4
$region0: #{net_forward.4}
  #allocation0 [shape = 'u32[]', space=smem, size = 0x4, offset = 0x4, fixed_abs, tag = 'smem constant byte address 0x4 - core index']
  #allocation1 [shape = 'u32[144,128]{1,0:T(1,128)}', space=vmem, size = 0x12000, scoped, tag = 'internal scratch']
  %s0 = inlined_call_operand.vmem [shape: bf16[2,4,25,3200], index: 0, kind: input, shape index: {}]
  %s1 = inlined_call_operand.vmem [shape: bf16[3200,128], index: 1, kind: input, shape index: {}]
  %s2 = inlined_call_operand.vmem [shape: f32[1,128], index: 2, kind: input, shape index: {}]
  %s3 = inlined_call_operand.vmem [shape: bf16[2,25,128], index: 3, kind: output, shape index: {}]
  %s4 = sld [smem:[#allocation0]]
  $region45: #{net_forward.4} parent=0
    _
  %s6 = ssub.s32 1, %s4
  %s7 = scalar_select 0, %s6, %s4
  loop: start=0, step=1, limit=4
  $region2: #{net_forward.4} parent=0 // loop_pre_header
    _
  $region3: #{net_forward.4} parent=0 // loop_header
    %s9 = sphi 0, %s13
    %p10 = scmp.ge.s32.totalorder %s9, 4
    %s19 = sphi 0, %s21
    %s22 = sphi 0, %s19
    %s23 = sphi 0, %s22
    %s39 = sphi 0, %s23
    %s43 = sphi 0, %s43
    %s45 = sphi 0, %s43
    %s46 = sphi 0, %s45
    %s60 = sphi 0, %s46
    %s64 = sphi 0, %s64
    %s66 = sphi 0, %s64
    %s67 = sphi 0, %s66
    %s81 = sphi 0, %s67
    %s87 = sphi 0, %s89
    %s90 = sphi 0, %s87
    %s91 = sphi 0, %s90
    %s107 = sphi 0, %s91
  $region4: #{net_forward.4} parent=0 // loop_header_branch
    %12 = sbr.rel (%p10) target = $region8
  $region5: #{net_forward.4} parent=0 // loop_body
    %s14 = ssub.s32 %s9, 1
    %s15 = ssub.s32 %s9, 2
    %s16 = sadd.s32 %s9, 1
    %s17 = ssub.s32 %s9, %s16
    %p18 = scmp.eq.s32.totalorder %s17, 0
    %s20 = sadd.s32 %s19, 1
    %s21 = scalar_select %p18, %s19, %s20
    %p24 = pneg %p18
    %p25 = scmp.eq.s32.totalorder %s9, 1
    %p26 = por %p24, %p25
    %p27 = scmp.ne.s32.totalorder %s19, %s22
    %p28 = scmp.eq.s32.totalorder %s9, 0
    %p29 = por %p27, %p28
    %p30 = scmp.ne.s32.totalorder %s19, %s22
    %p31 = scmp.eq.s32.totalorder %s14, 1
    %p32 = por %p30, %p31
    %p33 = scmp.ne.s32.totalorder %s22, %s23
    %p34 = scmp.eq.s32.totalorder %s14, 0
    %p35 = por %p33, %p34
    %p36 = scmp.ne.s32.totalorder %s22, %s23
    %p37 = scmp.eq.s32.totalorder %s15, 1
    %p38 = por %p36, %p37
    %p40 = scmp.ne.s32.totalorder %s23, %s39
    %p41 = scmp.eq.s32.totalorder %s15, 0
    %p42 = por %p40, %p41
    %s44 = sadd.s32 %s43, 1
    %p47 = scmp.eq.s32.totalorder %s9, 1
    %p48 = scmp.ne.s32.totalorder %s43, %s45
    %p49 = scmp.eq.s32.totalorder %s9, 0
    %p50 = por %p48, %p49
    %p51 = scmp.ne.s32.totalorder %s43, %s45
    %p52 = scmp.eq.s32.totalorder %s14, 1
    %p53 = por %p51, %p52
    %p54 = scmp.ne.s32.totalorder %s45, %s46
    %p55 = scmp.eq.s32.totalorder %s14, 0
    %p56 = por %p54, %p55
    %p57 = scmp.ne.s32.totalorder %s45, %s46
    %p58 = scmp.eq.s32.totalorder %s15, 1
    %p59 = por %p57, %p58
    %p61 = scmp.ne.s32.totalorder %s46, %s60
    %p62 = scmp.eq.s32.totalorder %s15, 0
    %p63 = por %p61, %p62
    %s65 = sadd.s32 %s64, 1
    %p68 = scmp.eq.s32.totalorder %s9, 1
    %p69 = scmp.ne.s32.totalorder %s64, %s66
    %p70 = scmp.eq.s32.totalorder %s9, 0
    %p71 = por %p69, %p70
    %p72 = scmp.ne.s32.totalorder %s64, %s66
    %p73 = scmp.eq.s32.totalorder %s14, 1
    %p74 = por %p72, %p73
    %p75 = scmp.ne.s32.totalorder %s66, %s67
    %p76 = scmp.eq.s32.totalorder %s14, 0
    %p77 = por %p75, %p76
    %p78 = scmp.ne.s32.totalorder %s66, %s67
    %p79 = scmp.eq.s32.totalorder %s15, 1
    %p80 = por %p78, %p79
    %p82 = scmp.ne.s32.totalorder %s67, %s81
    %p83 = scmp.eq.s32.totalorder %s15, 0
    %p84 = por %p82, %p83
    %s85 = ssub.s32 %s9, %s16
    %p86 = scmp.eq.s32.totalorder %s85, 0
    %s88 = sadd.s32 %s87, 1
    %s89 = scalar_select %p86, %s87, %s88
    %p92 = pneg %p86
    %p93 = scmp.eq.s32.totalorder %s9, 1
    %p94 = por %p92, %p93
    %p95 = scmp.ne.s32.totalorder %s87, %s90
    %p96 = scmp.eq.s32.totalorder %s9, 0
    %p97 = por %p95, %p96
    %p98 = scmp.ne.s32.totalorder %s87, %s90
    %p99 = scmp.eq.s32.totalorder %s14, 1
    %p100 = por %p98, %p99
    %p101 = scmp.ne.s32.totalorder %s90, %s91
    %p102 = scmp.eq.s32.totalorder %s14, 0
    %p103 = por %p101, %p102
    %p104 = scmp.ne.s32.totalorder %s90, %s91
    %p105 = scmp.eq.s32.totalorder %s15, 1
    %p106 = por %p104, %p105
    %p108 = scmp.ne.s32.totalorder %s91, %s107
    %p109 = scmp.eq.s32.totalorder %s15, 0
    %p110 = por %p108, %p109
    %p111 = scmp.le.s32.totalorder 1, %s9
    %p112 = scmp.lt.s32.totalorder %s9, 3
    %p113 = pnand %p111, %p112
    %p114 = pneg %p113
    // Predicated region
    $region9: #{net_forward.4} parent=5 // pred_check
      _
    $region10: #{net_forward.4} parent=5 // pred_check_branch
      %116 = sbr.rel (%p113) target = $region12
    $region11: #{net_forward.4} parent=5 // pred_region
      %s117 = ssub.s32 %s9, 1
      // Predicated region
      $region13: #{net_forward.4} parent=11 // pred_check
        %p118 = pneg %p56
      $region14: #{net_forward.4} parent=11 // pred_check_branch
        %120 = sbr.rel (%p118) target = $region16
      $region15: #{net_forward.4} parent=11 // pred_region
        _
      $region16: #{net_forward.4} parent=11 // pred_fallthru
        _
      // Predicated region
      $region17: #{net_forward.4} parent=11 // pred_check
        %p121 = pneg %p77
      $region18: #{net_forward.4} parent=11 // pred_check_branch
        %123 = sbr.rel (%p121) target = $region20
      $region19: #{net_forward.4} parent=11 // pred_region
        _
      $region20: #{net_forward.4} parent=11 // pred_fallthru
        _
    $region12: #{net_forward.4} parent=5 // pred_fallthru
      _
    %p124 = scmp.lt.s32.totalorder %s9, 2
    // Predicated region
    $region21: #{net_forward.4} parent=5 // pred_check
      %p125 = pneg %p124
    $region22: #{net_forward.4} parent=5 // pred_check_branch
      %127 = sbr.rel (%p125) target = $region24
    $region23: #{net_forward.4} parent=5 // pred_region
      // Predicated region
      $region25: #{net_forward.4} parent=23 // pred_check
        %p128 = pneg %p29
      $region26: #{net_forward.4} parent=23 // pred_check_branch
        %130 = sbr.rel (%p128) target = $region28
      $region27: #{net_forward.4} parent=23 // pred_region
        %p131 = scmp.lt.s32.totalorder %s9, 1
        %s132 = scalar_select %p131, %s9, 1
        %s133 = smul.addr %s132, 400
        %s134 = smul.addr %s133, 4
        %s135 = scalar_lea.vmem %s0, %s134
      $region28: #{net_forward.4} parent=23 // pred_fallthru
        _
    $region24: #{net_forward.4} parent=5 // pred_fallthru
      _
    %p136 = scmp.le.s32.totalorder 1, %s9
    %p137 = scmp.lt.s32.totalorder %s9, 3
    %p138 = pnand %p136, %p137
    %p139 = pneg %p138
    // Predicated region
    $region29: #{net_forward.4} parent=5 // pred_check
      _
    $region30: #{net_forward.4} parent=5 // pred_check_branch
      %141 = sbr.rel (%p138) target = $region32
    $region31: #{net_forward.4} parent=5 // pred_region
      %s142 = ssub.s32 %s9, 1
      %p143 = scmp.lt.s32.totalorder %s14, 1
      %s144 = scalar_select %p143, %s14, 1
      %s145 = smul.addr %s144, 400
      %s146 = smul.addr %s145, 4
      %s147 = scalar_lea.vmem %s0, %s146
      %p148 = pneg %p35
      %p149 = pneg %p32
      %p150 = pneg %p56
      %p151 = pneg %p53
      %p152 = pneg %p77
      %p153 = pneg %p74
      %p154 = pneg %p103
      %p155 = pneg %p100
      %p156 = scmp.lt.s32.totalorder %s14, 1
      %s157 = scalar_select %p156, %s14, 1
      %s158 = smul.addr %s157, 4
      %s159 = smul.addr %s158, 4
      %s160 = scalar_lea.vmem %s3, %s159
      %p161 = scmp.lt.s32.totalorder %s14, 1
      %s162 = scalar_select %p161, %s14, 1
      %s163 = smul.addr %s162, 400
      %s164 = smul.addr %s163, 4
      %s165 = scalar_lea.vmem %s0, %s164
      %p166 = scmp.lt.s32.totalorder %s14, 1
      %s167 = scalar_select %p166, %s14, 1
      %s168 = smul.addr %s167, 4
      %s169 = smul.addr %s168, 4
      %s170 = scalar_lea.vmem %s3, %s169
      %v172 = vld [vmem:[%s1] sm:$0xf]
      %v173 = vld [vmem:[%s1 + $0x4] sm:$0xf]
      %v174 = vld [vmem:[%s1 + $0x8] sm:$0xf]
      %v175 = vld [vmem:[%s1 + $0xc] sm:$0xf]
      %v176 = vld [vmem:[%s1 + $0x10] sm:$0xf]
      %v177 = vld [vmem:[%s1 + $0x14] sm:$0xf]
      %v178 = vld [vmem:[%s1 + $0x18] sm:$0xf]
      %v179 = vld [vmem:[%s1 + $0x1c] sm:$0xf]
      %v180 = vld [vmem:[%s1 + $0x20] sm:$0xf]
      %v181 = vld [vmem:[%s1 + $0x24] sm:$0xf]
      %v182 = vld [vmem:[%s1 + $0x28] sm:$0xf]
      %v183 = vld [vmem:[%s1 + $0x2c] sm:$0xf]
      %v184 = vld [vmem:[%s1 + $0x30] sm:$0xf]
      %v185 = vld [vmem:[%s1 + $0x34] sm:$0xf]
      %v186 = vld [vmem:[%s1 + $0x38] sm:$0xf]
      %v187 = vld [vmem:[%s1 + $0x3c] sm:$0xf]
      %v188 = vld [vmem:[%s1 + $0x40] sm:$0xf]
      %v189 = vld [vmem:[%s1 + $0x44] sm:$0xf]
      %v190 = vld [vmem:[%s1 + $0x48] sm:$0xf]
      %v191 = vld [vmem:[%s1 + $0x4c] sm:$0xf]
      %v192 = vld [vmem:[%s1 + $0x50] sm:$0xf]
      %v193 = vld [vmem:[%s1 + $0x54] sm:$0xf]
      %v194 = vld [vmem:[%s1 + $0x58] sm:$0xf]
      %v195 = vld [vmem:[%s1 + $0x5c] sm:$0xf]
      %v196 = vld [vmem:[%s1 + $0x60] sm:$0xf]
      %v197 = vld [vmem:[%s1 + $0x64] sm:$0xf]
      %v198 = vld [vmem:[%s1 + $0x68] sm:$0xf]
      %v199 = vld [vmem:[%s1 + $0x6c] sm:$0xf]
      %v200 = vld [vmem:[%s1 + $0x70] sm:$0xf]
      %v201 = vld [vmem:[%s1 + $0x74] sm:$0xf]
      %v202 = vld [vmem:[%s1 + $0x78] sm:$0xf]
      %v203 = vld [vmem:[%s1 + $0x7c] sm:$0xf]
      %v204 = vld [vmem:[%s1 + $0x80] sm:$0xf]
      %v205 = vld [vmem:[%s1 + $0x84] sm:$0xf]
      %v206 = vld [vmem:[%s1 + $0x88] sm:$0xf]
      %v207 = vld [vmem:[%s1 + $0x8c] sm:$0xf]
      %v208 = vld [vmem:[%s1 + $0x90] sm:$0xf]
      %v209 = vld [vmem:[%s1 + $0x94] sm:$0xf]
      %v210 = vld [vmem:[%s1 + $0x98] sm:$0xf]
      %v211 = vld [vmem:[%s1 + $0x9c] sm:$0xf]
      %v212 = vld [vmem:[%s1 + $0xa0] sm:$0xf]
      %v213 = vld [vmem:[%s1 + $0xa4] sm:$0xf]
      %v214 = vld [vmem:[%s1 + $0xa8] sm:$0xf]
      %v215 = vld [vmem:[%s1 + $0xac] sm:$0xf]
      %v216 = vld [vmem:[%s1 + $0xb0] sm:$0xf]
      %v217 = vld [vmem:[%s1 + $0xb4] sm:$0xf]
      %v218 = vld [vmem:[%s1 + $0xb8] sm:$0xf]
      %v219 = vld [vmem:[%s1 + $0xbc] sm:$0xf]
      %v220 = vld [vmem:[%s1 + $0xc0] sm:$0xf]
      %v221 = vld [vmem:[%s1 + $0xc4] sm:$0xf]
      %v222 = vld [vmem:[%s1 + $0xc8] sm:$0xf]
      %v223 = vld [vmem:[%s1 + $0xcc] sm:$0xf]
      %v224 = vld [vmem:[%s1 + $0xd0] sm:$0xf]
      %v225 = vld [vmem:[%s1 + $0xd4] sm:$0xf]
      %v226 = vld [vmem:[%s1 + $0xd8] sm:$0xf]
      %v227 = vld [vmem:[%s1 + $0xdc] sm:$0xf]
      %v228 = vld [vmem:[%s1 + $0xe0] sm:$0xf]
      %v229 = vld [vmem:[%s1 + $0xe4] sm:$0xf]
      %v230 = vld [vmem:[%s1 + $0xe8] sm:$0xf]
      %v231 = vld [vmem:[%s1 + $0xec] sm:$0xf]
      %v232 = vld [vmem:[%s1 + $0xf0] sm:$0xf]
      %v233 = vld [vmem:[%s1 + $0xf4] sm:$0xf]
      %v234 = vld [vmem:[%s1 + $0xf8] sm:$0xf]
      %v235 = vld [vmem:[%s1 + $0xfc] sm:$0xf]
      %v236 = vld [vmem:[%s1 + $0x100] sm:$0xf]
      %v237 = vld [vmem:[%s1 + $0x104] sm:$0xf]
      %v238 = vld [vmem:[%s1 + $0x108] sm:$0xf]
      %v239 = vld [vmem:[%s1 + $0x10c] sm:$0xf]
      %v240 = vld [vmem:[%s1 + $0x110] sm:$0xf]
      %v241 = vld [vmem:[%s1 + $0x114] sm:$0xf]
      %v242 = vld [vmem:[%s1 + $0x118] sm:$0xf]
      %v243 = vld [vmem:[%s1 + $0x11c] sm:$0xf]
      %v244 = vld [vmem:[%s1 + $0x120] sm:$0xf]
      %v245 = vld [vmem:[%s1 + $0x124] sm:$0xf]
      %v246 = vld [vmem:[%s1 + $0x128] sm:$0xf]
      %v247 = vld [vmem:[%s1 + $0x12c] sm:$0xf]
      %v248 = vld [vmem:[%s1 + $0x130] sm:$0xf]
      %v249 = vld [vmem:[%s1 + $0x134] sm:$0xf]
      %v250 = vld [vmem:[%s1 + $0x138] sm:$0xf]
      %v251 = vld [vmem:[%s1 + $0x13c] sm:$0xf]
      %v252 = vld [vmem:[%s1 + $0x140] sm:$0xf]
      %v253 = vld [vmem:[%s1 + $0x144] sm:$0xf]
      %v254 = vld [vmem:[%s1 + $0x148] sm:$0xf]
      %v255 = vld [vmem:[%s1 + $0x14c] sm:$0xf]
      %v256 = vld [vmem:[%s1 + $0x150] sm:$0xf]
      %v257 = vld [vmem:[%s1 + $0x154] sm:$0xf]
      %v258 = vld [vmem:[%s1 + $0x158] sm:$0xf]
      %v259 = vld [vmem:[%s1 + $0x15c] sm:$0xf]
      %v260 = vld [vmem:[%s1 + $0x160] sm:$0xf]
      %v261 = vld [vmem:[%s1 + $0x164] sm:$0xf]
      %v262 = vld [vmem:[%s1 + $0x168] sm:$0xf]
      %v263 = vld [vmem:[%s1 + $0x16c] sm:$0xf]
      %v264 = vld [vmem:[%s1 + $0x170] sm:$0xf]
      %v265 = vld [vmem:[%s1 + $0x174] sm:$0xf]
      %v266 = vld [vmem:[%s1 + $0x178] sm:$0xf]
      %v267 = vld [vmem:[%s1 + $0x17c] sm:$0xf]
      %v268 = vld [vmem:[%s1 + $0x180] sm:$0xf]
      %v269 = vld [vmem:[%s1 + $0x184] sm:$0xf]
      %v270 = vld [vmem:[%s1 + $0x188] sm:$0xf]
      %v271 = vld [vmem:[%s1 + $0x18c] sm:$0xf]
      %v272 = vld [vmem:[%s1 + $0x190] sm:$0xf]
      %v273 = vld [vmem:[%s1 + $0x194] sm:$0xf]
      %v274 = vld [vmem:[%s1 + $0x198] sm:$0xf]
      %v275 = vld [vmem:[%s1 + $0x19c] sm:$0xf]
      %v276 = vld [vmem:[%s1 + $0x1a0] sm:$0xf]
      %v277 = vld [vmem:[%s1 + $0x1a4] sm:$0xf]
      %v278 = vld [vmem:[%s1 + $0x1a8] sm:$0xf]
      %v279 = vld [vmem:[%s1 + $0x1ac] sm:$0xf]
      %v280 = vld [vmem:[%s1 + $0x1b0] sm:$0xf]
      %v281 = vld [vmem:[%s1 + $0x1b4] sm:$0xf]
      %v282 = vld [vmem:[%s1 + $0x1b8] sm:$0xf]
      %v283 = vld [vmem:[%s1 + $0x1bc] sm:$0xf]
      %v284 = vld [vmem:[%s1 + $0x1c0] sm:$0xf]
      %v285 = vld [vmem:[%s1 + $0x1c4] sm:$0xf]
      %v286 = vld [vmem:[%s1 + $0x1c8] sm:$0xf]
      %v287 = vld [vmem:[%s1 + $0x1cc] sm:$0xf]
      %v288 = vld [vmem:[%s1 + $0x1d0] sm:$0xf]
      %v289 = vld [vmem:[%s1 + $0x1d4] sm:$0xf]
      %v290 = vld [vmem:[%s1 + $0x1d8] sm:$0xf]
      %v291 = vld [vmem:[%s1 + $0x1dc] sm:$0xf]
      %v292 = vld [vmem:[%s1 + $0x1e0] sm:$0xf]
      %v293 = vld [vmem:[%s1 + $0x1e4] sm:$0xf]
      %v294 = vld [vmem:[%s1 + $0x1e8] sm:$0xf]
      %v295 = vld [vmem:[%s1 + $0x1ec] sm:$0xf]
      %v296 = vld [vmem:[%s1 + $0x1f0] sm:$0xf]
      %v297 = vld [vmem:[%s1 + $0x1f4] sm:$0xf]
      %v298 = vld [vmem:[%s1 + $0x1f8] sm:$0xf]
      %v299 = vld [vmem:[%s1 + $0x1fc] sm:$0xf]
      %v300 = vld [vmem:[%s1 + $0x200] sm:$0xf]
      %v301 = vld [vmem:[%s1 + $0x204] sm:$0xf]
      %v302 = vld [vmem:[%s1 + $0x208] sm:$0xf]
      %v303 = vld [vmem:[%s1 + $0x20c] sm:$0xf]
      %v304 = vld [vmem:[%s1 + $0x210] sm:$0xf]
      %v305 = vld [vmem:[%s1 + $0x214] sm:$0xf]
      %v306 = vld [vmem:[%s1 + $0x218] sm:$0xf]
      %v307 = vld [vmem:[%s1 + $0x21c] sm:$0xf]
      %v308 = vld [vmem:[%s1 + $0x220] sm:$0xf]
      %v309 = vld [vmem:[%s1 + $0x224] sm:$0xf]
      %v310 = vld [vmem:[%s1 + $0x228] sm:$0xf]
      %v311 = vld [vmem:[%s1 + $0x22c] sm:$0xf]
      %v312 = vld [vmem:[%s1 + $0x230] sm:$0xf]
      %v313 = vld [vmem:[%s1 + $0x234] sm:$0xf]
      %v314 = vld [vmem:[%s1 + $0x238] sm:$0xf]
      %v315 = vld [vmem:[%s1 + $0x23c] sm:$0xf]
      %v316 = vld [vmem:[%s1 + $0x240] sm:$0xf]
      %v317 = vld [vmem:[%s1 + $0x244] sm:$0xf]
      %v318 = vld [vmem:[%s1 + $0x248] sm:$0xf]
      %v319 = vld [vmem:[%s1 + $0x24c] sm:$0xf]
      %v320 = vld [vmem:[%s1 + $0x250] sm:$0xf]
      %v321 = vld [vmem:[%s1 + $0x254] sm:$0xf]
      %v322 = vld [vmem:[%s1 + $0x258] sm:$0xf]
      %v323 = vld [vmem:[%s1 + $0x25c] sm:$0xf]
      %v324 = vld [vmem:[%s1 + $0x260] sm:$0xf]
      %v325 = vld [vmem:[%s1 + $0x264] sm:$0xf]
      %v326 = vld [vmem:[%s1 + $0x268] sm:$0xf]
      %v327 = vld [vmem:[%s1 + $0x26c] sm:$0xf]
      %v328 = vld [vmem:[%s1 + $0x270] sm:$0xf]
      %v329 = vld [vmem:[%s1 + $0x274] sm:$0xf]
      %v330 = vld [vmem:[%s1 + $0x278] sm:$0xf]
      %v331 = vld [vmem:[%s1 + $0x27c] sm:$0xf]
      %v332 = vld [vmem:[%s1 + $0x280] sm:$0xf]
      %v333 = vld [vmem:[%s1 + $0x284] sm:$0xf]
      %v334 = vld [vmem:[%s1 + $0x288] sm:$0xf]
      %v335 = vld [vmem:[%s1 + $0x28c] sm:$0xf]
      %v336 = vld [vmem:[%s1 + $0x290] sm:$0xf]
      %v337 = vld [vmem:[%s1 + $0x294] sm:$0xf]
      %v338 = vld [vmem:[%s1 + $0x298] sm:$0xf]
      %v339 = vld [vmem:[%s1 + $0x29c] sm:$0xf]
      %v340 = vld [vmem:[%s1 + $0x2a0] sm:$0xf]
      %v341 = vld [vmem:[%s1 + $0x2a4] sm:$0xf]
      %v342 = vld [vmem:[%s1 + $0x2a8] sm:$0xf]
      %v343 = vld [vmem:[%s1 + $0x2ac] sm:$0xf]
      %v344 = vld [vmem:[%s1 + $0x2b0] sm:$0xf]
      %v345 = vld [vmem:[%s1 + $0x2b4] sm:$0xf]
      %v346 = vld [vmem:[%s1 + $0x2b8] sm:$0xf]
      %v347 = vld [vmem:[%s1 + $0x2bc] sm:$0xf]
      %v348 = vld [vmem:[%s1 + $0x2c0] sm:$0xf]
      %v349 = vld [vmem:[%s1 + $0x2c4] sm:$0xf]
      %v350 = vld [vmem:[%s1 + $0x2c8] sm:$0xf]
      %v351 = vld [vmem:[%s1 + $0x2cc] sm:$0xf]
      %v352 = vld [vmem:[%s1 + $0x2d0] sm:$0xf]
      %v353 = vld [vmem:[%s1 + $0x2d4] sm:$0xf]
      %v354 = vld [vmem:[%s1 + $0x2d8] sm:$0xf]
      %v355 = vld [vmem:[%s1 + $0x2dc] sm:$0xf]
      %v356 = vld [vmem:[%s1 + $0x2e0] sm:$0xf]
      %v357 = vld [vmem:[%s1 + $0x2e4] sm:$0xf]
      %v358 = vld [vmem:[%s1 + $0x2e8] sm:$0xf]
      %v359 = vld [vmem:[%s1 + $0x2ec] sm:$0xf]
      %v360 = vld [vmem:[%s1 + $0x2f0] sm:$0xf]
      %v361 = vld [vmem:[%s1 + $0x2f4] sm:$0xf]
      %v362 = vld [vmem:[%s1 + $0x2f8] sm:$0xf]
      %v363 = vld [vmem:[%s1 + $0x2fc] sm:$0xf]
      %v364 = vld [vmem:[%s1 + $0x300] sm:$0xf]
      %v365 = vld [vmem:[%s1 + $0x304] sm:$0xf]
      %v366 = vld [vmem:[%s1 + $0x308] sm:$0xf]
      %v367 = vld [vmem:[%s1 + $0x30c] sm:$0xf]
      %v368 = vld [vmem:[%s1 + $0x310] sm:$0xf]
      %v369 = vld [vmem:[%s1 + $0x314] sm:$0xf]
      %v370 = vld [vmem:[%s1 + $0x318] sm:$0xf]
      %v371 = vld [vmem:[%s1 + $0x31c] sm:$0xf]
      %v372 = vld [vmem:[%s1 + $0x320] sm:$0xf]
      %v373 = vld [vmem:[%s1 + $0x324] sm:$0xf]
      %v374 = vld [vmem:[%s1 + $0x328] sm:$0xf]
      %v375 = vld [vmem:[%s1 + $0x32c] sm:$0xf]
      %v376 = vld [vmem:[%s1 + $0x330] sm:$0xf]
      %v377 = vld [vmem:[%s1 + $0x334] sm:$0xf]
      %v378 = vld [vmem:[%s1 + $0x338] sm:$0xf]
      %v379 = vld [vmem:[%s1 + $0x33c] sm:$0xf]
      %v380 = vld [vmem:[%s1 + $0x340] sm:$0xf]
      %v381 = vld [vmem:[%s1 + $0x344] sm:$0xf]
      %v382 = vld [vmem:[%s1 + $0x348] sm:$0xf]
      %v383 = vld [vmem:[%s1 + $0x34c] sm:$0xf]
      %v384 = vld [vmem:[%s1 + $0x350] sm:$0xf]
      %v385 = vld [vmem:[%s1 + $0x354] sm:$0xf]
      %v386 = vld [vmem:[%s1 + $0x358] sm:$0xf]
      %v387 = vld [vmem:[%s1 + $0x35c] sm:$0xf]
      %v388 = vld [vmem:[%s1 + $0x360] sm:$0xf]
      %v389 = vld [vmem:[%s1 + $0x364] sm:$0xf]
      %v390 = vld [vmem:[%s1 + $0x368] sm:$0xf]
      %v391 = vld [vmem:[%s1 + $0x36c] sm:$0xf]
      %v392 = vld [vmem:[%s1 + $0x370] sm:$0xf]
      %v393 = vld [vmem:[%s1 + $0x374] sm:$0xf]
      %v394 = vld [vmem:[%s1 + $0x378] sm:$0xf]
      %v395 = vld [vmem:[%s1 + $0x37c] sm:$0xf]
      %v396 = vld [vmem:[%s1 + $0x380] sm:$0xf]
      %v397 = vld [vmem:[%s1 + $0x384] sm:$0xf]
      %v398 = vld [vmem:[%s1 + $0x388] sm:$0xf]
      %v399 = vld [vmem:[%s1 + $0x38c] sm:$0xf]
      %v400 = vld [vmem:[%s1 + $0x390] sm:$0xf]
      %v401 = vld [vmem:[%s1 + $0x394] sm:$0xf]
      %v402 = vld [vmem:[%s1 + $0x398] sm:$0xf]
      %v403 = vld [vmem:[%s1 + $0x39c] sm:$0xf]
      %v404 = vld [vmem:[%s1 + $0x3a0] sm:$0xf]
      %v405 = vld [vmem:[%s1 + $0x3a4] sm:$0xf]
      %v406 = vld [vmem:[%s1 + $0x3a8] sm:$0xf]
      %v407 = vld [vmem:[%s1 + $0x3ac] sm:$0xf]
      %v408 = vld [vmem:[%s1 + $0x3b0] sm:$0xf]
      %v409 = vld [vmem:[%s1 + $0x3b4] sm:$0xf]
      %v410 = vld [vmem:[%s1 + $0x3b8] sm:$0xf]
      %v411 = vld [vmem:[%s1 + $0x3bc] sm:$0xf]
      %v412 = vld [vmem:[%s1 + $0x3c0] sm:$0xf]
      %v413 = vld [vmem:[%s1 + $0x3c4] sm:$0xf]
      %v414 = vld [vmem:[%s1 + $0x3c8] sm:$0xf]
      %v415 = vld [vmem:[%s1 + $0x3cc] sm:$0xf]
      %v416 = vld [vmem:[%s1 + $0x3d0] sm:$0xf]
      %v417 = vld [vmem:[%s1 + $0x3d4] sm:$0xf]
      %v418 = vld [vmem:[%s1 + $0x3d8] sm:$0xf]
      %v419 = vld [vmem:[%s1 + $0x3dc] sm:$0xf]
      %v420 = vld [vmem:[%s1 + $0x3e0] sm:$0xf]
      %v421 = vld [vmem:[%s1 + $0x3e4] sm:$0xf]
      %v422 = vld [vmem:[%s1 + $0x3e8] sm:$0xf]
      %v423 = vld [vmem:[%s1 + $0x3ec] sm:$0xf]
      %v424 = vld [vmem:[%s1 + $0x3f0] sm:$0xf]
      %v425 = vld [vmem:[%s1 + $0x3f4] sm:$0xf]
      %v426 = vld [vmem:[%s1 + $0x3f8] sm:$0xf]
      %v427 = vld [vmem:[%s1 + $0x3fc] sm:$0xf]
      %v428 = vld [vmem:[%s1 + $0x400] sm:$0xf]
      %v429 = vld [vmem:[%s1 + $0x404] sm:$0xf]
      %v430 = vld [vmem:[%s1 + $0x408] sm:$0xf]
      %v431 = vld [vmem:[%s1 + $0x40c] sm:$0xf]
      %v432 = vld [vmem:[%s1 + $0x410] sm:$0xf]
      %v433 = vld [vmem:[%s1 + $0x414] sm:$0xf]
      %v434 = vld [vmem:[%s1 + $0x418] sm:$0xf]
      %v435 = vld [vmem:[%s1 + $0x41c] sm:$0xf]
      %v436 = vld [vmem:[%s1 + $0x420] sm:$0xf]
      %v437 = vld [vmem:[%s1 + $0x424] sm:$0xf]
      %v438 = vld [vmem:[%s1 + $0x428] sm:$0xf]
      %v439 = vld [vmem:[%s1 + $0x42c] sm:$0xf]
      %v440 = vld [vmem:[%s1 + $0x430] sm:$0xf]
      %v441 = vld [vmem:[%s1 + $0x434] sm:$0xf]
      %v442 = vld [vmem:[%s1 + $0x438] sm:$0xf]
      %v443 = vld [vmem:[%s1 + $0x43c] sm:$0xf]
      %v444 = vld [vmem:[%s1 + $0x440] sm:$0xf]
      %v445 = vld [vmem:[%s1 + $0x444] sm:$0xf]
      %v446 = vld [vmem:[%s1 + $0x448] sm:$0xf]
      %v447 = vld [vmem:[%s1 + $0x44c] sm:$0xf]
      %v448 = vld [vmem:[%s1 + $0x450] sm:$0xf]
      %v449 = vld [vmem:[%s1 + $0x454] sm:$0xf]
      %v450 = vld [vmem:[%s1 + $0x458] sm:$0xf]
      %v451 = vld [vmem:[%s1 + $0x45c] sm:$0xf]
      %v452 = vld [vmem:[%s1 + $0x460] sm:$0xf]
      %v453 = vld [vmem:[%s1 + $0x464] sm:$0xf]
      %v454 = vld [vmem:[%s1 + $0x468] sm:$0xf]
      %v455 = vld [vmem:[%s1 + $0x46c] sm:$0xf]
      %v456 = vld [vmem:[%s1 + $0x470] sm:$0xf]
      %v457 = vld [vmem:[%s1 + $0x474] sm:$0xf]
      %v458 = vld [vmem:[%s1 + $0x478] sm:$0xf]
      %v459 = vld [vmem:[%s1 + $0x47c] sm:$0xf]
      %v460 = vld [vmem:[%s1 + $0x480] sm:$0xf]
      %v461 = vld [vmem:[%s1 + $0x484] sm:$0xf]
      %v462 = vld [vmem:[%s1 + $0x488] sm:$0xf]
      %v463 = vld [vmem:[%s1 + $0x48c] sm:$0xf]
      %v464 = vld [vmem:[%s1 + $0x490] sm:$0xf]
      %v465 = vld [vmem:[%s1 + $0x494] sm:$0xf]
      %v466 = vld [vmem:[%s1 + $0x498] sm:$0xf]
      %v467 = vld [vmem:[%s1 + $0x49c] sm:$0xf]
      %v468 = vld [vmem:[%s1 + $0x4a0] sm:$0xf]
      %v469 = vld [vmem:[%s1 + $0x4a4] sm:$0xf]
      %v470 = vld [vmem:[%s1 + $0x4a8] sm:$0xf]
      %v471 = vld [vmem:[%s1 + $0x4ac] sm:$0xf]
      %v472 = vld [vmem:[%s1 + $0x4b0] sm:$0xf]
      %v473 = vld [vmem:[%s1 + $0x4b4] sm:$0xf]
      %v474 = vld [vmem:[%s1 + $0x4b8] sm:$0xf]
      %v475 = vld [vmem:[%s1 + $0x4bc] sm:$0xf]
      %v476 = vld [vmem:[%s1 + $0x4c0] sm:$0xf]
      %v477 = vld [vmem:[%s1 + $0x4c4] sm:$0xf]
      %v478 = vld [vmem:[%s1 + $0x4c8] sm:$0xf]
      %v479 = vld [vmem:[%s1 + $0x4cc] sm:$0xf]
      %v480 = vld [vmem:[%s1 + $0x4d0] sm:$0xf]
      %v481 = vld [vmem:[%s1 + $0x4d4] sm:$0xf]
      %v482 = vld [vmem:[%s1 + $0x4d8] sm:$0xf]
      %v483 = vld [vmem:[%s1 + $0x4dc] sm:$0xf]
      %v484 = vld [vmem:[%s1 + $0x4e0] sm:$0xf]
      %v485 = vld [vmem:[%s1 + $0x4e4] sm:$0xf]
      %v486 = vld [vmem:[%s1 + $0x4e8] sm:$0xf]
      %v487 = vld [vmem:[%s1 + $0x4ec] sm:$0xf]
      %v488 = vld [vmem:[%s1 + $0x4f0] sm:$0xf]
      %v489 = vld [vmem:[%s1 + $0x4f4] sm:$0xf]
      %v490 = vld [vmem:[%s1 + $0x4f8] sm:$0xf]
      %v491 = vld [vmem:[%s1 + $0x4fc] sm:$0xf]
      %v492 = vld [vmem:[%s1 + $0x500] sm:$0xf]
      %v493 = vld [vmem:[%s1 + $0x504] sm:$0xf]
      %v494 = vld [vmem:[%s1 + $0x508] sm:$0xf]
      %v495 = vld [vmem:[%s1 + $0x50c] sm:$0xf]
      %v496 = vld [vmem:[%s1 + $0x510] sm:$0xf]
      %v497 = vld [vmem:[%s1 + $0x514] sm:$0xf]
      %v498 = vld [vmem:[%s1 + $0x518] sm:$0xf]
      %v499 = vld [vmem:[%s1 + $0x51c] sm:$0xf]
      %v500 = vld [vmem:[%s1 + $0x520] sm:$0xf]
      %v501 = vld [vmem:[%s1 + $0x524] sm:$0xf]
      %v502 = vld [vmem:[%s1 + $0x528] sm:$0xf]
      %v503 = vld [vmem:[%s1 + $0x52c] sm:$0xf]
      %v504 = vld [vmem:[%s1 + $0x530] sm:$0xf]
      %v505 = vld [vmem:[%s1 + $0x534] sm:$0xf]
      %v506 = vld [vmem:[%s1 + $0x538] sm:$0xf]
      %v507 = vld [vmem:[%s1 + $0x53c] sm:$0xf]
      %v508 = vld [vmem:[%s1 + $0x540] sm:$0xf]
      %v509 = vld [vmem:[%s1 + $0x544] sm:$0xf]
      %v510 = vld [vmem:[%s1 + $0x548] sm:$0xf]
      %v511 = vld [vmem:[%s1 + $0x54c] sm:$0xf]
      %v512 = vld [vmem:[%s1 + $0x550] sm:$0xf]
      %v513 = vld [vmem:[%s1 + $0x554] sm:$0xf]
      %v514 = vld [vmem:[%s1 + $0x558] sm:$0xf]
      %v515 = vld [vmem:[%s1 + $0x55c] sm:$0xf]
      %v516 = vld [vmem:[%s1 + $0x560] sm:$0xf]
      %v517 = vld [vmem:[%s1 + $0x564] sm:$0xf]
      %v518 = vld [vmem:[%s1 + $0x568] sm:$0xf]
      %v519 = vld [vmem:[%s1 + $0x56c] sm:$0xf]
      %v520 = vld [vmem:[%s1 + $0x570] sm:$0xf]
      %v521 = vld [vmem:[%s1 + $0x574] sm:$0xf]
      %v522 = vld [vmem:[%s1 + $0x578] sm:$0xf]
      %v523 = vld [vmem:[%s1 + $0x57c] sm:$0xf]
      %v524 = vld [vmem:[%s1 + $0x580] sm:$0xf]
      %v525 = vld [vmem:[%s1 + $0x584] sm:$0xf]
      %v526 = vld [vmem:[%s1 + $0x588] sm:$0xf]
      %v527 = vld [vmem:[%s1 + $0x58c] sm:$0xf]
      %v528 = vld [vmem:[%s1 + $0x590] sm:$0xf]
      %v529 = vld [vmem:[%s1 + $0x594] sm:$0xf]
      %v530 = vld [vmem:[%s1 + $0x598] sm:$0xf]
      %v531 = vld [vmem:[%s1 + $0x59c] sm:$0xf]
      %v532 = vld [vmem:[%s1 + $0x5a0] sm:$0xf]
      %v533 = vld [vmem:[%s1 + $0x5a4] sm:$0xf]
      %v534 = vld [vmem:[%s1 + $0x5a8] sm:$0xf]
      %v535 = vld [vmem:[%s1 + $0x5ac] sm:$0xf]
      %v536 = vld [vmem:[%s1 + $0x5b0] sm:$0xf]
      %v537 = vld [vmem:[%s1 + $0x5b4] sm:$0xf]
      %v538 = vld [vmem:[%s1 + $0x5b8] sm:$0xf]
      %v539 = vld [vmem:[%s1 + $0x5bc] sm:$0xf]
      %v540 = vld [vmem:[%s1 + $0x5c0] sm:$0xf]
      %v541 = vld [vmem:[%s1 + $0x5c4] sm:$0xf]
      %v542 = vld [vmem:[%s1 + $0x5c8] sm:$0xf]
      %v543 = vld [vmem:[%s1 + $0x5cc] sm:$0xf]
      %v544 = vld [vmem:[%s1 + $0x5d0] sm:$0xf]
      %v545 = vld [vmem:[%s1 + $0x5d4] sm:$0xf]
      %v546 = vld [vmem:[%s1 + $0x5d8] sm:$0xf]
      %v547 = vld [vmem:[%s1 + $0x5dc] sm:$0xf]
      %v548 = vld [vmem:[%s1 + $0x5e0] sm:$0xf]
      %v549 = vld [vmem:[%s1 + $0x5e4] sm:$0xf]
      %v550 = vld [vmem:[%s1 + $0x5e8] sm:$0xf]
      %v551 = vld [vmem:[%s1 + $0x5ec] sm:$0xf]
      %v552 = vld [vmem:[%s1 + $0x5f0] sm:$0xf]
      %v553 = vld [vmem:[%s1 + $0x5f4] sm:$0xf]
      %v554 = vld [vmem:[%s1 + $0x5f8] sm:$0xf]
      %v555 = vld [vmem:[%s1 + $0x5fc] sm:$0xf]
      %v556 = vld [vmem:[%s1 + $0x600] sm:$0xf]
      %v557 = vld [vmem:[%s1 + $0x604] sm:$0xf]
      %v558 = vld [vmem:[%s1 + $0x608] sm:$0xf]
      %v559 = vld [vmem:[%s1 + $0x60c] sm:$0xf]
      %v560 = vld [vmem:[%s1 + $0x610] sm:$0xf]
      %v561 = vld [vmem:[%s1 + $0x614] sm:$0xf]
      %v562 = vld [vmem:[%s1 + $0x618] sm:$0xf]
      %v563 = vld [vmem:[%s1 + $0x61c] sm:$0xf]
      %v564 = vld [vmem:[%s1 + $0x620] sm:$0xf]
      %v565 = vld [vmem:[%s1 + $0x624] sm:$0xf]
      %v566 = vld [vmem:[%s1 + $0x628] sm:$0xf]
      %v567 = vld [vmem:[%s1 + $0x62c] sm:$0xf]
      %v568 = vld [vmem:[%s1 + $0x630] sm:$0xf]
      %v569 = vld [vmem:[%s1 + $0x634] sm:$0xf]
      %v570 = vld [vmem:[%s1 + $0x638] sm:$0xf]
      %v571 = vld [vmem:[%s1 + $0x63c] sm:$0xf]
      %v572 = vld [vmem:[%s2] sm:$0x1]
      %v573 = vld [vmem:[%s165] sm:$0xff]
      %v574 = vld [vmem:[%s165 + $0x8] sm:$0xff]
      %v575 = vld [vmem:[%s165 + $0x10] sm:$0xff]
      %v576 = vld [vmem:[%s165 + $0x18] sm:$0xff]
      %v577 = vld [vmem:[%s165 + $0x20] sm:$0xff]
      %v578 = vld [vmem:[%s165 + $0x28] sm:$0xff]
      %v579 = vld [vmem:[%s165 + $0x30] sm:$0xff]
      %v580 = vld [vmem:[%s165 + $0x38] sm:$0xff]
      %v581 = vld [vmem:[%s165 + $0x40] sm:$0xff]
      %v582 = vld [vmem:[%s165 + $0x48] sm:$0xff]
      %v583 = vld [vmem:[%s165 + $0x50] sm:$0xff]
      %v584 = vld [vmem:[%s165 + $0x58] sm:$0xff]
      %v585 = vld [vmem:[%s165 + $0x60] sm:$0xf]
      %v586 = vld [vmem:[%s165 + $0x64] sm:$0xff]
      %v587 = vld [vmem:[%s165 + $0x6c] sm:$0xff]
      %v588 = vld [vmem:[%s165 + $0x74] sm:$0xff]
      %v589 = vld [vmem:[%s165 + $0x7c] sm:$0xff]
      %v590 = vld [vmem:[%s165 + $0x84] sm:$0xff]
      %v591 = vld [vmem:[%s165 + $0x8c] sm:$0xff]
      %v592 = vld [vmem:[%s165 + $0x94] sm:$0xff]
      %v593 = vld [vmem:[%s165 + $0x9c] sm:$0xff]
      %v594 = vld [vmem:[%s165 + $0xa4] sm:$0xff]
      %v595 = vld [vmem:[%s165 + $0xac] sm:$0xff]
      %v596 = vld [vmem:[%s165 + $0xb4] sm:$0xff]
      %v597 = vld [vmem:[%s165 + $0xbc] sm:$0xff]
      %v598 = vld [vmem:[%s165 + $0xc4] sm:$0xf]
      %v599 = vld [vmem:[%s165 + $0xc8] sm:$0xff]
      %v600 = vld [vmem:[%s165 + $0xd0] sm:$0xff]
      %v601 = vld [vmem:[%s165 + $0xd8] sm:$0xff]
      %v602 = vld [vmem:[%s165 + $0xe0] sm:$0xff]
      %v603 = vld [vmem:[%s165 + $0xe8] sm:$0xff]
      %v604 = vld [vmem:[%s165 + $0xf0] sm:$0xff]
      %v605 = vld [vmem:[%s165 + $0xf8] sm:$0xff]
      %v606 = vld [vmem:[%s165 + $0x100] sm:$0xff]
      %v607 = vld [vmem:[%s165 + $0x108] sm:$0xff]
      %v608 = vld [vmem:[%s165 + $0x110] sm:$0xff]
      %v609 = vld [vmem:[%s165 + $0x118] sm:$0xff]
      %v610 = vld [vmem:[%s165 + $0x120] sm:$0xff]
      %v611 = vld [vmem:[%s165 + $0x128] sm:$0xf]
      %v612 = vld [vmem:[%s165 + $0x12c] sm:$0x11]
      %v613 = vld [vmem:[%s165 + $0x134] sm:$0x11]
      %v614 = vld [vmem:[%s165 + $0x13c] sm:$0x11]
      %v615 = vld [vmem:[%s165 + $0x144] sm:$0x11]
      %v616 = vld [vmem:[%s165 + $0x14c] sm:$0x11]
      %v617 = vld [vmem:[%s165 + $0x154] sm:$0x11]
      %v618 = vld [vmem:[%s165 + $0x15c] sm:$0x11]
      %v619 = vld [vmem:[%s165 + $0x164] sm:$0x11]
      %v620 = vld [vmem:[%s165 + $0x16c] sm:$0x11]
      %v621 = vld [vmem:[%s165 + $0x174] sm:$0x11]
      %v622 = vld [vmem:[%s165 + $0x17c] sm:$0x11]
      %v623 = vld [vmem:[%s165 + $0x184] sm:$0x11]
      %v624 = vld [vmem:[%s165 + $0x18c] sm:$0x1]
      %v626 = vlaneseq
      %v627 = vshrl.u32 %v626, 7
      %v628 = vsub.s32 0, %v627
      %v629 = vrot.slane %v572, %v628
      %v683 = vunpack.c.l.b16 %v573
      %v684 = vunpack.c.h.b16 %v573
      %v685 = vunpack.c.l.b16 %v574
      %v686 = vunpack.c.h.b16 %v574
      %v687 = vunpack.c.l.b16 %v575
      %v688 = vunpack.c.h.b16 %v575
      %v689 = vunpack.c.l.b16 %v576
      %v690 = vunpack.c.h.b16 %v576
      %v691 = vunpack.c.l.b16 %v577
      %v692 = vunpack.c.h.b16 %v577
      %v693 = vunpack.c.l.b16 %v578
      %v694 = vunpack.c.h.b16 %v578
      %v695 = vunpack.c.l.b16 %v579
      %v696 = vunpack.c.h.b16 %v579
      %v697 = vunpack.c.l.b16 %v580
      %v698 = vunpack.c.h.b16 %v580
      %v699 = vunpack.c.l.b16 %v581
      %v700 = vunpack.c.h.b16 %v581
      %v701 = vunpack.c.l.b16 %v582
      %v702 = vunpack.c.h.b16 %v582
      %v703 = vunpack.c.l.b16 %v583
      %v704 = vunpack.c.h.b16 %v583
      %v705 = vunpack.c.l.b16 %v584
      %v706 = vunpack.c.h.b16 %v584
      %v707 = vunpack.c.l.b16 %v585
      %v708 = vunpack.c.l.b16 %v586
      %v709 = vunpack.c.h.b16 %v586
      %v710 = vunpack.c.l.b16 %v587
      %v711 = vunpack.c.h.b16 %v587
      %v712 = vunpack.c.l.b16 %v588
      %v713 = vunpack.c.h.b16 %v588
      %v714 = vunpack.c.l.b16 %v589
      %v715 = vunpack.c.h.b16 %v589
      %v716 = vunpack.c.l.b16 %v590
      %v717 = vunpack.c.h.b16 %v590
      %v718 = vunpack.c.l.b16 %v591
      %v719 = vunpack.c.h.b16 %v591
      %v720 = vunpack.c.l.b16 %v592
      %v721 = vunpack.c.h.b16 %v592
      %v722 = vunpack.c.l.b16 %v593
      %v723 = vunpack.c.h.b16 %v593
      %v724 = vunpack.c.l.b16 %v594
      %v725 = vunpack.c.h.b16 %v594
      %v726 = vunpack.c.l.b16 %v595
      %v727 = vunpack.c.h.b16 %v595
      %v728 = vunpack.c.l.b16 %v596
      %v729 = vunpack.c.h.b16 %v596
      %v730 = vunpack.c.l.b16 %v597
      %v731 = vunpack.c.h.b16 %v597
      %v732 = vunpack.c.l.b16 %v598
      %v733 = vunpack.c.l.b16 %v599
      %v734 = vunpack.c.h.b16 %v599
      %v735 = vunpack.c.l.b16 %v600
      %v736 = vunpack.c.h.b16 %v600
      %v737 = vunpack.c.l.b16 %v601
      %v738 = vunpack.c.h.b16 %v601
      %v739 = vunpack.c.l.b16 %v602
      %v740 = vunpack.c.h.b16 %v602
      %v741 = vunpack.c.l.b16 %v603
      %v742 = vunpack.c.h.b16 %v603
      %v743 = vunpack.c.l.b16 %v604
      %v744 = vunpack.c.h.b16 %v604
      %v745 = vunpack.c.l.b16 %v605
      %v746 = vunpack.c.h.b16 %v605
      %v747 = vunpack.c.l.b16 %v606
      %v748 = vunpack.c.h.b16 %v606
      %v749 = vunpack.c.l.b16 %v607
      %v750 = vunpack.c.h.b16 %v607
      %v751 = vunpack.c.l.b16 %v608
      %v752 = vunpack.c.h.b16 %v608
      %v753 = vunpack.c.l.b16 %v609
      %v754 = vunpack.c.h.b16 %v609
      %v755 = vunpack.c.l.b16 %v610
      %v756 = vunpack.c.h.b16 %v610
      %v757 = vunpack.c.l.b16 %v611
      %v758 = vunpack.c.l.b16 %v612
      %v759 = vunpack.c.h.b16 %v612
      %v760 = vunpack.c.l.b16 %v613
      %v761 = vunpack.c.h.b16 %v613
      %v762 = vunpack.c.l.b16 %v614
      %v763 = vunpack.c.h.b16 %v614
      %v764 = vunpack.c.l.b16 %v615
      %v765 = vunpack.c.h.b16 %v615
      %v766 = vunpack.c.l.b16 %v616
      %v767 = vunpack.c.h.b16 %v616
      %v768 = vunpack.c.l.b16 %v617
      %v769 = vunpack.c.h.b16 %v617
      %v770 = vunpack.c.l.b16 %v618
      %v771 = vunpack.c.h.b16 %v618
      %v772 = vunpack.c.l.b16 %v619
      %v773 = vunpack.c.h.b16 %v619
      %v774 = vunpack.c.l.b16 %v620
      %v775 = vunpack.c.h.b16 %v620
      %v776 = vunpack.c.l.b16 %v621
      %v777 = vunpack.c.h.b16 %v621
      %v778 = vunpack.c.l.b16 %v622
      %v779 = vunpack.c.h.b16 %v622
      %v780 = vunpack.c.l.b16 %v623
      %v781 = vunpack.c.h.b16 %v623
      %v782 = vunpack.c.l.b16 %v624
      %v783 = vpack.c.b16 %v708, %v683
      %v784 = vpack.c.b16 %v709, %v684
      %v785 = vpack.c.b16 %v710, %v685
      %v786 = vpack.c.b16 %v711, %v686
      %v787 = vpack.c.b16 %v712, %v687
      %v788 = vpack.c.b16 %v713, %v688
      %v789 = vpack.c.b16 %v714, %v689
      %v790 = vpack.c.b16 %v715, %v690
      %v791 = vpack.c.b16 %v716, %v691
      %v792 = vpack.c.b16 %v717, %v692
      %v793 = vpack.c.b16 %v718, %v693
      %v794 = vpack.c.b16 %v719, %v694
      %v795 = vpack.c.b16 %v720, %v695
      %v796 = vpack.c.b16 %v721, %v696
      %v797 = vpack.c.b16 %v722, %v697
      %v798 = vpack.c.b16 %v723, %v698
      %v799 = vpack.c.b16 %v724, %v699
      %v800 = vpack.c.b16 %v725, %v700
      %v801 = vpack.c.b16 %v726, %v701
      %v802 = vpack.c.b16 %v727, %v702
      %v803 = vpack.c.b16 %v728, %v703
      %v804 = vpack.c.b16 %v729, %v704
      %v805 = vpack.c.b16 %v730, %v705
      %v806 = vpack.c.b16 %v731, %v706
      %v807 = vpack.c.b16 %v732, %v707
      %v808 = vpack.c.b16 %v758, %v733
      %v809 = vpack.c.b16 %v759, %v734
      %v810 = vpack.c.b16 %v760, %v735
      %v811 = vpack.c.b16 %v761, %v736
      %v812 = vpack.c.b16 %v762, %v737
      %v813 = vpack.c.b16 %v763, %v738
      %v814 = vpack.c.b16 %v764, %v739
      %v815 = vpack.c.b16 %v765, %v740
      %v816 = vpack.c.b16 %v766, %v741
      %v817 = vpack.c.b16 %v767, %v742
      %v818 = vpack.c.b16 %v768, %v743
      %v819 = vpack.c.b16 %v769, %v744
      %v820 = vpack.c.b16 %v770, %v745
      %v821 = vpack.c.b16 %v771, %v746
      %v822 = vpack.c.b16 %v772, %v747
      %v823 = vpack.c.b16 %v773, %v748
      %v824 = vpack.c.b16 %v774, %v749
      %v825 = vpack.c.b16 %v775, %v750
      %v826 = vpack.c.b16 %v776, %v751
      %v827 = vpack.c.b16 %v777, %v752
      %v828 = vpack.c.b16 %v778, %v753
      %v829 = vpack.c.b16 %v779, %v754
      %v830 = vpack.c.b16 %v780, %v755
      %v831 = vpack.c.b16 %v781, %v756
      %v832 = vpack.c.b16 %v782, %v757
      %v1283 = vunpack.c.l.b16 %v172
      %v1284 = vunpack.c.l.b16 %v173
      %v1285 = vunpack.c.l.b16 %v174
      %v1286 = vunpack.c.l.b16 %v175
      %v1287 = vunpack.c.l.b16 %v176
      %v1288 = vunpack.c.l.b16 %v177
      %v1289 = vunpack.c.l.b16 %v178
      %v1290 = vunpack.c.l.b16 %v179
      %v1291 = vunpack.c.l.b16 %v180
      %v1292 = vunpack.c.l.b16 %v181
      %v1293 = vunpack.c.l.b16 %v182
      %v1294 = vunpack.c.l.b16 %v183
      %v1295 = vunpack.c.l.b16 %v184
      %v1296 = vunpack.c.l.b16 %v185
      %v1297 = vunpack.c.l.b16 %v186
      %v1298 = vunpack.c.l.b16 %v187
      %v1299 = vunpack.c.l.b16 %v188
      %v1300 = vunpack.c.l.b16 %v189
      %v1301 = vunpack.c.l.b16 %v190
      %v1302 = vunpack.c.l.b16 %v191
      %v1303 = vunpack.c.l.b16 %v192
      %v1304 = vunpack.c.l.b16 %v193
      %v1305 = vunpack.c.l.b16 %v194
      %v1306 = vunpack.c.l.b16 %v195
      %v1307 = vunpack.c.l.b16 %v196
      %v1308 = vunpack.c.l.b16 %v197
      %v1309 = vunpack.c.l.b16 %v198
      %v1310 = vunpack.c.l.b16 %v199
      %v1311 = vunpack.c.l.b16 %v200
      %v1312 = vunpack.c.l.b16 %v201
      %v1313 = vunpack.c.l.b16 %v202
      %v1314 = vunpack.c.l.b16 %v203
      %v1315 = vunpack.c.l.b16 %v204
      %v1316 = vunpack.c.l.b16 %v205
      %v1317 = vunpack.c.l.b16 %v206
      %v1318 = vunpack.c.l.b16 %v207
      %v1319 = vunpack.c.l.b16 %v208
      %v1320 = vunpack.c.l.b16 %v209
      %v1321 = vunpack.c.l.b16 %v210
      %v1322 = vunpack.c.l.b16 %v211
      %v1323 = vunpack.c.l.b16 %v212
      %v1324 = vunpack.c.l.b16 %v213
      %v1325 = vunpack.c.l.b16 %v214
      %v1326 = vunpack.c.l.b16 %v215
      %v1327 = vunpack.c.l.b16 %v216
      %v1328 = vunpack.c.l.b16 %v217
      %v1329 = vunpack.c.l.b16 %v218
      %v1330 = vunpack.c.l.b16 %v219
      %v1331 = vunpack.c.l.b16 %v220
      %v1332 = vunpack.c.l.b16 %v221
      %v1333 = vunpack.c.l.b16 %v222
      %v1334 = vunpack.c.l.b16 %v223
      %v1335 = vunpack.c.l.b16 %v224
      %v1336 = vunpack.c.l.b16 %v225
      %v1337 = vunpack.c.l.b16 %v226
      %v1338 = vunpack.c.l.b16 %v227
      %v1339 = vunpack.c.l.b16 %v228
      %v1340 = vunpack.c.l.b16 %v229
      %v1341 = vunpack.c.l.b16 %v230
      %v1342 = vunpack.c.l.b16 %v231
      %v1343 = vunpack.c.l.b16 %v232
      %v1344 = vunpack.c.l.b16 %v233
      %v1345 = vunpack.c.l.b16 %v234
      %v1346 = vunpack.c.l.b16 %v235
      %v1347 = vunpack.c.l.b16 %v236
      %v1348 = vunpack.c.l.b16 %v237
      %v1349 = vunpack.c.l.b16 %v238
      %v1350 = vunpack.c.l.b16 %v239
      %v1351 = vunpack.c.l.b16 %v240
      %v1352 = vunpack.c.l.b16 %v241
      %v1353 = vunpack.c.l.b16 %v242
      %v1354 = vunpack.c.l.b16 %v243
      %v1355 = vunpack.c.l.b16 %v244
      %v1356 = vunpack.c.l.b16 %v245
      %v1357 = vunpack.c.l.b16 %v246
      %v1358 = vunpack.c.l.b16 %v247
      %v1359 = vunpack.c.l.b16 %v248
      %v1360 = vunpack.c.l.b16 %v249
      %v1361 = vunpack.c.l.b16 %v250
      %v1362 = vunpack.c.l.b16 %v251
      %v1363 = vunpack.c.l.b16 %v252
      %v1364 = vunpack.c.l.b16 %v253
      %v1365 = vunpack.c.l.b16 %v254
      %v1366 = vunpack.c.l.b16 %v255
      %v1367 = vunpack.c.l.b16 %v256
      %v1368 = vunpack.c.l.b16 %v257
      %v1369 = vunpack.c.l.b16 %v258
      %v1370 = vunpack.c.l.b16 %v259
      %v1371 = vunpack.c.l.b16 %v260
      %v1372 = vunpack.c.l.b16 %v261
      %v1373 = vunpack.c.l.b16 %v262
      %v1374 = vunpack.c.l.b16 %v263
      %v1375 = vunpack.c.l.b16 %v264
      %v1376 = vunpack.c.l.b16 %v265
      %v1377 = vunpack.c.l.b16 %v266
      %v1378 = vunpack.c.l.b16 %v267
      %v1379 = vunpack.c.l.b16 %v268
      %v1380 = vunpack.c.l.b16 %v269
      %v1381 = vunpack.c.l.b16 %v270
      %v1382 = vunpack.c.l.b16 %v271
      %v1383 = vunpack.c.l.b16 %v272
      %v1384 = vunpack.c.l.b16 %v273
      %v1385 = vunpack.c.l.b16 %v274
      %v1386 = vunpack.c.l.b16 %v275
      %v1387 = vunpack.c.l.b16 %v276
      %v1388 = vunpack.c.l.b16 %v277
      %v1389 = vunpack.c.l.b16 %v278
      %v1390 = vunpack.c.l.b16 %v279
      %v1391 = vunpack.c.l.b16 %v280
      %v1392 = vunpack.c.l.b16 %v281
      %v1393 = vunpack.c.l.b16 %v282
      %v1394 = vunpack.c.l.b16 %v283
      %v1395 = vunpack.c.l.b16 %v284
      %v1396 = vunpack.c.l.b16 %v285
      %v1397 = vunpack.c.l.b16 %v286
      %v1398 = vunpack.c.l.b16 %v287
      %v1399 = vunpack.c.l.b16 %v288
      %v1400 = vunpack.c.l.b16 %v289
      %v1401 = vunpack.c.l.b16 %v290
      %v1402 = vunpack.c.l.b16 %v291
      %v1403 = vunpack.c.l.b16 %v292
      %v1404 = vunpack.c.l.b16 %v293
      %v1405 = vunpack.c.l.b16 %v294
      %v1406 = vunpack.c.l.b16 %v295
      %v1407 = vunpack.c.l.b16 %v296
      %v1408 = vunpack.c.l.b16 %v297
      %v1409 = vunpack.c.l.b16 %v298
      %v1410 = vunpack.c.l.b16 %v299
      %v1411 = vunpack.c.l.b16 %v300
      %v1412 = vunpack.c.l.b16 %v301
      %v1413 = vunpack.c.l.b16 %v302
      %v1414 = vunpack.c.l.b16 %v303
      %v1415 = vunpack.c.l.b16 %v304
      %v1416 = vunpack.c.l.b16 %v305
      %v1417 = vunpack.c.l.b16 %v306
      %v1418 = vunpack.c.l.b16 %v307
      %v1419 = vunpack.c.l.b16 %v308
      %v1420 = vunpack.c.l.b16 %v309
      %v1421 = vunpack.c.l.b16 %v310
      %v1422 = vunpack.c.l.b16 %v311
      %v1423 = vunpack.c.l.b16 %v312
      %v1424 = vunpack.c.l.b16 %v313
      %v1425 = vunpack.c.l.b16 %v314
      %v1426 = vunpack.c.l.b16 %v315
      %v1427 = vunpack.c.l.b16 %v316
      %v1428 = vunpack.c.l.b16 %v317
      %v1429 = vunpack.c.l.b16 %v318
      %v1430 = vunpack.c.l.b16 %v319
      %v1431 = vunpack.c.l.b16 %v320
      %v1432 = vunpack.c.l.b16 %v321
      %v1433 = vunpack.c.l.b16 %v322
      %v1434 = vunpack.c.l.b16 %v323
      %v1435 = vunpack.c.l.b16 %v324
      %v1436 = vunpack.c.l.b16 %v325
      %v1437 = vunpack.c.l.b16 %v326
      %v1438 = vunpack.c.l.b16 %v327
      %v1439 = vunpack.c.l.b16 %v328
      %v1440 = vunpack.c.l.b16 %v329
      %v1441 = vunpack.c.l.b16 %v330
      %v1442 = vunpack.c.l.b16 %v331
      %v1443 = vunpack.c.l.b16 %v332
      %v1444 = vunpack.c.l.b16 %v333
      %v1445 = vunpack.c.l.b16 %v334
      %v1446 = vunpack.c.l.b16 %v335
      %v1447 = vunpack.c.l.b16 %v336
      %v1448 = vunpack.c.l.b16 %v337
      %v1449 = vunpack.c.l.b16 %v338
      %v1450 = vunpack.c.l.b16 %v339
      %v1451 = vunpack.c.l.b16 %v340
      %v1452 = vunpack.c.l.b16 %v341
      %v1453 = vunpack.c.l.b16 %v342
      %v1454 = vunpack.c.l.b16 %v343
      %v1455 = vunpack.c.l.b16 %v344
      %v1456 = vunpack.c.l.b16 %v345
      %v1457 = vunpack.c.l.b16 %v346
      %v1458 = vunpack.c.l.b16 %v347
      %v1459 = vunpack.c.l.b16 %v348
      %v1460 = vunpack.c.l.b16 %v349
      %v1461 = vunpack.c.l.b16 %v350
      %v1462 = vunpack.c.l.b16 %v351
      %v1463 = vunpack.c.l.b16 %v352
      %v1464 = vunpack.c.l.b16 %v353
      %v1465 = vunpack.c.l.b16 %v354
      %v1466 = vunpack.c.l.b16 %v355
      %v1467 = vunpack.c.l.b16 %v356
      %v1468 = vunpack.c.l.b16 %v357
      %v1469 = vunpack.c.l.b16 %v358
      %v1470 = vunpack.c.l.b16 %v359
      %v1471 = vunpack.c.l.b16 %v360
      %v1472 = vunpack.c.l.b16 %v361
      %v1473 = vunpack.c.l.b16 %v362
      %v1474 = vunpack.c.l.b16 %v363
      %v1475 = vunpack.c.l.b16 %v364
      %v1476 = vunpack.c.l.b16 %v365
      %v1477 = vunpack.c.l.b16 %v366
      %v1478 = vunpack.c.l.b16 %v367
      %v1479 = vunpack.c.l.b16 %v368
      %v1480 = vunpack.c.l.b16 %v369
      %v1481 = vunpack.c.l.b16 %v370
      %v1482 = vunpack.c.l.b16 %v371
      %v1483 = vunpack.c.l.b16 %v372
      %v1484 = vunpack.c.l.b16 %v373
      %v1485 = vunpack.c.l.b16 %v374
      %v1486 = vunpack.c.l.b16 %v375
      %v1487 = vunpack.c.l.b16 %v376
      %v1488 = vunpack.c.l.b16 %v377
      %v1489 = vunpack.c.l.b16 %v378
      %v1490 = vunpack.c.l.b16 %v379
      %v1491 = vunpack.c.l.b16 %v380
      %v1492 = vunpack.c.l.b16 %v381
      %v1493 = vunpack.c.l.b16 %v382
      %v1494 = vunpack.c.l.b16 %v383
      %v1495 = vunpack.c.l.b16 %v384
      %v1496 = vunpack.c.l.b16 %v385
      %v1497 = vunpack.c.l.b16 %v386
      %v1498 = vunpack.c.l.b16 %v387
      %v1499 = vunpack.c.l.b16 %v388
      %v1500 = vunpack.c.l.b16 %v389
      %v1501 = vunpack.c.l.b16 %v390
      %v1502 = vunpack.c.l.b16 %v391
      %v1503 = vunpack.c.l.b16 %v392
      %v1504 = vunpack.c.l.b16 %v393
      %v1505 = vunpack.c.l.b16 %v394
      %v1506 = vunpack.c.l.b16 %v395
      %v1507 = vunpack.c.l.b16 %v396
      %v1508 = vunpack.c.l.b16 %v397
      %v1509 = vunpack.c.l.b16 %v398
      %v1510 = vunpack.c.l.b16 %v399
      %v1511 = vunpack.c.l.b16 %v400
      %v1512 = vunpack.c.l.b16 %v401
      %v1513 = vunpack.c.l.b16 %v402
      %v1514 = vunpack.c.l.b16 %v403
      %v1515 = vunpack.c.l.b16 %v404
      %v1516 = vunpack.c.l.b16 %v405
      %v1517 = vunpack.c.l.b16 %v406
      %v1518 = vunpack.c.l.b16 %v407
      %v1519 = vunpack.c.l.b16 %v408
      %v1520 = vunpack.c.l.b16 %v409
      %v1521 = vunpack.c.l.b16 %v410
      %v1522 = vunpack.c.l.b16 %v411
      %v1523 = vunpack.c.l.b16 %v412
      %v1524 = vunpack.c.l.b16 %v413
      %v1525 = vunpack.c.l.b16 %v414
      %v1526 = vunpack.c.l.b16 %v415
      %v1527 = vunpack.c.l.b16 %v416
      %v1528 = vunpack.c.l.b16 %v417
      %v1529 = vunpack.c.l.b16 %v418
      %v1530 = vunpack.c.l.b16 %v419
      %v1531 = vunpack.c.l.b16 %v420
      %v1532 = vunpack.c.l.b16 %v421
      %v1533 = vunpack.c.l.b16 %v422
      %v1534 = vunpack.c.l.b16 %v423
      %v1535 = vunpack.c.l.b16 %v424
      %v1536 = vunpack.c.l.b16 %v425
      %v1537 = vunpack.c.l.b16 %v426
      %v1538 = vunpack.c.l.b16 %v427
      %v1539 = vunpack.c.l.b16 %v428
      %v1540 = vunpack.c.l.b16 %v429
      %v1541 = vunpack.c.l.b16 %v430
      %v1542 = vunpack.c.l.b16 %v431
      %v1543 = vunpack.c.l.b16 %v432
      %v1544 = vunpack.c.l.b16 %v433
      %v1545 = vunpack.c.l.b16 %v434
      %v1546 = vunpack.c.l.b16 %v435
      %v1547 = vunpack.c.l.b16 %v436
      %v1548 = vunpack.c.l.b16 %v437
      %v1549 = vunpack.c.l.b16 %v438
      %v1550 = vunpack.c.l.b16 %v439
      %v1551 = vunpack.c.l.b16 %v440
      %v1552 = vunpack.c.l.b16 %v441
      %v1553 = vunpack.c.l.b16 %v442
      %v1554 = vunpack.c.l.b16 %v443
      %v1555 = vunpack.c.l.b16 %v444
      %v1556 = vunpack.c.l.b16 %v445
      %v1557 = vunpack.c.l.b16 %v446
      %v1558 = vunpack.c.l.b16 %v447
      %v1559 = vunpack.c.l.b16 %v448
      %v1560 = vunpack.c.l.b16 %v449
      %v1561 = vunpack.c.l.b16 %v450
      %v1562 = vunpack.c.l.b16 %v451
      %v1563 = vunpack.c.l.b16 %v452
      %v1564 = vunpack.c.l.b16 %v453
      %v1565 = vunpack.c.l.b16 %v454
      %v1566 = vunpack.c.l.b16 %v455
      %v1567 = vunpack.c.l.b16 %v456
      %v1568 = vunpack.c.l.b16 %v457
      %v1569 = vunpack.c.l.b16 %v458
      %v1570 = vunpack.c.l.b16 %v459
      %v1571 = vunpack.c.l.b16 %v460
      %v1572 = vunpack.c.l.b16 %v461
      %v1573 = vunpack.c.l.b16 %v462
      %v1574 = vunpack.c.l.b16 %v463
      %v1575 = vunpack.c.l.b16 %v464
      %v1576 = vunpack.c.l.b16 %v465
      %v1577 = vunpack.c.l.b16 %v466
      %v1578 = vunpack.c.l.b16 %v467
      %v1579 = vunpack.c.l.b16 %v468
      %v1580 = vunpack.c.l.b16 %v469
      %v1581 = vunpack.c.l.b16 %v470
      %v1582 = vunpack.c.l.b16 %v471
      %v1583 = vunpack.c.l.b16 %v472
      %v1584 = vunpack.c.l.b16 %v473
      %v1585 = vunpack.c.l.b16 %v474
      %v1586 = vunpack.c.l.b16 %v475
      %v1587 = vunpack.c.l.b16 %v476
      %v1588 = vunpack.c.l.b16 %v477
      %v1589 = vunpack.c.l.b16 %v478
      %v1590 = vunpack.c.l.b16 %v479
      %v1591 = vunpack.c.l.b16 %v480
      %v1592 = vunpack.c.l.b16 %v481
      %v1593 = vunpack.c.l.b16 %v482
      %v1594 = vunpack.c.l.b16 %v483
      %v1595 = vunpack.c.l.b16 %v484
      %v1596 = vunpack.c.l.b16 %v485
      %v1597 = vunpack.c.l.b16 %v486
      %v1598 = vunpack.c.l.b16 %v487
      %v1599 = vunpack.c.l.b16 %v488
      %v1600 = vunpack.c.l.b16 %v489
      %v1601 = vunpack.c.l.b16 %v490
      %v1602 = vunpack.c.l.b16 %v491
      %v1603 = vunpack.c.l.b16 %v492
      %v1604 = vunpack.c.l.b16 %v493
      %v1605 = vunpack.c.l.b16 %v494
      %v1606 = vunpack.c.l.b16 %v495
      %v1607 = vunpack.c.l.b16 %v496
      %v1608 = vunpack.c.l.b16 %v497
      %v1609 = vunpack.c.l.b16 %v498
      %v1610 = vunpack.c.l.b16 %v499
      %v1611 = vunpack.c.l.b16 %v500
      %v1612 = vunpack.c.l.b16 %v501
      %v1613 = vunpack.c.l.b16 %v502
      %v1614 = vunpack.c.l.b16 %v503
      %v1615 = vunpack.c.l.b16 %v504
      %v1616 = vunpack.c.l.b16 %v505
      %v1617 = vunpack.c.l.b16 %v506
      %v1618 = vunpack.c.l.b16 %v507
      %v1619 = vunpack.c.l.b16 %v508
      %v1620 = vunpack.c.l.b16 %v509
      %v1621 = vunpack.c.l.b16 %v510
      %v1622 = vunpack.c.l.b16 %v511
      %v1623 = vunpack.c.l.b16 %v512
      %v1624 = vunpack.c.l.b16 %v513
      %v1625 = vunpack.c.l.b16 %v514
      %v1626 = vunpack.c.l.b16 %v515
      %v1627 = vunpack.c.l.b16 %v516
      %v1628 = vunpack.c.l.b16 %v517
      %v1629 = vunpack.c.l.b16 %v518
      %v1630 = vunpack.c.l.b16 %v519
      %v1631 = vunpack.c.l.b16 %v520
      %v1632 = vunpack.c.l.b16 %v521
      %v1633 = vunpack.c.l.b16 %v522
      %v1634 = vunpack.c.l.b16 %v523
      %v1635 = vunpack.c.l.b16 %v524
      %v1636 = vunpack.c.l.b16 %v525
      %v1637 = vunpack.c.l.b16 %v526
      %v1638 = vunpack.c.l.b16 %v527
      %v1639 = vunpack.c.l.b16 %v528
      %v1640 = vunpack.c.l.b16 %v529
      %v1641 = vunpack.c.l.b16 %v530
      %v1642 = vunpack.c.l.b16 %v531
      %v1643 = vunpack.c.l.b16 %v532
      %v1644 = vunpack.c.l.b16 %v533
      %v1645 = vunpack.c.l.b16 %v534
      %v1646 = vunpack.c.l.b16 %v535
      %v1647 = vunpack.c.l.b16 %v536
      %v1648 = vunpack.c.l.b16 %v537
      %v1649 = vunpack.c.l.b16 %v538
      %v1650 = vunpack.c.l.b16 %v539
      %v1651 = vunpack.c.l.b16 %v540
      %v1652 = vunpack.c.l.b16 %v541
      %v1653 = vunpack.c.l.b16 %v542
      %v1654 = vunpack.c.l.b16 %v543
      %v1655 = vunpack.c.l.b16 %v544
      %v1656 = vunpack.c.l.b16 %v545
      %v1657 = vunpack.c.l.b16 %v546
      %v1658 = vunpack.c.l.b16 %v547
      %v1659 = vunpack.c.l.b16 %v548
      %v1660 = vunpack.c.l.b16 %v549
      %v1661 = vunpack.c.l.b16 %v550
      %v1662 = vunpack.c.l.b16 %v551
      %v1663 = vunpack.c.l.b16 %v552
      %v1664 = vunpack.c.l.b16 %v553
      %v1665 = vunpack.c.l.b16 %v554
      %v1666 = vunpack.c.l.b16 %v555
      %v1667 = vunpack.c.l.b16 %v556
      %v1668 = vunpack.c.l.b16 %v557
      %v1669 = vunpack.c.l.b16 %v558
      %v1670 = vunpack.c.l.b16 %v559
      %v1671 = vunpack.c.l.b16 %v560
      %v1672 = vunpack.c.l.b16 %v561
      %v1673 = vunpack.c.l.b16 %v562
      %v1674 = vunpack.c.l.b16 %v563
      %v1675 = vunpack.c.l.b16 %v564
      %v1676 = vunpack.c.l.b16 %v565
      %v1677 = vunpack.c.l.b16 %v566
      %v1678 = vunpack.c.l.b16 %v567
      %v1679 = vunpack.c.l.b16 %v568
      %v1680 = vunpack.c.l.b16 %v569
      %v1681 = vunpack.c.l.b16 %v570
      %v1682 = vunpack.c.l.b16 %v571
      %v1683 = vpack.c.b16 %v1284, %v1283
      %v1684 = vpack.c.b16 %v1286, %v1285
      %v1685 = vpack.c.b16 %v1288, %v1287
      %v1686 = vpack.c.b16 %v1290, %v1289
      %v1687 = vpack.c.b16 %v1292, %v1291
      %v1688 = vpack.c.b16 %v1294, %v1293
      %v1689 = vpack.c.b16 %v1296, %v1295
      %v1690 = vpack.c.b16 %v1298, %v1297
      %v1691 = vpack.c.b16 %v1300, %v1299
      %v1692 = vpack.c.b16 %v1302, %v1301
      %v1693 = vpack.c.b16 %v1304, %v1303
      %v1694 = vpack.c.b16 %v1306, %v1305
      %v1695 = vpack.c.b16 %v1308, %v1307
      %v1696 = vpack.c.b16 %v1310, %v1309
      %v1697 = vpack.c.b16 %v1312, %v1311
      %v1698 = vpack.c.b16 %v1314, %v1313
      %v1699 = vpack.c.b16 %v1316, %v1315
      %v1700 = vpack.c.b16 %v1318, %v1317
      %v1701 = vpack.c.b16 %v1320, %v1319
      %v1702 = vpack.c.b16 %v1322, %v1321
      %v1703 = vpack.c.b16 %v1324, %v1323
      %v1704 = vpack.c.b16 %v1326, %v1325
      %v1705 = vpack.c.b16 %v1328, %v1327
      %v1706 = vpack.c.b16 %v1330, %v1329
      %v1707 = vpack.c.b16 %v1332, %v1331
      %v1708 = vpack.c.b16 %v1334, %v1333
      %v1709 = vpack.c.b16 %v1336, %v1335
      %v1710 = vpack.c.b16 %v1338, %v1337
      %v1711 = vpack.c.b16 %v1340, %v1339
      %v1712 = vpack.c.b16 %v1342, %v1341
      %v1713 = vpack.c.b16 %v1344, %v1343
      %v1714 = vpack.c.b16 %v1346, %v1345
      %v1715 = vpack.c.b16 %v1348, %v1347
      %v1716 = vpack.c.b16 %v1350, %v1349
      %v1717 = vpack.c.b16 %v1352, %v1351
      %v1718 = vpack.c.b16 %v1354, %v1353
      %v1719 = vpack.c.b16 %v1356, %v1355
      %v1720 = vpack.c.b16 %v1358, %v1357
      %v1721 = vpack.c.b16 %v1360, %v1359
      %v1722 = vpack.c.b16 %v1362, %v1361
      %v1723 = vpack.c.b16 %v1364, %v1363
      %v1724 = vpack.c.b16 %v1366, %v1365
      %v1725 = vpack.c.b16 %v1368, %v1367
      %v1726 = vpack.c.b16 %v1370, %v1369
      %v1727 = vpack.c.b16 %v1372, %v1371
      %v1728 = vpack.c.b16 %v1374, %v1373
      %v1729 = vpack.c.b16 %v1376, %v1375
      %v1730 = vpack.c.b16 %v1378, %v1377
      %v1731 = vpack.c.b16 %v1380, %v1379
      %v1732 = vpack.c.b16 %v1382, %v1381
      %v1733 = vpack.c.b16 %v1384, %v1383
      %v1734 = vpack.c.b16 %v1386, %v1385
      %v1735 = vpack.c.b16 %v1388, %v1387
      %v1736 = vpack.c.b16 %v1390, %v1389
      %v1737 = vpack.c.b16 %v1392, %v1391
      %v1738 = vpack.c.b16 %v1394, %v1393
      %v1739 = vpack.c.b16 %v1396, %v1395
      %v1740 = vpack.c.b16 %v1398, %v1397
      %v1741 = vpack.c.b16 %v1400, %v1399
      %v1742 = vpack.c.b16 %v1402, %v1401
      %v1743 = vpack.c.b16 %v1404, %v1403
      %v1744 = vpack.c.b16 %v1406, %v1405
      %v1745 = vpack.c.b16 %v1408, %v1407
      %v1746 = vpack.c.b16 %v1410, %v1409
      %v1747 = vpack.c.b16 %v1412, %v1411
      %v1748 = vpack.c.b16 %v1414, %v1413
      %v1749 = vpack.c.b16 %v1416, %v1415
      %v1750 = vpack.c.b16 %v1418, %v1417
      %v1751 = vpack.c.b16 %v1420, %v1419
      %v1752 = vpack.c.b16 %v1422, %v1421
      %v1753 = vpack.c.b16 %v1424, %v1423
      %v1754 = vpack.c.b16 %v1426, %v1425
      %v1755 = vpack.c.b16 %v1428, %v1427
      %v1756 = vpack.c.b16 %v1430, %v1429
      %v1757 = vpack.c.b16 %v1432, %v1431
      %v1758 = vpack.c.b16 %v1434, %v1433
      %v1759 = vpack.c.b16 %v1436, %v1435
      %v1760 = vpack.c.b16 %v1438, %v1437
      %v1761 = vpack.c.b16 %v1440, %v1439
      %v1762 = vpack.c.b16 %v1442, %v1441
      %v1763 = vpack.c.b16 %v1444, %v1443
      %v1764 = vpack.c.b16 %v1446, %v1445
      %v1765 = vpack.c.b16 %v1448, %v1447
      %v1766 = vpack.c.b16 %v1450, %v1449
      %v1767 = vpack.c.b16 %v1452, %v1451
      %v1768 = vpack.c.b16 %v1454, %v1453
      %v1769 = vpack.c.b16 %v1456, %v1455
      %v1770 = vpack.c.b16 %v1458, %v1457
      %v1771 = vpack.c.b16 %v1460, %v1459
      %v1772 = vpack.c.b16 %v1462, %v1461
      %v1773 = vpack.c.b16 %v1464, %v1463
      %v1774 = vpack.c.b16 %v1466, %v1465
      %v1775 = vpack.c.b16 %v1468, %v1467
      %v1776 = vpack.c.b16 %v1470, %v1469
      %v1777 = vpack.c.b16 %v1472, %v1471
      %v1778 = vpack.c.b16 %v1474, %v1473
      %v1779 = vpack.c.b16 %v1476, %v1475
      %v1780 = vpack.c.b16 %v1478, %v1477
      %v1781 = vpack.c.b16 %v1480, %v1479
      %v1782 = vpack.c.b16 %v1482, %v1481
      %v1783 = vpack.c.b16 %v1484, %v1483
      %v1784 = vpack.c.b16 %v1486, %v1485
      %v1785 = vpack.c.b16 %v1488, %v1487
      %v1786 = vpack.c.b16 %v1490, %v1489
      %v1787 = vpack.c.b16 %v1492, %v1491
      %v1788 = vpack.c.b16 %v1494, %v1493
      %v1789 = vpack.c.b16 %v1496, %v1495
      %v1790 = vpack.c.b16 %v1498, %v1497
      %v1791 = vpack.c.b16 %v1500, %v1499
      %v1792 = vpack.c.b16 %v1502, %v1501
      %v1793 = vpack.c.b16 %v1504, %v1503
      %v1794 = vpack.c.b16 %v1506, %v1505
      %v1795 = vpack.c.b16 %v1508, %v1507
      %v1796 = vpack.c.b16 %v1510, %v1509
      %v1797 = vpack.c.b16 %v1512, %v1511
      %v1798 = vpack.c.b16 %v1514, %v1513
      %v1799 = vpack.c.b16 %v1516, %v1515
      %v1800 = vpack.c.b16 %v1518, %v1517
      %v1801 = vpack.c.b16 %v1520, %v1519
      %v1802 = vpack.c.b16 %v1522, %v1521
      %v1803 = vpack.c.b16 %v1524, %v1523
      %v1804 = vpack.c.b16 %v1526, %v1525
      %v1805 = vpack.c.b16 %v1528, %v1527
      %v1806 = vpack.c.b16 %v1530, %v1529
      %v1807 = vpack.c.b16 %v1532, %v1531
      %v1808 = vpack.c.b16 %v1534, %v1533
      %v1809 = vpack.c.b16 %v1536, %v1535
      %v1810 = vpack.c.b16 %v1538, %v1537
      %v1811 = vpack.c.b16 %v1540, %v1539
      %v1812 = vpack.c.b16 %v1542, %v1541
      %v1813 = vpack.c.b16 %v1544, %v1543
      %v1814 = vpack.c.b16 %v1546, %v1545
      %v1815 = vpack.c.b16 %v1548, %v1547
      %v1816 = vpack.c.b16 %v1550, %v1549
      %v1817 = vpack.c.b16 %v1552, %v1551
      %v1818 = vpack.c.b16 %v1554, %v1553
      %v1819 = vpack.c.b16 %v1556, %v1555
      %v1820 = vpack.c.b16 %v1558, %v1557
      %v1821 = vpack.c.b16 %v1560, %v1559
      %v1822 = vpack.c.b16 %v1562, %v1561
      %v1823 = vpack.c.b16 %v1564, %v1563
      %v1824 = vpack.c.b16 %v1566, %v1565
      %v1825 = vpack.c.b16 %v1568, %v1567
      %v1826 = vpack.c.b16 %v1570, %v1569
      %v1827 = vpack.c.b16 %v1572, %v1571
      %v1828 = vpack.c.b16 %v1574, %v1573
      %v1829 = vpack.c.b16 %v1576, %v1575
      %v1830 = vpack.c.b16 %v1578, %v1577
      %v1831 = vpack.c.b16 %v1580, %v1579
      %v1832 = vpack.c.b16 %v1582, %v1581
      %v1833 = vpack.c.b16 %v1584, %v1583
      %v1834 = vpack.c.b16 %v1586, %v1585
      %v1835 = vpack.c.b16 %v1588, %v1587
      %v1836 = vpack.c.b16 %v1590, %v1589
      %v1837 = vpack.c.b16 %v1592, %v1591
      %v1838 = vpack.c.b16 %v1594, %v1593
      %v1839 = vpack.c.b16 %v1596, %v1595
      %v1840 = vpack.c.b16 %v1598, %v1597
      %v1841 = vpack.c.b16 %v1600, %v1599
      %v1842 = vpack.c.b16 %v1602, %v1601
      %v1843 = vpack.c.b16 %v1604, %v1603
      %v1844 = vpack.c.b16 %v1606, %v1605
      %v1845 = vpack.c.b16 %v1608, %v1607
      %v1846 = vpack.c.b16 %v1610, %v1609
      %v1847 = vpack.c.b16 %v1612, %v1611
      %v1848 = vpack.c.b16 %v1614, %v1613
      %v1849 = vpack.c.b16 %v1616, %v1615
      %v1850 = vpack.c.b16 %v1618, %v1617
      %v1851 = vpack.c.b16 %v1620, %v1619
      %v1852 = vpack.c.b16 %v1622, %v1621
      %v1853 = vpack.c.b16 %v1624, %v1623
      %v1854 = vpack.c.b16 %v1626, %v1625
      %v1855 = vpack.c.b16 %v1628, %v1627
      %v1856 = vpack.c.b16 %v1630, %v1629
      %v1857 = vpack.c.b16 %v1632, %v1631
      %v1858 = vpack.c.b16 %v1634, %v1633
      %v1859 = vpack.c.b16 %v1636, %v1635
      %v1860 = vpack.c.b16 %v1638, %v1637
      %v1861 = vpack.c.b16 %v1640, %v1639
      %v1862 = vpack.c.b16 %v1642, %v1641
      %v1863 = vpack.c.b16 %v1644, %v1643
      %v1864 = vpack.c.b16 %v1646, %v1645
      %v1865 = vpack.c.b16 %v1648, %v1647
      %v1866 = vpack.c.b16 %v1650, %v1649
      %v1867 = vpack.c.b16 %v1652, %v1651
      %v1868 = vpack.c.b16 %v1654, %v1653
      %v1869 = vpack.c.b16 %v1656, %v1655
      %v1870 = vpack.c.b16 %v1658, %v1657
      %v1871 = vpack.c.b16 %v1660, %v1659
      %v1872 = vpack.c.b16 %v1662, %v1661
      %v1873 = vpack.c.b16 %v1664, %v1663
      %v1874 = vpack.c.b16 %v1666, %v1665
      %v1875 = vpack.c.b16 %v1668, %v1667
      %v1876 = vpack.c.b16 %v1670, %v1669
      %v1877 = vpack.c.b16 %v1672, %v1671
      %v1878 = vpack.c.b16 %v1674, %v1673
      %v1879 = vpack.c.b16 %v1676, %v1675
      %v1880 = vpack.c.b16 %v1678, %v1677
      %v1881 = vpack.c.b16 %v1680, %v1679
      %v1882 = vpack.c.b16 %v1682, %v1681
      %2083 = vmatprep.subr.bf16.mxu0 0
      %2084 = vmatpush1.bf16.msra.mxu0 %v1683
      %2085 = vmatprep.subr.bf16.mxu0 0
      %2086 = vmatpush1.bf16.msra.mxu0 %v1684
      %2087 = vmatprep.subr.bf16.mxu0 0
      %2088 = vmatpush1.bf16.msra.mxu0 %v1685
      %2089 = vmatprep.subr.bf16.mxu0 0
      %2090 = vmatpush1.bf16.msra.mxu0 %v1686
      %2091 = vmatprep.subr.bf16.mxu0 0
      %2092 = vmatpush1.bf16.msra.mxu0 %v1687
      %2093 = vmatprep.subr.bf16.mxu0 0
      %2094 = vmatpush1.bf16.msra.mxu0 %v1688
      %2095 = vmatprep.subr.bf16.mxu0 0
      %2096 = vmatpush1.bf16.msra.mxu0 %v1689
      %2097 = vmatprep.subr.bf16.mxu0 0
      %2098 = vmatpush1.bf16.msra.mxu0 %v1690
      %2099 = vmatprep.subr.bf16.mxu0 0
      %2100 = vmatpush1.bf16.msra.mxu0 %v1691
      %2101 = vmatprep.subr.bf16.mxu0 0
      %2102 = vmatpush1.bf16.msra.mxu0 %v1692
      %2103 = vmatprep.subr.bf16.mxu0 0
      %2104 = vmatpush1.bf16.msra.mxu0 %v1693
      %2105 = vmatprep.subr.bf16.mxu0 0
      %2106 = vmatpush1.bf16.msra.mxu0 %v1694
      %2107 = vmatprep.subr.bf16.mxu0 0
      %2108 = vmatpush1.bf16.msra.mxu0 %v1695
      %2109 = vmatprep.subr.bf16.mxu0 0
      %2110 = vmatpush1.bf16.msra.mxu0 %v1696
      %2111 = vmatprep.subr.bf16.mxu0 0
      %2112 = vmatpush1.bf16.msra.mxu0 %v1697
      %2113 = vmatprep.subr.bf16.mxu0 0
      %2114 = vmatpush1.bf16.msra.mxu0 %v1698
      %2115 = vmatprep.mubr.bf16.mxu0 %v784
      %2116 = vmatmul.mubr.bf16.gmra.mrb[0].mxu0 %v783
      %v2117 = vpop.f32.mrb[0].mxu0
      %v2118 = vadd.f32 %v629, %v2117
      %v2119 = vpop.f32.mrb[0].mxu0
      %v2120 = vpop.f32.mrb[0].mxu0
      %v2121 = vadd.f32 %v629, %v2120
      %v2122 = vpop.f32.mrb[0].mxu0
      %2123 = vmatprep.mubr.bf16.mxu0 %v809
      %2124 = vmatmul.mubr.bf16.gmra.mrb[0].mxu0 %v808
      %v2125 = vpop.f32.mrb[0].mxu0
      %v2126 = vadd.f32 %v629, %v2125
      %v2127 = vpop.f32.mrb[0].mxu0
      %v2128 = vpop.f32.mrb[0].mxu0
      %v2129 = vadd.f32 %v629, %v2128
      %v2130 = vpop.f32.mrb[0].mxu0
      %2131 = vdwg.mxu0
      %2132 = vmatprep.subr.bf16.mxu0 0
      %2133 = vmatpush1.bf16.msra.mxu0 %v1699
      %2134 = vmatprep.subr.bf16.mxu0 0
      %2135 = vmatpush1.bf16.msra.mxu0 %v1700
      %2136 = vmatprep.subr.bf16.mxu0 0
      %2137 = vmatpush1.bf16.msra.mxu0 %v1701
      %2138 = vmatprep.subr.bf16.mxu0 0
      %2139 = vmatpush1.bf16.msra.mxu0 %v1702
      %2140 = vmatprep.subr.bf16.mxu0 0
      %2141 = vmatpush1.bf16.msra.mxu0 %v1703
      %2142 = vmatprep.subr.bf16.mxu0 0
      %2143 = vmatpush1.bf16.msra.mxu0 %v1704
      %2144 = vmatprep.subr.bf16.mxu0 0
      %2145 = vmatpush1.bf16.msra.mxu0 %v1705
      %2146 = vmatprep.subr.bf16.mxu0 0
      %2147 = vmatpush1.bf16.msra.mxu0 %v1706
      %2148 = vmatprep.subr.bf16.mxu0 0
      %2149 = vmatpush1.bf16.msra.mxu0 %v1707
      %2150 = vmatprep.subr.bf16.mxu0 0
      %2151 = vmatpush1.bf16.msra.mxu0 %v1708
      %2152 = vmatprep.subr.bf16.mxu0 0
      %2153 = vmatpush1.bf16.msra.mxu0 %v1709
      %2154 = vmatprep.subr.bf16.mxu0 0
      %2155 = vmatpush1.bf16.msra.mxu0 %v1710
      %2156 = vmatprep.subr.bf16.mxu0 0
      %2157 = vmatpush1.bf16.msra.mxu0 %v1711
      %2158 = vmatprep.subr.bf16.mxu0 0
      %2159 = vmatpush1.bf16.msra.mxu0 %v1712
      %2160 = vmatprep.subr.bf16.mxu0 0
      %2161 = vmatpush1.bf16.msra.mxu0 %v1713
      %2162 = vmatprep.subr.bf16.mxu0 0
      %2163 = vmatpush1.bf16.msra.mxu0 %v1714
      %2164 = vmatprep.mubr.bf16.mxu0 %v786
      %2165 = vmatmul.mubr.bf16.gmra.mrb[0].mxu0 %v785
      %v2166 = vpop.f32.mrb[0].mxu0
      %v2167 = vadd.f32 %v2118, %v2166
      %v2168 = vpop.f32.mrb[0].mxu0
      %v2169 = vpop.f32.mrb[0].mxu0
      %v2170 = vadd.f32 %v2121, %v2169
      %v2171 = vpop.f32.mrb[0].mxu0
      %2172 = vmatprep.mubr.bf16.mxu0 %v811
      %2173 = vmatmul.mubr.bf16.gmra.mrb[0].mxu0 %v810
      %v2174 = vpop.f32.mrb[0].mxu0
      %v2175 = vadd.f32 %v2126, %v2174
      %v2176 = vpop.f32.mrb[0].mxu0
      %v2177 = vpop.f32.mrb[0].mxu0
      %v2178 = vadd.f32 %v2129, %v2177
      %v2179 = vpop.f32.mrb[0].mxu0
      %2180 = vdwg.mxu0
      %2181 = vmatprep.subr.bf16.mxu0 0
      %2182 = vmatpush1.bf16.msra.mxu0 %v1715
      %2183 = vmatprep.subr.bf16.mxu0 0
      %2184 = vmatpush1.bf16.msra.mxu0 %v1716
      %2185 = vmatprep.subr.bf16.mxu0 0
      %2186 = vmatpush1.bf16.msra.mxu0 %v1717
      %2187 = vmatprep.subr.bf16.mxu0 0
      %2188 = vmatpush1.bf16.msra.mxu0 %v1718
      %2189 = vmatprep.subr.bf16.mxu0 0
      %2190 = vmatpush1.bf16.msra.mxu0 %v1719
      %2191 = vmatprep.subr.bf16.mxu0 0
      %2192 = vmatpush1.bf16.msra.mxu0 %v1720
      %2193 = vmatprep.subr.bf16.mxu0 0
      %2194 = vmatpush1.bf16.msra.mxu0 %v1721
      %2195 = vmatprep.subr.bf16.mxu0 0
      %2196 = vmatpush1.bf16.msra.mxu0 %v1722
      %2197 = vmatprep.subr.bf16.mxu0 0
      %2198 = vmatpush1.bf16.msra.mxu0 %v1723
      %2199 = vmatprep.subr.bf16.mxu0 0
      %2200 = vmatpush1.bf16.msra.mxu0 %v1724
      %2201 = vmatprep.subr.bf16.mxu0 0
      %2202 = vmatpush1.bf16.msra.mxu0 %v1725
      %2203 = vmatprep.subr.bf16.mxu0 0
      %2204 = vmatpush1.bf16.msra.mxu0 %v1726
      %2205 = vmatprep.subr.bf16.mxu0 0
      %2206 = vmatpush1.bf16.msra.mxu0 %v1727
      %2207 = vmatprep.subr.bf16.mxu0 0
      %2208 = vmatpush1.bf16.msra.mxu0 %v1728
      %2209 = vmatprep.subr.bf16.mxu0 0
      %2210 = vmatpush1.bf16.msra.mxu0 %v1729
      %2211 = vmatprep.subr.bf16.mxu0 0
      %2212 = vmatpush1.bf16.msra.mxu0 %v1730
      %2213 = vmatprep.mubr.bf16.mxu0 %v788
      %2214 = vmatmul.mubr.bf16.gmra.mrb[0].mxu0 %v787
      %v2215 = vpop.f32.mrb[0].mxu0
      %v2216 = vadd.f32 %v2167, %v2215
      %v2217 = vpop.f32.mrb[0].mxu0
      %v2218 = vpop.f32.mrb[0].mxu0
      %v2219 = vadd.f32 %v2170, %v2218
      %v2220 = vpop.f32.mrb[0].mxu0
      %2221 = vmatprep.mubr.bf16.mxu0 %v813
      %2222 = vmatmul.mubr.bf16.gmra.mrb[0].mxu0 %v812
      %v2223 = vpop.f32.mrb[0].mxu0
      %v2224 = vadd.f32 %v2175, %v2223
      %v2225 = vpop.f32.mrb[0].mxu0
      %v2226 = vpop.f32.mrb[0].mxu0
      %v2227 = vadd.f32 %v2178, %v2226
      %v2228 = vpop.f32.mrb[0].mxu0
      %2229 = vdwg.mxu0
      %2230 = vmatprep.subr.bf16.mxu0 0
      %2231 = vmatpush1.bf16.msra.mxu0 %v1731
      %2232 = vmatprep.subr.bf16.mxu0 0
      %2233 = vmatpush1.bf16.msra.mxu0 %v1732
      %2234 = vmatprep.subr.bf16.mxu0 0
      %2235 = vmatpush1.bf16.msra.mxu0 %v1733
      %2236 = vmatprep.subr.bf16.mxu0 0
      %2237 = vmatpush1.bf16.msra.mxu0 %v1734
      %2238 = vmatprep.subr.bf16.mxu0 0
      %2239 = vmatpush1.bf16.msra.mxu0 %v1735
      %2240 = vmatprep.subr.bf16.mxu0 0
      %2241 = vmatpush1.bf16.msra.mxu0 %v1736
      %2242 = vmatprep.subr.bf16.mxu0 0
      %2243 = vmatpush1.bf16.msra.mxu0 %v1737
      %2244 = vmatprep.subr.bf16.mxu0 0
      %2245 = vmatpush1.bf16.msra.mxu0 %v1738
      %2246 = vmatprep.subr.bf16.mxu0 0
      %2247 = vmatpush1.bf16.msra.mxu0 %v1739
      %2248 = vmatprep.subr.bf16.mxu0 0
      %2249 = vmatpush1.bf16.msra.mxu0 %v1740
      %2250 = vmatprep.subr.bf16.mxu0 0
      %2251 = vmatpush1.bf16.msra.mxu0 %v1741
      %2252 = vmatprep.subr.bf16.mxu0 0
      %2253 = vmatpush1.bf16.msra.mxu0 %v1742
      %2254 = vmatprep.subr.bf16.mxu0 0
      %2255 = vmatpush1.bf16.msra.mxu0 %v1743
      %2256 = vmatprep.subr.bf16.mxu0 0
      %2257 = vmatpush1.bf16.msra.mxu0 %v1744
      %2258 = vmatprep.subr.bf16.mxu0 0
      %2259 = vmatpush1.bf16.msra.mxu0 %v1745
      %2260 = vmatprep.subr.bf16.mxu0 0
      %2261 = vmatpush1.bf16.msra.mxu0 %v1746
      %2262 = vmatprep.mubr.bf16.mxu0 %v790
      %2263 = vmatmul.mubr.bf16.gmra.mrb[0].mxu0 %v789
      %v2264 = vpop.f32.mrb[0].mxu0
      %v2265 = vadd.f32 %v2216, %v2264
      %v2266 = vpop.f32.mrb[0].mxu0
      %v2267 = vpop.f32.mrb[0].mxu0
      %v2268 = vadd.f32 %v2219, %v2267
      %v2269 = vpop.f32.mrb[0].mxu0
      %2270 = vmatprep.mubr.bf16.mxu0 %v815
      %2271 = vmatmul.mubr.bf16.gmra.mrb[0].mxu0 %v814
      %v2272 = vpop.f32.mrb[0].mxu0
      %v2273 = vadd.f32 %v2224, %v2272
      %v2274 = vpop.f32.mrb[0].mxu0
      %v2275 = vpop.f32.mrb[0].mxu0
      %v2276 = vadd.f32 %v2227, %v2275
      %v2277 = vpop.f32.mrb[0].mxu0
      %2278 = vdwg.mxu0
      %2279 = vmatprep.subr.bf16.mxu0 0
      %2280 = vmatpush1.bf16.msra.mxu0 %v1747
      %2281 = vmatprep.subr.bf16.mxu0 0
      %2282 = vmatpush1.bf16.msra.mxu0 %v1748
      %2283 = vmatprep.subr.bf16.mxu0 0
      %2284 = vmatpush1.bf16.msra.mxu0 %v1749
      %2285 = vmatprep.subr.bf16.mxu0 0
      %2286 = vmatpush1.bf16.msra.mxu0 %v1750
      %2287 = vmatprep.subr.bf16.mxu0 0
      %2288 = vmatpush1.bf16.msra.mxu0 %v1751
      %2289 = vmatprep.subr.bf16.mxu0 0
      %2290 = vmatpush1.bf16.msra.mxu0 %v1752
      %2291 = vmatprep.subr.bf16.mxu0 0
      %2292 = vmatpush1.bf16.msra.mxu0 %v1753
      %2293 = vmatprep.subr.bf16.mxu0 0
      %2294 = vmatpush1.bf16.msra.mxu0 %v1754
      %2295 = vmatprep.subr.bf16.mxu0 0
      %2296 = vmatpush1.bf16.msra.mxu0 %v1755
      %2297 = vmatprep.subr.bf16.mxu0 0
      %2298 = vmatpush1.bf16.msra.mxu0 %v1756
      %2299 = vmatprep.subr.bf16.mxu0 0
      %2300 = vmatpush1.bf16.msra.mxu0 %v1757
      %2301 = vmatprep.subr.bf16.mxu0 0
      %2302 = vmatpush1.bf16.msra.mxu0 %v1758
      %2303 = vmatprep.subr.bf16.mxu0 0
      %2304 = vmatpush1.bf16.msra.mxu0 %v1759
      %2305 = vmatprep.subr.bf16.mxu0 0
      %2306 = vmatpush1.bf16.msra.mxu0 %v1760
      %2307 = vmatprep.subr.bf16.mxu0 0
      %2308 = vmatpush1.bf16.msra.mxu0 %v1761
      %2309 = vmatprep.subr.bf16.mxu0 0
      %2310 = vmatpush1.bf16.msra.mxu0 %v1762
      %2311 = vmatprep.mubr.bf16.mxu0 %v792
      %2312 = vmatmul.mubr.bf16.gmra.mrb[0].mxu0 %v791
      %v2313 = vpop.f32.mrb[0].mxu0
      %v2314 = vadd.f32 %v2265, %v2313
      %v2315 = vpop.f32.mrb[0].mxu0
      %v2316 = vpop.f32.mrb[0].mxu0
      %v2317 = vadd.f32 %v2268, %v2316
      %v2318 = vpop.f32.mrb[0].mxu0
      %2319 = vmatprep.mubr.bf16.mxu0 %v817
      %2320 = vmatmul.mubr.bf16.gmra.mrb[0].mxu0 %v816
      %v2321 = vpop.f32.mrb[0].mxu0
      %v2322 = vadd.f32 %v2273, %v2321
      %v2323 = vpop.f32.mrb[0].mxu0
      %v2324 = vpop.f32.mrb[0].mxu0
      %v2325 = vadd.f32 %v2276, %v2324
      %v2326 = vpop.f32.mrb[0].mxu0
      %2327 = vdwg.mxu0
      %2328 = vmatprep.subr.bf16.mxu0 0
      %2329 = vmatpush1.bf16.msra.mxu0 %v1763
      %2330 = vmatprep.subr.bf16.mxu0 0
      %2331 = vmatpush1.bf16.msra.mxu0 %v1764
      %2332 = vmatprep.subr.bf16.mxu0 0
      %2333 = vmatpush1.bf16.msra.mxu0 %v1765
      %2334 = vmatprep.subr.bf16.mxu0 0
      %2335 = vmatpush1.bf16.msra.mxu0 %v1766
      %2336 = vmatprep.subr.bf16.mxu0 0
      %2337 = vmatpush1.bf16.msra.mxu0 %v1767
      %2338 = vmatprep.subr.bf16.mxu0 0
      %2339 = vmatpush1.bf16.msra.mxu0 %v1768
      %2340 = vmatprep.subr.bf16.mxu0 0
      %2341 = vmatpush1.bf16.msra.mxu0 %v1769
      %2342 = vmatprep.subr.bf16.mxu0 0
      %2343 = vmatpush1.bf16.msra.mxu0 %v1770
      %2344 = vmatprep.subr.bf16.mxu0 0
      %2345 = vmatpush1.bf16.msra.mxu0 %v1771
      %2346 = vmatprep.subr.bf16.mxu0 0
      %2347 = vmatpush1.bf16.msra.mxu0 %v1772
      %2348 = vmatprep.subr.bf16.mxu0 0
      %2349 = vmatpush1.bf16.msra.mxu0 %v1773
      %2350 = vmatprep.subr.bf16.mxu0 0
      %2351 = vmatpush1.bf16.msra.mxu0 %v1774
      %2352 = vmatprep.subr.bf16.mxu0 0
      %2353 = vmatpush1.bf16.msra.mxu0 %v1775
      %2354 = vmatprep.subr.bf16.mxu0 0
      %2355 = vmatpush1.bf16.msra.mxu0 %v1776
      %2356 = vmatprep.subr.bf16.mxu0 0
      %2357 = vmatpush1.bf16.msra.mxu0 %v1777
      %2358 = vmatprep.subr.bf16.mxu0 0
      %2359 = vmatpush1.bf16.msra.mxu0 %v1778
      %2360 = vmatprep.mubr.bf16.mxu0 %v794
      %2361 = vmatmul.mubr.bf16.gmra.mrb[0].mxu0 %v793
      %v2362 = vpop.f32.mrb[0].mxu0
      %v2363 = vadd.f32 %v2314, %v2362
      %v2364 = vpop.f32.mrb[0].mxu0
      %v2365 = vpop.f32.mrb[0].mxu0
      %v2366 = vadd.f32 %v2317, %v2365
      %v2367 = vpop.f32.mrb[0].mxu0
      %2368 = vmatprep.mubr.bf16.mxu0 %v819
      %2369 = vmatmul.mubr.bf16.gmra.mrb[0].mxu0 %v818
      %v2370 = vpop.f32.mrb[0].mxu0
      %v2371 = vadd.f32 %v2322, %v2370
      %v2372 = vpop.f32.mrb[0].mxu0
      %v2373 = vpop.f32.mrb[0].mxu0
      %v2374 = vadd.f32 %v2325, %v2373
      %v2375 = vpop.f32.mrb[0].mxu0
      %2376 = vdwg.mxu0
      %2377 = vmatprep.subr.bf16.mxu0 0
      %2378 = vmatpush1.bf16.msra.mxu0 %v1779
      %2379 = vmatprep.subr.bf16.mxu0 0
      %2380 = vmatpush1.bf16.msra.mxu0 %v1780
      %2381 = vmatprep.subr.bf16.mxu0 0
      %2382 = vmatpush1.bf16.msra.mxu0 %v1781
      %2383 = vmatprep.subr.bf16.mxu0 0
      %2384 = vmatpush1.bf16.msra.mxu0 %v1782
      %2385 = vmatprep.subr.bf16.mxu0 0
      %2386 = vmatpush1.bf16.msra.mxu0 %v1783
      %2387 = vmatprep.subr.bf16.mxu0 0
      %2388 = vmatpush1.bf16.msra.mxu0 %v1784
      %2389 = vmatprep.subr.bf16.mxu0 0
      %2390 = vmatpush1.bf16.msra.mxu0 %v1785
      %2391 = vmatprep.subr.bf16.mxu0 0
      %2392 = vmatpush1.bf16.msra.mxu0 %v1786
      %2393 = vmatprep.subr.bf16.mxu0 0
      %2394 = vmatpush1.bf16.msra.mxu0 %v1787
      %2395 = vmatprep.subr.bf16.mxu0 0
      %2396 = vmatpush1.bf16.msra.mxu0 %v1788
      %2397 = vmatprep.subr.bf16.mxu0 0
      %2398 = vmatpush1.bf16.msra.mxu0 %v1789
      %2399 = vmatprep.subr.bf16.mxu0 0
      %2400 = vmatpush1.bf16.msra.mxu0 %v1790
      %2401 = vmatprep.subr.bf16.mxu0 0
      %2402 = vmatpush1.bf16.msra.mxu0 %v1791
      %2403 = vmatprep.subr.bf16.mxu0 0
      %2404 = vmatpush1.bf16.msra.mxu0 %v1792
      %2405 = vmatprep.subr.bf16.mxu0 0
      %2406 = vmatpush1.bf16.msra.mxu0 %v1793
      %2407 = vmatprep.subr.bf16.mxu0 0
      %2408 = vmatpush1.bf16.msra.mxu0 %v1794
      %2409 = vmatprep.mubr.bf16.mxu0 %v796
      %2410 = vmatmul.mubr.bf16.gmra.mrb[0].mxu0 %v795
      %v2411 = vpop.f32.mrb[0].mxu0
      %v2412 = vadd.f32 %v2363, %v2411
      %v2413 = vpop.f32.mrb[0].mxu0
      %v2414 = vpop.f32.mrb[0].mxu0
      %v2415 = vadd.f32 %v2366, %v2414
      %v2416 = vpop.f32.mrb[0].mxu0
      %2417 = vmatprep.mubr.bf16.mxu0 %v821
      %2418 = vmatmul.mubr.bf16.gmra.mrb[0].mxu0 %v820
      %v2419 = vpop.f32.mrb[0].mxu0
      %v2420 = vadd.f32 %v2371, %v2419
      %v2421 = vpop.f32.mrb[0].mxu0
      %v2422 = vpop.f32.mrb[0].mxu0
      %v2423 = vadd.f32 %v2374, %v2422
      %v2424 = vpop.f32.mrb[0].mxu0
      %2425 = vdwg.mxu0
      %2426 = vmatprep.subr.bf16.mxu0 0
      %2427 = vmatpush1.bf16.msra.mxu0 %v1795
      %2428 = vmatprep.subr.bf16.mxu0 0
      %2429 = vmatpush1.bf16.msra.mxu0 %v1796
      %2430 = vmatprep.subr.bf16.mxu0 0
      %2431 = vmatpush1.bf16.msra.mxu0 %v1797
      %2432 = vmatprep.subr.bf16.mxu0 0
      %2433 = vmatpush1.bf16.msra.mxu0 %v1798
      %2434 = vmatprep.subr.bf16.mxu0 0
      %2435 = vmatpush1.bf16.msra.mxu0 %v1799
      %2436 = vmatprep.subr.bf16.mxu0 0
      %2437 = vmatpush1.bf16.msra.mxu0 %v1800
      %2438 = vmatprep.subr.bf16.mxu0 0
      %2439 = vmatpush1.bf16.msra.mxu0 %v1801
      %2440 = vmatprep.subr.bf16.mxu0 0
      %2441 = vmatpush1.bf16.msra.mxu0 %v1802
      %2442 = vmatprep.subr.bf16.mxu0 0
      %2443 = vmatpush1.bf16.msra.mxu0 %v1803
      %2444 = vmatprep.subr.bf16.mxu0 0
      %2445 = vmatpush1.bf16.msra.mxu0 %v1804
      %2446 = vmatprep.subr.bf16.mxu0 0
      %2447 = vmatpush1.bf16.msra.mxu0 %v1805
      %2448 = vmatprep.subr.bf16.mxu0 0
      %2449 = vmatpush1.bf16.msra.mxu0 %v1806
      %2450 = vmatprep.subr.bf16.mxu0 0
      %2451 = vmatpush1.bf16.msra.mxu0 %v1807
      %2452 = vmatprep.subr.bf16.mxu0 0
      %2453 = vmatpush1.bf16.msra.mxu0 %v1808
      %2454 = vmatprep.subr.bf16.mxu0 0
      %2455 = vmatpush1.bf16.msra.mxu0 %v1809
      %2456 = vmatprep.subr.bf16.mxu0 0
      %2457 = vmatpush1.bf16.msra.mxu0 %v1810
      %2458 = vmatprep.mubr.bf16.mxu0 %v798
      %2459 = vmatmul.mubr.bf16.gmra.mrb[0].mxu0 %v797
      %v2460 = vpop.f32.mrb[0].mxu0
      %v2461 = vadd.f32 %v2412, %v2460
      %v2462 = vpop.f32.mrb[0].mxu0
      %v2463 = vpop.f32.mrb[0].mxu0
      %v2464 = vadd.f32 %v2415, %v2463
      %v2465 = vpop.f32.mrb[0].mxu0
      %2466 = vmatprep.mubr.bf16.mxu0 %v823
      %2467 = vmatmul.mubr.bf16.gmra.mrb[0].mxu0 %v822
      %v2468 = vpop.f32.mrb[0].mxu0
      %v2469 = vadd.f32 %v2420, %v2468
      %v2470 = vpop.f32.mrb[0].mxu0
      %v2471 = vpop.f32.mrb[0].mxu0
      %v2472 = vadd.f32 %v2423, %v2471
      %v2473 = vpop.f32.mrb[0].mxu0
      %2474 = vdwg.mxu0
      %2475 = vmatprep.subr.bf16.mxu0 0
      %2476 = vmatpush1.bf16.msra.mxu0 %v1811
      %2477 = vmatprep.subr.bf16.mxu0 0
      %2478 = vmatpush1.bf16.msra.mxu0 %v1812
      %2479 = vmatprep.subr.bf16.mxu0 0
      %2480 = vmatpush1.bf16.msra.mxu0 %v1813
      %2481 = vmatprep.subr.bf16.mxu0 0
      %2482 = vmatpush1.bf16.msra.mxu0 %v1814
      %2483 = vmatprep.subr.bf16.mxu0 0
      %2484 = vmatpush1.bf16.msra.mxu0 %v1815
      %2485 = vmatprep.subr.bf16.mxu0 0
      %2486 = vmatpush1.bf16.msra.mxu0 %v1816
      %2487 = vmatprep.subr.bf16.mxu0 0
      %2488 = vmatpush1.bf16.msra.mxu0 %v1817
      %2489 = vmatprep.subr.bf16.mxu0 0
      %2490 = vmatpush1.bf16.msra.mxu0 %v1818
      %2491 = vmatprep.subr.bf16.mxu0 0
      %2492 = vmatpush1.bf16.msra.mxu0 %v1819
      %2493 = vmatprep.subr.bf16.mxu0 0
      %2494 = vmatpush1.bf16.msra.mxu0 %v1820
      %2495 = vmatprep.subr.bf16.mxu0 0
      %2496 = vmatpush1.bf16.msra.mxu0 %v1821
      %2497 = vmatprep.subr.bf16.mxu0 0
      %2498 = vmatpush1.bf16.msra.mxu0 %v1822
      %2499 = vmatprep.subr.bf16.mxu0 0
      %2500 = vmatpush1.bf16.msra.mxu0 %v1823
      %2501 = vmatprep.subr.bf16.mxu0 0
      %2502 = vmatpush1.bf16.msra.mxu0 %v1824
      %2503 = vmatprep.subr.bf16.mxu0 0
      %2504 = vmatpush1.bf16.msra.mxu0 %v1825
      %2505 = vmatprep.subr.bf16.mxu0 0
      %2506 = vmatpush1.bf16.msra.mxu0 %v1826
      %2507 = vmatprep.mubr.bf16.mxu0 %v800
      %2508 = vmatmul.mubr.bf16.gmra.mrb[0].mxu0 %v799
      %v2509 = vpop.f32.mrb[0].mxu0
      %v2510 = vadd.f32 %v2461, %v2509
      %v2511 = vpop.f32.mrb[0].mxu0
      %v2512 = vpop.f32.mrb[0].mxu0
      %v2513 = vadd.f32 %v2464, %v2512
      %v2514 = vpop.f32.mrb[0].mxu0
      %2515 = vmatprep.mubr.bf16.mxu0 %v825
      %2516 = vmatmul.mubr.bf16.gmra.mrb[0].mxu0 %v824
      %v2517 = vpop.f32.mrb[0].mxu0
      %v2518 = vadd.f32 %v2469, %v2517
      %v2519 = vpop.f32.mrb[0].mxu0
      %v2520 = vpop.f32.mrb[0].mxu0
      %v2521 = vadd.f32 %v2472, %v2520
      %v2522 = vpop.f32.mrb[0].mxu0
      %2523 = vdwg.mxu0
      %2524 = vmatprep.subr.bf16.mxu0 0
      %2525 = vmatpush1.bf16.msra.mxu0 %v1827
      %2526 = vmatprep.subr.bf16.mxu0 0
      %2527 = vmatpush1.bf16.msra.mxu0 %v1828
      %2528 = vmatprep.subr.bf16.mxu0 0
      %2529 = vmatpush1.bf16.msra.mxu0 %v1829
      %2530 = vmatprep.subr.bf16.mxu0 0
      %2531 = vmatpush1.bf16.msra.mxu0 %v1830
      %2532 = vmatprep.subr.bf16.mxu0 0
      %2533 = vmatpush1.bf16.msra.mxu0 %v1831
      %2534 = vmatprep.subr.bf16.mxu0 0
      %2535 = vmatpush1.bf16.msra.mxu0 %v1832
      %2536 = vmatprep.subr.bf16.mxu0 0
      %2537 = vmatpush1.bf16.msra.mxu0 %v1833
      %2538 = vmatprep.subr.bf16.mxu0 0
      %2539 = vmatpush1.bf16.msra.mxu0 %v1834
      %2540 = vmatprep.subr.bf16.mxu0 0
      %2541 = vmatpush1.bf16.msra.mxu0 %v1835
      %2542 = vmatprep.subr.bf16.mxu0 0
      %2543 = vmatpush1.bf16.msra.mxu0 %v1836
      %2544 = vmatprep.subr.bf16.mxu0 0
      %2545 = vmatpush1.bf16.msra.mxu0 %v1837
      %2546 = vmatprep.subr.bf16.mxu0 0
      %2547 = vmatpush1.bf16.msra.mxu0 %v1838
      %2548 = vmatprep.subr.bf16.mxu0 0
      %2549 = vmatpush1.bf16.msra.mxu0 %v1839
      %2550 = vmatprep.subr.bf16.mxu0 0
      %2551 = vmatpush1.bf16.msra.mxu0 %v1840
      %2552 = vmatprep.subr.bf16.mxu0 0
      %2553 = vmatpush1.bf16.msra.mxu0 %v1841
      %2554 = vmatprep.subr.bf16.mxu0 0
      %2555 = vmatpush1.bf16.msra.mxu0 %v1842
      %2556 = vmatprep.mubr.bf16.mxu0 %v802
      %2557 = vmatmul.mubr.bf16.gmra.mrb[0].mxu0 %v801
      %v2558 = vpop.f32.mrb[0].mxu0
      %v2559 = vadd.f32 %v2510, %v2558
      %v2560 = vpop.f32.mrb[0].mxu0
      %v2561 = vpop.f32.mrb[0].mxu0
      %v2562 = vadd.f32 %v2513, %v2561
      %v2563 = vpop.f32.mrb[0].mxu0
      %2564 = vmatprep.mubr.bf16.mxu0 %v827
      %2565 = vmatmul.mubr.bf16.gmra.mrb[0].mxu0 %v826
      %v2566 = vpop.f32.mrb[0].mxu0
      %v2567 = vadd.f32 %v2518, %v2566
      %v2568 = vpop.f32.mrb[0].mxu0
      %v2569 = vpop.f32.mrb[0].mxu0
      %v2570 = vadd.f32 %v2521, %v2569
      %v2571 = vpop.f32.mrb[0].mxu0
      %2572 = vdwg.mxu0
      %2573 = vmatprep.subr.bf16.mxu0 0
      %2574 = vmatpush1.bf16.msra.mxu0 %v1843
      %2575 = vmatprep.subr.bf16.mxu0 0
      %2576 = vmatpush1.bf16.msra.mxu0 %v1844
      %2577 = vmatprep.subr.bf16.mxu0 0
      %2578 = vmatpush1.bf16.msra.mxu0 %v1845
      %2579 = vmatprep.subr.bf16.mxu0 0
      %2580 = vmatpush1.bf16.msra.mxu0 %v1846
      %2581 = vmatprep.subr.bf16.mxu0 0
      %2582 = vmatpush1.bf16.msra.mxu0 %v1847
      %2583 = vmatprep.subr.bf16.mxu0 0
      %2584 = vmatpush1.bf16.msra.mxu0 %v1848
      %2585 = vmatprep.subr.bf16.mxu0 0
      %2586 = vmatpush1.bf16.msra.mxu0 %v1849
      %2587 = vmatprep.subr.bf16.mxu0 0
      %2588 = vmatpush1.bf16.msra.mxu0 %v1850
      %2589 = vmatprep.subr.bf16.mxu0 0
      %2590 = vmatpush1.bf16.msra.mxu0 %v1851
      %2591 = vmatprep.subr.bf16.mxu0 0
      %2592 = vmatpush1.bf16.msra.mxu0 %v1852
      %2593 = vmatprep.subr.bf16.mxu0 0
      %2594 = vmatpush1.bf16.msra.mxu0 %v1853
      %2595 = vmatprep.subr.bf16.mxu0 0
      %2596 = vmatpush1.bf16.msra.mxu0 %v1854
      %2597 = vmatprep.subr.bf16.mxu0 0
      %2598 = vmatpush1.bf16.msra.mxu0 %v1855
      %2599 = vmatprep.subr.bf16.mxu0 0
      %2600 = vmatpush1.bf16.msra.mxu0 %v1856
      %2601 = vmatprep.subr.bf16.mxu0 0
      %2602 = vmatpush1.bf16.msra.mxu0 %v1857
      %2603 = vmatprep.subr.bf16.mxu0 0
      %2604 = vmatpush1.bf16.msra.mxu0 %v1858
      %2605 = vmatprep.mubr.bf16.mxu0 %v804
      %2606 = vmatmul.mubr.bf16.gmra.mrb[0].mxu0 %v803
      %v2607 = vpop.f32.mrb[0].mxu0
      %v2608 = vadd.f32 %v2559, %v2607
      %v2609 = vpop.f32.mrb[0].mxu0
      %v2610 = vpop.f32.mrb[0].mxu0
      %v2611 = vadd.f32 %v2562, %v2610
      %v2612 = vpop.f32.mrb[0].mxu0
      %2613 = vmatprep.mubr.bf16.mxu0 %v829
      %2614 = vmatmul.mubr.bf16.gmra.mrb[0].mxu0 %v828
      %v2615 = vpop.f32.mrb[0].mxu0
      %v2616 = vadd.f32 %v2567, %v2615
      %v2617 = vpop.f32.mrb[0].mxu0
      %v2618 = vpop.f32.mrb[0].mxu0
      %v2619 = vadd.f32 %v2570, %v2618
      %v2620 = vpop.f32.mrb[0].mxu0
      %2621 = vdwg.mxu0
      %2622 = vmatprep.subr.bf16.mxu0 0
      %2623 = vmatpush1.bf16.msra.mxu0 %v1859
      %2624 = vmatprep.subr.bf16.mxu0 0
      %2625 = vmatpush1.bf16.msra.mxu0 %v1860
      %2626 = vmatprep.subr.bf16.mxu0 0
      %2627 = vmatpush1.bf16.msra.mxu0 %v1861
      %2628 = vmatprep.subr.bf16.mxu0 0
      %2629 = vmatpush1.bf16.msra.mxu0 %v1862
      %2630 = vmatprep.subr.bf16.mxu0 0
      %2631 = vmatpush1.bf16.msra.mxu0 %v1863
      %2632 = vmatprep.subr.bf16.mxu0 0
      %2633 = vmatpush1.bf16.msra.mxu0 %v1864
      %2634 = vmatprep.subr.bf16.mxu0 0
      %2635 = vmatpush1.bf16.msra.mxu0 %v1865
      %2636 = vmatprep.subr.bf16.mxu0 0
      %2637 = vmatpush1.bf16.msra.mxu0 %v1866
      %2638 = vmatprep.subr.bf16.mxu0 0
      %2639 = vmatpush1.bf16.msra.mxu0 %v1867
      %2640 = vmatprep.subr.bf16.mxu0 0
      %2641 = vmatpush1.bf16.msra.mxu0 %v1868
      %2642 = vmatprep.subr.bf16.mxu0 0
      %2643 = vmatpush1.bf16.msra.mxu0 %v1869
      %2644 = vmatprep.subr.bf16.mxu0 0
      %2645 = vmatpush1.bf16.msra.mxu0 %v1870
      %2646 = vmatprep.subr.bf16.mxu0 0
      %2647 = vmatpush1.bf16.msra.mxu0 %v1871
      %2648 = vmatprep.subr.bf16.mxu0 0
      %2649 = vmatpush1.bf16.msra.mxu0 %v1872
      %2650 = vmatprep.subr.bf16.mxu0 0
      %2651 = vmatpush1.bf16.msra.mxu0 %v1873
      %2652 = vmatprep.subr.bf16.mxu0 0
      %2653 = vmatpush1.bf16.msra.mxu0 %v1874
      %2654 = vmatprep.mubr.bf16.mxu0 %v806
      %2655 = vmatmul.mubr.bf16.gmra.mrb[0].mxu0 %v805
      %v2656 = vpop.f32.mrb[0].mxu0
      %v2657 = vadd.f32 %v2608, %v2656
      %v2658 = vpop.f32.mrb[0].mxu0
      %v2659 = vpop.f32.mrb[0].mxu0
      %v2660 = vadd.f32 %v2611, %v2659
      %v2661 = vpop.f32.mrb[0].mxu0
      %2662 = vmatprep.mubr.bf16.mxu0 %v831
      %2663 = vmatmul.mubr.bf16.gmra.mrb[0].mxu0 %v830
      %v2664 = vpop.f32.mrb[0].mxu0
      %v2665 = vadd.f32 %v2616, %v2664
      %v2666 = vpop.f32.mrb[0].mxu0
      %v2667 = vpop.f32.mrb[0].mxu0
      %v2668 = vadd.f32 %v2619, %v2667
      %v2669 = vpop.f32.mrb[0].mxu0
      %2670 = vdwg.mxu0
      %2671 = vmatprep.subr.bf16.mxu0 0
      %2672 = vmatpush1.bf16.msra.mxu0 %v1875
      %2673 = vmatprep.subr.bf16.mxu0 0
      %2674 = vmatpush1.bf16.msra.mxu0 %v1876
      %2675 = vmatprep.subr.bf16.mxu0 0
      %2676 = vmatpush1.bf16.msra.mxu0 %v1877
      %2677 = vmatprep.subr.bf16.mxu0 0
      %2678 = vmatpush1.bf16.msra.mxu0 %v1878
      %2679 = vmatprep.subr.bf16.mxu0 0
      %2680 = vmatpush1.bf16.msra.mxu0 %v1879
      %2681 = vmatprep.subr.bf16.mxu0 0
      %2682 = vmatpush1.bf16.msra.mxu0 %v1880
      %2683 = vmatprep.subr.bf16.mxu0 0
      %2684 = vmatpush1.bf16.msra.mxu0 %v1881
      %2685 = vmatprep.subr.bf16.mxu0 0
      %2686 = vmatpush1.bf16.msra.mxu0 %v1882
      %2687 = vmatprep.subr.bf16.mxu0 0
      %2688 = vmatpush1.bf16.msra.mxu0 0
      %2689 = vmatprep.subr.bf16.mxu0 0
      %2690 = vmatpush1.bf16.msra.mxu0 0
      %2691 = vmatprep.subr.bf16.mxu0 0
      %2692 = vmatpush1.bf16.msra.mxu0 0
      %2693 = vmatprep.subr.bf16.mxu0 0
      %2694 = vmatpush1.bf16.msra.mxu0 0
      %2695 = vmatprep.subr.bf16.mxu0 0
      %2696 = vmatpush1.bf16.msra.mxu0 0
      %2697 = vmatprep.subr.bf16.mxu0 0
      %2698 = vmatpush1.bf16.msra.mxu0 0
      %2699 = vmatprep.subr.bf16.mxu0 0
      %2700 = vmatpush1.bf16.msra.mxu0 0
      %2701 = vmatprep.subr.bf16.mxu0 0
      %2702 = vmatpush1.bf16.msra.mxu0 0
      %2703 = vmatprep.mubr.bf16.mxu0 0
      %2704 = vmatmul.mubr.bf16.gmra.mrb[0].mxu0 %v807
      %v2705 = vpop.f32.mrb[0].mxu0
      %v2706 = vadd.f32 %v2657, %v2705
      %v2707 = vpop.f32.mrb[0].mxu0
      %v2708 = vpop.f32.mrb[0].mxu0
      %v2709 = vadd.f32 %v2660, %v2708
      %v2710 = vpop.f32.mrb[0].mxu0
      %2711 = vmatprep.mubr.bf16.mxu0 0
      %2712 = vmatmul.mubr.bf16.gmra.mrb[0].mxu0 %v832
      %v2713 = vpop.f32.mrb[0].mxu0
      %v2714 = vadd.f32 %v2665, %v2713
      %v2715 = vpop.f32.mrb[0].mxu0
      %v2716 = vpop.f32.mrb[0].mxu0
      %v2717 = vadd.f32 %v2668, %v2716
      %v2718 = vpop.f32.mrb[0].mxu0
      %2719 = vdwg.mxu0
      %v2720 = vmax.f32 %v2706, 0.0
      %v2721 = vmax.f32 %v2709, 0.0
      %v2722 = vmax.f32 %v2714, 0.0
      %v2723 = vmax.f32 %v2717, 0.0
      %s2724 = scalar_lea.vmem %s165, 400
      %v2725 = vld [vmem:[%s2724] sm:$0xff]
      %v2726 = vld [vmem:[%s2724 + $0x8] sm:$0xff]
      %v2727 = vld [vmem:[%s2724 + $0x10] sm:$0xff]
      %v2728 = vld [vmem:[%s2724 + $0x18] sm:$0xff]
      %v2729 = vld [vmem:[%s2724 + $0x20] sm:$0xff]
      %v2730 = vld [vmem:[%s2724 + $0x28] sm:$0xff]
      %v2731 = vld [vmem:[%s2724 + $0x30] sm:$0xff]
      %v2732 = vld [vmem:[%s2724 + $0x38] sm:$0xff]
      %v2733 = vld [vmem:[%s2724 + $0x40] sm:$0xff]
      %v2734 = vld [vmem:[%s2724 + $0x48] sm:$0xff]
      %v2735 = vld [vmem:[%s2724 + $0x50] sm:$0xff]
      %v2736 = vld [vmem:[%s2724 + $0x58] sm:$0xff]
      %v2737 = vld [vmem:[%s2724 + $0x60] sm:$0xf]
      %v2738 = vld [vmem:[%s2724 + $0x64] sm:$0xff]
      %v2739 = vld [vmem:[%s2724 + $0x6c] sm:$0xff]
      %v2740 = vld [vmem:[%s2724 + $0x74] sm:$0xff]
      %v2741 = vld [vmem:[%s2724 + $0x7c] sm:$0xff]
      %v2742 = vld [vmem:[%s2724 + $0x84] sm:$0xff]
      %v2743 = vld [vmem:[%s2724 + $0x8c] sm:$0xff]
      %v2744 = vld [vmem:[%s2724 + $0x94] sm:$0xff]
      %v2745 = vld [vmem:[%s2724 + $0x9c] sm:$0xff]
      %v2746 = vld [vmem:[%s2724 + $0xa4] sm:$0xff]
      %v2747 = vld [vmem:[%s2724 + $0xac] sm:$0xff]
      %v2748 = vld [vmem:[%s2724 + $0xb4] sm:$0xff]
      %v2749 = vld [vmem:[%s2724 + $0xbc] sm:$0xff]
      %v2750 = vld [vmem:[%s2724 + $0xc4] sm:$0xf]
      %v2751 = vld [vmem:[%s2724 + $0xc8] sm:$0xff]
      %v2752 = vld [vmem:[%s2724 + $0xd0] sm:$0xff]
      %v2753 = vld [vmem:[%s2724 + $0xd8] sm:$0xff]
      %v2754 = vld [vmem:[%s2724 + $0xe0] sm:$0xff]
      %v2755 = vld [vmem:[%s2724 + $0xe8] sm:$0xff]
      %v2756 = vld [vmem:[%s2724 + $0xf0] sm:$0xff]
      %v2757 = vld [vmem:[%s2724 + $0xf8] sm:$0xff]
      %v2758 = vld [vmem:[%s2724 + $0x100] sm:$0xff]
      %v2759 = vld [vmem:[%s2724 + $0x108] sm:$0xff]
      %v2760 = vld [vmem:[%s2724 + $0x110] sm:$0xff]
      %v2761 = vld [vmem:[%s2724 + $0x118] sm:$0xff]
      %v2762 = vld [vmem:[%s2724 + $0x120] sm:$0xff]
      %v2763 = vld [vmem:[%s2724 + $0x128] sm:$0xf]
      %v2764 = vld [vmem:[%s2724 + $0x12c] sm:$0x11]
      %v2765 = vld [vmem:[%s2724 + $0x134] sm:$0x11]
      %v2766 = vld [vmem:[%s2724 + $0x13c] sm:$0x11]
      %v2767 = vld [vmem:[%s2724 + $0x144] sm:$0x11]
      %v2768 = vld [vmem:[%s2724 + $0x14c] sm:$0x11]
      %v2769 = vld [vmem:[%s2724 + $0x154] sm:$0x11]
      %v2770 = vld [vmem:[%s2724 + $0x15c] sm:$0x11]
      %v2771 = vld [vmem:[%s2724 + $0x164] sm:$0x11]
      %v2772 = vld [vmem:[%s2724 + $0x16c] sm:$0x11]
      %v2773 = vld [vmem:[%s2724 + $0x174] sm:$0x11]
      %v2774 = vld [vmem:[%s2724 + $0x17c] sm:$0x11]
      %v2775 = vld [vmem:[%s2724 + $0x184] sm:$0x11]
      %v2776 = vld [vmem:[%s2724 + $0x18c] sm:$0x1]
      %v2829 = vunpack.c.l.b16 %v2725
      %v2830 = vunpack.c.h.b16 %v2725
      %v2831 = vunpack.c.l.b16 %v2726
      %v2832 = vunpack.c.h.b16 %v2726
      %v2833 = vunpack.c.l.b16 %v2727
      %v2834 = vunpack.c.h.b16 %v2727
      %v2835 = vunpack.c.l.b16 %v2728
      %v2836 = vunpack.c.h.b16 %v2728
      %v2837 = vunpack.c.l.b16 %v2729
      %v2838 = vunpack.c.h.b16 %v2729
      %v2839 = vunpack.c.l.b16 %v2730
      %v2840 = vunpack.c.h.b16 %v2730
      %v2841 = vunpack.c.l.b16 %v2731
      %v2842 = vunpack.c.h.b16 %v2731
      %v2843 = vunpack.c.l.b16 %v2732
      %v2844 = vunpack.c.h.b16 %v2732
      %v2845 = vunpack.c.l.b16 %v2733
      %v2846 = vunpack.c.h.b16 %v2733
      %v2847 = vunpack.c.l.b16 %v2734
      %v2848 = vunpack.c.h.b16 %v2734
      %v2849 = vunpack.c.l.b16 %v2735
      %v2850 = vunpack.c.h.b16 %v2735
      %v2851 = vunpack.c.l.b16 %v2736
      %v2852 = vunpack.c.h.b16 %v2736
      %v2853 = vunpack.c.l.b16 %v2737
      %v2854 = vunpack.c.l.b16 %v2738
      %v2855 = vunpack.c.h.b16 %v2738
      %v2856 = vunpack.c.l.b16 %v2739
      %v2857 = vunpack.c.h.b16 %v2739
      %v2858 = vunpack.c.l.b16 %v2740
      %v2859 = vunpack.c.h.b16 %v2740
      %v2860 = vunpack.c.l.b16 %v2741
      %v2861 = vunpack.c.h.b16 %v2741
      %v2862 = vunpack.c.l.b16 %v2742
      %v2863 = vunpack.c.h.b16 %v2742
      %v2864 = vunpack.c.l.b16 %v2743
      %v2865 = vunpack.c.h.b16 %v2743
      %v2866 = vunpack.c.l.b16 %v2744
      %v2867 = vunpack.c.h.b16 %v2744
      %v2868 = vunpack.c.l.b16 %v2745
      %v2869 = vunpack.c.h.b16 %v2745
      %v2870 = vunpack.c.l.b16 %v2746
      %v2871 = vunpack.c.h.b16 %v2746
      %v2872 = vunpack.c.l.b16 %v2747
      %v2873 = vunpack.c.h.b16 %v2747
      %v2874 = vunpack.c.l.b16 %v2748
      %v2875 = vunpack.c.h.b16 %v2748
      %v2876 = vunpack.c.l.b16 %v2749
      %v2877 = vunpack.c.h.b16 %v2749
      %v2878 = vunpack.c.l.b16 %v2750
      %v2879 = vunpack.c.l.b16 %v2751
      %v2880 = vunpack.c.h.b16 %v2751
      %v2881 = vunpack.c.l.b16 %v2752
      %v2882 = vunpack.c.h.b16 %v2752
      %v2883 = vunpack.c.l.b16 %v2753
      %v2884 = vunpack.c.h.b16 %v2753
      %v2885 = vunpack.c.l.b16 %v2754
      %v2886 = vunpack.c.h.b16 %v2754
      %v2887 = vunpack.c.l.b16 %v2755
      %v2888 = vunpack.c.h.b16 %v2755
      %v2889 = vunpack.c.l.b16 %v2756
      %v2890 = vunpack.c.h.b16 %v2756
      %v2891 = vunpack.c.l.b16 %v2757
      %v2892 = vunpack.c.h.b16 %v2757
      %v2893 = vunpack.c.l.b16 %v2758
      %v2894 = vunpack.c.h.b16 %v2758
      %v2895 = vunpack.c.l.b16 %v2759
      %v2896 = vunpack.c.h.b16 %v2759
      %v2897 = vunpack.c.l.b16 %v2760
      %v2898 = vunpack.c.h.b16 %v2760
      %v2899 = vunpack.c.l.b16 %v2761
      %v2900 = vunpack.c.h.b16 %v2761
      %v2901 = vunpack.c.l.b16 %v2762
      %v2902 = vunpack.c.h.b16 %v2762
      %v2903 = vunpack.c.l.b16 %v2763
      %v2904 = vunpack.c.l.b16 %v2764
      %v2905 = vunpack.c.h.b16 %v2764
      %v2906 = vunpack.c.l.b16 %v2765
      %v2907 = vunpack.c.h.b16 %v2765
      %v2908 = vunpack.c.l.b16 %v2766
      %v2909 = vunpack.c.h.b16 %v2766
      %v2910 = vunpack.c.l.b16 %v2767
      %v2911 = vunpack.c.h.b16 %v2767
      %v2912 = vunpack.c.l.b16 %v2768
      %v2913 = vunpack.c.h.b16 %v2768
      %v2914 = vunpack.c.l.b16 %v2769
      %v2915 = vunpack.c.h.b16 %v2769
      %v2916 = vunpack.c.l.b16 %v2770
      %v2917 = vunpack.c.h.b16 %v2770
      %v2918 = vunpack.c.l.b16 %v2771
      %v2919 = vunpack.c.h.b16 %v2771
      %v2920 = vunpack.c.l.b16 %v2772
      %v2921 = vunpack.c.h.b16 %v2772
      %v2922 = vunpack.c.l.b16 %v2773
      %v2923 = vunpack.c.h.b16 %v2773
      %v2924 = vunpack.c.l.b16 %v2774
      %v2925 = vunpack.c.h.b16 %v2774
      %v2926 = vunpack.c.l.b16 %v2775
      %v2927 = vunpack.c.h.b16 %v2775
      %v2928 = vunpack.c.l.b16 %v2776
      %v2929 = vpack.c.b16 %v2854, %v2829
      %v2930 = vpack.c.b16 %v2855, %v2830
      %v2931 = vpack.c.b16 %v2856, %v2831
      %v2932 = vpack.c.b16 %v2857, %v2832
      %v2933 = vpack.c.b16 %v2858, %v2833
      %v2934 = vpack.c.b16 %v2859, %v2834
      %v2935 = vpack.c.b16 %v2860, %v2835
      %v2936 = vpack.c.b16 %v2861, %v2836
      %v2937 = vpack.c.b16 %v2862, %v2837
      %v2938 = vpack.c.b16 %v2863, %v2838
      %v2939 = vpack.c.b16 %v2864, %v2839
      %v2940 = vpack.c.b16 %v2865, %v2840
      %v2941 = vpack.c.b16 %v2866, %v2841
      %v2942 = vpack.c.b16 %v2867, %v2842
      %v2943 = vpack.c.b16 %v2868, %v2843
      %v2944 = vpack.c.b16 %v2869, %v2844
      %v2945 = vpack.c.b16 %v2870, %v2845
      %v2946 = vpack.c.b16 %v2871, %v2846
      %v2947 = vpack.c.b16 %v2872, %v2847
      %v2948 = vpack.c.b16 %v2873, %v2848
      %v2949 = vpack.c.b16 %v2874, %v2849
      %v2950 = vpack.c.b16 %v2875, %v2850
      %v2951 = vpack.c.b16 %v2876, %v2851
      %v2952 = vpack.c.b16 %v2877, %v2852
      %v2953 = vpack.c.b16 %v2878, %v2853
      %v2954 = vpack.c.b16 %v2904, %v2879
      %v2955 = vpack.c.b16 %v2905, %v2880
      %v2956 = vpack.c.b16 %v2906, %v2881
      %v2957 = vpack.c.b16 %v2907, %v2882
      %v2958 = vpack.c.b16 %v2908, %v2883
      %v2959 = vpack.c.b16 %v2909, %v2884
      %v2960 = vpack.c.b16 %v2910, %v2885
      %v2961 = vpack.c.b16 %v2911, %v2886
      %v2962 = vpack.c.b16 %v2912, %v2887
      %v2963 = vpack.c.b16 %v2913, %v2888
      %v2964 = vpack.c.b16 %v2914, %v2889
      %v2965 = vpack.c.b16 %v2915, %v2890
      %v2966 = vpack.c.b16 %v2916, %v2891
      %v2967 = vpack.c.b16 %v2917, %v2892
      %v2968 = vpack.c.b16 %v2918, %v2893
      %v2969 = vpack.c.b16 %v2919, %v2894
      %v2970 = vpack.c.b16 %v2920, %v2895
      %v2971 = vpack.c.b16 %v2921, %v2896
      %v2972 = vpack.c.b16 %v2922, %v2897
      %v2973 = vpack.c.b16 %v2923, %v2898
      %v2974 = vpack.c.b16 %v2924, %v2899
      %v2975 = vpack.c.b16 %v2925, %v2900
      %v2976 = vpack.c.b16 %v2926, %v2901
      %v2977 = vpack.c.b16 %v2927, %v2902
      %v2978 = vpack.c.b16 %v2928, %v2903
      %3029 = vmatprep.subr.bf16.mxu0 0
      %3030 = vmatpush1.bf16.msra.mxu0 %v1683
      %3031 = vmatprep.subr.bf16.mxu0 0
      %3032 = vmatpush1.bf16.msra.mxu0 %v1684
      %3033 = vmatprep.subr.bf16.mxu0 0
      %3034 = vmatpush1.bf16.msra.mxu0 %v1685
      %3035 = vmatprep.subr.bf16.mxu0 0
      %3036 = vmatpush1.bf16.msra.mxu0 %v1686
      %3037 = vmatprep.subr.bf16.mxu0 0
      %3038 = vmatpush1.bf16.msra.mxu0 %v1687
      %3039 = vmatprep.subr.bf16.mxu0 0
      %3040 = vmatpush1.bf16.msra.mxu0 %v1688
      %3041 = vmatprep.subr.bf16.mxu0 0
      %3042 = vmatpush1.bf16.msra.mxu0 %v1689
      %3043 = vmatprep.subr.bf16.mxu0 0
      %3044 = vmatpush1.bf16.msra.mxu0 %v1690
      %3045 = vmatprep.subr.bf16.mxu0 0
      %3046 = vmatpush1.bf16.msra.mxu0 %v1691
      %3047 = vmatprep.subr.bf16.mxu0 0
      %3048 = vmatpush1.bf16.msra.mxu0 %v1692
      %3049 = vmatprep.subr.bf16.mxu0 0
      %3050 = vmatpush1.bf16.msra.mxu0 %v1693
      %3051 = vmatprep.subr.bf16.mxu0 0
      %3052 = vmatpush1.bf16.msra.mxu0 %v1694
      %3053 = vmatprep.subr.bf16.mxu0 0
      %3054 = vmatpush1.bf16.msra.mxu0 %v1695
      %3055 = vmatprep.subr.bf16.mxu0 0
      %3056 = vmatpush1.bf16.msra.mxu0 %v1696
      %3057 = vmatprep.subr.bf16.mxu0 0
      %3058 = vmatpush1.bf16.msra.mxu0 %v1697
      %3059 = vmatprep.subr.bf16.mxu0 0
      %3060 = vmatpush1.bf16.msra.mxu0 %v1698
      %3061 = vmatprep.mubr.bf16.mxu0 %v2930
      %3062 = vmatmul.mubr.bf16.gmra.mrb[0].mxu0 %v2929
      %v3063 = vpop.f32.mrb[0].mxu0
      %v3064 = vadd.f32 %v629, %v3063
      %v3065 = vpop.f32.mrb[0].mxu0
      %v3066 = vpop.f32.mrb[0].mxu0
      %v3067 = vadd.f32 %v629, %v3066
      %v3068 = vpop.f32.mrb[0].mxu0
      %3069 = vmatprep.mubr.bf16.mxu0 %v2955
      %3070 = vmatmul.mubr.bf16.gmra.mrb[0].mxu0 %v2954
      %v3071 = vpop.f32.mrb[0].mxu0
      %v3072 = vadd.f32 %v629, %v3071
      %v3073 = vpop.f32.mrb[0].mxu0
      %v3074 = vpop.f32.mrb[0].mxu0
      %v3075 = vadd.f32 %v629, %v3074
      %v3076 = vpop.f32.mrb[0].mxu0
      %3077 = vdwg.mxu0
      %3078 = vmatprep.subr.bf16.mxu0 0
      %3079 = vmatpush1.bf16.msra.mxu0 %v1699
      %3080 = vmatprep.subr.bf16.mxu0 0
      %3081 = vmatpush1.bf16.msra.mxu0 %v1700
      %3082 = vmatprep.subr.bf16.mxu0 0
      %3083 = vmatpush1.bf16.msra.mxu0 %v1701
      %3084 = vmatprep.subr.bf16.mxu0 0
      %3085 = vmatpush1.bf16.msra.mxu0 %v1702
      %3086 = vmatprep.subr.bf16.mxu0 0
      %3087 = vmatpush1.bf16.msra.mxu0 %v1703
      %3088 = vmatprep.subr.bf16.mxu0 0
      %3089 = vmatpush1.bf16.msra.mxu0 %v1704
      %3090 = vmatprep.subr.bf16.mxu0 0
      %3091 = vmatpush1.bf16.msra.mxu0 %v1705
      %3092 = vmatprep.subr.bf16.mxu0 0
      %3093 = vmatpush1.bf16.msra.mxu0 %v1706
      %3094 = vmatprep.subr.bf16.mxu0 0
      %3095 = vmatpush1.bf16.msra.mxu0 %v1707
      %3096 = vmatprep.subr.bf16.mxu0 0
      %3097 = vmatpush1.bf16.msra.mxu0 %v1708
      %3098 = vmatprep.subr.bf16.mxu0 0
      %3099 = vmatpush1.bf16.msra.mxu0 %v1709
      %3100 = vmatprep.subr.bf16.mxu0 0
      %3101 = vmatpush1.bf16.msra.mxu0 %v1710
      %3102 = vmatprep.subr.bf16.mxu0 0
      %3103 = vmatpush1.bf16.msra.mxu0 %v1711
      %3104 = vmatprep.subr.bf16.mxu0 0
      %3105 = vmatpush1.bf16.msra.mxu0 %v1712
      %3106 = vmatprep.subr.bf16.mxu0 0
      %3107 = vmatpush1.bf16.msra.mxu0 %v1713
      %3108 = vmatprep.subr.bf16.mxu0 0
      %3109 = vmatpush1.bf16.msra.mxu0 %v1714
      %3110 = vmatprep.mubr.bf16.mxu0 %v2932
      %3111 = vmatmul.mubr.bf16.gmra.mrb[0].mxu0 %v2931
      %v3112 = vpop.f32.mrb[0].mxu0
      %v3113 = vadd.f32 %v3064, %v3112
      %v3114 = vpop.f32.mrb[0].mxu0
      %v3115 = vpop.f32.mrb[0].mxu0
      %v3116 = vadd.f32 %v3067, %v3115
      %v3117 = vpop.f32.mrb[0].mxu0
      %3118 = vmatprep.mubr.bf16.mxu0 %v2957
      %3119 = vmatmul.mubr.bf16.gmra.mrb[0].mxu0 %v2956
      %v3120 = vpop.f32.mrb[0].mxu0
      %v3121 = vadd.f32 %v3072, %v3120
      %v3122 = vpop.f32.mrb[0].mxu0
      %v3123 = vpop.f32.mrb[0].mxu0
      %v3124 = vadd.f32 %v3075, %v3123
      %v3125 = vpop.f32.mrb[0].mxu0
      %3126 = vdwg.mxu0
      %3127 = vmatprep.subr.bf16.mxu0 0
      %3128 = vmatpush1.bf16.msra.mxu0 %v1715
      %3129 = vmatprep.subr.bf16.mxu0 0
      %3130 = vmatpush1.bf16.msra.mxu0 %v1716
      %3131 = vmatprep.subr.bf16.mxu0 0
      %3132 = vmatpush1.bf16.msra.mxu0 %v1717
      %3133 = vmatprep.subr.bf16.mxu0 0
      %3134 = vmatpush1.bf16.msra.mxu0 %v1718
      %3135 = vmatprep.subr.bf16.mxu0 0
      %3136 = vmatpush1.bf16.msra.mxu0 %v1719
      %3137 = vmatprep.subr.bf16.mxu0 0
      %3138 = vmatpush1.bf16.msra.mxu0 %v1720
      %3139 = vmatprep.subr.bf16.mxu0 0
      %3140 = vmatpush1.bf16.msra.mxu0 %v1721
      %3141 = vmatprep.subr.bf16.mxu0 0
      %3142 = vmatpush1.bf16.msra.mxu0 %v1722
      %3143 = vmatprep.subr.bf16.mxu0 0
      %3144 = vmatpush1.bf16.msra.mxu0 %v1723
      %3145 = vmatprep.subr.bf16.mxu0 0
      %3146 = vmatpush1.bf16.msra.mxu0 %v1724
      %3147 = vmatprep.subr.bf16.mxu0 0
      %3148 = vmatpush1.bf16.msra.mxu0 %v1725
      %3149 = vmatprep.subr.bf16.mxu0 0
      %3150 = vmatpush1.bf16.msra.mxu0 %v1726
      %3151 = vmatprep.subr.bf16.mxu0 0
      %3152 = vmatpush1.bf16.msra.mxu0 %v1727
      %3153 = vmatprep.subr.bf16.mxu0 0
      %3154 = vmatpush1.bf16.msra.mxu0 %v1728
      %3155 = vmatprep.subr.bf16.mxu0 0
      %3156 = vmatpush1.bf16.msra.mxu0 %v1729
      %3157 = vmatprep.subr.bf16.mxu0 0
      %3158 = vmatpush1.bf16.msra.mxu0 %v1730
      %3159 = vmatprep.mubr.bf16.mxu0 %v2934
      %3160 = vmatmul.mubr.bf16.gmra.mrb[0].mxu0 %v2933
      %v3161 = vpop.f32.mrb[0].mxu0
      %v3162 = vadd.f32 %v3113, %v3161
      %v3163 = vpop.f32.mrb[0].mxu0
      %v3164 = vpop.f32.mrb[0].mxu0
      %v3165 = vadd.f32 %v3116, %v3164
      %v3166 = vpop.f32.mrb[0].mxu0
      %3167 = vmatprep.mubr.bf16.mxu0 %v2959
      %3168 = vmatmul.mubr.bf16.gmra.mrb[0].mxu0 %v2958
      %v3169 = vpop.f32.mrb[0].mxu0
      %v3170 = vadd.f32 %v3121, %v3169
      %v3171 = vpop.f32.mrb[0].mxu0
      %v3172 = vpop.f32.mrb[0].mxu0
      %v3173 = vadd.f32 %v3124, %v3172
      %v3174 = vpop.f32.mrb[0].mxu0
      %3175 = vdwg.mxu0
      %3176 = vmatprep.subr.bf16.mxu0 0
      %3177 = vmatpush1.bf16.msra.mxu0 %v1731
      %3178 = vmatprep.subr.bf16.mxu0 0
      %3179 = vmatpush1.bf16.msra.mxu0 %v1732
      %3180 = vmatprep.subr.bf16.mxu0 0
      %3181 = vmatpush1.bf16.msra.mxu0 %v1733
      %3182 = vmatprep.subr.bf16.mxu0 0
      %3183 = vmatpush1.bf16.msra.mxu0 %v1734
      %3184 = vmatprep.subr.bf16.mxu0 0
      %3185 = vmatpush1.bf16.msra.mxu0 %v1735
      %3186 = vmatprep.subr.bf16.mxu0 0
      %3187 = vmatpush1.bf16.msra.mxu0 %v1736
      %3188 = vmatprep.subr.bf16.mxu0 0
      %3189 = vmatpush1.bf16.msra.mxu0 %v1737
      %3190 = vmatprep.subr.bf16.mxu0 0
      %3191 = vmatpush1.bf16.msra.mxu0 %v1738
      %3192 = vmatprep.subr.bf16.mxu0 0
      %3193 = vmatpush1.bf16.msra.mxu0 %v1739
      %3194 = vmatprep.subr.bf16.mxu0 0
      %3195 = vmatpush1.bf16.msra.mxu0 %v1740
      %3196 = vmatprep.subr.bf16.mxu0 0
      %3197 = vmatpush1.bf16.msra.mxu0 %v1741
      %3198 = vmatprep.subr.bf16.mxu0 0
      %3199 = vmatpush1.bf16.msra.mxu0 %v1742
      %3200 = vmatprep.subr.bf16.mxu0 0
      %3201 = vmatpush1.bf16.msra.mxu0 %v1743
      %3202 = vmatprep.subr.bf16.mxu0 0
      %3203 = vmatpush1.bf16.msra.mxu0 %v1744
      %3204 = vmatprep.subr.bf16.mxu0 0
      %3205 = vmatpush1.bf16.msra.mxu0 %v1745
      %3206 = vmatprep.subr.bf16.mxu0 0
      %3207 = vmatpush1.bf16.msra.mxu0 %v1746
      %3208 = vmatprep.mubr.bf16.mxu0 %v2936
      %3209 = vmatmul.mubr.bf16.gmra.mrb[0].mxu0 %v2935
      %v3210 = vpop.f32.mrb[0].mxu0
      %v3211 = vadd.f32 %v3162, %v3210
      %v3212 = vpop.f32.mrb[0].mxu0
      %v3213 = vpop.f32.mrb[0].mxu0
      %v3214 = vadd.f32 %v3165, %v3213
      %v3215 = vpop.f32.mrb[0].mxu0
      %3216 = vmatprep.mubr.bf16.mxu0 %v2961
      %3217 = vmatmul.mubr.bf16.gmra.mrb[0].mxu0 %v2960
      %v3218 = vpop.f32.mrb[0].mxu0
      %v3219 = vadd.f32 %v3170, %v3218
      %v3220 = vpop.f32.mrb[0].mxu0
      %v3221 = vpop.f32.mrb[0].mxu0
      %v3222 = vadd.f32 %v3173, %v3221
      %v3223 = vpop.f32.mrb[0].mxu0
      %3224 = vdwg.mxu0
      %3225 = vmatprep.subr.bf16.mxu0 0
      %3226 = vmatpush1.bf16.msra.mxu0 %v1747
      %3227 = vmatprep.subr.bf16.mxu0 0
      %3228 = vmatpush1.bf16.msra.mxu0 %v1748
      %3229 = vmatprep.subr.bf16.mxu0 0
      %3230 = vmatpush1.bf16.msra.mxu0 %v1749
      %3231 = vmatprep.subr.bf16.mxu0 0
      %3232 = vmatpush1.bf16.msra.mxu0 %v1750
      %3233 = vmatprep.subr.bf16.mxu0 0
      %3234 = vmatpush1.bf16.msra.mxu0 %v1751
      %3235 = vmatprep.subr.bf16.mxu0 0
      %3236 = vmatpush1.bf16.msra.mxu0 %v1752
      %3237 = vmatprep.subr.bf16.mxu0 0
      %3238 = vmatpush1.bf16.msra.mxu0 %v1753
      %3239 = vmatprep.subr.bf16.mxu0 0
      %3240 = vmatpush1.bf16.msra.mxu0 %v1754
      %3241 = vmatprep.subr.bf16.mxu0 0
      %3242 = vmatpush1.bf16.msra.mxu0 %v1755
      %3243 = vmatprep.subr.bf16.mxu0 0
      %3244 = vmatpush1.bf16.msra.mxu0 %v1756
      %3245 = vmatprep.subr.bf16.mxu0 0
      %3246 = vmatpush1.bf16.msra.mxu0 %v1757
      %3247 = vmatprep.subr.bf16.mxu0 0
      %3248 = vmatpush1.bf16.msra.mxu0 %v1758
      %3249 = vmatprep.subr.bf16.mxu0 0
      %3250 = vmatpush1.bf16.msra.mxu0 %v1759
      %3251 = vmatprep.subr.bf16.mxu0 0
      %3252 = vmatpush1.bf16.msra.mxu0 %v1760
      %3253 = vmatprep.subr.bf16.mxu0 0
      %3254 = vmatpush1.bf16.msra.mxu0 %v1761
      %3255 = vmatprep.subr.bf16.mxu0 0
      %3256 = vmatpush1.bf16.msra.mxu0 %v1762
      %3257 = vmatprep.mubr.bf16.mxu0 %v2938
      %3258 = vmatmul.mubr.bf16.gmra.mrb[0].mxu0 %v2937
      %v3259 = vpop.f32.mrb[0].mxu0
      %v3260 = vadd.f32 %v3211, %v3259
      %v3261 = vpop.f32.mrb[0].mxu0
      %v3262 = vpop.f32.mrb[0].mxu0
      %v3263 = vadd.f32 %v3214, %v3262
      %v3264 = vpop.f32.mrb[0].mxu0
      %3265 = vmatprep.mubr.bf16.mxu0 %v2963
      %3266 = vmatmul.mubr.bf16.gmra.mrb[0].mxu0 %v2962
      %v3267 = vpop.f32.mrb[0].mxu0
      %v3268 = vadd.f32 %v3219, %v3267
      %v3269 = vpop.f32.mrb[0].mxu0
      %v3270 = vpop.f32.mrb[0].mxu0
      %v3271 = vadd.f32 %v3222, %v3270
      %v3272 = vpop.f32.mrb[0].mxu0
      %3273 = vdwg.mxu0
      %3274 = vmatprep.subr.bf16.mxu0 0
      %3275 = vmatpush1.bf16.msra.mxu0 %v1763
      %3276 = vmatprep.subr.bf16.mxu0 0
      %3277 = vmatpush1.bf16.msra.mxu0 %v1764
      %3278 = vmatprep.subr.bf16.mxu0 0
      %3279 = vmatpush1.bf16.msra.mxu0 %v1765
      %3280 = vmatprep.subr.bf16.mxu0 0
      %3281 = vmatpush1.bf16.msra.mxu0 %v1766
      %3282 = vmatprep.subr.bf16.mxu0 0
      %3283 = vmatpush1.bf16.msra.mxu0 %v1767
      %3284 = vmatprep.subr.bf16.mxu0 0
      %3285 = vmatpush1.bf16.msra.mxu0 %v1768
      %3286 = vmatprep.subr.bf16.mxu0 0
      %3287 = vmatpush1.bf16.msra.mxu0 %v1769
      %3288 = vmatprep.subr.bf16.mxu0 0
      %3289 = vmatpush1.bf16.msra.mxu0 %v1770
      %3290 = vmatprep.subr.bf16.mxu0 0
      %3291 = vmatpush1.bf16.msra.mxu0 %v1771
      %3292 = vmatprep.subr.bf16.mxu0 0
      %3293 = vmatpush1.bf16.msra.mxu0 %v1772
      %3294 = vmatprep.subr.bf16.mxu0 0
      %3295 = vmatpush1.bf16.msra.mxu0 %v1773
      %3296 = vmatprep.subr.bf16.mxu0 0
      %3297 = vmatpush1.bf16.msra.mxu0 %v1774
      %3298 = vmatprep.subr.bf16.mxu0 0
      %3299 = vmatpush1.bf16.msra.mxu0 %v1775
      %3300 = vmatprep.subr.bf16.mxu0 0
      %3301 = vmatpush1.bf16.msra.mxu0 %v1776
      %3302 = vmatprep.subr.bf16.mxu0 0
      %3303 = vmatpush1.bf16.msra.mxu0 %v1777
      %3304 = vmatprep.subr.bf16.mxu0 0
      %3305 = vmatpush1.bf16.msra.mxu0 %v1778
      %3306 = vmatprep.mubr.bf16.mxu0 %v2940
      %3307 = vmatmul.mubr.bf16.gmra.mrb[0].mxu0 %v2939
      %v3308 = vpop.f32.mrb[0].mxu0
      %v3309 = vadd.f32 %v3260, %v3308
      %v3310 = vpop.f32.mrb[0].mxu0
      %v3311 = vpop.f32.mrb[0].mxu0
      %v3312 = vadd.f32 %v3263, %v3311
      %v3313 = vpop.f32.mrb[0].mxu0
      %3314 = vmatprep.mubr.bf16.mxu0 %v2965
      %3315 = vmatmul.mubr.bf16.gmra.mrb[0].mxu0 %v2964
      %v3316 = vpop.f32.mrb[0].mxu0
      %v3317 = vadd.f32 %v3268, %v3316
      %v3318 = vpop.f32.mrb[0].mxu0
      %v3319 = vpop.f32.mrb[0].mxu0
      %v3320 = vadd.f32 %v3271, %v3319
      %v3321 = vpop.f32.mrb[0].mxu0
      %3322 = vdwg.mxu0
      %3323 = vmatprep.subr.bf16.mxu0 0
      %3324 = vmatpush1.bf16.msra.mxu0 %v1779
      %3325 = vmatprep.subr.bf16.mxu0 0
      %3326 = vmatpush1.bf16.msra.mxu0 %v1780
      %3327 = vmatprep.subr.bf16.mxu0 0
      %3328 = vmatpush1.bf16.msra.mxu0 %v1781
      %3329 = vmatprep.subr.bf16.mxu0 0
      %3330 = vmatpush1.bf16.msra.mxu0 %v1782
      %3331 = vmatprep.subr.bf16.mxu0 0
      %3332 = vmatpush1.bf16.msra.mxu0 %v1783
      %3333 = vmatprep.subr.bf16.mxu0 0
      %3334 = vmatpush1.bf16.msra.mxu0 %v1784
      %3335 = vmatprep.subr.bf16.mxu0 0
      %3336 = vmatpush1.bf16.msra.mxu0 %v1785
      %3337 = vmatprep.subr.bf16.mxu0 0
      %3338 = vmatpush1.bf16.msra.mxu0 %v1786
      %3339 = vmatprep.subr.bf16.mxu0 0
      %3340 = vmatpush1.bf16.msra.mxu0 %v1787
      %3341 = vmatprep.subr.bf16.mxu0 0
      %3342 = vmatpush1.bf16.msra.mxu0 %v1788
      %3343 = vmatprep.subr.bf16.mxu0 0
      %3344 = vmatpush1.bf16.msra.mxu0 %v1789
      %3345 = vmatprep.subr.bf16.mxu0 0
      %3346 = vmatpush1.bf16.msra.mxu0 %v1790
      %3347 = vmatprep.subr.bf16.mxu0 0
      %3348 = vmatpush1.bf16.msra.mxu0 %v1791
      %3349 = vmatprep.subr.bf16.mxu0 0
      %3350 = vmatpush1.bf16.msra.mxu0 %v1792
      %3351 = vmatprep.subr.bf16.mxu0 0
      %3352 = vmatpush1.bf16.msra.mxu0 %v1793
      %3353 = vmatprep.subr.bf16.mxu0 0
      %3354 = vmatpush1.bf16.msra.mxu0 %v1794
      %3355 = vmatprep.mubr.bf16.mxu0 %v2942
      %3356 = vmatmul.mubr.bf16.gmra.mrb[0].mxu0 %v2941
      %v3357 = vpop.f32.mrb[0].mxu0
      %v3358 = vadd.f32 %v3309, %v3357
      %v3359 = vpop.f32.mrb[0].mxu0
      %v3360 = vpop.f32.mrb[0].mxu0
      %v3361 = vadd.f32 %v3312, %v3360
      %v3362 = vpop.f32.mrb[0].mxu0
      %3363 = vmatprep.mubr.bf16.mxu0 %v2967
      %3364 = vmatmul.mubr.bf16.gmra.mrb[0].mxu0 %v2966
      %v3365 = vpop.f32.mrb[0].mxu0
      %v3366 = vadd.f32 %v3317, %v3365
      %v3367 = vpop.f32.mrb[0].mxu0
      %v3368 = vpop.f32.mrb[0].mxu0
      %v3369 = vadd.f32 %v3320, %v3368
      %v3370 = vpop.f32.mrb[0].mxu0
      %3371 = vdwg.mxu0
      %3372 = vmatprep.subr.bf16.mxu0 0
      %3373 = vmatpush1.bf16.msra.mxu0 %v1795
      %3374 = vmatprep.subr.bf16.mxu0 0
      %3375 = vmatpush1.bf16.msra.mxu0 %v1796
      %3376 = vmatprep.subr.bf16.mxu0 0
      %3377 = vmatpush1.bf16.msra.mxu0 %v1797
      %3378 = vmatprep.subr.bf16.mxu0 0
      %3379 = vmatpush1.bf16.msra.mxu0 %v1798
      %3380 = vmatprep.subr.bf16.mxu0 0
      %3381 = vmatpush1.bf16.msra.mxu0 %v1799
      %3382 = vmatprep.subr.bf16.mxu0 0
      %3383 = vmatpush1.bf16.msra.mxu0 %v1800
      %3384 = vmatprep.subr.bf16.mxu0 0
      %3385 = vmatpush1.bf16.msra.mxu0 %v1801
      %3386 = vmatprep.subr.bf16.mxu0 0
      %3387 = vmatpush1.bf16.msra.mxu0 %v1802
      %3388 = vmatprep.subr.bf16.mxu0 0
      %3389 = vmatpush1.bf16.msra.mxu0 %v1803
      %3390 = vmatprep.subr.bf16.mxu0 0
      %3391 = vmatpush1.bf16.msra.mxu0 %v1804
      %3392 = vmatprep.subr.bf16.mxu0 0
      %3393 = vmatpush1.bf16.msra.mxu0 %v1805
      %3394 = vmatprep.subr.bf16.mxu0 0
      %3395 = vmatpush1.bf16.msra.mxu0 %v1806
      %3396 = vmatprep.subr.bf16.mxu0 0
      %3397 = vmatpush1.bf16.msra.mxu0 %v1807
      %3398 = vmatprep.subr.bf16.mxu0 0
      %3399 = vmatpush1.bf16.msra.mxu0 %v1808
      %3400 = vmatprep.subr.bf16.mxu0 0
      %3401 = vmatpush1.bf16.msra.mxu0 %v1809
      %3402 = vmatprep.subr.bf16.mxu0 0
      %3403 = vmatpush1.bf16.msra.mxu0 %v1810
      %3404 = vmatprep.mubr.bf16.mxu0 %v2944
      %3405 = vmatmul.mubr.bf16.gmra.mrb[0].mxu0 %v2943
      %v3406 = vpop.f32.mrb[0].mxu0
      %v3407 = vadd.f32 %v3358, %v3406
      %v3408 = vpop.f32.mrb[0].mxu0
      %v3409 = vpop.f32.mrb[0].mxu0
      %v3410 = vadd.f32 %v3361, %v3409
      %v3411 = vpop.f32.mrb[0].mxu0
      %3412 = vmatprep.mubr.bf16.mxu0 %v2969
      %3413 = vmatmul.mubr.bf16.gmra.mrb[0].mxu0 %v2968
      %v3414 = vpop.f32.mrb[0].mxu0
      %v3415 = vadd.f32 %v3366, %v3414
      %v3416 = vpop.f32.mrb[0].mxu0
      %v3417 = vpop.f32.mrb[0].mxu0
      %v3418 = vadd.f32 %v3369, %v3417
      %v3419 = vpop.f32.mrb[0].mxu0
      %3420 = vdwg.mxu0
      %3421 = vmatprep.subr.bf16.mxu0 0
      %3422 = vmatpush1.bf16.msra.mxu0 %v1811
      %3423 = vmatprep.subr.bf16.mxu0 0
      %3424 = vmatpush1.bf16.msra.mxu0 %v1812
      %3425 = vmatprep.subr.bf16.mxu0 0
      %3426 = vmatpush1.bf16.msra.mxu0 %v1813
      %3427 = vmatprep.subr.bf16.mxu0 0
      %3428 = vmatpush1.bf16.msra.mxu0 %v1814
      %3429 = vmatprep.subr.bf16.mxu0 0
      %3430 = vmatpush1.bf16.msra.mxu0 %v1815
      %3431 = vmatprep.subr.bf16.mxu0 0
      %3432 = vmatpush1.bf16.msra.mxu0 %v1816
      %3433 = vmatprep.subr.bf16.mxu0 0
      %3434 = vmatpush1.bf16.msra.mxu0 %v1817
      %3435 = vmatprep.subr.bf16.mxu0 0
      %3436 = vmatpush1.bf16.msra.mxu0 %v1818
      %3437 = vmatprep.subr.bf16.mxu0 0
      %3438 = vmatpush1.bf16.msra.mxu0 %v1819
      %3439 = vmatprep.subr.bf16.mxu0 0
      %3440 = vmatpush1.bf16.msra.mxu0 %v1820
      %3441 = vmatprep.subr.bf16.mxu0 0
      %3442 = vmatpush1.bf16.msra.mxu0 %v1821
      %3443 = vmatprep.subr.bf16.mxu0 0
      %3444 = vmatpush1.bf16.msra.mxu0 %v1822
      %3445 = vmatprep.subr.bf16.mxu0 0
      %3446 = vmatpush1.bf16.msra.mxu0 %v1823
      %3447 = vmatprep.subr.bf16.mxu0 0
      %3448 = vmatpush1.bf16.msra.mxu0 %v1824
      %3449 = vmatprep.subr.bf16.mxu0 0
      %3450 = vmatpush1.bf16.msra.mxu0 %v1825
      %3451 = vmatprep.subr.bf16.mxu0 0
      %3452 = vmatpush1.bf16.msra.mxu0 %v1826
      %3453 = vmatprep.mubr.bf16.mxu0 %v2946
      %3454 = vmatmul.mubr.bf16.gmra.mrb[0].mxu0 %v2945
      %v3455 = vpop.f32.mrb[0].mxu0
      %v3456 = vadd.f32 %v3407, %v3455
      %v3457 = vpop.f32.mrb[0].mxu0
      %v3458 = vpop.f32.mrb[0].mxu0
      %v3459 = vadd.f32 %v3410, %v3458
      %v3460 = vpop.f32.mrb[0].mxu0
      %3461 = vmatprep.mubr.bf16.mxu0 %v2971
      %3462 = vmatmul.mubr.bf16.gmra.mrb[0].mxu0 %v2970
      %v3463 = vpop.f32.mrb[0].mxu0
      %v3464 = vadd.f32 %v3415, %v3463
      %v3465 = vpop.f32.mrb[0].mxu0
      %v3466 = vpop.f32.mrb[0].mxu0
      %v3467 = vadd.f32 %v3418, %v3466
      %v3468 = vpop.f32.mrb[0].mxu0
      %3469 = vdwg.mxu0
      %3470 = vmatprep.subr.bf16.mxu0 0
      %3471 = vmatpush1.bf16.msra.mxu0 %v1827
      %3472 = vmatprep.subr.bf16.mxu0 0
      %3473 = vmatpush1.bf16.msra.mxu0 %v1828
      %3474 = vmatprep.subr.bf16.mxu0 0
      %3475 = vmatpush1.bf16.msra.mxu0 %v1829
      %3476 = vmatprep.subr.bf16.mxu0 0
      %3477 = vmatpush1.bf16.msra.mxu0 %v1830
      %3478 = vmatprep.subr.bf16.mxu0 0
      %3479 = vmatpush1.bf16.msra.mxu0 %v1831
      %3480 = vmatprep.subr.bf16.mxu0 0
      %3481 = vmatpush1.bf16.msra.mxu0 %v1832
      %3482 = vmatprep.subr.bf16.mxu0 0
      %3483 = vmatpush1.bf16.msra.mxu0 %v1833
      %3484 = vmatprep.subr.bf16.mxu0 0
      %3485 = vmatpush1.bf16.msra.mxu0 %v1834
      %3486 = vmatprep.subr.bf16.mxu0 0
      %3487 = vmatpush1.bf16.msra.mxu0 %v1835
      %3488 = vmatprep.subr.bf16.mxu0 0
      %3489 = vmatpush1.bf16.msra.mxu0 %v1836
      %3490 = vmatprep.subr.bf16.mxu0 0
      %3491 = vmatpush1.bf16.msra.mxu0 %v1837
      %3492 = vmatprep.subr.bf16.mxu0 0
      %3493 = vmatpush1.bf16.msra.mxu0 %v1838
      %3494 = vmatprep.subr.bf16.mxu0 0
      %3495 = vmatpush1.bf16.msra.mxu0 %v1839
      %3496 = vmatprep.subr.bf16.mxu0 0
      %3497 = vmatpush1.bf16.msra.mxu0 %v1840
      %3498 = vmatprep.subr.bf16.mxu0 0
      %3499 = vmatpush1.bf16.msra.mxu0 %v1841
      %3500 = vmatprep.subr.bf16.mxu0 0
      %3501 = vmatpush1.bf16.msra.mxu0 %v1842
      %3502 = vmatprep.mubr.bf16.mxu0 %v2948
      %3503 = vmatmul.mubr.bf16.gmra.mrb[0].mxu0 %v2947
      %v3504 = vpop.f32.mrb[0].mxu0
      %v3505 = vadd.f32 %v3456, %v3504
      %v3506 = vpop.f32.mrb[0].mxu0
      %v3507 = vpop.f32.mrb[0].mxu0
      %v3508 = vadd.f32 %v3459, %v3507
      %v3509 = vpop.f32.mrb[0].mxu0
      %3510 = vmatprep.mubr.bf16.mxu0 %v2973
      %3511 = vmatmul.mubr.bf16.gmra.mrb[0].mxu0 %v2972
      %v3512 = vpop.f32.mrb[0].mxu0
      %v3513 = vadd.f32 %v3464, %v3512
      %v3514 = vpop.f32.mrb[0].mxu0
      %v3515 = vpop.f32.mrb[0].mxu0
      %v3516 = vadd.f32 %v3467, %v3515
      %v3517 = vpop.f32.mrb[0].mxu0
      %3518 = vdwg.mxu0
      %3519 = vmatprep.subr.bf16.mxu0 0
      %3520 = vmatpush1.bf16.msra.mxu0 %v1843
      %3521 = vmatprep.subr.bf16.mxu0 0
      %3522 = vmatpush1.bf16.msra.mxu0 %v1844
      %3523 = vmatprep.subr.bf16.mxu0 0
      %3524 = vmatpush1.bf16.msra.mxu0 %v1845
      %3525 = vmatprep.subr.bf16.mxu0 0
      %3526 = vmatpush1.bf16.msra.mxu0 %v1846
      %3527 = vmatprep.subr.bf16.mxu0 0
      %3528 = vmatpush1.bf16.msra.mxu0 %v1847
      %3529 = vmatprep.subr.bf16.mxu0 0
      %3530 = vmatpush1.bf16.msra.mxu0 %v1848
      %3531 = vmatprep.subr.bf16.mxu0 0
      %3532 = vmatpush1.bf16.msra.mxu0 %v1849
      %3533 = vmatprep.subr.bf16.mxu0 0
      %3534 = vmatpush1.bf16.msra.mxu0 %v1850
      %3535 = vmatprep.subr.bf16.mxu0 0
      %3536 = vmatpush1.bf16.msra.mxu0 %v1851
      %3537 = vmatprep.subr.bf16.mxu0 0
      %3538 = vmatpush1.bf16.msra.mxu0 %v1852
      %3539 = vmatprep.subr.bf16.mxu0 0
      %3540 = vmatpush1.bf16.msra.mxu0 %v1853
      %3541 = vmatprep.subr.bf16.mxu0 0
      %3542 = vmatpush1.bf16.msra.mxu0 %v1854
      %3543 = vmatprep.subr.bf16.mxu0 0
      %3544 = vmatpush1.bf16.msra.mxu0 %v1855
      %3545 = vmatprep.subr.bf16.mxu0 0
      %3546 = vmatpush1.bf16.msra.mxu0 %v1856
      %3547 = vmatprep.subr.bf16.mxu0 0
      %3548 = vmatpush1.bf16.msra.mxu0 %v1857
      %3549 = vmatprep.subr.bf16.mxu0 0
      %3550 = vmatpush1.bf16.msra.mxu0 %v1858
      %3551 = vmatprep.mubr.bf16.mxu0 %v2950
      %3552 = vmatmul.mubr.bf16.gmra.mrb[0].mxu0 %v2949
      %v3553 = vpop.f32.mrb[0].mxu0
      %v3554 = vadd.f32 %v3505, %v3553
      %v3555 = vpop.f32.mrb[0].mxu0
      %v3556 = vpop.f32.mrb[0].mxu0
      %v3557 = vadd.f32 %v3508, %v3556
      %v3558 = vpop.f32.mrb[0].mxu0
      %3559 = vmatprep.mubr.bf16.mxu0 %v2975
      %3560 = vmatmul.mubr.bf16.gmra.mrb[0].mxu0 %v2974
      %v3561 = vpop.f32.mrb[0].mxu0
      %v3562 = vadd.f32 %v3513, %v3561
      %v3563 = vpop.f32.mrb[0].mxu0
      %v3564 = vpop.f32.mrb[0].mxu0
      %v3565 = vadd.f32 %v3516, %v3564
      %v3566 = vpop.f32.mrb[0].mxu0
      %3567 = vdwg.mxu0
      %3568 = vmatprep.subr.bf16.mxu0 0
      %3569 = vmatpush1.bf16.msra.mxu0 %v1859
      %3570 = vmatprep.subr.bf16.mxu0 0
      %3571 = vmatpush1.bf16.msra.mxu0 %v1860
      %3572 = vmatprep.subr.bf16.mxu0 0
      %3573 = vmatpush1.bf16.msra.mxu0 %v1861
      %3574 = vmatprep.subr.bf16.mxu0 0
      %3575 = vmatpush1.bf16.msra.mxu0 %v1862
      %3576 = vmatprep.subr.bf16.mxu0 0
      %3577 = vmatpush1.bf16.msra.mxu0 %v1863
      %3578 = vmatprep.subr.bf16.mxu0 0
      %3579 = vmatpush1.bf16.msra.mxu0 %v1864
      %3580 = vmatprep.subr.bf16.mxu0 0
      %3581 = vmatpush1.bf16.msra.mxu0 %v1865
      %3582 = vmatprep.subr.bf16.mxu0 0
      %3583 = vmatpush1.bf16.msra.mxu0 %v1866
      %3584 = vmatprep.subr.bf16.mxu0 0
      %3585 = vmatpush1.bf16.msra.mxu0 %v1867
      %3586 = vmatprep.subr.bf16.mxu0 0
      %3587 = vmatpush1.bf16.msra.mxu0 %v1868
      %3588 = vmatprep.subr.bf16.mxu0 0
      %3589 = vmatpush1.bf16.msra.mxu0 %v1869
      %3590 = vmatprep.subr.bf16.mxu0 0
      %3591 = vmatpush1.bf16.msra.mxu0 %v1870
      %3592 = vmatprep.subr.bf16.mxu0 0
      %3593 = vmatpush1.bf16.msra.mxu0 %v1871
      %3594 = vmatprep.subr.bf16.mxu0 0
      %3595 = vmatpush1.bf16.msra.mxu0 %v1872
      %3596 = vmatprep.subr.bf16.mxu0 0
      %3597 = vmatpush1.bf16.msra.mxu0 %v1873
      %3598 = vmatprep.subr.bf16.mxu0 0
      %3599 = vmatpush1.bf16.msra.mxu0 %v1874
      %3600 = vmatprep.mubr.bf16.mxu0 %v2952
      %3601 = vmatmul.mubr.bf16.gmra.mrb[0].mxu0 %v2951
      %v3602 = vpop.f32.mrb[0].mxu0
      %v3603 = vadd.f32 %v3554, %v3602
      %v3604 = vpop.f32.mrb[0].mxu0
      %v3605 = vpop.f32.mrb[0].mxu0
      %v3606 = vadd.f32 %v3557, %v3605
      %v3607 = vpop.f32.mrb[0].mxu0
      %3608 = vmatprep.mubr.bf16.mxu0 %v2977
      %3609 = vmatmul.mubr.bf16.gmra.mrb[0].mxu0 %v2976
      %v3610 = vpop.f32.mrb[0].mxu0
      %v3611 = vadd.f32 %v3562, %v3610
      %v3612 = vpop.f32.mrb[0].mxu0
      %v3613 = vpop.f32.mrb[0].mxu0
      %v3614 = vadd.f32 %v3565, %v3613
      %v3615 = vpop.f32.mrb[0].mxu0
      %3616 = vdwg.mxu0
      %3617 = vmatprep.subr.bf16.mxu0 0
      %3618 = vmatpush1.bf16.msra.mxu0 %v1875
      %3619 = vmatprep.subr.bf16.mxu0 0
      %3620 = vmatpush1.bf16.msra.mxu0 %v1876
      %3621 = vmatprep.subr.bf16.mxu0 0
      %3622 = vmatpush1.bf16.msra.mxu0 %v1877
      %3623 = vmatprep.subr.bf16.mxu0 0
      %3624 = vmatpush1.bf16.msra.mxu0 %v1878
      %3625 = vmatprep.subr.bf16.mxu0 0
      %3626 = vmatpush1.bf16.msra.mxu0 %v1879
      %3627 = vmatprep.subr.bf16.mxu0 0
      %3628 = vmatpush1.bf16.msra.mxu0 %v1880
      %3629 = vmatprep.subr.bf16.mxu0 0
      %3630 = vmatpush1.bf16.msra.mxu0 %v1881
      %3631 = vmatprep.subr.bf16.mxu0 0
      %3632 = vmatpush1.bf16.msra.mxu0 %v1882
      %3633 = vmatprep.subr.bf16.mxu0 0
      %3634 = vmatpush1.bf16.msra.mxu0 0
      %3635 = vmatprep.subr.bf16.mxu0 0
      %3636 = vmatpush1.bf16.msra.mxu0 0
      %3637 = vmatprep.subr.bf16.mxu0 0
      %3638 = vmatpush1.bf16.msra.mxu0 0
      %3639 = vmatprep.subr.bf16.mxu0 0
      %3640 = vmatpush1.bf16.msra.mxu0 0
      %3641 = vmatprep.subr.bf16.mxu0 0
      %3642 = vmatpush1.bf16.msra.mxu0 0
      %3643 = vmatprep.subr.bf16.mxu0 0
      %3644 = vmatpush1.bf16.msra.mxu0 0
      %3645 = vmatprep.subr.bf16.mxu0 0
      %3646 = vmatpush1.bf16.msra.mxu0 0
      %3647 = vmatprep.subr.bf16.mxu0 0
      %3648 = vmatpush1.bf16.msra.mxu0 0
      %3649 = vmatprep.mubr.bf16.mxu0 0
      %3650 = vmatmul.mubr.bf16.gmra.mrb[0].mxu0 %v2953
      %v3651 = vpop.f32.mrb[0].mxu0
      %v3652 = vadd.f32 %v3603, %v3651
      %v3653 = vpop.f32.mrb[0].mxu0
      %v3654 = vpop.f32.mrb[0].mxu0
      %v3655 = vadd.f32 %v3606, %v3654
      %v3656 = vpop.f32.mrb[0].mxu0
      %3657 = vmatprep.mubr.bf16.mxu0 0
      %3658 = vmatmul.mubr.bf16.gmra.mrb[0].mxu0 %v2978
      %v3659 = vpop.f32.mrb[0].mxu0
      %v3660 = vadd.f32 %v3611, %v3659
      %v3661 = vpop.f32.mrb[0].mxu0
      %v3662 = vpop.f32.mrb[0].mxu0
      %v3663 = vadd.f32 %v3614, %v3662
      %v3664 = vpop.f32.mrb[0].mxu0
      %3665 = vdwg.mxu0
      %v3666 = vmax.f32 %v3652, 0.0
      %v3667 = vmax.f32 %v3655, 0.0
      %v3668 = vmax.f32 %v3660, 0.0
      %v3669 = vmax.f32 %v3663, 0.0
      %v3670 = vmax.f32 %v2720, %v3666
      %v3671 = vmax.f32 %v2721, %v3667
      %v3672 = vmax.f32 %v2722, %v3668
      %v3673 = vmax.f32 %v2723, %v3669
      %s3674 = scalar_lea.vmem %s165, 800
      %v3675 = vld [vmem:[%s3674] sm:$0xff]
      %v3676 = vld [vmem:[%s3674 + $0x8] sm:$0xff]
      %v3677 = vld [vmem:[%s3674 + $0x10] sm:$0xff]
      %v3678 = vld [vmem:[%s3674 + $0x18] sm:$0xff]
      %v3679 = vld [vmem:[%s3674 + $0x20] sm:$0xff]
      %v3680 = vld [vmem:[%s3674 + $0x28] sm:$0xff]
      %v3681 = vld [vmem:[%s3674 + $0x30] sm:$0xff]
      %v3682 = vld [vmem:[%s3674 + $0x38] sm:$0xff]
      %v3683 = vld [vmem:[%s3674 + $0x40] sm:$0xff]
      %v3684 = vld [vmem:[%s3674 + $0x48] sm:$0xff]
      %v3685 = vld [vmem:[%s3674 + $0x50] sm:$0xff]
      %v3686 = vld [vmem:[%s3674 + $0x58] sm:$0xff]
      %v3687 = vld [vmem:[%s3674 + $0x60] sm:$0xf]
      %v3688 = vld [vmem:[%s3674 + $0x64] sm:$0xff]
      %v3689 = vld [vmem:[%s3674 + $0x6c] sm:$0xff]
      %v3690 = vld [vmem:[%s3674 + $0x74] sm:$0xff]
      %v3691 = vld [vmem:[%s3674 + $0x7c] sm:$0xff]
      %v3692 = vld [vmem:[%s3674 + $0x84] sm:$0xff]
      %v3693 = vld [vmem:[%s3674 + $0x8c] sm:$0xff]
      %v3694 = vld [vmem:[%s3674 + $0x94] sm:$0xff]
      %v3695 = vld [vmem:[%s3674 + $0x9c] sm:$0xff]
      %v3696 = vld [vmem:[%s3674 + $0xa4] sm:$0xff]
      %v3697 = vld [vmem:[%s3674 + $0xac] sm:$0xff]
      %v3698 = vld [vmem:[%s3674 + $0xb4] sm:$0xff]
      %v3699 = vld [vmem:[%s3674 + $0xbc] sm:$0xff]
      %v3700 = vld [vmem:[%s3674 + $0xc4] sm:$0xf]
      %v3701 = vld [vmem:[%s3674 + $0xc8] sm:$0xff]
      %v3702 = vld [vmem:[%s3674 + $0xd0] sm:$0xff]
      %v3703 = vld [vmem:[%s3674 + $0xd8] sm:$0xff]
      %v3704 = vld [vmem:[%s3674 + $0xe0] sm:$0xff]
      %v3705 = vld [vmem:[%s3674 + $0xe8] sm:$0xff]
      %v3706 = vld [vmem:[%s3674 + $0xf0] sm:$0xff]
      %v3707 = vld [vmem:[%s3674 + $0xf8] sm:$0xff]
      %v3708 = vld [vmem:[%s3674 + $0x100] sm:$0xff]
      %v3709 = vld [vmem:[%s3674 + $0x108] sm:$0xff]
      %v3710 = vld [vmem:[%s3674 + $0x110] sm:$0xff]
      %v3711 = vld [vmem:[%s3674 + $0x118] sm:$0xff]
      %v3712 = vld [vmem:[%s3674 + $0x120] sm:$0xff]
      %v3713 = vld [vmem:[%s3674 + $0x128] sm:$0xf]
      %v3714 = vld [vmem:[%s3674 + $0x12c] sm:$0x11]
      %v3715 = vld [vmem:[%s3674 + $0x134] sm:$0x11]
      %v3716 = vld [vmem:[%s3674 + $0x13c] sm:$0x11]
      %v3717 = vld [vmem:[%s3674 + $0x144] sm:$0x11]
      %v3718 = vld [vmem:[%s3674 + $0x14c] sm:$0x11]
      %v3719 = vld [vmem:[%s3674 + $0x154] sm:$0x11]
      %v3720 = vld [vmem:[%s3674 + $0x15c] sm:$0x11]
      %v3721 = vld [vmem:[%s3674 + $0x164] sm:$0x11]
      %v3722 = vld [vmem:[%s3674 + $0x16c] sm:$0x11]
      %v3723 = vld [vmem:[%s3674 + $0x174] sm:$0x11]
      %v3724 = vld [vmem:[%s3674 + $0x17c] sm:$0x11]
      %v3725 = vld [vmem:[%s3674 + $0x184] sm:$0x11]
      %v3726 = vld [vmem:[%s3674 + $0x18c] sm:$0x1]
      %v3779 = vunpack.c.l.b16 %v3675
      %v3780 = vunpack.c.h.b16 %v3675
      %v3781 = vunpack.c.l.b16 %v3676
      %v3782 = vunpack.c.h.b16 %v3676
      %v3783 = vunpack.c.l.b16 %v3677
      %v3784 = vunpack.c.h.b16 %v3677
      %v3785 = vunpack.c.l.b16 %v3678
      %v3786 = vunpack.c.h.b16 %v3678
      %v3787 = vunpack.c.l.b16 %v3679
      %v3788 = vunpack.c.h.b16 %v3679
      %v3789 = vunpack.c.l.b16 %v3680
      %v3790 = vunpack.c.h.b16 %v3680
      %v3791 = vunpack.c.l.b16 %v3681
      %v3792 = vunpack.c.h.b16 %v3681
      %v3793 = vunpack.c.l.b16 %v3682
      %v3794 = vunpack.c.h.b16 %v3682
      %v3795 = vunpack.c.l.b16 %v3683
      %v3796 = vunpack.c.h.b16 %v3683
      %v3797 = vunpack.c.l.b16 %v3684
      %v3798 = vunpack.c.h.b16 %v3684
      %v3799 = vunpack.c.l.b16 %v3685
      %v3800 = vunpack.c.h.b16 %v3685
      %v3801 = vunpack.c.l.b16 %v3686
      %v3802 = vunpack.c.h.b16 %v3686
      %v3803 = vunpack.c.l.b16 %v3687
      %v3804 = vunpack.c.l.b16 %v3688
      %v3805 = vunpack.c.h.b16 %v3688
      %v3806 = vunpack.c.l.b16 %v3689
      %v3807 = vunpack.c.h.b16 %v3689
      %v3808 = vunpack.c.l.b16 %v3690
      %v3809 = vunpack.c.h.b16 %v3690
      %v3810 = vunpack.c.l.b16 %v3691
      %v3811 = vunpack.c.h.b16 %v3691
      %v3812 = vunpack.c.l.b16 %v3692
      %v3813 = vunpack.c.h.b16 %v3692
      %v3814 = vunpack.c.l.b16 %v3693
      %v3815 = vunpack.c.h.b16 %v3693
      %v3816 = vunpack.c.l.b16 %v3694
      %v3817 = vunpack.c.h.b16 %v3694
      %v3818 = vunpack.c.l.b16 %v3695
      %v3819 = vunpack.c.h.b16 %v3695
      %v3820 = vunpack.c.l.b16 %v3696
      %v3821 = vunpack.c.h.b16 %v3696
      %v3822 = vunpack.c.l.b16 %v3697
      %v3823 = vunpack.c.h.b16 %v3697
      %v3824 = vunpack.c.l.b16 %v3698
      %v3825 = vunpack.c.h.b16 %v3698
      %v3826 = vunpack.c.l.b16 %v3699
      %v3827 = vunpack.c.h.b16 %v3699
      %v3828 = vunpack.c.l.b16 %v3700
      %v3829 = vunpack.c.l.b16 %v3701
      %v3830 = vunpack.c.h.b16 %v3701
      %v3831 = vunpack.c.l.b16 %v3702
      %v3832 = vunpack.c.h.b16 %v3702
      %v3833 = vunpack.c.l.b16 %v3703
      %v3834 = vunpack.c.h.b16 %v3703
      %v3835 = vunpack.c.l.b16 %v3704
      %v3836 = vunpack.c.h.b16 %v3704
      %v3837 = vunpack.c.l.b16 %v3705
      %v3838 = vunpack.c.h.b16 %v3705
      %v3839 = vunpack.c.l.b16 %v3706
      %v3840 = vunpack.c.h.b16 %v3706
      %v3841 = vunpack.c.l.b16 %v3707
      %v3842 = vunpack.c.h.b16 %v3707
      %v3843 = vunpack.c.l.b16 %v3708
      %v3844 = vunpack.c.h.b16 %v3708
      %v3845 = vunpack.c.l.b16 %v3709
      %v3846 = vunpack.c.h.b16 %v3709
      %v3847 = vunpack.c.l.b16 %v3710
      %v3848 = vunpack.c.h.b16 %v3710
      %v3849 = vunpack.c.l.b16 %v3711
      %v3850 = vunpack.c.h.b16 %v3711
      %v3851 = vunpack.c.l.b16 %v3712
      %v3852 = vunpack.c.h.b16 %v3712
      %v3853 = vunpack.c.l.b16 %v3713
      %v3854 = vunpack.c.l.b16 %v3714
      %v3855 = vunpack.c.h.b16 %v3714
      %v3856 = vunpack.c.l.b16 %v3715
      %v3857 = vunpack.c.h.b16 %v3715
      %v3858 = vunpack.c.l.b16 %v3716
      %v3859 = vunpack.c.h.b16 %v3716
      %v3860 = vunpack.c.l.b16 %v3717
      %v3861 = vunpack.c.h.b16 %v3717
      %v3862 = vunpack.c.l.b16 %v3718
      %v3863 = vunpack.c.h.b16 %v3718
      %v3864 = vunpack.c.l.b16 %v3719
      %v3865 = vunpack.c.h.b16 %v3719
      %v3866 = vunpack.c.l.b16 %v3720
      %v3867 = vunpack.c.h.b16 %v3720
      %v3868 = vunpack.c.l.b16 %v3721
      %v3869 = vunpack.c.h.b16 %v3721
      %v3870 = vunpack.c.l.b16 %v3722
      %v3871 = vunpack.c.h.b16 %v3722
      %v3872 = vunpack.c.l.b16 %v3723
      %v3873 = vunpack.c.h.b16 %v3723
      %v3874 = vunpack.c.l.b16 %v3724
      %v3875 = vunpack.c.h.b16 %v3724
      %v3876 = vunpack.c.l.b16 %v3725
      %v3877 = vunpack.c.h.b16 %v3725
      %v3878 = vunpack.c.l.b16 %v3726
      %v3879 = vpack.c.b16 %v3804, %v3779
      %v3880 = vpack.c.b16 %v3805, %v3780
      %v3881 = vpack.c.b16 %v3806, %v3781
      %v3882 = vpack.c.b16 %v3807, %v3782
      %v3883 = vpack.c.b16 %v3808, %v3783
      %v3884 = vpack.c.b16 %v3809, %v3784
      %v3885 = vpack.c.b16 %v3810, %v3785
      %v3886 = vpack.c.b16 %v3811, %v3786
      %v3887 = vpack.c.b16 %v3812, %v3787
      %v3888 = vpack.c.b16 %v3813, %v3788
      %v3889 = vpack.c.b16 %v3814, %v3789
      %v3890 = vpack.c.b16 %v3815, %v3790
      %v3891 = vpack.c.b16 %v3816, %v3791
      %v3892 = vpack.c.b16 %v3817, %v3792
      %v3893 = vpack.c.b16 %v3818, %v3793
      %v3894 = vpack.c.b16 %v3819, %v3794
      %v3895 = vpack.c.b16 %v3820, %v3795
      %v3896 = vpack.c.b16 %v3821, %v3796
      %v3897 = vpack.c.b16 %v3822, %v3797
      %v3898 = vpack.c.b16 %v3823, %v3798
      %v3899 = vpack.c.b16 %v3824, %v3799
      %v3900 = vpack.c.b16 %v3825, %v3800
      %v3901 = vpack.c.b16 %v3826, %v3801
      %v3902 = vpack.c.b16 %v3827, %v3802
      %v3903 = vpack.c.b16 %v3828, %v3803
      %v3904 = vpack.c.b16 %v3854, %v3829
      %v3905 = vpack.c.b16 %v3855, %v3830
      %v3906 = vpack.c.b16 %v3856, %v3831
      %v3907 = vpack.c.b16 %v3857, %v3832
      %v3908 = vpack.c.b16 %v3858, %v3833
      %v3909 = vpack.c.b16 %v3859, %v3834
      %v3910 = vpack.c.b16 %v3860, %v3835
      %v3911 = vpack.c.b16 %v3861, %v3836
      %v3912 = vpack.c.b16 %v3862, %v3837
      %v3913 = vpack.c.b16 %v3863, %v3838
      %v3914 = vpack.c.b16 %v3864, %v3839
      %v3915 = vpack.c.b16 %v3865, %v3840
      %v3916 = vpack.c.b16 %v3866, %v3841
      %v3917 = vpack.c.b16 %v3867, %v3842
      %v3918 = vpack.c.b16 %v3868, %v3843
      %v3919 = vpack.c.b16 %v3869, %v3844
      %v3920 = vpack.c.b16 %v3870, %v3845
      %v3921 = vpack.c.b16 %v3871, %v3846
      %v3922 = vpack.c.b16 %v3872, %v3847
      %v3923 = vpack.c.b16 %v3873, %v3848
      %v3924 = vpack.c.b16 %v3874, %v3849
      %v3925 = vpack.c.b16 %v3875, %v3850
      %v3926 = vpack.c.b16 %v3876, %v3851
      %v3927 = vpack.c.b16 %v3877, %v3852
      %v3928 = vpack.c.b16 %v3878, %v3853
      %3979 = vmatprep.subr.bf16.mxu0 0
      %3980 = vmatpush1.bf16.msra.mxu0 %v1683
      %3981 = vmatprep.subr.bf16.mxu0 0
      %3982 = vmatpush1.bf16.msra.mxu0 %v1684
      %3983 = vmatprep.subr.bf16.mxu0 0
      %3984 = vmatpush1.bf16.msra.mxu0 %v1685
      %3985 = vmatprep.subr.bf16.mxu0 0
      %3986 = vmatpush1.bf16.msra.mxu0 %v1686
      %3987 = vmatprep.subr.bf16.mxu0 0
      %3988 = vmatpush1.bf16.msra.mxu0 %v1687
      %3989 = vmatprep.subr.bf16.mxu0 0
      %3990 = vmatpush1.bf16.msra.mxu0 %v1688
      %3991 = vmatprep.subr.bf16.mxu0 0
      %3992 = vmatpush1.bf16.msra.mxu0 %v1689
      %3993 = vmatprep.subr.bf16.mxu0 0
      %3994 = vmatpush1.bf16.msra.mxu0 %v1690
      %3995 = vmatprep.subr.bf16.mxu0 0
      %3996 = vmatpush1.bf16.msra.mxu0 %v1691
      %3997 = vmatprep.subr.bf16.mxu0 0
      %3998 = vmatpush1.bf16.msra.mxu0 %v1692
      %3999 = vmatprep.subr.bf16.mxu0 0
      %4000 = vmatpush1.bf16.msra.mxu0 %v1693
      %4001 = vmatprep.subr.bf16.mxu0 0
      %4002 = vmatpush1.bf16.msra.mxu0 %v1694
      %4003 = vmatprep.subr.bf16.mxu0 0
      %4004 = vmatpush1.bf16.msra.mxu0 %v1695
      %4005 = vmatprep.subr.bf16.mxu0 0
      %4006 = vmatpush1.bf16.msra.mxu0 %v1696
      %4007 = vmatprep.subr.bf16.mxu0 0
      %4008 = vmatpush1.bf16.msra.mxu0 %v1697
      %4009 = vmatprep.subr.bf16.mxu0 0
      %4010 = vmatpush1.bf16.msra.mxu0 %v1698
      %4011 = vmatprep.mubr.bf16.mxu0 %v3880
      %4012 = vmatmul.mubr.bf16.gmra.mrb[0].mxu0 %v3879
      %v4013 = vpop.f32.mrb[0].mxu0
      %v4014 = vadd.f32 %v629, %v4013
      %v4015 = vpop.f32.mrb[0].mxu0
      %v4016 = vpop.f32.mrb[0].mxu0
      %v4017 = vadd.f32 %v629, %v4016
      %v4018 = vpop.f32.mrb[0].mxu0
      %4019 = vmatprep.mubr.bf16.mxu0 %v3905
      %4020 = vmatmul.mubr.bf16.gmra.mrb[0].mxu0 %v3904
      %v4021 = vpop.f32.mrb[0].mxu0
      %v4022 = vadd.f32 %v629, %v4021
      %v4023 = vpop.f32.mrb[0].mxu0
      %v4024 = vpop.f32.mrb[0].mxu0
      %v4025 = vadd.f32 %v629, %v4024
      %v4026 = vpop.f32.mrb[0].mxu0
      %4027 = vdwg.mxu0
      %4028 = vmatprep.subr.bf16.mxu0 0
      %4029 = vmatpush1.bf16.msra.mxu0 %v1699
      %4030 = vmatprep.subr.bf16.mxu0 0
      %4031 = vmatpush1.bf16.msra.mxu0 %v1700
      %4032 = vmatprep.subr.bf16.mxu0 0
      %4033 = vmatpush1.bf16.msra.mxu0 %v1701
      %4034 = vmatprep.subr.bf16.mxu0 0
      %4035 = vmatpush1.bf16.msra.mxu0 %v1702
      %4036 = vmatprep.subr.bf16.mxu0 0
      %4037 = vmatpush1.bf16.msra.mxu0 %v1703
      %4038 = vmatprep.subr.bf16.mxu0 0
      %4039 = vmatpush1.bf16.msra.mxu0 %v1704
      %4040 = vmatprep.subr.bf16.mxu0 0
      %4041 = vmatpush1.bf16.msra.mxu0 %v1705
      %4042 = vmatprep.subr.bf16.mxu0 0
      %4043 = vmatpush1.bf16.msra.mxu0 %v1706
      %4044 = vmatprep.subr.bf16.mxu0 0
      %4045 = vmatpush1.bf16.msra.mxu0 %v1707
      %4046 = vmatprep.subr.bf16.mxu0 0
      %4047 = vmatpush1.bf16.msra.mxu0 %v1708
      %4048 = vmatprep.subr.bf16.mxu0 0
      %4049 = vmatpush1.bf16.msra.mxu0 %v1709
      %4050 = vmatprep.subr.bf16.mxu0 0
      %4051 = vmatpush1.bf16.msra.mxu0 %v1710
      %4052 = vmatprep.subr.bf16.mxu0 0
      %4053 = vmatpush1.bf16.msra.mxu0 %v1711
      %4054 = vmatprep.subr.bf16.mxu0 0
      %4055 = vmatpush1.bf16.msra.mxu0 %v1712
      %4056 = vmatprep.subr.bf16.mxu0 0
      %4057 = vmatpush1.bf16.msra.mxu0 %v1713
      %4058 = vmatprep.subr.bf16.mxu0 0
      %4059 = vmatpush1.bf16.msra.mxu0 %v1714
      %4060 = vmatprep.mubr.bf16.mxu0 %v3882
      %4061 = vmatmul.mubr.bf16.gmra.mrb[0].mxu0 %v3881
      %v4062 = vpop.f32.mrb[0].mxu0
      %v4063 = vadd.f32 %v4014, %v4062
      %v4064 = vpop.f32.mrb[0].mxu0
      %v4065 = vpop.f32.mrb[0].mxu0
      %v4066 = vadd.f32 %v4017, %v4065
      %v4067 = vpop.f32.mrb[0].mxu0
      %4068 = vmatprep.mubr.bf16.mxu0 %v3907
      %4069 = vmatmul.mubr.bf16.gmra.mrb[0].mxu0 %v3906
      %v4070 = vpop.f32.mrb[0].mxu0
      %v4071 = vadd.f32 %v4022, %v4070
      %v4072 = vpop.f32.mrb[0].mxu0
      %v4073 = vpop.f32.mrb[0].mxu0
      %v4074 = vadd.f32 %v4025, %v4073
      %v4075 = vpop.f32.mrb[0].mxu0
      %4076 = vdwg.mxu0
      %4077 = vmatprep.subr.bf16.mxu0 0
      %4078 = vmatpush1.bf16.msra.mxu0 %v1715
      %4079 = vmatprep.subr.bf16.mxu0 0
      %4080 = vmatpush1.bf16.msra.mxu0 %v1716
      %4081 = vmatprep.subr.bf16.mxu0 0
      %4082 = vmatpush1.bf16.msra.mxu0 %v1717
      %4083 = vmatprep.subr.bf16.mxu0 0
      %4084 = vmatpush1.bf16.msra.mxu0 %v1718
      %4085 = vmatprep.subr.bf16.mxu0 0
      %4086 = vmatpush1.bf16.msra.mxu0 %v1719
      %4087 = vmatprep.subr.bf16.mxu0 0
      %4088 = vmatpush1.bf16.msra.mxu0 %v1720
      %4089 = vmatprep.subr.bf16.mxu0 0
      %4090 = vmatpush1.bf16.msra.mxu0 %v1721
      %4091 = vmatprep.subr.bf16.mxu0 0
      %4092 = vmatpush1.bf16.msra.mxu0 %v1722
      %4093 = vmatprep.subr.bf16.mxu0 0
      %4094 = vmatpush1.bf16.msra.mxu0 %v1723
      %4095 = vmatprep.subr.bf16.mxu0 0
      %4096 = vmatpush1.bf16.msra.mxu0 %v1724
      %4097 = vmatprep.subr.bf16.mxu0 0
      %4098 = vmatpush1.bf16.msra.mxu0 %v1725
      %4099 = vmatprep.subr.bf16.mxu0 0
      %4100 = vmatpush1.bf16.msra.mxu0 %v1726
      %4101 = vmatprep.subr.bf16.mxu0 0
      %4102 = vmatpush1.bf16.msra.mxu0 %v1727
      %4103 = vmatprep.subr.bf16.mxu0 0
      %4104 = vmatpush1.bf16.msra.mxu0 %v1728
      %4105 = vmatprep.subr.bf16.mxu0 0
      %4106 = vmatpush1.bf16.msra.mxu0 %v1729
      %4107 = vmatprep.subr.bf16.mxu0 0
      %4108 = vmatpush1.bf16.msra.mxu0 %v1730
      %4109 = vmatprep.mubr.bf16.mxu0 %v3884
      %4110 = vmatmul.mubr.bf16.gmra.mrb[0].mxu0 %v3883
      %v4111 = vpop.f32.mrb[0].mxu0
      %v4112 = vadd.f32 %v4063, %v4111
      %v4113 = vpop.f32.mrb[0].mxu0
      %v4114 = vpop.f32.mrb[0].mxu0
      %v4115 = vadd.f32 %v4066, %v4114
      %v4116 = vpop.f32.mrb[0].mxu0
      %4117 = vmatprep.mubr.bf16.mxu0 %v3909
      %4118 = vmatmul.mubr.bf16.gmra.mrb[0].mxu0 %v3908
      %v4119 = vpop.f32.mrb[0].mxu0
      %v4120 = vadd.f32 %v4071, %v4119
      %v4121 = vpop.f32.mrb[0].mxu0
      %v4122 = vpop.f32.mrb[0].mxu0
      %v4123 = vadd.f32 %v4074, %v4122
      %v4124 = vpop.f32.mrb[0].mxu0
      %4125 = vdwg.mxu0
      %4126 = vmatprep.subr.bf16.mxu0 0
      %4127 = vmatpush1.bf16.msra.mxu0 %v1731
      %4128 = vmatprep.subr.bf16.mxu0 0
      %4129 = vmatpush1.bf16.msra.mxu0 %v1732
      %4130 = vmatprep.subr.bf16.mxu0 0
      %4131 = vmatpush1.bf16.msra.mxu0 %v1733
      %4132 = vmatprep.subr.bf16.mxu0 0
      %4133 = vmatpush1.bf16.msra.mxu0 %v1734
      %4134 = vmatprep.subr.bf16.mxu0 0
      %4135 = vmatpush1.bf16.msra.mxu0 %v1735
      %4136 = vmatprep.subr.bf16.mxu0 0
      %4137 = vmatpush1.bf16.msra.mxu0 %v1736
      %4138 = vmatprep.subr.bf16.mxu0 0
      %4139 = vmatpush1.bf16.msra.mxu0 %v1737
      %4140 = vmatprep.subr.bf16.mxu0 0
      %4141 = vmatpush1.bf16.msra.mxu0 %v1738
      %4142 = vmatprep.subr.bf16.mxu0 0
      %4143 = vmatpush1.bf16.msra.mxu0 %v1739
      %4144 = vmatprep.subr.bf16.mxu0 0
      %4145 = vmatpush1.bf16.msra.mxu0 %v1740
      %4146 = vmatprep.subr.bf16.mxu0 0
      %4147 = vmatpush1.bf16.msra.mxu0 %v1741
      %4148 = vmatprep.subr.bf16.mxu0 0
      %4149 = vmatpush1.bf16.msra.mxu0 %v1742
      %4150 = vmatprep.subr.bf16.mxu0 0
      %4151 = vmatpush1.bf16.msra.mxu0 %v1743
      %4152 = vmatprep.subr.bf16.mxu0 0
      %4153 = vmatpush1.bf16.msra.mxu0 %v1744
      %4154 = vmatprep.subr.bf16.mxu0 0
      %4155 = vmatpush1.bf16.msra.mxu0 %v1745
      %4156 = vmatprep.subr.bf16.mxu0 0
      %4157 = vmatpush1.bf16.msra.mxu0 %v1746
      %4158 = vmatprep.mubr.bf16.mxu0 %v3886
      %4159 = vmatmul.mubr.bf16.gmra.mrb[0].mxu0 %v3885
      %v4160 = vpop.f32.mrb[0].mxu0
      %v4161 = vadd.f32 %v4112, %v4160
      %v4162 = vpop.f32.mrb[0].mxu0
      %v4163 = vpop.f32.mrb[0].mxu0
      %v4164 = vadd.f32 %v4115, %v4163
      %v4165 = vpop.f32.mrb[0].mxu0
      %4166 = vmatprep.mubr.bf16.mxu0 %v3911
      %4167 = vmatmul.mubr.bf16.gmra.mrb[0].mxu0 %v3910
      %v4168 = vpop.f32.mrb[0].mxu0
      %v4169 = vadd.f32 %v4120, %v4168
      %v4170 = vpop.f32.mrb[0].mxu0
      %v4171 = vpop.f32.mrb[0].mxu0
      %v4172 = vadd.f32 %v4123, %v4171
      %v4173 = vpop.f32.mrb[0].mxu0
      %4174 = vdwg.mxu0
      %4175 = vmatprep.subr.bf16.mxu0 0
      %4176 = vmatpush1.bf16.msra.mxu0 %v1747
      %4177 = vmatprep.subr.bf16.mxu0 0
      %4178 = vmatpush1.bf16.msra.mxu0 %v1748
      %4179 = vmatprep.subr.bf16.mxu0 0
      %4180 = vmatpush1.bf16.msra.mxu0 %v1749
      %4181 = vmatprep.subr.bf16.mxu0 0
      %4182 = vmatpush1.bf16.msra.mxu0 %v1750
      %4183 = vmatprep.subr.bf16.mxu0 0
      %4184 = vmatpush1.bf16.msra.mxu0 %v1751
      %4185 = vmatprep.subr.bf16.mxu0 0
      %4186 = vmatpush1.bf16.msra.mxu0 %v1752
      %4187 = vmatprep.subr.bf16.mxu0 0
      %4188 = vmatpush1.bf16.msra.mxu0 %v1753
      %4189 = vmatprep.subr.bf16.mxu0 0
      %4190 = vmatpush1.bf16.msra.mxu0 %v1754
      %4191 = vmatprep.subr.bf16.mxu0 0
      %4192 = vmatpush1.bf16.msra.mxu0 %v1755
      %4193 = vmatprep.subr.bf16.mxu0 0
      %4194 = vmatpush1.bf16.msra.mxu0 %v1756
      %4195 = vmatprep.subr.bf16.mxu0 0
      %4196 = vmatpush1.bf16.msra.mxu0 %v1757
      %4197 = vmatprep.subr.bf16.mxu0 0
      %4198 = vmatpush1.bf16.msra.mxu0 %v1758
      %4199 = vmatprep.subr.bf16.mxu0 0
      %4200 = vmatpush1.bf16.msra.mxu0 %v1759
      %4201 = vmatprep.subr.bf16.mxu0 0
      %4202 = vmatpush1.bf16.msra.mxu0 %v1760
      %4203 = vmatprep.subr.bf16.mxu0 0
      %4204 = vmatpush1.bf16.msra.mxu0 %v1761
      %4205 = vmatprep.subr.bf16.mxu0 0
      %4206 = vmatpush1.bf16.msra.mxu0 %v1762
      %4207 = vmatprep.mubr.bf16.mxu0 %v3888
      %4208 = vmatmul.mubr.bf16.gmra.mrb[0].mxu0 %v3887
      %v4209 = vpop.f32.mrb[0].mxu0
      %v4210 = vadd.f32 %v4161, %v4209
      %v4211 = vpop.f32.mrb[0].mxu0
      %v4212 = vpop.f32.mrb[0].mxu0
      %v4213 = vadd.f32 %v4164, %v4212
      %v4214 = vpop.f32.mrb[0].mxu0
      %4215 = vmatprep.mubr.bf16.mxu0 %v3913
      %4216 = vmatmul.mubr.bf16.gmra.mrb[0].mxu0 %v3912
      %v4217 = vpop.f32.mrb[0].mxu0
      %v4218 = vadd.f32 %v4169, %v4217
      %v4219 = vpop.f32.mrb[0].mxu0
      %v4220 = vpop.f32.mrb[0].mxu0
      %v4221 = vadd.f32 %v4172, %v4220
      %v4222 = vpop.f32.mrb[0].mxu0
      %4223 = vdwg.mxu0
      %4224 = vmatprep.subr.bf16.mxu0 0
      %4225 = vmatpush1.bf16.msra.mxu0 %v1763
      %4226 = vmatprep.subr.bf16.mxu0 0
      %4227 = vmatpush1.bf16.msra.mxu0 %v1764
      %4228 = vmatprep.subr.bf16.mxu0 0
      %4229 = vmatpush1.bf16.msra.mxu0 %v1765
      %4230 = vmatprep.subr.bf16.mxu0 0
      %4231 = vmatpush1.bf16.msra.mxu0 %v1766
      %4232 = vmatprep.subr.bf16.mxu0 0
      %4233 = vmatpush1.bf16.msra.mxu0 %v1767
      %4234 = vmatprep.subr.bf16.mxu0 0
      %4235 = vmatpush1.bf16.msra.mxu0 %v1768
      %4236 = vmatprep.subr.bf16.mxu0 0
      %4237 = vmatpush1.bf16.msra.mxu0 %v1769
      %4238 = vmatprep.subr.bf16.mxu0 0
      %4239 = vmatpush1.bf16.msra.mxu0 %v1770
      %4240 = vmatprep.subr.bf16.mxu0 0
      %4241 = vmatpush1.bf16.msra.mxu0 %v1771
      %4242 = vmatprep.subr.bf16.mxu0 0
      %4243 = vmatpush1.bf16.msra.mxu0 %v1772
      %4244 = vmatprep.subr.bf16.mxu0 0
      %4245 = vmatpush1.bf16.msra.mxu0 %v1773
      %4246 = vmatprep.subr.bf16.mxu0 0
      %4247 = vmatpush1.bf16.msra.mxu0 %v1774
      %4248 = vmatprep.subr.bf16.mxu0 0
      %4249 = vmatpush1.bf16.msra.mxu0 %v1775
      %4250 = vmatprep.subr.bf16.mxu0 0
      %4251 = vmatpush1.bf16.msra.mxu0 %v1776
      %4252 = vmatprep.subr.bf16.mxu0 0
      %4253 = vmatpush1.bf16.msra.mxu0 %v1777
      %4254 = vmatprep.subr.bf16.mxu0 0
      %4255 = vmatpush1.bf16.msra.mxu0 %v1778
      %4256 = vmatprep.mubr.bf16.mxu0 %v3890
      %4257 = vmatmul.mubr.bf16.gmra.mrb[0].mxu0 %v3889
      %v4258 = vpop.f32.mrb[0].mxu0
      %v4259 = vadd.f32 %v4210, %v4258
      %v4260 = vpop.f32.mrb[0].mxu0
      %v4261 = vpop.f32.mrb[0].mxu0
      %v4262 = vadd.f32 %v4213, %v4261
      %v4263 = vpop.f32.mrb[0].mxu0
      %4264 = vmatprep.mubr.bf16.mxu0 %v3915
      %4265 = vmatmul.mubr.bf16.gmra.mrb[0].mxu0 %v3914
      %v4266 = vpop.f32.mrb[0].mxu0
      %v4267 = vadd.f32 %v4218, %v4266
      %v4268 = vpop.f32.mrb[0].mxu0
      %v4269 = vpop.f32.mrb[0].mxu0
      %v4270 = vadd.f32 %v4221, %v4269
      %v4271 = vpop.f32.mrb[0].mxu0
      %4272 = vdwg.mxu0
      %4273 = vmatprep.subr.bf16.mxu0 0
      %4274 = vmatpush1.bf16.msra.mxu0 %v1779
      %4275 = vmatprep.subr.bf16.mxu0 0
      %4276 = vmatpush1.bf16.msra.mxu0 %v1780
      %4277 = vmatprep.subr.bf16.mxu0 0
      %4278 = vmatpush1.bf16.msra.mxu0 %v1781
      %4279 = vmatprep.subr.bf16.mxu0 0
      %4280 = vmatpush1.bf16.msra.mxu0 %v1782
      %4281 = vmatprep.subr.bf16.mxu0 0
      %4282 = vmatpush1.bf16.msra.mxu0 %v1783
      %4283 = vmatprep.subr.bf16.mxu0 0
      %4284 = vmatpush1.bf16.msra.mxu0 %v1784
      %4285 = vmatprep.subr.bf16.mxu0 0
      %4286 = vmatpush1.bf16.msra.mxu0 %v1785
      %4287 = vmatprep.subr.bf16.mxu0 0
      %4288 = vmatpush1.bf16.msra.mxu0 %v1786
      %4289 = vmatprep.subr.bf16.mxu0 0
      %4290 = vmatpush1.bf16.msra.mxu0 %v1787
      %4291 = vmatprep.subr.bf16.mxu0 0
      %4292 = vmatpush1.bf16.msra.mxu0 %v1788
      %4293 = vmatprep.subr.bf16.mxu0 0
      %4294 = vmatpush1.bf16.msra.mxu0 %v1789
      %4295 = vmatprep.subr.bf16.mxu0 0
      %4296 = vmatpush1.bf16.msra.mxu0 %v1790
      %4297 = vmatprep.subr.bf16.mxu0 0
      %4298 = vmatpush1.bf16.msra.mxu0 %v1791
      %4299 = vmatprep.subr.bf16.mxu0 0
      %4300 = vmatpush1.bf16.msra.mxu0 %v1792
      %4301 = vmatprep.subr.bf16.mxu0 0
      %4302 = vmatpush1.bf16.msra.mxu0 %v1793
      %4303 = vmatprep.subr.bf16.mxu0 0
      %4304 = vmatpush1.bf16.msra.mxu0 %v1794
      %4305 = vmatprep.mubr.bf16.mxu0 %v3892
      %4306 = vmatmul.mubr.bf16.gmra.mrb[0].mxu0 %v3891
      %v4307 = vpop.f32.mrb[0].mxu0
      %v4308 = vadd.f32 %v4259, %v4307
      %v4309 = vpop.f32.mrb[0].mxu0
      %v4310 = vpop.f32.mrb[0].mxu0
      %v4311 = vadd.f32 %v4262, %v4310
      %v4312 = vpop.f32.mrb[0].mxu0
      %4313 = vmatprep.mubr.bf16.mxu0 %v3917
      %4314 = vmatmul.mubr.bf16.gmra.mrb[0].mxu0 %v3916
      %v4315 = vpop.f32.mrb[0].mxu0
      %v4316 = vadd.f32 %v4267, %v4315
      %v4317 = vpop.f32.mrb[0].mxu0
      %v4318 = vpop.f32.mrb[0].mxu0
      %v4319 = vadd.f32 %v4270, %v4318
      %v4320 = vpop.f32.mrb[0].mxu0
      %4321 = vdwg.mxu0
      %4322 = vmatprep.subr.bf16.mxu0 0
      %4323 = vmatpush1.bf16.msra.mxu0 %v1795
      %4324 = vmatprep.subr.bf16.mxu0 0
      %4325 = vmatpush1.bf16.msra.mxu0 %v1796
      %4326 = vmatprep.subr.bf16.mxu0 0
      %4327 = vmatpush1.bf16.msra.mxu0 %v1797
      %4328 = vmatprep.subr.bf16.mxu0 0
      %4329 = vmatpush1.bf16.msra.mxu0 %v1798
      %4330 = vmatprep.subr.bf16.mxu0 0
      %4331 = vmatpush1.bf16.msra.mxu0 %v1799
      %4332 = vmatprep.subr.bf16.mxu0 0
      %4333 = vmatpush1.bf16.msra.mxu0 %v1800
      %4334 = vmatprep.subr.bf16.mxu0 0
      %4335 = vmatpush1.bf16.msra.mxu0 %v1801
      %4336 = vmatprep.subr.bf16.mxu0 0
      %4337 = vmatpush1.bf16.msra.mxu0 %v1802
      %4338 = vmatprep.subr.bf16.mxu0 0
      %4339 = vmatpush1.bf16.msra.mxu0 %v1803
      %4340 = vmatprep.subr.bf16.mxu0 0
      %4341 = vmatpush1.bf16.msra.mxu0 %v1804
      %4342 = vmatprep.subr.bf16.mxu0 0
      %4343 = vmatpush1.bf16.msra.mxu0 %v1805
      %4344 = vmatprep.subr.bf16.mxu0 0
      %4345 = vmatpush1.bf16.msra.mxu0 %v1806
      %4346 = vmatprep.subr.bf16.mxu0 0
      %4347 = vmatpush1.bf16.msra.mxu0 %v1807
      %4348 = vmatprep.subr.bf16.mxu0 0
      %4349 = vmatpush1.bf16.msra.mxu0 %v1808
      %4350 = vmatprep.subr.bf16.mxu0 0
      %4351 = vmatpush1.bf16.msra.mxu0 %v1809
      %4352 = vmatprep.subr.bf16.mxu0 0
      %4353 = vmatpush1.bf16.msra.mxu0 %v1810
      %4354 = vmatprep.mubr.bf16.mxu0 %v3894
      %4355 = vmatmul.mubr.bf16.gmra.mrb[0].mxu0 %v3893
      %v4356 = vpop.f32.mrb[0].mxu0
      %v4357 = vadd.f32 %v4308, %v4356
      %v4358 = vpop.f32.mrb[0].mxu0
      %v4359 = vpop.f32.mrb[0].mxu0
      %v4360 = vadd.f32 %v4311, %v4359
      %v4361 = vpop.f32.mrb[0].mxu0
      %4362 = vmatprep.mubr.bf16.mxu0 %v3919
      %4363 = vmatmul.mubr.bf16.gmra.mrb[0].mxu0 %v3918
      %v4364 = vpop.f32.mrb[0].mxu0
      %v4365 = vadd.f32 %v4316, %v4364
      %v4366 = vpop.f32.mrb[0].mxu0
      %v4367 = vpop.f32.mrb[0].mxu0
      %v4368 = vadd.f32 %v4319, %v4367
      %v4369 = vpop.f32.mrb[0].mxu0
      %4370 = vdwg.mxu0
      %4371 = vmatprep.subr.bf16.mxu0 0
      %4372 = vmatpush1.bf16.msra.mxu0 %v1811
      %4373 = vmatprep.subr.bf16.mxu0 0
      %4374 = vmatpush1.bf16.msra.mxu0 %v1812
      %4375 = vmatprep.subr.bf16.mxu0 0
      %4376 = vmatpush1.bf16.msra.mxu0 %v1813
      %4377 = vmatprep.subr.bf16.mxu0 0
      %4378 = vmatpush1.bf16.msra.mxu0 %v1814
      %4379 = vmatprep.subr.bf16.mxu0 0
      %4380 = vmatpush1.bf16.msra.mxu0 %v1815
      %4381 = vmatprep.subr.bf16.mxu0 0
      %4382 = vmatpush1.bf16.msra.mxu0 %v1816
      %4383 = vmatprep.subr.bf16.mxu0 0
      %4384 = vmatpush1.bf16.msra.mxu0 %v1817
      %4385 = vmatprep.subr.bf16.mxu0 0
      %4386 = vmatpush1.bf16.msra.mxu0 %v1818
      %4387 = vmatprep.subr.bf16.mxu0 0
      %4388 = vmatpush1.bf16.msra.mxu0 %v1819
      %4389 = vmatprep.subr.bf16.mxu0 0
      %4390 = vmatpush1.bf16.msra.mxu0 %v1820
      %4391 = vmatprep.subr.bf16.mxu0 0
      %4392 = vmatpush1.bf16.msra.mxu0 %v1821
      %4393 = vmatprep.subr.bf16.mxu0 0
      %4394 = vmatpush1.bf16.msra.mxu0 %v1822
      %4395 = vmatprep.subr.bf16.mxu0 0
      %4396 = vmatpush1.bf16.msra.mxu0 %v1823
      %4397 = vmatprep.subr.bf16.mxu0 0
      %4398 = vmatpush1.bf16.msra.mxu0 %v1824
      %4399 = vmatprep.subr.bf16.mxu0 0
      %4400 = vmatpush1.bf16.msra.mxu0 %v1825
      %4401 = vmatprep.subr.bf16.mxu0 0
      %4402 = vmatpush1.bf16.msra.mxu0 %v1826
      %4403 = vmatprep.mubr.bf16.mxu0 %v3896
      %4404 = vmatmul.mubr.bf16.gmra.mrb[0].mxu0 %v3895
      %v4405 = vpop.f32.mrb[0].mxu0
      %v4406 = vadd.f32 %v4357, %v4405
      %v4407 = vpop.f32.mrb[0].mxu0
      %v4408 = vpop.f32.mrb[0].mxu0
      %v4409 = vadd.f32 %v4360, %v4408
      %v4410 = vpop.f32.mrb[0].mxu0
      %4411 = vmatprep.mubr.bf16.mxu0 %v3921
      %4412 = vmatmul.mubr.bf16.gmra.mrb[0].mxu0 %v3920
      %v4413 = vpop.f32.mrb[0].mxu0
      %v4414 = vadd.f32 %v4365, %v4413
      %v4415 = vpop.f32.mrb[0].mxu0
      %v4416 = vpop.f32.mrb[0].mxu0
      %v4417 = vadd.f32 %v4368, %v4416
      %v4418 = vpop.f32.mrb[0].mxu0
      %4419 = vdwg.mxu0
      %4420 = vmatprep.subr.bf16.mxu0 0
      %4421 = vmatpush1.bf16.msra.mxu0 %v1827
      %4422 = vmatprep.subr.bf16.mxu0 0
      %4423 = vmatpush1.bf16.msra.mxu0 %v1828
      %4424 = vmatprep.subr.bf16.mxu0 0
      %4425 = vmatpush1.bf16.msra.mxu0 %v1829
      %4426 = vmatprep.subr.bf16.mxu0 0
      %4427 = vmatpush1.bf16.msra.mxu0 %v1830
      %4428 = vmatprep.subr.bf16.mxu0 0
      %4429 = vmatpush1.bf16.msra.mxu0 %v1831
      %4430 = vmatprep.subr.bf16.mxu0 0
      %4431 = vmatpush1.bf16.msra.mxu0 %v1832
      %4432 = vmatprep.subr.bf16.mxu0 0
      %4433 = vmatpush1.bf16.msra.mxu0 %v1833
      %4434 = vmatprep.subr.bf16.mxu0 0
      %4435 = vmatpush1.bf16.msra.mxu0 %v1834
      %4436 = vmatprep.subr.bf16.mxu0 0
      %4437 = vmatpush1.bf16.msra.mxu0 %v1835
      %4438 = vmatprep.subr.bf16.mxu0 0
      %4439 = vmatpush1.bf16.msra.mxu0 %v1836
      %4440 = vmatprep.subr.bf16.mxu0 0
      %4441 = vmatpush1.bf16.msra.mxu0 %v1837
      %4442 = vmatprep.subr.bf16.mxu0 0
      %4443 = vmatpush1.bf16.msra.mxu0 %v1838
      %4444 = vmatprep.subr.bf16.mxu0 0
      %4445 = vmatpush1.bf16.msra.mxu0 %v1839
      %4446 = vmatprep.subr.bf16.mxu0 0
      %4447 = vmatpush1.bf16.msra.mxu0 %v1840
      %4448 = vmatprep.subr.bf16.mxu0 0
      %4449 = vmatpush1.bf16.msra.mxu0 %v1841
      %4450 = vmatprep.subr.bf16.mxu0 0
      %4451 = vmatpush1.bf16.msra.mxu0 %v1842
      %4452 = vmatprep.mubr.bf16.mxu0 %v3898
      %4453 = vmatmul.mubr.bf16.gmra.mrb[0].mxu0 %v3897
      %v4454 = vpop.f32.mrb[0].mxu0
      %v4455 = vadd.f32 %v4406, %v4454
      %v4456 = vpop.f32.mrb[0].mxu0
      %v4457 = vpop.f32.mrb[0].mxu0
      %v4458 = vadd.f32 %v4409, %v4457
      %v4459 = vpop.f32.mrb[0].mxu0
      %4460 = vmatprep.mubr.bf16.mxu0 %v3923
      %4461 = vmatmul.mubr.bf16.gmra.mrb[0].mxu0 %v3922
      %v4462 = vpop.f32.mrb[0].mxu0
      %v4463 = vadd.f32 %v4414, %v4462
      %v4464 = vpop.f32.mrb[0].mxu0
      %v4465 = vpop.f32.mrb[0].mxu0
      %v4466 = vadd.f32 %v4417, %v4465
      %v4467 = vpop.f32.mrb[0].mxu0
      %4468 = vdwg.mxu0
      %4469 = vmatprep.subr.bf16.mxu0 0
      %4470 = vmatpush1.bf16.msra.mxu0 %v1843
      %4471 = vmatprep.subr.bf16.mxu0 0
      %4472 = vmatpush1.bf16.msra.mxu0 %v1844
      %4473 = vmatprep.subr.bf16.mxu0 0
      %4474 = vmatpush1.bf16.msra.mxu0 %v1845
      %4475 = vmatprep.subr.bf16.mxu0 0
      %4476 = vmatpush1.bf16.msra.mxu0 %v1846
      %4477 = vmatprep.subr.bf16.mxu0 0
      %4478 = vmatpush1.bf16.msra.mxu0 %v1847
      %4479 = vmatprep.subr.bf16.mxu0 0
      %4480 = vmatpush1.bf16.msra.mxu0 %v1848
      %4481 = vmatprep.subr.bf16.mxu0 0
      %4482 = vmatpush1.bf16.msra.mxu0 %v1849
      %4483 = vmatprep.subr.bf16.mxu0 0
      %4484 = vmatpush1.bf16.msra.mxu0 %v1850
      %4485 = vmatprep.subr.bf16.mxu0 0
      %4486 = vmatpush1.bf16.msra.mxu0 %v1851
      %4487 = vmatprep.subr.bf16.mxu0 0
      %4488 = vmatpush1.bf16.msra.mxu0 %v1852
      %4489 = vmatprep.subr.bf16.mxu0 0
      %4490 = vmatpush1.bf16.msra.mxu0 %v1853
      %4491 = vmatprep.subr.bf16.mxu0 0
      %4492 = vmatpush1.bf16.msra.mxu0 %v1854
      %4493 = vmatprep.subr.bf16.mxu0 0
      %4494 = vmatpush1.bf16.msra.mxu0 %v1855
      %4495 = vmatprep.subr.bf16.mxu0 0
      %4496 = vmatpush1.bf16.msra.mxu0 %v1856
      %4497 = vmatprep.subr.bf16.mxu0 0
      %4498 = vmatpush1.bf16.msra.mxu0 %v1857
      %4499 = vmatprep.subr.bf16.mxu0 0
      %4500 = vmatpush1.bf16.msra.mxu0 %v1858
      %4501 = vmatprep.mubr.bf16.mxu0 %v3900
      %4502 = vmatmul.mubr.bf16.gmra.mrb[0].mxu0 %v3899
      %v4503 = vpop.f32.mrb[0].mxu0
      %v4504 = vadd.f32 %v4455, %v4503
      %v4505 = vpop.f32.mrb[0].mxu0
      %v4506 = vpop.f32.mrb[0].mxu0
      %v4507 = vadd.f32 %v4458, %v4506
      %v4508 = vpop.f32.mrb[0].mxu0
      %4509 = vmatprep.mubr.bf16.mxu0 %v3925
      %4510 = vmatmul.mubr.bf16.gmra.mrb[0].mxu0 %v3924
      %v4511 = vpop.f32.mrb[0].mxu0
      %v4512 = vadd.f32 %v4463, %v4511
      %v4513 = vpop.f32.mrb[0].mxu0
      %v4514 = vpop.f32.mrb[0].mxu0
      %v4515 = vadd.f32 %v4466, %v4514
      %v4516 = vpop.f32.mrb[0].mxu0
      %4517 = vdwg.mxu0
      %4518 = vmatprep.subr.bf16.mxu0 0
      %4519 = vmatpush1.bf16.msra.mxu0 %v1859
      %4520 = vmatprep.subr.bf16.mxu0 0
      %4521 = vmatpush1.bf16.msra.mxu0 %v1860
      %4522 = vmatprep.subr.bf16.mxu0 0
      %4523 = vmatpush1.bf16.msra.mxu0 %v1861
      %4524 = vmatprep.subr.bf16.mxu0 0
      %4525 = vmatpush1.bf16.msra.mxu0 %v1862
      %4526 = vmatprep.subr.bf16.mxu0 0
      %4527 = vmatpush1.bf16.msra.mxu0 %v1863
      %4528 = vmatprep.subr.bf16.mxu0 0
      %4529 = vmatpush1.bf16.msra.mxu0 %v1864
      %4530 = vmatprep.subr.bf16.mxu0 0
      %4531 = vmatpush1.bf16.msra.mxu0 %v1865
      %4532 = vmatprep.subr.bf16.mxu0 0
      %4533 = vmatpush1.bf16.msra.mxu0 %v1866
      %4534 = vmatprep.subr.bf16.mxu0 0
      %4535 = vmatpush1.bf16.msra.mxu0 %v1867
      %4536 = vmatprep.subr.bf16.mxu0 0
      %4537 = vmatpush1.bf16.msra.mxu0 %v1868
      %4538 = vmatprep.subr.bf16.mxu0 0
      %4539 = vmatpush1.bf16.msra.mxu0 %v1869
      %4540 = vmatprep.subr.bf16.mxu0 0
      %4541 = vmatpush1.bf16.msra.mxu0 %v1870
      %4542 = vmatprep.subr.bf16.mxu0 0
      %4543 = vmatpush1.bf16.msra.mxu0 %v1871
      %4544 = vmatprep.subr.bf16.mxu0 0
      %4545 = vmatpush1.bf16.msra.mxu0 %v1872
      %4546 = vmatprep.subr.bf16.mxu0 0
      %4547 = vmatpush1.bf16.msra.mxu0 %v1873
      %4548 = vmatprep.subr.bf16.mxu0 0
      %4549 = vmatpush1.bf16.msra.mxu0 %v1874
      %4550 = vmatprep.mubr.bf16.mxu0 %v3902
      %4551 = vmatmul.mubr.bf16.gmra.mrb[0].mxu0 %v3901
      %v4552 = vpop.f32.mrb[0].mxu0
      %v4553 = vadd.f32 %v4504, %v4552
      %v4554 = vpop.f32.mrb[0].mxu0
      %v4555 = vpop.f32.mrb[0].mxu0
      %v4556 = vadd.f32 %v4507, %v4555
      %v4557 = vpop.f32.mrb[0].mxu0
      %4558 = vmatprep.mubr.bf16.mxu0 %v3927
      %4559 = vmatmul.mubr.bf16.gmra.mrb[0].mxu0 %v3926
      %v4560 = vpop.f32.mrb[0].mxu0
      %v4561 = vadd.f32 %v4512, %v4560
      %v4562 = vpop.f32.mrb[0].mxu0
      %v4563 = vpop.f32.mrb[0].mxu0
      %v4564 = vadd.f32 %v4515, %v4563
      %v4565 = vpop.f32.mrb[0].mxu0
      %4566 = vdwg.mxu0
      %4567 = vmatprep.subr.bf16.mxu0 0
      %4568 = vmatpush1.bf16.msra.mxu0 %v1875
      %4569 = vmatprep.subr.bf16.mxu0 0
      %4570 = vmatpush1.bf16.msra.mxu0 %v1876
      %4571 = vmatprep.subr.bf16.mxu0 0
      %4572 = vmatpush1.bf16.msra.mxu0 %v1877
      %4573 = vmatprep.subr.bf16.mxu0 0
      %4574 = vmatpush1.bf16.msra.mxu0 %v1878
      %4575 = vmatprep.subr.bf16.mxu0 0
      %4576 = vmatpush1.bf16.msra.mxu0 %v1879
      %4577 = vmatprep.subr.bf16.mxu0 0
      %4578 = vmatpush1.bf16.msra.mxu0 %v1880
      %4579 = vmatprep.subr.bf16.mxu0 0
      %4580 = vmatpush1.bf16.msra.mxu0 %v1881
      %4581 = vmatprep.subr.bf16.mxu0 0
      %4582 = vmatpush1.bf16.msra.mxu0 %v1882
      %4583 = vmatprep.subr.bf16.mxu0 0
      %4584 = vmatpush1.bf16.msra.mxu0 0
      %4585 = vmatprep.subr.bf16.mxu0 0
      %4586 = vmatpush1.bf16.msra.mxu0 0
      %4587 = vmatprep.subr.bf16.mxu0 0
      %4588 = vmatpush1.bf16.msra.mxu0 0
      %4589 = vmatprep.subr.bf16.mxu0 0
      %4590 = vmatpush1.bf16.msra.mxu0 0
      %4591 = vmatprep.subr.bf16.mxu0 0
      %4592 = vmatpush1.bf16.msra.mxu0 0
      %4593 = vmatprep.subr.bf16.mxu0 0
      %4594 = vmatpush1.bf16.msra.mxu0 0
      %4595 = vmatprep.subr.bf16.mxu0 0
      %4596 = vmatpush1.bf16.msra.mxu0 0
      %4597 = vmatprep.subr.bf16.mxu0 0
      %4598 = vmatpush1.bf16.msra.mxu0 0
      %4599 = vmatprep.mubr.bf16.mxu0 0
      %4600 = vmatmul.mubr.bf16.gmra.mrb[0].mxu0 %v3903
      %v4601 = vpop.f32.mrb[0].mxu0
      %v4602 = vadd.f32 %v4553, %v4601
      %v4603 = vpop.f32.mrb[0].mxu0
      %v4604 = vpop.f32.mrb[0].mxu0
      %v4605 = vadd.f32 %v4556, %v4604
      %v4606 = vpop.f32.mrb[0].mxu0
      %4607 = vmatprep.mubr.bf16.mxu0 0
      %4608 = vmatmul.mubr.bf16.gmra.mrb[0].mxu0 %v3928
      %v4609 = vpop.f32.mrb[0].mxu0
      %v4610 = vadd.f32 %v4561, %v4609
      %v4611 = vpop.f32.mrb[0].mxu0
      %v4612 = vpop.f32.mrb[0].mxu0
      %v4613 = vadd.f32 %v4564, %v4612
      %v4614 = vpop.f32.mrb[0].mxu0
      %4615 = vdwg.mxu0
      %v4616 = vmax.f32 %v4602, 0.0
      %v4617 = vmax.f32 %v4605, 0.0
      %v4618 = vmax.f32 %v4610, 0.0
      %v4619 = vmax.f32 %v4613, 0.0
      %s4620 = scalar_lea.vmem %s165, 1200
      %v4621 = vld [vmem:[%s4620] sm:$0xff]
      %v4622 = vld [vmem:[%s4620 + $0x8] sm:$0xff]
      %v4623 = vld [vmem:[%s4620 + $0x10] sm:$0xff]
      %v4624 = vld [vmem:[%s4620 + $0x18] sm:$0xff]
      %v4625 = vld [vmem:[%s4620 + $0x20] sm:$0xff]
      %v4626 = vld [vmem:[%s4620 + $0x28] sm:$0xff]
      %v4627 = vld [vmem:[%s4620 + $0x30] sm:$0xff]
      %v4628 = vld [vmem:[%s4620 + $0x38] sm:$0xff]
      %v4629 = vld [vmem:[%s4620 + $0x40] sm:$0xff]
      %v4630 = vld [vmem:[%s4620 + $0x48] sm:$0xff]
      %v4631 = vld [vmem:[%s4620 + $0x50] sm:$0xff]
      %v4632 = vld [vmem:[%s4620 + $0x58] sm:$0xff]
      %v4633 = vld [vmem:[%s4620 + $0x60] sm:$0xf]
      %v4634 = vld [vmem:[%s4620 + $0x64] sm:$0xff]
      %v4635 = vld [vmem:[%s4620 + $0x6c] sm:$0xff]
      %v4636 = vld [vmem:[%s4620 + $0x74] sm:$0xff]
      %v4637 = vld [vmem:[%s4620 + $0x7c] sm:$0xff]
      %v4638 = vld [vmem:[%s4620 + $0x84] sm:$0xff]
      %v4639 = vld [vmem:[%s4620 + $0x8c] sm:$0xff]
      %v4640 = vld [vmem:[%s4620 + $0x94] sm:$0xff]
      %v4641 = vld [vmem:[%s4620 + $0x9c] sm:$0xff]
      %v4642 = vld [vmem:[%s4620 + $0xa4] sm:$0xff]
      %v4643 = vld [vmem:[%s4620 + $0xac] sm:$0xff]
      %v4644 = vld [vmem:[%s4620 + $0xb4] sm:$0xff]
      %v4645 = vld [vmem:[%s4620 + $0xbc] sm:$0xff]
      %v4646 = vld [vmem:[%s4620 + $0xc4] sm:$0xf]
      %v4647 = vld [vmem:[%s4620 + $0xc8] sm:$0xff]
      %v4648 = vld [vmem:[%s4620 + $0xd0] sm:$0xff]
      %v4649 = vld [vmem:[%s4620 + $0xd8] sm:$0xff]
      %v4650 = vld [vmem:[%s4620 + $0xe0] sm:$0xff]
      %v4651 = vld [vmem:[%s4620 + $0xe8] sm:$0xff]
      %v4652 = vld [vmem:[%s4620 + $0xf0] sm:$0xff]
      %v4653 = vld [vmem:[%s4620 + $0xf8] sm:$0xff]
      %v4654 = vld [vmem:[%s4620 + $0x100] sm:$0xff]
      %v4655 = vld [vmem:[%s4620 + $0x108] sm:$0xff]
      %v4656 = vld [vmem:[%s4620 + $0x110] sm:$0xff]
      %v4657 = vld [vmem:[%s4620 + $0x118] sm:$0xff]
      %v4658 = vld [vmem:[%s4620 + $0x120] sm:$0xff]
      %v4659 = vld [vmem:[%s4620 + $0x128] sm:$0xf]
      %v4660 = vld [vmem:[%s4620 + $0x12c] sm:$0x11]
      %v4661 = vld [vmem:[%s4620 + $0x134] sm:$0x11]
      %v4662 = vld [vmem:[%s4620 + $0x13c] sm:$0x11]
      %v4663 = vld [vmem:[%s4620 + $0x144] sm:$0x11]
      %v4664 = vld [vmem:[%s4620 + $0x14c] sm:$0x11]
      %v4665 = vld [vmem:[%s4620 + $0x154] sm:$0x11]
      %v4666 = vld [vmem:[%s4620 + $0x15c] sm:$0x11]
      %v4667 = vld [vmem:[%s4620 + $0x164] sm:$0x11]
      %v4668 = vld [vmem:[%s4620 + $0x16c] sm:$0x11]
      %v4669 = vld [vmem:[%s4620 + $0x174] sm:$0x11]
      %v4670 = vld [vmem:[%s4620 + $0x17c] sm:$0x11]
      %v4671 = vld [vmem:[%s4620 + $0x184] sm:$0x11]
      %v4672 = vld [vmem:[%s4620 + $0x18c] sm:$0x1]
      %v4725 = vunpack.c.l.b16 %v4621
      %v4726 = vunpack.c.h.b16 %v4621
      %v4727 = vunpack.c.l.b16 %v4622
      %v4728 = vunpack.c.h.b16 %v4622
      %v4729 = vunpack.c.l.b16 %v4623
      %v4730 = vunpack.c.h.b16 %v4623
      %v4731 = vunpack.c.l.b16 %v4624
      %v4732 = vunpack.c.h.b16 %v4624
      %v4733 = vunpack.c.l.b16 %v4625
      %v4734 = vunpack.c.h.b16 %v4625
      %v4735 = vunpack.c.l.b16 %v4626
      %v4736 = vunpack.c.h.b16 %v4626
      %v4737 = vunpack.c.l.b16 %v4627
      %v4738 = vunpack.c.h.b16 %v4627
      %v4739 = vunpack.c.l.b16 %v4628
      %v4740 = vunpack.c.h.b16 %v4628
      %v4741 = vunpack.c.l.b16 %v4629
      %v4742 = vunpack.c.h.b16 %v4629
      %v4743 = vunpack.c.l.b16 %v4630
      %v4744 = vunpack.c.h.b16 %v4630
      %v4745 = vunpack.c.l.b16 %v4631
      %v4746 = vunpack.c.h.b16 %v4631
      %v4747 = vunpack.c.l.b16 %v4632
      %v4748 = vunpack.c.h.b16 %v4632
      %v4749 = vunpack.c.l.b16 %v4633
      %v4750 = vunpack.c.l.b16 %v4634
      %v4751 = vunpack.c.h.b16 %v4634
      %v4752 = vunpack.c.l.b16 %v4635
      %v4753 = vunpack.c.h.b16 %v4635
      %v4754 = vunpack.c.l.b16 %v4636
      %v4755 = vunpack.c.h.b16 %v4636
      %v4756 = vunpack.c.l.b16 %v4637
      %v4757 = vunpack.c.h.b16 %v4637
      %v4758 = vunpack.c.l.b16 %v4638
      %v4759 = vunpack.c.h.b16 %v4638
      %v4760 = vunpack.c.l.b16 %v4639
      %v4761 = vunpack.c.h.b16 %v4639
      %v4762 = vunpack.c.l.b16 %v4640
      %v4763 = vunpack.c.h.b16 %v4640
      %v4764 = vunpack.c.l.b16 %v4641
      %v4765 = vunpack.c.h.b16 %v4641
      %v4766 = vunpack.c.l.b16 %v4642
      %v4767 = vunpack.c.h.b16 %v4642
      %v4768 = vunpack.c.l.b16 %v4643
      %v4769 = vunpack.c.h.b16 %v4643
      %v4770 = vunpack.c.l.b16 %v4644
      %v4771 = vunpack.c.h.b16 %v4644
      %v4772 = vunpack.c.l.b16 %v4645
      %v4773 = vunpack.c.h.b16 %v4645
      %v4774 = vunpack.c.l.b16 %v4646
      %v4775 = vunpack.c.l.b16 %v4647
      %v4776 = vunpack.c.h.b16 %v4647
      %v4777 = vunpack.c.l.b16 %v4648
      %v4778 = vunpack.c.h.b16 %v4648
      %v4779 = vunpack.c.l.b16 %v4649
      %v4780 = vunpack.c.h.b16 %v4649
      %v4781 = vunpack.c.l.b16 %v4650
      %v4782 = vunpack.c.h.b16 %v4650
      %v4783 = vunpack.c.l.b16 %v4651
      %v4784 = vunpack.c.h.b16 %v4651
      %v4785 = vunpack.c.l.b16 %v4652
      %v4786 = vunpack.c.h.b16 %v4652
      %v4787 = vunpack.c.l.b16 %v4653
      %v4788 = vunpack.c.h.b16 %v4653
      %v4789 = vunpack.c.l.b16 %v4654
      %v4790 = vunpack.c.h.b16 %v4654
      %v4791 = vunpack.c.l.b16 %v4655
      %v4792 = vunpack.c.h.b16 %v4655
      %v4793 = vunpack.c.l.b16 %v4656
      %v4794 = vunpack.c.h.b16 %v4656
      %v4795 = vunpack.c.l.b16 %v4657
      %v4796 = vunpack.c.h.b16 %v4657
      %v4797 = vunpack.c.l.b16 %v4658
      %v4798 = vunpack.c.h.b16 %v4658
      %v4799 = vunpack.c.l.b16 %v4659
      %v4800 = vunpack.c.l.b16 %v4660
      %v4801 = vunpack.c.h.b16 %v4660
      %v4802 = vunpack.c.l.b16 %v4661
      %v4803 = vunpack.c.h.b16 %v4661
      %v4804 = vunpack.c.l.b16 %v4662
      %v4805 = vunpack.c.h.b16 %v4662
      %v4806 = vunpack.c.l.b16 %v4663
      %v4807 = vunpack.c.h.b16 %v4663
      %v4808 = vunpack.c.l.b16 %v4664
      %v4809 = vunpack.c.h.b16 %v4664
      %v4810 = vunpack.c.l.b16 %v4665
      %v4811 = vunpack.c.h.b16 %v4665
      %v4812 = vunpack.c.l.b16 %v4666
      %v4813 = vunpack.c.h.b16 %v4666
      %v4814 = vunpack.c.l.b16 %v4667
      %v4815 = vunpack.c.h.b16 %v4667
      %v4816 = vunpack.c.l.b16 %v4668
      %v4817 = vunpack.c.h.b16 %v4668
      %v4818 = vunpack.c.l.b16 %v4669
      %v4819 = vunpack.c.h.b16 %v4669
      %v4820 = vunpack.c.l.b16 %v4670
      %v4821 = vunpack.c.h.b16 %v4670
      %v4822 = vunpack.c.l.b16 %v4671
      %v4823 = vunpack.c.h.b16 %v4671
      %v4824 = vunpack.c.l.b16 %v4672
      %v4825 = vpack.c.b16 %v4750, %v4725
      %v4826 = vpack.c.b16 %v4751, %v4726
      %v4827 = vpack.c.b16 %v4752, %v4727
      %v4828 = vpack.c.b16 %v4753, %v4728
      %v4829 = vpack.c.b16 %v4754, %v4729
      %v4830 = vpack.c.b16 %v4755, %v4730
      %v4831 = vpack.c.b16 %v4756, %v4731
      %v4832 = vpack.c.b16 %v4757, %v4732
      %v4833 = vpack.c.b16 %v4758, %v4733
      %v4834 = vpack.c.b16 %v4759, %v4734
      %v4835 = vpack.c.b16 %v4760, %v4735
      %v4836 = vpack.c.b16 %v4761, %v4736
      %v4837 = vpack.c.b16 %v4762, %v4737
      %v4838 = vpack.c.b16 %v4763, %v4738
      %v4839 = vpack.c.b16 %v4764, %v4739
      %v4840 = vpack.c.b16 %v4765, %v4740
      %v4841 = vpack.c.b16 %v4766, %v4741
      %v4842 = vpack.c.b16 %v4767, %v4742
      %v4843 = vpack.c.b16 %v4768, %v4743
      %v4844 = vpack.c.b16 %v4769, %v4744
      %v4845 = vpack.c.b16 %v4770, %v4745
      %v4846 = vpack.c.b16 %v4771, %v4746
      %v4847 = vpack.c.b16 %v4772, %v4747
      %v4848 = vpack.c.b16 %v4773, %v4748
      %v4849 = vpack.c.b16 %v4774, %v4749
      %v4850 = vpack.c.b16 %v4800, %v4775
      %v4851 = vpack.c.b16 %v4801, %v4776
      %v4852 = vpack.c.b16 %v4802, %v4777
      %v4853 = vpack.c.b16 %v4803, %v4778
      %v4854 = vpack.c.b16 %v4804, %v4779
      %v4855 = vpack.c.b16 %v4805, %v4780
      %v4856 = vpack.c.b16 %v4806, %v4781
      %v4857 = vpack.c.b16 %v4807, %v4782
      %v4858 = vpack.c.b16 %v4808, %v4783
      %v4859 = vpack.c.b16 %v4809, %v4784
      %v4860 = vpack.c.b16 %v4810, %v4785
      %v4861 = vpack.c.b16 %v4811, %v4786
      %v4862 = vpack.c.b16 %v4812, %v4787
      %v4863 = vpack.c.b16 %v4813, %v4788
      %v4864 = vpack.c.b16 %v4814, %v4789
      %v4865 = vpack.c.b16 %v4815, %v4790
      %v4866 = vpack.c.b16 %v4816, %v4791
      %v4867 = vpack.c.b16 %v4817, %v4792
      %v4868 = vpack.c.b16 %v4818, %v4793
      %v4869 = vpack.c.b16 %v4819, %v4794
      %v4870 = vpack.c.b16 %v4820, %v4795
      %v4871 = vpack.c.b16 %v4821, %v4796
      %v4872 = vpack.c.b16 %v4822, %v4797
      %v4873 = vpack.c.b16 %v4823, %v4798
      %v4874 = vpack.c.b16 %v4824, %v4799
      %4925 = vmatprep.subr.bf16.mxu0 0
      %4926 = vmatpush1.bf16.msra.mxu0 %v1683
      %4927 = vmatprep.subr.bf16.mxu0 0
      %4928 = vmatpush1.bf16.msra.mxu0 %v1684
      %4929 = vmatprep.subr.bf16.mxu0 0
      %4930 = vmatpush1.bf16.msra.mxu0 %v1685
      %4931 = vmatprep.subr.bf16.mxu0 0
      %4932 = vmatpush1.bf16.msra.mxu0 %v1686
      %4933 = vmatprep.subr.bf16.mxu0 0
      %4934 = vmatpush1.bf16.msra.mxu0 %v1687
      %4935 = vmatprep.subr.bf16.mxu0 0
      %4936 = vmatpush1.bf16.msra.mxu0 %v1688
      %4937 = vmatprep.subr.bf16.mxu0 0
      %4938 = vmatpush1.bf16.msra.mxu0 %v1689
      %4939 = vmatprep.subr.bf16.mxu0 0
      %4940 = vmatpush1.bf16.msra.mxu0 %v1690
      %4941 = vmatprep.subr.bf16.mxu0 0
      %4942 = vmatpush1.bf16.msra.mxu0 %v1691
      %4943 = vmatprep.subr.bf16.mxu0 0
      %4944 = vmatpush1.bf16.msra.mxu0 %v1692
      %4945 = vmatprep.subr.bf16.mxu0 0
      %4946 = vmatpush1.bf16.msra.mxu0 %v1693
      %4947 = vmatprep.subr.bf16.mxu0 0
      %4948 = vmatpush1.bf16.msra.mxu0 %v1694
      %4949 = vmatprep.subr.bf16.mxu0 0
      %4950 = vmatpush1.bf16.msra.mxu0 %v1695
      %4951 = vmatprep.subr.bf16.mxu0 0
      %4952 = vmatpush1.bf16.msra.mxu0 %v1696
      %4953 = vmatprep.subr.bf16.mxu0 0
      %4954 = vmatpush1.bf16.msra.mxu0 %v1697
      %4955 = vmatprep.subr.bf16.mxu0 0
      %4956 = vmatpush1.bf16.msra.mxu0 %v1698
      %4957 = vmatprep.mubr.bf16.mxu0 %v4826
      %4958 = vmatmul.mubr.bf16.gmra.mrb[0].mxu0 %v4825
      %v4959 = vpop.f32.mrb[0].mxu0
      %v4960 = vadd.f32 %v629, %v4959
      %v4961 = vpop.f32.mrb[0].mxu0
      %v4962 = vpop.f32.mrb[0].mxu0
      %v4963 = vadd.f32 %v629, %v4962
      %v4964 = vpop.f32.mrb[0].mxu0
      %4965 = vmatprep.mubr.bf16.mxu0 %v4851
      %4966 = vmatmul.mubr.bf16.gmra.mrb[0].mxu0 %v4850
      %v4967 = vpop.f32.mrb[0].mxu0
      %v4968 = vadd.f32 %v629, %v4967
      %v4969 = vpop.f32.mrb[0].mxu0
      %v4970 = vpop.f32.mrb[0].mxu0
      %v4971 = vadd.f32 %v629, %v4970
      %v4972 = vpop.f32.mrb[0].mxu0
      %4973 = vdwg.mxu0
      %4974 = vmatprep.subr.bf16.mxu0 0
      %4975 = vmatpush1.bf16.msra.mxu0 %v1699
      %4976 = vmatprep.subr.bf16.mxu0 0
      %4977 = vmatpush1.bf16.msra.mxu0 %v1700
      %4978 = vmatprep.subr.bf16.mxu0 0
      %4979 = vmatpush1.bf16.msra.mxu0 %v1701
      %4980 = vmatprep.subr.bf16.mxu0 0
      %4981 = vmatpush1.bf16.msra.mxu0 %v1702
      %4982 = vmatprep.subr.bf16.mxu0 0
      %4983 = vmatpush1.bf16.msra.mxu0 %v1703
      %4984 = vmatprep.subr.bf16.mxu0 0
      %4985 = vmatpush1.bf16.msra.mxu0 %v1704
      %4986 = vmatprep.subr.bf16.mxu0 0
      %4987 = vmatpush1.bf16.msra.mxu0 %v1705
      %4988 = vmatprep.subr.bf16.mxu0 0
      %4989 = vmatpush1.bf16.msra.mxu0 %v1706
      %4990 = vmatprep.subr.bf16.mxu0 0
      %4991 = vmatpush1.bf16.msra.mxu0 %v1707
      %4992 = vmatprep.subr.bf16.mxu0 0
      %4993 = vmatpush1.bf16.msra.mxu0 %v1708
      %4994 = vmatprep.subr.bf16.mxu0 0
      %4995 = vmatpush1.bf16.msra.mxu0 %v1709
      %4996 = vmatprep.subr.bf16.mxu0 0
      %4997 = vmatpush1.bf16.msra.mxu0 %v1710
      %4998 = vmatprep.subr.bf16.mxu0 0
      %4999 = vmatpush1.bf16.msra.mxu0 %v1711
      %5000 = vmatprep.subr.bf16.mxu0 0
      %5001 = vmatpush1.bf16.msra.mxu0 %v1712
      %5002 = vmatprep.subr.bf16.mxu0 0
      %5003 = vmatpush1.bf16.msra.mxu0 %v1713
      %5004 = vmatprep.subr.bf16.mxu0 0
      %5005 = vmatpush1.bf16.msra.mxu0 %v1714
      %5006 = vmatprep.mubr.bf16.mxu0 %v4828
      %5007 = vmatmul.mubr.bf16.gmra.mrb[0].mxu0 %v4827
      %v5008 = vpop.f32.mrb[0].mxu0
      %v5009 = vadd.f32 %v4960, %v5008
      %v5010 = vpop.f32.mrb[0].mxu0
      %v5011 = vpop.f32.mrb[0].mxu0
      %v5012 = vadd.f32 %v4963, %v5011
      %v5013 = vpop.f32.mrb[0].mxu0
      %5014 = vmatprep.mubr.bf16.mxu0 %v4853
      %5015 = vmatmul.mubr.bf16.gmra.mrb[0].mxu0 %v4852
      %v5016 = vpop.f32.mrb[0].mxu0
      %v5017 = vadd.f32 %v4968, %v5016
      %v5018 = vpop.f32.mrb[0].mxu0
      %v5019 = vpop.f32.mrb[0].mxu0
      %v5020 = vadd.f32 %v4971, %v5019
      %v5021 = vpop.f32.mrb[0].mxu0
      %5022 = vdwg.mxu0
      %5023 = vmatprep.subr.bf16.mxu0 0
      %5024 = vmatpush1.bf16.msra.mxu0 %v1715
      %5025 = vmatprep.subr.bf16.mxu0 0
      %5026 = vmatpush1.bf16.msra.mxu0 %v1716
      %5027 = vmatprep.subr.bf16.mxu0 0
      %5028 = vmatpush1.bf16.msra.mxu0 %v1717
      %5029 = vmatprep.subr.bf16.mxu0 0
      %5030 = vmatpush1.bf16.msra.mxu0 %v1718
      %5031 = vmatprep.subr.bf16.mxu0 0
      %5032 = vmatpush1.bf16.msra.mxu0 %v1719
      %5033 = vmatprep.subr.bf16.mxu0 0
      %5034 = vmatpush1.bf16.msra.mxu0 %v1720
      %5035 = vmatprep.subr.bf16.mxu0 0
      %5036 = vmatpush1.bf16.msra.mxu0 %v1721
      %5037 = vmatprep.subr.bf16.mxu0 0
      %5038 = vmatpush1.bf16.msra.mxu0 %v1722
      %5039 = vmatprep.subr.bf16.mxu0 0
      %5040 = vmatpush1.bf16.msra.mxu0 %v1723
      %5041 = vmatprep.subr.bf16.mxu0 0
      %5042 = vmatpush1.bf16.msra.mxu0 %v1724
      %5043 = vmatprep.subr.bf16.mxu0 0
      %5044 = vmatpush1.bf16.msra.mxu0 %v1725
      %5045 = vmatprep.subr.bf16.mxu0 0
      %5046 = vmatpush1.bf16.msra.mxu0 %v1726
      %5047 = vmatprep.subr.bf16.mxu0 0
      %5048 = vmatpush1.bf16.msra.mxu0 %v1727
      %5049 = vmatprep.subr.bf16.mxu0 0
      %5050 = vmatpush1.bf16.msra.mxu0 %v1728
      %5051 = vmatprep.subr.bf16.mxu0 0
      %5052 = vmatpush1.bf16.msra.mxu0 %v1729
      %5053 = vmatprep.subr.bf16.mxu0 0
      %5054 = vmatpush1.bf16.msra.mxu0 %v1730
      %5055 = vmatprep.mubr.bf16.mxu0 %v4830
      %5056 = vmatmul.mubr.bf16.gmra.mrb[0].mxu0 %v4829
      %v5057 = vpop.f32.mrb[0].mxu0
      %v5058 = vadd.f32 %v5009, %v5057
      %v5059 = vpop.f32.mrb[0].mxu0
      %v5060 = vpop.f32.mrb[0].mxu0
      %v5061 = vadd.f32 %v5012, %v5060
      %v5062 = vpop.f32.mrb[0].mxu0
      %5063 = vmatprep.mubr.bf16.mxu0 %v4855
      %5064 = vmatmul.mubr.bf16.gmra.mrb[0].mxu0 %v4854
      %v5065 = vpop.f32.mrb[0].mxu0
      %v5066 = vadd.f32 %v5017, %v5065
      %v5067 = vpop.f32.mrb[0].mxu0
      %v5068 = vpop.f32.mrb[0].mxu0
      %v5069 = vadd.f32 %v5020, %v5068
      %v5070 = vpop.f32.mrb[0].mxu0
      %5071 = vdwg.mxu0
      %5072 = vmatprep.subr.bf16.mxu0 0
      %5073 = vmatpush1.bf16.msra.mxu0 %v1731
      %5074 = vmatprep.subr.bf16.mxu0 0
      %5075 = vmatpush1.bf16.msra.mxu0 %v1732
      %5076 = vmatprep.subr.bf16.mxu0 0
      %5077 = vmatpush1.bf16.msra.mxu0 %v1733
      %5078 = vmatprep.subr.bf16.mxu0 0
      %5079 = vmatpush1.bf16.msra.mxu0 %v1734
      %5080 = vmatprep.subr.bf16.mxu0 0
      %5081 = vmatpush1.bf16.msra.mxu0 %v1735
      %5082 = vmatprep.subr.bf16.mxu0 0
      %5083 = vmatpush1.bf16.msra.mxu0 %v1736
      %5084 = vmatprep.subr.bf16.mxu0 0
      %5085 = vmatpush1.bf16.msra.mxu0 %v1737
      %5086 = vmatprep.subr.bf16.mxu0 0
      %5087 = vmatpush1.bf16.msra.mxu0 %v1738
      %5088 = vmatprep.subr.bf16.mxu0 0
      %5089 = vmatpush1.bf16.msra.mxu0 %v1739
      %5090 = vmatprep.subr.bf16.mxu0 0
      %5091 = vmatpush1.bf16.msra.mxu0 %v1740
      %5092 = vmatprep.subr.bf16.mxu0 0
      %5093 = vmatpush1.bf16.msra.mxu0 %v1741
      %5094 = vmatprep.subr.bf16.mxu0 0
      %5095 = vmatpush1.bf16.msra.mxu0 %v1742
      %5096 = vmatprep.subr.bf16.mxu0 0
      %5097 = vmatpush1.bf16.msra.mxu0 %v1743
      %5098 = vmatprep.subr.bf16.mxu0 0
      %5099 = vmatpush1.bf16.msra.mxu0 %v1744
      %5100 = vmatprep.subr.bf16.mxu0 0
      %5101 = vmatpush1.bf16.msra.mxu0 %v1745
      %5102 = vmatprep.subr.bf16.mxu0 0
      %5103 = vmatpush1.bf16.msra.mxu0 %v1746
      %5104 = vmatprep.mubr.bf16.mxu0 %v4832
      %5105 = vmatmul.mubr.bf16.gmra.mrb[0].mxu0 %v4831
      %v5106 = vpop.f32.mrb[0].mxu0
      %v5107 = vadd.f32 %v5058, %v5106
      %v5108 = vpop.f32.mrb[0].mxu0
      %v5109 = vpop.f32.mrb[0].mxu0
      %v5110 = vadd.f32 %v5061, %v5109
      %v5111 = vpop.f32.mrb[0].mxu0
      %5112 = vmatprep.mubr.bf16.mxu0 %v4857
      %5113 = vmatmul.mubr.bf16.gmra.mrb[0].mxu0 %v4856
      %v5114 = vpop.f32.mrb[0].mxu0
      %v5115 = vadd.f32 %v5066, %v5114
      %v5116 = vpop.f32.mrb[0].mxu0
      %v5117 = vpop.f32.mrb[0].mxu0
      %v5118 = vadd.f32 %v5069, %v5117
      %v5119 = vpop.f32.mrb[0].mxu0
      %5120 = vdwg.mxu0
      %5121 = vmatprep.subr.bf16.mxu0 0
      %5122 = vmatpush1.bf16.msra.mxu0 %v1747
      %5123 = vmatprep.subr.bf16.mxu0 0
      %5124 = vmatpush1.bf16.msra.mxu0 %v1748
      %5125 = vmatprep.subr.bf16.mxu0 0
      %5126 = vmatpush1.bf16.msra.mxu0 %v1749
      %5127 = vmatprep.subr.bf16.mxu0 0
      %5128 = vmatpush1.bf16.msra.mxu0 %v1750
      %5129 = vmatprep.subr.bf16.mxu0 0
      %5130 = vmatpush1.bf16.msra.mxu0 %v1751
      %5131 = vmatprep.subr.bf16.mxu0 0
      %5132 = vmatpush1.bf16.msra.mxu0 %v1752
      %5133 = vmatprep.subr.bf16.mxu0 0
      %5134 = vmatpush1.bf16.msra.mxu0 %v1753
      %5135 = vmatprep.subr.bf16.mxu0 0
      %5136 = vmatpush1.bf16.msra.mxu0 %v1754
      %5137 = vmatprep.subr.bf16.mxu0 0
      %5138 = vmatpush1.bf16.msra.mxu0 %v1755
      %5139 = vmatprep.subr.bf16.mxu0 0
      %5140 = vmatpush1.bf16.msra.mxu0 %v1756
      %5141 = vmatprep.subr.bf16.mxu0 0
      %5142 = vmatpush1.bf16.msra.mxu0 %v1757
      %5143 = vmatprep.subr.bf16.mxu0 0
      %5144 = vmatpush1.bf16.msra.mxu0 %v1758
      %5145 = vmatprep.subr.bf16.mxu0 0
      %5146 = vmatpush1.bf16.msra.mxu0 %v1759
      %5147 = vmatprep.subr.bf16.mxu0 0
      %5148 = vmatpush1.bf16.msra.mxu0 %v1760
      %5149 = vmatprep.subr.bf16.mxu0 0
      %5150 = vmatpush1.bf16.msra.mxu0 %v1761
      %5151 = vmatprep.subr.bf16.mxu0 0
      %5152 = vmatpush1.bf16.msra.mxu0 %v1762
      %5153 = vmatprep.mubr.bf16.mxu0 %v4834
      %5154 = vmatmul.mubr.bf16.gmra.mrb[0].mxu0 %v4833
      %v5155 = vpop.f32.mrb[0].mxu0
      %v5156 = vadd.f32 %v5107, %v5155
      %v5157 = vpop.f32.mrb[0].mxu0
      %v5158 = vpop.f32.mrb[0].mxu0
      %v5159 = vadd.f32 %v5110, %v5158
      %v5160 = vpop.f32.mrb[0].mxu0
      %5161 = vmatprep.mubr.bf16.mxu0 %v4859
      %5162 = vmatmul.mubr.bf16.gmra.mrb[0].mxu0 %v4858
      %v5163 = vpop.f32.mrb[0].mxu0
      %v5164 = vadd.f32 %v5115, %v5163
      %v5165 = vpop.f32.mrb[0].mxu0
      %v5166 = vpop.f32.mrb[0].mxu0
      %v5167 = vadd.f32 %v5118, %v5166
      %v5168 = vpop.f32.mrb[0].mxu0
      %5169 = vdwg.mxu0
      %5170 = vmatprep.subr.bf16.mxu0 0
      %5171 = vmatpush1.bf16.msra.mxu0 %v1763
      %5172 = vmatprep.subr.bf16.mxu0 0
      %5173 = vmatpush1.bf16.msra.mxu0 %v1764
      %5174 = vmatprep.subr.bf16.mxu0 0
      %5175 = vmatpush1.bf16.msra.mxu0 %v1765
      %5176 = vmatprep.subr.bf16.mxu0 0
      %5177 = vmatpush1.bf16.msra.mxu0 %v1766
      %5178 = vmatprep.subr.bf16.mxu0 0
      %5179 = vmatpush1.bf16.msra.mxu0 %v1767
      %5180 = vmatprep.subr.bf16.mxu0 0
      %5181 = vmatpush1.bf16.msra.mxu0 %v1768
      %5182 = vmatprep.subr.bf16.mxu0 0
      %5183 = vmatpush1.bf16.msra.mxu0 %v1769
      %5184 = vmatprep.subr.bf16.mxu0 0
      %5185 = vmatpush1.bf16.msra.mxu0 %v1770
      %5186 = vmatprep.subr.bf16.mxu0 0
      %5187 = vmatpush1.bf16.msra.mxu0 %v1771
      %5188 = vmatprep.subr.bf16.mxu0 0
      %5189 = vmatpush1.bf16.msra.mxu0 %v1772
      %5190 = vmatprep.subr.bf16.mxu0 0
      %5191 = vmatpush1.bf16.msra.mxu0 %v1773
      %5192 = vmatprep.subr.bf16.mxu0 0
      %5193 = vmatpush1.bf16.msra.mxu0 %v1774
      %5194 = vmatprep.subr.bf16.mxu0 0
      %5195 = vmatpush1.bf16.msra.mxu0 %v1775
      %5196 = vmatprep.subr.bf16.mxu0 0
      %5197 = vmatpush1.bf16.msra.mxu0 %v1776
      %5198 = vmatprep.subr.bf16.mxu0 0
      %5199 = vmatpush1.bf16.msra.mxu0 %v1777
      %5200 = vmatprep.subr.bf16.mxu0 0
      %5201 = vmatpush1.bf16.msra.mxu0 %v1778
      %5202 = vmatprep.mubr.bf16.mxu0 %v4836
      %5203 = vmatmul.mubr.bf16.gmra.mrb[0].mxu0 %v4835
      %v5204 = vpop.f32.mrb[0].mxu0
      %v5205 = vadd.f32 %v5156, %v5204
      %v5206 = vpop.f32.mrb[0].mxu0
      %v5207 = vpop.f32.mrb[0].mxu0
      %v5208 = vadd.f32 %v5159, %v5207
      %v5209 = vpop.f32.mrb[0].mxu0
      %5210 = vmatprep.mubr.bf16.mxu0 %v4861
      %5211 = vmatmul.mubr.bf16.gmra.mrb[0].mxu0 %v4860
      %v5212 = vpop.f32.mrb[0].mxu0
      %v5213 = vadd.f32 %v5164, %v5212
      %v5214 = vpop.f32.mrb[0].mxu0
      %v5215 = vpop.f32.mrb[0].mxu0
      %v5216 = vadd.f32 %v5167, %v5215
      %v5217 = vpop.f32.mrb[0].mxu0
      %5218 = vdwg.mxu0
      %5219 = vmatprep.subr.bf16.mxu0 0
      %5220 = vmatpush1.bf16.msra.mxu0 %v1779
      %5221 = vmatprep.subr.bf16.mxu0 0
      %5222 = vmatpush1.bf16.msra.mxu0 %v1780
      %5223 = vmatprep.subr.bf16.mxu0 0
      %5224 = vmatpush1.bf16.msra.mxu0 %v1781
      %5225 = vmatprep.subr.bf16.mxu0 0
      %5226 = vmatpush1.bf16.msra.mxu0 %v1782
      %5227 = vmatprep.subr.bf16.mxu0 0
      %5228 = vmatpush1.bf16.msra.mxu0 %v1783
      %5229 = vmatprep.subr.bf16.mxu0 0
      %5230 = vmatpush1.bf16.msra.mxu0 %v1784
      %5231 = vmatprep.subr.bf16.mxu0 0
      %5232 = vmatpush1.bf16.msra.mxu0 %v1785
      %5233 = vmatprep.subr.bf16.mxu0 0
      %5234 = vmatpush1.bf16.msra.mxu0 %v1786
      %5235 = vmatprep.subr.bf16.mxu0 0
      %5236 = vmatpush1.bf16.msra.mxu0 %v1787
      %5237 = vmatprep.subr.bf16.mxu0 0
      %5238 = vmatpush1.bf16.msra.mxu0 %v1788
      %5239 = vmatprep.subr.bf16.mxu0 0
      %5240 = vmatpush1.bf16.msra.mxu0 %v1789
      %5241 = vmatprep.subr.bf16.mxu0 0
      %5242 = vmatpush1.bf16.msra.mxu0 %v1790
      %5243 = vmatprep.subr.bf16.mxu0 0
      %5244 = vmatpush1.bf16.msra.mxu0 %v1791
      %5245 = vmatprep.subr.bf16.mxu0 0
      %5246 = vmatpush1.bf16.msra.mxu0 %v1792
      %5247 = vmatprep.subr.bf16.mxu0 0
      %5248 = vmatpush1.bf16.msra.mxu0 %v1793
      %5249 = vmatprep.subr.bf16.mxu0 0
      %5250 = vmatpush1.bf16.msra.mxu0 %v1794
      %5251 = vmatprep.mubr.bf16.mxu0 %v4838
      %5252 = vmatmul.mubr.bf16.gmra.mrb[0].mxu0 %v4837
      %v5253 = vpop.f32.mrb[0].mxu0
      %v5254 = vadd.f32 %v5205, %v5253
      %v5255 = vpop.f32.mrb[0].mxu0
      %v5256 = vpop.f32.mrb[0].mxu0
      %v5257 = vadd.f32 %v5208, %v5256
      %v5258 = vpop.f32.mrb[0].mxu0
      %5259 = vmatprep.mubr.bf16.mxu0 %v4863
      %5260 = vmatmul.mubr.bf16.gmra.mrb[0].mxu0 %v4862
      %v5261 = vpop.f32.mrb[0].mxu0
      %v5262 = vadd.f32 %v5213, %v5261
      %v5263 = vpop.f32.mrb[0].mxu0
      %v5264 = vpop.f32.mrb[0].mxu0
      %v5265 = vadd.f32 %v5216, %v5264
      %v5266 = vpop.f32.mrb[0].mxu0
      %5267 = vdwg.mxu0
      %5268 = vmatprep.subr.bf16.mxu0 0
      %5269 = vmatpush1.bf16.msra.mxu0 %v1795
      %5270 = vmatprep.subr.bf16.mxu0 0
      %5271 = vmatpush1.bf16.msra.mxu0 %v1796
      %5272 = vmatprep.subr.bf16.mxu0 0
      %5273 = vmatpush1.bf16.msra.mxu0 %v1797
      %5274 = vmatprep.subr.bf16.mxu0 0
      %5275 = vmatpush1.bf16.msra.mxu0 %v1798
      %5276 = vmatprep.subr.bf16.mxu0 0
      %5277 = vmatpush1.bf16.msra.mxu0 %v1799
      %5278 = vmatprep.subr.bf16.mxu0 0
      %5279 = vmatpush1.bf16.msra.mxu0 %v1800
      %5280 = vmatprep.subr.bf16.mxu0 0
      %5281 = vmatpush1.bf16.msra.mxu0 %v1801
      %5282 = vmatprep.subr.bf16.mxu0 0
      %5283 = vmatpush1.bf16.msra.mxu0 %v1802
      %5284 = vmatprep.subr.bf16.mxu0 0
      %5285 = vmatpush1.bf16.msra.mxu0 %v1803
      %5286 = vmatprep.subr.bf16.mxu0 0
      %5287 = vmatpush1.bf16.msra.mxu0 %v1804
      %5288 = vmatprep.subr.bf16.mxu0 0
      %5289 = vmatpush1.bf16.msra.mxu0 %v1805
      %5290 = vmatprep.subr.bf16.mxu0 0
      %5291 = vmatpush1.bf16.msra.mxu0 %v1806
      %5292 = vmatprep.subr.bf16.mxu0 0
      %5293 = vmatpush1.bf16.msra.mxu0 %v1807
      %5294 = vmatprep.subr.bf16.mxu0 0
      %5295 = vmatpush1.bf16.msra.mxu0 %v1808
      %5296 = vmatprep.subr.bf16.mxu0 0
      %5297 = vmatpush1.bf16.msra.mxu0 %v1809
      %5298 = vmatprep.subr.bf16.mxu0 0
      %5299 = vmatpush1.bf16.msra.mxu0 %v1810
      %5300 = vmatprep.mubr.bf16.mxu0 %v4840
      %5301 = vmatmul.mubr.bf16.gmra.mrb[0].mxu0 %v4839
      %v5302 = vpop.f32.mrb[0].mxu0
      %v5303 = vadd.f32 %v5254, %v5302
      %v5304 = vpop.f32.mrb[0].mxu0
      %v5305 = vpop.f32.mrb[0].mxu0
      %v5306 = vadd.f32 %v5257, %v5305
      %v5307 = vpop.f32.mrb[0].mxu0
      %5308 = vmatprep.mubr.bf16.mxu0 %v4865
      %5309 = vmatmul.mubr.bf16.gmra.mrb[0].mxu0 %v4864
      %v5310 = vpop.f32.mrb[0].mxu0
      %v5311 = vadd.f32 %v5262, %v5310
      %v5312 = vpop.f32.mrb[0].mxu0
      %v5313 = vpop.f32.mrb[0].mxu0
      %v5314 = vadd.f32 %v5265, %v5313
      %v5315 = vpop.f32.mrb[0].mxu0
      %5316 = vdwg.mxu0
      %5317 = vmatprep.subr.bf16.mxu0 0
      %5318 = vmatpush1.bf16.msra.mxu0 %v1811
      %5319 = vmatprep.subr.bf16.mxu0 0
      %5320 = vmatpush1.bf16.msra.mxu0 %v1812
      %5321 = vmatprep.subr.bf16.mxu0 0
      %5322 = vmatpush1.bf16.msra.mxu0 %v1813
      %5323 = vmatprep.subr.bf16.mxu0 0
      %5324 = vmatpush1.bf16.msra.mxu0 %v1814
      %5325 = vmatprep.subr.bf16.mxu0 0
      %5326 = vmatpush1.bf16.msra.mxu0 %v1815
      %5327 = vmatprep.subr.bf16.mxu0 0
      %5328 = vmatpush1.bf16.msra.mxu0 %v1816
      %5329 = vmatprep.subr.bf16.mxu0 0
      %5330 = vmatpush1.bf16.msra.mxu0 %v1817
      %5331 = vmatprep.subr.bf16.mxu0 0
      %5332 = vmatpush1.bf16.msra.mxu0 %v1818
      %5333 = vmatprep.subr.bf16.mxu0 0
      %5334 = vmatpush1.bf16.msra.mxu0 %v1819
      %5335 = vmatprep.subr.bf16.mxu0 0
      %5336 = vmatpush1.bf16.msra.mxu0 %v1820
      %5337 = vmatprep.subr.bf16.mxu0 0
      %5338 = vmatpush1.bf16.msra.mxu0 %v1821
      %5339 = vmatprep.subr.bf16.mxu0 0
      %5340 = vmatpush1.bf16.msra.mxu0 %v1822
      %5341 = vmatprep.subr.bf16.mxu0 0
      %5342 = vmatpush1.bf16.msra.mxu0 %v1823
      %5343 = vmatprep.subr.bf16.mxu0 0
      %5344 = vmatpush1.bf16.msra.mxu0 %v1824
      %5345 = vmatprep.subr.bf16.mxu0 0
      %5346 = vmatpush1.bf16.msra.mxu0 %v1825
      %5347 = vmatprep.subr.bf16.mxu0 0
      %5348 = vmatpush1.bf16.msra.mxu0 %v1826
      %5349 = vmatprep.mubr.bf16.mxu0 %v4842
      %5350 = vmatmul.mubr.bf16.gmra.mrb[0].mxu0 %v4841
      %v5351 = vpop.f32.mrb[0].mxu0
      %v5352 = vadd.f32 %v5303, %v5351
      %v5353 = vpop.f32.mrb[0].mxu0
      %v5354 = vpop.f32.mrb[0].mxu0
      %v5355 = vadd.f32 %v5306, %v5354
      %v5356 = vpop.f32.mrb[0].mxu0
      %5357 = vmatprep.mubr.bf16.mxu0 %v4867
      %5358 = vmatmul.mubr.bf16.gmra.mrb[0].mxu0 %v4866
      %v5359 = vpop.f32.mrb[0].mxu0
      %v5360 = vadd.f32 %v5311, %v5359
      %v5361 = vpop.f32.mrb[0].mxu0
      %v5362 = vpop.f32.mrb[0].mxu0
      %v5363 = vadd.f32 %v5314, %v5362
      %v5364 = vpop.f32.mrb[0].mxu0
      %5365 = vdwg.mxu0
      %5366 = vmatprep.subr.bf16.mxu0 0
      %5367 = vmatpush1.bf16.msra.mxu0 %v1827
      %5368 = vmatprep.subr.bf16.mxu0 0
      %5369 = vmatpush1.bf16.msra.mxu0 %v1828
      %5370 = vmatprep.subr.bf16.mxu0 0
      %5371 = vmatpush1.bf16.msra.mxu0 %v1829
      %5372 = vmatprep.subr.bf16.mxu0 0
      %5373 = vmatpush1.bf16.msra.mxu0 %v1830
      %5374 = vmatprep.subr.bf16.mxu0 0
      %5375 = vmatpush1.bf16.msra.mxu0 %v1831
      %5376 = vmatprep.subr.bf16.mxu0 0
      %5377 = vmatpush1.bf16.msra.mxu0 %v1832
      %5378 = vmatprep.subr.bf16.mxu0 0
      %5379 = vmatpush1.bf16.msra.mxu0 %v1833
      %5380 = vmatprep.subr.bf16.mxu0 0
      %5381 = vmatpush1.bf16.msra.mxu0 %v1834
      %5382 = vmatprep.subr.bf16.mxu0 0
      %5383 = vmatpush1.bf16.msra.mxu0 %v1835
      %5384 = vmatprep.subr.bf16.mxu0 0
      %5385 = vmatpush1.bf16.msra.mxu0 %v1836
      %5386 = vmatprep.subr.bf16.mxu0 0
      %5387 = vmatpush1.bf16.msra.mxu0 %v1837
      %5388 = vmatprep.subr.bf16.mxu0 0
      %5389 = vmatpush1.bf16.msra.mxu0 %v1838
      %5390 = vmatprep.subr.bf16.mxu0 0
      %5391 = vmatpush1.bf16.msra.mxu0 %v1839
      %5392 = vmatprep.subr.bf16.mxu0 0
      %5393 = vmatpush1.bf16.msra.mxu0 %v1840
      %5394 = vmatprep.subr.bf16.mxu0 0
      %5395 = vmatpush1.bf16.msra.mxu0 %v1841
      %5396 = vmatprep.subr.bf16.mxu0 0
      %5397 = vmatpush1.bf16.msra.mxu0 %v1842
      %5398 = vmatprep.mubr.bf16.mxu0 %v4844
      %5399 = vmatmul.mubr.bf16.gmra.mrb[0].mxu0 %v4843
      %v5400 = vpop.f32.mrb[0].mxu0
      %v5401 = vadd.f32 %v5352, %v5400
      %v5402 = vpop.f32.mrb[0].mxu0
      %v5403 = vpop.f32.mrb[0].mxu0
      %v5404 = vadd.f32 %v5355, %v5403
      %v5405 = vpop.f32.mrb[0].mxu0
      %5406 = vmatprep.mubr.bf16.mxu0 %v4869
      %5407 = vmatmul.mubr.bf16.gmra.mrb[0].mxu0 %v4868
      %v5408 = vpop.f32.mrb[0].mxu0
      %v5409 = vadd.f32 %v5360, %v5408
      %v5410 = vpop.f32.mrb[0].mxu0
      %v5411 = vpop.f32.mrb[0].mxu0
      %v5412 = vadd.f32 %v5363, %v5411
      %v5413 = vpop.f32.mrb[0].mxu0
      %5414 = vdwg.mxu0
      %5415 = vmatprep.subr.bf16.mxu0 0
      %5416 = vmatpush1.bf16.msra.mxu0 %v1843
      %5417 = vmatprep.subr.bf16.mxu0 0
      %5418 = vmatpush1.bf16.msra.mxu0 %v1844
      %5419 = vmatprep.subr.bf16.mxu0 0
      %5420 = vmatpush1.bf16.msra.mxu0 %v1845
      %5421 = vmatprep.subr.bf16.mxu0 0
      %5422 = vmatpush1.bf16.msra.mxu0 %v1846
      %5423 = vmatprep.subr.bf16.mxu0 0
      %5424 = vmatpush1.bf16.msra.mxu0 %v1847
      %5425 = vmatprep.subr.bf16.mxu0 0
      %5426 = vmatpush1.bf16.msra.mxu0 %v1848
      %5427 = vmatprep.subr.bf16.mxu0 0
      %5428 = vmatpush1.bf16.msra.mxu0 %v1849
      %5429 = vmatprep.subr.bf16.mxu0 0
      %5430 = vmatpush1.bf16.msra.mxu0 %v1850
      %5431 = vmatprep.subr.bf16.mxu0 0
      %5432 = vmatpush1.bf16.msra.mxu0 %v1851
      %5433 = vmatprep.subr.bf16.mxu0 0
      %5434 = vmatpush1.bf16.msra.mxu0 %v1852
      %5435 = vmatprep.subr.bf16.mxu0 0
      %5436 = vmatpush1.bf16.msra.mxu0 %v1853
      %5437 = vmatprep.subr.bf16.mxu0 0
      %5438 = vmatpush1.bf16.msra.mxu0 %v1854
      %5439 = vmatprep.subr.bf16.mxu0 0
      %5440 = vmatpush1.bf16.msra.mxu0 %v1855
      %5441 = vmatprep.subr.bf16.mxu0 0
      %5442 = vmatpush1.bf16.msra.mxu0 %v1856
      %5443 = vmatprep.subr.bf16.mxu0 0
      %5444 = vmatpush1.bf16.msra.mxu0 %v1857
      %5445 = vmatprep.subr.bf16.mxu0 0
      %5446 = vmatpush1.bf16.msra.mxu0 %v1858
      %5447 = vmatprep.mubr.bf16.mxu0 %v4846
      %5448 = vmatmul.mubr.bf16.gmra.mrb[0].mxu0 %v4845
      %v5449 = vpop.f32.mrb[0].mxu0
      %v5450 = vadd.f32 %v5401, %v5449
      %v5451 = vpop.f32.mrb[0].mxu0
      %v5452 = vpop.f32.mrb[0].mxu0
      %v5453 = vadd.f32 %v5404, %v5452
      %v5454 = vpop.f32.mrb[0].mxu0
      %5455 = vmatprep.mubr.bf16.mxu0 %v4871
      %5456 = vmatmul.mubr.bf16.gmra.mrb[0].mxu0 %v4870
      %v5457 = vpop.f32.mrb[0].mxu0
      %v5458 = vadd.f32 %v5409, %v5457
      %v5459 = vpop.f32.mrb[0].mxu0
      %v5460 = vpop.f32.mrb[0].mxu0
      %v5461 = vadd.f32 %v5412, %v5460
      %v5462 = vpop.f32.mrb[0].mxu0
      %5463 = vdwg.mxu0
      %5464 = vmatprep.subr.bf16.mxu0 0
      %5465 = vmatpush1.bf16.msra.mxu0 %v1859
      %5466 = vmatprep.subr.bf16.mxu0 0
      %5467 = vmatpush1.bf16.msra.mxu0 %v1860
      %5468 = vmatprep.subr.bf16.mxu0 0
      %5469 = vmatpush1.bf16.msra.mxu0 %v1861
      %5470 = vmatprep.subr.bf16.mxu0 0
      %5471 = vmatpush1.bf16.msra.mxu0 %v1862
      %5472 = vmatprep.subr.bf16.mxu0 0
      %5473 = vmatpush1.bf16.msra.mxu0 %v1863
      %5474 = vmatprep.subr.bf16.mxu0 0
      %5475 = vmatpush1.bf16.msra.mxu0 %v1864
      %5476 = vmatprep.subr.bf16.mxu0 0
      %5477 = vmatpush1.bf16.msra.mxu0 %v1865
      %5478 = vmatprep.subr.bf16.mxu0 0
      %5479 = vmatpush1.bf16.msra.mxu0 %v1866
      %5480 = vmatprep.subr.bf16.mxu0 0
      %5481 = vmatpush1.bf16.msra.mxu0 %v1867
      %5482 = vmatprep.subr.bf16.mxu0 0
      %5483 = vmatpush1.bf16.msra.mxu0 %v1868
      %5484 = vmatprep.subr.bf16.mxu0 0
      %5485 = vmatpush1.bf16.msra.mxu0 %v1869
      %5486 = vmatprep.subr.bf16.mxu0 0
      %5487 = vmatpush1.bf16.msra.mxu0 %v1870
      %5488 = vmatprep.subr.bf16.mxu0 0
      %5489 = vmatpush1.bf16.msra.mxu0 %v1871
      %5490 = vmatprep.subr.bf16.mxu0 0
      %5491 = vmatpush1.bf16.msra.mxu0 %v1872
      %5492 = vmatprep.subr.bf16.mxu0 0
      %5493 = vmatpush1.bf16.msra.mxu0 %v1873
      %5494 = vmatprep.subr.bf16.mxu0 0
      %5495 = vmatpush1.bf16.msra.mxu0 %v1874
      %5496 = vmatprep.mubr.bf16.mxu0 %v4848
      %5497 = vmatmul.mubr.bf16.gmra.mrb[0].mxu0 %v4847
      %v5498 = vpop.f32.mrb[0].mxu0
      %v5499 = vadd.f32 %v5450, %v5498
      %v5500 = vpop.f32.mrb[0].mxu0
      %v5501 = vpop.f32.mrb[0].mxu0
      %v5502 = vadd.f32 %v5453, %v5501
      %v5503 = vpop.f32.mrb[0].mxu0
      %5504 = vmatprep.mubr.bf16.mxu0 %v4873
      %5505 = vmatmul.mubr.bf16.gmra.mrb[0].mxu0 %v4872
      %v5506 = vpop.f32.mrb[0].mxu0
      %v5507 = vadd.f32 %v5458, %v5506
      %v5508 = vpop.f32.mrb[0].mxu0
      %v5509 = vpop.f32.mrb[0].mxu0
      %v5510 = vadd.f32 %v5461, %v5509
      %v5511 = vpop.f32.mrb[0].mxu0
      %5512 = vdwg.mxu0
      %5513 = vmatprep.subr.bf16.mxu0 0
      %5514 = vmatpush1.bf16.msra.mxu0 %v1875
      %5515 = vmatprep.subr.bf16.mxu0 0
      %5516 = vmatpush1.bf16.msra.mxu0 %v1876
      %5517 = vmatprep.subr.bf16.mxu0 0
      %5518 = vmatpush1.bf16.msra.mxu0 %v1877
      %5519 = vmatprep.subr.bf16.mxu0 0
      %5520 = vmatpush1.bf16.msra.mxu0 %v1878
      %5521 = vmatprep.subr.bf16.mxu0 0
      %5522 = vmatpush1.bf16.msra.mxu0 %v1879
      %5523 = vmatprep.subr.bf16.mxu0 0
      %5524 = vmatpush1.bf16.msra.mxu0 %v1880
      %5525 = vmatprep.subr.bf16.mxu0 0
      %5526 = vmatpush1.bf16.msra.mxu0 %v1881
      %5527 = vmatprep.subr.bf16.mxu0 0
      %5528 = vmatpush1.bf16.msra.mxu0 %v1882
      %5529 = vmatprep.subr.bf16.mxu0 0
      %5530 = vmatpush1.bf16.msra.mxu0 0
      %5531 = vmatprep.subr.bf16.mxu0 0
      %5532 = vmatpush1.bf16.msra.mxu0 0
      %5533 = vmatprep.subr.bf16.mxu0 0
      %5534 = vmatpush1.bf16.msra.mxu0 0
      %5535 = vmatprep.subr.bf16.mxu0 0
      %5536 = vmatpush1.bf16.msra.mxu0 0
      %5537 = vmatprep.subr.bf16.mxu0 0
      %5538 = vmatpush1.bf16.msra.mxu0 0
      %5539 = vmatprep.subr.bf16.mxu0 0
      %5540 = vmatpush1.bf16.msra.mxu0 0
      %5541 = vmatprep.subr.bf16.mxu0 0
      %5542 = vmatpush1.bf16.msra.mxu0 0
      %5543 = vmatprep.subr.bf16.mxu0 0
      %5544 = vmatpush1.bf16.msra.mxu0 0
      %5545 = vmatprep.mubr.bf16.mxu0 0
      %5546 = vmatmul.mubr.bf16.gmra.mrb[0].mxu0 %v4849
      %v5547 = vpop.f32.mrb[0].mxu0
      %v5548 = vadd.f32 %v5499, %v5547
      %v5549 = vpop.f32.mrb[0].mxu0
      %v5550 = vpop.f32.mrb[0].mxu0
      %v5551 = vadd.f32 %v5502, %v5550
      %v5552 = vpop.f32.mrb[0].mxu0
      %5553 = vmatprep.mubr.bf16.mxu0 0
      %5554 = vmatmul.mubr.bf16.gmra.mrb[0].mxu0 %v4874
      %v5555 = vpop.f32.mrb[0].mxu0
      %v5556 = vadd.f32 %v5507, %v5555
      %v5557 = vpop.f32.mrb[0].mxu0
      %v5558 = vpop.f32.mrb[0].mxu0
      %v5559 = vadd.f32 %v5510, %v5558
      %v5560 = vpop.f32.mrb[0].mxu0
      %5561 = vdwg.mxu0
      %v5562 = vmax.f32 %v5548, 0.0
      %v5563 = vmax.f32 %v5551, 0.0
      %v5564 = vmax.f32 %v5556, 0.0
      %v5565 = vmax.f32 %v5559, 0.0
      %v5566 = vmax.f32 %v4616, %v5562
      %v5567 = vmax.f32 %v4617, %v5563
      %v5568 = vmax.f32 %v4618, %v5564
      %v5569 = vmax.f32 %v4619, %v5565
      %v5570 = vmax.f32 %v3670, %v5566
      %v5571 = vmax.f32 %v3671, %v5567
      %v5572 = vmax.f32 %v3672, %v5568
      %v5573 = vmax.f32 %v3673, %v5569
      %v5574 = vpack.c.bf16 %v5571, %v5570
      %v5575 = vpack.c.bf16 %v5573, %v5572
      %v5578 = vunpack.c.l.b16 %v5574
      %v5579 = vunpack.c.h.b16 %v5574
      %v5580 = vunpack.c.l.b16 %v5575
      %v5581 = vunpack.c.h.b16 %v5575
      %v5582 = vpack.c.b16 %v5578, %v5578
      %v5583 = vpack.c.b16 %v5579, %v5579
      %v5584 = vpack.c.b16 %v5580, %v5580
      %v5585 = vpack.c.b16 %v5581, %v5581
      %5590 = vst [vmem:[%s170] sm:$0xf] %v5582
      %5591 = vst [vmem:[%s170 + $0x4] sm:$0xf] %v5583
      %5592 = vst [vmem:[%s170 + $0x8] sm:$0xf] %v5584
      %vm5593 = vcmask 1040384
      %vm5594 = vsmask.f32 256
      %vm5595 = vmand %vm5593, %vm5594
      %v5596 = vld [vmem:[%s170 + $0xc] sm:$0x1]
      %v5597 = vsel %vm5595, %v5585, %v5596
      %5598 = vst [vmem:[%s170 + $0xc] sm:$0x1] %v5597
      %p5599 = scmp.lt.s32.totalorder %s14, 1
      %s5600 = scalar_select %p5599, %s14, 1
      %s5601 = smul.addr %s5600, 4
      %s5602 = smul.addr %s5601, 4
      %s5603 = scalar_lea.vmem %s3, %s5602
      // Predicated region
      $region33: #{net_forward.4} parent=31 // pred_check
        %p5604 = pneg %p100
      $region34: #{net_forward.4} parent=31 // pred_check_branch
        %5606 = sbr.rel (%p5604) target = $region36
      $region35: #{net_forward.4} parent=31 // pred_region
        _
      $region36: #{net_forward.4} parent=31 // pred_fallthru
        _
    $region32: #{net_forward.4} parent=5 // pred_fallthru
      _
    %p5607 = scmp.le.s32.totalorder 2, %s9
    // Predicated region
    $region37: #{net_forward.4} parent=5 // pred_check
      %p5608 = pneg %p5607
    $region38: #{net_forward.4} parent=5 // pred_check_branch
      %5610 = sbr.rel (%p5608) target = $region40
    $region39: #{net_forward.4} parent=5 // pred_region
      %s5611 = ssub.s32 %s9, 2
      // Predicated region
      $region41: #{net_forward.4} parent=39 // pred_check
        %p5612 = pneg %p106
      $region42: #{net_forward.4} parent=39 // pred_check_branch
        %5614 = sbr.rel (%p5612) target = $region44
      $region43: #{net_forward.4} parent=39 // pred_region
        %p5615 = scmp.lt.s32.totalorder %s15, 1
        %s5616 = scalar_select %p5615, %s15, 1
        %s5617 = smul.addr %s5616, 4
        %s5618 = smul.addr %s5617, 4
        %s5619 = scalar_lea.vmem %s3, %s5618
      $region44: #{net_forward.4} parent=39 // pred_fallthru
        _
    $region40: #{net_forward.4} parent=5 // pred_fallthru
      _
  $region6: #{net_forward.4} parent=0 // loop_footer
    %s13 = sadd.s32 1, %s9
  $region7: #{net_forward.4} parent=0 // loop_footer_branch
    %8 = sbr.rel target = $region3
  $region8: #{net_forward.4} parent=0 // loop_exit
    _

</llo_original>
